<compile_context>
chip_gen: v7x
topology: tpu7x:2x2x1
jax: 0.10.0
libtpu: 0.0.40
codegen_flags: <defaults>
</compile_context>

<pallas_src>
import jax
import jax.numpy as jnp
from jax import lax
from jax.experimental import pallas as pl
from jax.experimental.pallas import tpu as pltpu

EPS = 1e-5      # GroupNorm default eps
GROUPS = 32     # GroupNorm32


# ---------------------------------------------------------------------------
# Pallas kernel: one batch element per grid step, fully lane-dense.
# ---------------------------------------------------------------------------
def _resblock_kernel(x_ref, temb_ref,
                     g1_ref, b1_ref, rg1_ref, rb1_ref, w1_ref, bc1_ref,
                     we_ref, be_ref,
                     g2_ref, b2_ref, rg2_ref, rb2_ref, w2_ref, bc2_ref,
                     out_ref, pad_ref):
    _, H, WC_in = x_ref.shape
    WC_out = out_ref.shape[2]

    # Zero only the 1-row halo of the conv scratch (interior is fully
    # overwritten by every conv call).  Done per invocation: with a "parallel"
    # batch axis each core owns its own scratch, so an init under
    # pl.when(program_id == 0) would not be safe.
    zrow = jnp.zeros((1, pad_ref.shape[1]), jnp.float32)
    pad_ref[0:1, :] = zrow
    pad_ref[H + 1:H + 2, :] = zrow

    def silu(v):
        # sigmoid denominator reciprocal on the EUP (separate VLIW slot).
        return v * pl.reciprocal(1.0 + jnp.exp(-v), approx=True)

    def group_norm(v, rg_ref, rb_ref, gamma_ref, beta_ref):
        # v: (H, W*C) lane-dense.  Group statistics via a (W*C, G) one-hot
        # reduce matmul + (G, W*C) broadcast matmul; centered variance.
        inv_n = float(rg_ref.shape[1]) / float(v.shape[0] * v.shape[1])
        csum = jnp.sum(v, axis=0, keepdims=True)                     # (1, W*C)
        mean = jnp.dot(jnp.dot(csum, rg_ref[...],
                               preferred_element_type=jnp.float32),
                       rb_ref[...],
                       preferred_element_type=jnp.float32) * inv_n   # (1, W*C)
        d = v - mean
        csq = jnp.sum(d * d, axis=0, keepdims=True)
        var = jnp.dot(jnp.dot(csq, rg_ref[...],
                              preferred_element_type=jnp.float32),
                      rb_ref[...],
                      preferred_element_type=jnp.float32) * inv_n
        return d * lax.rsqrt(var + EPS) * gamma_ref[...] + beta_ref[...]

    def conv3x3(v, wband_ref, bias_ref):
        # v: (H, W*C).  Single matmul: K = 3*W*Cin, N = W*Cout (lane-dense).
        pad_ref[1:H + 1, :] = v
        lhs = jnp.concatenate(
            [pad_ref[0:H, :], pad_ref[1:H + 1, :], pad_ref[2:H + 2, :]],
            axis=1)                                                  # (H, 3*W*C)
        return jnp.dot(lhs, wband_ref[...],
                       preferred_element_type=jnp.float32) + bias_ref[...]

    xw = x_ref[...].reshape(H, WC_in).astype(jnp.float32)

    # in_layers: GroupNorm32 -> SiLU -> Conv2d(3x3, pad=1)
    h = conv3x3(silu(group_norm(xw, rg1_ref, rb1_ref, g1_ref, b1_ref)),
                w1_ref, bc1_ref)

    # embed_layers: SiLU -> Linear, broadcast over H and W
    # (linear weights/bias are pre-tiled over W in the wrapper).
    te = temb_ref[0].astype(jnp.float32)                             # (1, De)
    h = h + (jnp.dot(silu(te), we_ref[...],
                     preferred_element_type=jnp.float32) + be_ref[...])

    # out_layers: GroupNorm32 -> SiLU -> Dropout(identity) -> Conv2d(3x3, pad=1)
    h = conv3x3(silu(group_norm(h, rg2_ref, rb2_ref, g2_ref, b2_ref)),
                w2_ref, bc2_ref)

    # skip_connection = Identity (out_channels == in_channels)
    out_ref[...] = (xw + h).reshape(1, H, WC_out).astype(out_ref.dtype)


# ---------------------------------------------------------------------------
# Wrapper-side parameter packing (pure JAX, O(weights) work, done once).
# ---------------------------------------------------------------------------
def _band_conv_weight(w_hwio, width):
    """Fold the kx shift + channel mixing of a 3x3 'SAME' conv into a single
    (3*W*Cin, W*Cout) banded matrix (zero wherever |xi - xo| > 1)."""
    kh, kw, cin, cout = w_hwio.shape
    xi = jnp.arange(width)[:, None]                      # input column
    xo = jnp.arange(width)[None, :]                      # output column
    kx = xi - xo + (kw // 2)                             # tap connecting xi -> xo
    valid = ((kx >= 0) & (kx < kw)).astype(w_hwio.dtype)
    kx = jnp.clip(kx, 0, kw - 1)
    band = w_hwio[:, kx, :, :]                           # (kh, xi, xo, cin, cout)
    band = band * valid[None, :, :, None, None]
    band = jnp.transpose(band, (0, 1, 3, 2, 4))          # (kh, xi, cin, xo, cout)
    return band.reshape(kh * width * cin, width * cout)


def _group_matrices(channels, width, groups=GROUPS):
    gid = jnp.tile(jnp.arange(channels) // (channels // groups), width)  # (W*C,)
    rg = (gid[:, None] == jnp.arange(groups)[None, :]).astype(jnp.float32)
    return rg, rg.T                                      # (W*C, G), (G, W*C)


def _tile_w(p, width):
    return jnp.tile(p.reshape(1, -1), (1, width))        # (1, C) -> (1, W*C)


def resblock_pallas(x_nhwc, temb, params, groups=GROUPS):
    B, H, W, Cin = x_nhwc.shape
    Cout = params["w1"].shape[-1]
    De = temb.shape[-1]
    assert Cout == Cin, "realized config: skip_connection=Identity needs Cout==Cin"
    assert Cin % groups == 0

    x2d = x_nhwc.reshape(B, H, W * Cin)                  # lane-dense I/O layout
    temb3 = temb.reshape(B, 1, De)

    w1 = _band_conv_weight(params["w1"], W)              # (3*W*Cin, W*Cout)
    w2 = _band_conv_weight(params["w2"], W)
    rg1, rb1 = _group_matrices(Cin, W, groups)
    rg2, rb2 = _group_matrices(Cout, W, groups)

    g1, b1 = _tile_w(params["g1"], W), _tile_w(params["bn1"], W)
    g2, b2 = _tile_w(params["g2"], W), _tile_w(params["bn2"], W)
    bc1, bc2 = _tile_w(params["bc1"], W), _tile_w(params["bc2"], W)
    we = jnp.tile(params["we"], (1, W))                  # (De, W*Cout)
    be = _tile_w(params["be"], W)

    consts = [g1, b1, rg1, rb1, w1, bc1, we, be, g2, b2, rg2, rb2, w2, bc2]

    def const_spec(a):
        return pl.BlockSpec(a.shape, lambda b, _n=a.ndim: (0,) * _n)

    in_specs = ([pl.BlockSpec((1, H, W * Cin), lambda b: (b, 0, 0)),
                 pl.BlockSpec((1, 1, De), lambda b: (b, 0, 0))]
                + [const_spec(a) for a in consts])
    out_spec = pl.BlockSpec((1, H, W * Cout), lambda b: (b, 0, 0))

    out2d = pl.pallas_call(
        _resblock_kernel,
        out_shape=jax.ShapeDtypeStruct((B, H, W * Cout), x_nhwc.dtype),
        grid_spec=pltpu.PrefetchScalarGridSpec(
            num_scalar_prefetch=0,
            grid=(B,),
            in_specs=in_specs,
            out_specs=out_spec,
            scratch_shapes=[pltpu.VMEM((H + 2, W * Cin), jnp.float32)],
        ),
        compiler_params=pltpu.CompilerParams(
            dimension_semantics=("parallel",),           # batch steps independent
            vmem_limit_bytes=32 * 1024 * 1024,
        ),
    )(x2d, temb3, *consts)
    return out2d.reshape(B, H, W, Cout)


# ---------------------------------------------------------------------------
# Pure-JAX reference (ground truth for the correctness check).
# ---------------------------------------------------------------------------
def group_norm_ref(x, gamma, beta, groups=GROUPS, eps=EPS):
    B, H, W, C = x.shape
    xg = x.reshape(B, H, W, groups, C // groups)
    mean = jnp.mean(xg, axis=(1, 2, 4), keepdims=True)
    var = jnp.mean((xg - mean) ** 2, axis=(1, 2, 4), keepdims=True)
    xn = ((xg - mean) / jnp.sqrt(var + eps)).reshape(B, H, W, C)
    return xn * gamma.reshape(1, 1, 1, C) + beta.reshape(1, 1, 1, C)


def resblock_ref(x, temb, params):
    dn = ("NHWC", "HWIO", "NHWC")
    h = group_norm_ref(x, params["g1"], params["bn1"])
    h = jax.nn.silu(h)
    h = lax.conv_general_dilated(h, params["w1"], (1, 1), "SAME",
                                 dimension_numbers=dn,
                                 precision=lax.Precision.HIGHEST)
    h = h + params["bc1"].reshape(1, 1, 1, -1)
    e = jax.nn.silu(temb) @ params["we"] + params["be"]      # (B, Cout)
    h = h + e[:, None, None, :]
    h = group_norm_ref(h, params["g2"], params["bn2"])
    h = jax.nn.silu(h)
    h = lax.conv_general_dilated(h, params["w2"], (1, 1), "SAME",
                                 dimension_numbers=dn,
                                 precision=lax.Precision.HIGHEST)
    h = h + params["bc2"].reshape(1, 1, 1, -1)
    return x + h


# ---------------------------------------------------------------------------
if __name__ == "__main__":
    # GroupNorm32 needs channels divisible by 32; C=64 exercises 2-channel groups.
    B, Cin, H, W = 2, 64, 8, 8
    Cout, De = 64, 16

    key = jax.random.PRNGKey(0)
    kx, kt, kp = jax.random.split(key, 3)
    x_nchw = jax.random.normal(kx, (B, Cin, H, W), jnp.float32)   # PyTorch layout
    temb = jax.random.normal(kt, (B, De), jnp.float32)
    x = jnp.transpose(x_nchw, (0, 2, 3, 1))                       # NCHW -> NHWC

    ks = jax.random.split(kp, 9)
    params = dict(
        g1=1.0 + 0.1 * jax.random.normal(ks[0], (Cin,), jnp.float32),
        bn1=0.1 * jax.random.normal(ks[1], (Cin,), jnp.float32),
        w1=0.05 * jax.random.normal(ks[2], (3, 3, Cin, Cout), jnp.float32),  # HWIO
        bc1=0.05 * jax.random.normal(ks[3], (Cout,), jnp.float32),
        we=0.05 * jax.random.normal(ks[4], (De, Cout), jnp.float32),
        be=0.05 * jax.random.normal(ks[5], (Cout,), jnp.float32),
        g2=1.0 + 0.1 * jax.random.normal(ks[6], (Cout,), jnp.float32),
        bn2=0.1 * jax.random.normal(ks[7], (Cout,), jnp.float32),
        # NOTE: PyTorch zero-inits this conv (zero_module); small random weights
        # here so the second conv path is numerically exercised.
        w2=0.05 * jax.random.normal(ks[8], (3, 3, Cout, Cout), jnp.float32),
        bc2=jnp.zeros((Cout,), jnp.float32),
    )

    out = jax.block_until_ready(resblock_pallas(x, temb, params))
    ref = resblock_ref(x, temb, params)

    # Kernel matmuls run at DEFAULT MXU precision (single bf16 pass, f32 acc);
    # the reference uses HIGHEST, so allow a few bf16 ulps of divergence.
    if not bool(jnp.allclose(out, ref, atol=2e-2, rtol=2e-2)):
        err = float(jnp.max(jnp.abs(out - ref)))
        raise AssertionError(f"Pallas output mismatch vs reference: max abs err = {err}")

    print("KERNEL_OK")
</pallas_src>

<mosaic_0001>
module attributes {stable_mosaic.version = 11 : i64} {
  func.func @_resblock_kernel(%arg0: i32, %arg1: memref<1x8x512xf32, #tpu.memory_space<vmem>>, %arg2: memref<1x1x16xf32, #tpu.memory_space<vmem>>, %arg3: memref<1x512xf32, #tpu.memory_space<vmem>>, %arg4: memref<1x512xf32, #tpu.memory_space<vmem>>, %arg5: memref<512x32xf32, #tpu.memory_space<vmem>>, %arg6: memref<32x512xf32, #tpu.memory_space<vmem>>, %arg7: memref<1536x512xf32, #tpu.memory_space<vmem>>, %arg8: memref<1x512xf32, #tpu.memory_space<vmem>>, %arg9: memref<16x512xf32, #tpu.memory_space<vmem>>, %arg10: memref<1x512xf32, #tpu.memory_space<vmem>>, %arg11: memref<1x512xf32, #tpu.memory_space<vmem>>, %arg12: memref<1x512xf32, #tpu.memory_space<vmem>>, %arg13: memref<512x32xf32, #tpu.memory_space<vmem>>, %arg14: memref<32x512xf32, #tpu.memory_space<vmem>>, %arg15: memref<1536x512xf32, #tpu.memory_space<vmem>>, %arg16: memref<1x512xf32, #tpu.memory_space<vmem>>, %arg17: memref<1x8x512xf32, #tpu.memory_space<vmem>>, %arg18: memref<10x512xf32, #tpu.memory_space<vmem>>) attributes {dimension_semantics = [#tpu.dimension_semantics<parallel>], iteration_bounds = array<i64: 2>, scalar_prefetch = 0 : i64, scratch_operands = 1 : i64, tpu.core_type = #tpu.core_type<tc>, window_params = [{transform_indices = @transform_0, window_bounds = array<i64: 1, 8, 512>}, {transform_indices = @transform_1, window_bounds = array<i64: 1, 1, 16>}, {pipeline_mode = #tpu.pipeline_mode<synchronous>, transform_indices = @transform_2, window_bounds = array<i64: 1, 512>}, {pipeline_mode = #tpu.pipeline_mode<synchronous>, transform_indices = @transform_3, window_bounds = array<i64: 1, 512>}, {pipeline_mode = #tpu.pipeline_mode<synchronous>, transform_indices = @transform_4, window_bounds = array<i64: 512, 32>}, {pipeline_mode = #tpu.pipeline_mode<synchronous>, transform_indices = @transform_5, window_bounds = array<i64: 32, 512>}, {pipeline_mode = #tpu.pipeline_mode<synchronous>, transform_indices = @transform_6, window_bounds = array<i64: 1536, 512>}, {pipeline_mode = #tpu.pipeline_mode<synchronous>, transform_indices = @transform_7, window_bounds = array<i64: 1, 512>}, {pipeline_mode = #tpu.pipeline_mode<synchronous>, transform_indices = @transform_8, window_bounds = array<i64: 16, 512>}, {pipeline_mode = #tpu.pipeline_mode<synchronous>, transform_indices = @transform_9, window_bounds = array<i64: 1, 512>}, {pipeline_mode = #tpu.pipeline_mode<synchronous>, transform_indices = @transform_10, window_bounds = array<i64: 1, 512>}, {pipeline_mode = #tpu.pipeline_mode<synchronous>, transform_indices = @transform_11, window_bounds = array<i64: 1, 512>}, {pipeline_mode = #tpu.pipeline_mode<synchronous>, transform_indices = @transform_12, window_bounds = array<i64: 512, 32>}, {pipeline_mode = #tpu.pipeline_mode<synchronous>, transform_indices = @transform_13, window_bounds = array<i64: 32, 512>}, {pipeline_mode = #tpu.pipeline_mode<synchronous>, transform_indices = @transform_14, window_bounds = array<i64: 1536, 512>}, {pipeline_mode = #tpu.pipeline_mode<synchronous>, transform_indices = @transform_15, window_bounds = array<i64: 1, 512>}, {transform_indices = @transform_16, window_bounds = array<i64: 1, 8, 512>}]} {
    %cst = arith.constant 0.000000e+00 : f32
    %0 = vector.broadcast %cst : f32 to vector<1x512xf32>
    %c0 = arith.constant 0 : index
    %c0_0 = arith.constant 0 : index
    %1 = vector.load %arg18[%c0, %c0_0] : memref<10x512xf32, #tpu.memory_space<vmem>>, vector<1x512xf32>
    tpu.vector_store %arg18[%c0, %c0_0], %0 {strides = array<i32>} : memref<10x512xf32, #tpu.memory_space<vmem>>, vector<1x512xf32>,
    %c9 = arith.constant 9 : index
    %c0_1 = arith.constant 0 : index
    %2 = vector.load %arg18[%c9, %c0_1] : memref<10x512xf32, #tpu.memory_space<vmem>>, vector<1x512xf32>
    tpu.vector_store %arg18[%c9, %c0_1], %0 {strides = array<i32>} : memref<10x512xf32, #tpu.memory_space<vmem>>, vector<1x512xf32>,
    %c0_2 = arith.constant 0 : index
    %c0_3 = arith.constant 0 : index
    %c0_4 = arith.constant 0 : index
    %3 = vector.load %arg1[%c0_2, %c0_3, %c0_4] : memref<1x8x512xf32, #tpu.memory_space<vmem>>, vector<1x8x512xf32>
    %4 = vector.shape_cast %3 : vector<1x8x512xf32> to vector<8x512xf32>
    %cst_5 = arith.constant dense<0.000000e+00> : vector<512xf32>
    %5 = vector.multi_reduction <add>, %4, %cst_5 [0] : vector<8x512xf32> to vector<512xf32>
    %6 = vector.shape_cast %5 : vector<512xf32> to vector<1x512xf32>
    %c0_6 = arith.constant 0 : index
    %c0_7 = arith.constant 0 : index
    %7 = vector.load %arg5[%c0_6, %c0_7] : memref<512x32xf32, #tpu.memory_space<vmem>>, vector<512x32xf32>
    %cst_8 = arith.constant dense<0.000000e+00> : vector<1x32xf32>
    %8 = tpu.matmul %6, %7, %cst_8 {dimension_numbers = #tpu.dot_dimension_numbers<[1], [0], [0], [1], [0, 0, 1, 1], [], []>} : vector<1x512xf32>, vector<512x32xf32>, vector<1x32xf32> -> vector<1x32xf32>
    %c0_9 = arith.constant 0 : index
    %c0_10 = arith.constant 0 : index
    %9 = vector.load %arg6[%c0_9, %c0_10] : memref<32x512xf32, #tpu.memory_space<vmem>>, vector<32x512xf32>
    %cst_11 = arith.constant dense<0.000000e+00> : vector<1x512xf32>
    %10 = tpu.matmul %8, %9, %cst_11 {dimension_numbers = #tpu.dot_dimension_numbers<[1], [0], [0], [1], [0, 0, 1, 1], [], []>} : vector<1x32xf32>, vector<32x512xf32>, vector<1x512xf32> -> vector<1x512xf32>
    %cst_12 = arith.constant 7.812500e-03 : f32
    %11 = vector.broadcast %cst_12 : f32 to vector<1x512xf32>
    %12 = arith.mulf %10, %11 : vector<1x512xf32>
    %13 = vector.broadcast %12 : vector<1x512xf32> to vector<8x512xf32>
    %14 = arith.subf %4, %13 : vector<8x512xf32>
    %15 = arith.mulf %14, %14 : vector<8x512xf32>
    %cst_13 = arith.constant dense<0.000000e+00> : vector<512xf32>
    %16 = vector.multi_reduction <add>, %15, %cst_13 [0] : vector<8x512xf32> to vector<512xf32>
    %17 = vector.shape_cast %16 : vector<512xf32> to vector<1x512xf32>
    %c0_14 = arith.constant 0 : index
    %c0_15 = arith.constant 0 : index
    %18 = vector.load %arg5[%c0_14, %c0_15] : memref<512x32xf32, #tpu.memory_space<vmem>>, vector<512x32xf32>
    %cst_16 = arith.constant dense<0.000000e+00> : vector<1x32xf32>
    %19 = tpu.matmul %17, %18, %cst_16 {dimension_numbers = #tpu.dot_dimension_numbers<[1], [0], [0], [1], [0, 0, 1, 1], [], []>} : vector<1x512xf32>, vector<512x32xf32>, vector<1x32xf32> -> vector<1x32xf32>
    %c0_17 = arith.constant 0 : index
    %c0_18 = arith.constant 0 : index
    %20 = vector.load %arg6[%c0_17, %c0_18] : memref<32x512xf32, #tpu.memory_space<vmem>>, vector<32x512xf32>
    %cst_19 = arith.constant dense<0.000000e+00> : vector<1x512xf32>
    %21 = tpu.matmul %19, %20, %cst_19 {dimension_numbers = #tpu.dot_dimension_numbers<[1], [0], [0], [1], [0, 0, 1, 1], [], []>} : vector<1x32xf32>, vector<32x512xf32>, vector<1x512xf32> -> vector<1x512xf32>
    %cst_20 = arith.constant 7.812500e-03 : f32
    %22 = vector.broadcast %cst_20 : f32 to vector<1x512xf32>
    %23 = arith.mulf %21, %22 : vector<1x512xf32>
    %cst_21 = arith.constant 9.99999974E-6 : f32
    %24 = vector.broadcast %cst_21 : f32 to vector<1x512xf32>
    %25 = arith.addf %23, %24 : vector<1x512xf32>
    %26 = math.rsqrt %25 : vector<1x512xf32>
    %27 = vector.broadcast %26 : vector<1x512xf32> to vector<8x512xf32>
    %28 = arith.mulf %14, %27 : vector<8x512xf32>
    %c0_22 = arith.constant 0 : index
    %c0_23 = arith.constant 0 : index
    %29 = vector.load %arg3[%c0_22, %c0_23] : memref<1x512xf32, #tpu.memory_space<vmem>>, vector<1x512xf32>
    %30 = vector.broadcast %29 : vector<1x512xf32> to vector<8x512xf32>
    %31 = arith.mulf %28, %30 : vector<8x512xf32>
    %c0_24 = arith.constant 0 : index
    %c0_25 = arith.constant 0 : index
    %32 = vector.load %arg4[%c0_24, %c0_25] : memref<1x512xf32, #tpu.memory_space<vmem>>, vector<1x512xf32>
    %33 = vector.broadcast %32 : vector<1x512xf32> to vector<8x512xf32>
    %34 = arith.addf %31, %33 : vector<8x512xf32>
    %cst_26 = arith.constant 0.000000e+00 : f32
    %35 = vector.broadcast %cst_26 : f32 to vector<8x512xf32>
    %36 = arith.subf %35, %34 : vector<8x512xf32>
    %37 = math.exp %36 : vector<8x512xf32>
    %cst_27 = arith.constant 1.000000e+00 : f32
    %38 = vector.broadcast %cst_27 : f32 to vector<8x512xf32>
    %39 = arith.addf %38, %37 : vector<8x512xf32>
    %40 = tpu.reciprocal %39 {approx = true} : vector<8x512xf32> -> vector<8x512xf32>
    %41 = arith.mulf %34, %40 : vector<8x512xf32>
    %c1 = arith.constant 1 : index
    %c0_28 = arith.constant 0 : index
    %42 = vector.load %arg18[%c1, %c0_28] : memref<10x512xf32, #tpu.memory_space<vmem>>, vector<8x512xf32>
    tpu.vector_store %arg18[%c1, %c0_28], %41 {strides = array<i32>} : memref<10x512xf32, #tpu.memory_space<vmem>>, vector<8x512xf32>,
    %c0_29 = arith.constant 0 : index
    %c0_30 = arith.constant 0 : index
    %43 = vector.load %arg18[%c0_29, %c0_30] : memref<10x512xf32, #tpu.memory_space<vmem>>, vector<8x512xf32>
    %c1_31 = arith.constant 1 : index
    %c0_32 = arith.constant 0 : index
    %44 = vector.load %arg18[%c1_31, %c0_32] : memref<10x512xf32, #tpu.memory_space<vmem>>, vector<8x512xf32>
    %c2 = arith.constant 2 : index
    %c0_33 = arith.constant 0 : index
    %45 = vector.load %arg18[%c2, %c0_33] : memref<10x512xf32, #tpu.memory_space<vmem>>, vector<8x512xf32>
    %46 = tpu.concatenate %43, %44, %45 in 1 : vector<8x512xf32>, vector<8x512xf32>, vector<8x512xf32> -> vector<8x1536xf32>
    %c0_34 = arith.constant 0 : index
    %c0_35 = arith.constant 0 : index
    %47 = vector.load %arg7[%c0_34, %c0_35] : memref<1536x512xf32, #tpu.memory_space<vmem>>, vector<1536x512xf32>
    %cst_36 = arith.constant dense<0.000000e+00> : vector<8x512xf32>
    %48 = tpu.matmul %46, %47, %cst_36 {dimension_numbers = #tpu.dot_dimension_numbers<[1], [0], [0], [1], [0, 0, 1, 1], [], []>} : vector<8x1536xf32>, vector<1536x512xf32>, vector<8x512xf32> -> vector<8x512xf32>
    %c0_37 = arith.constant 0 : index
    %c0_38 = arith.constant 0 : index
    %49 = vector.load %arg8[%c0_37, %c0_38] : memref<1x512xf32, #tpu.memory_space<vmem>>, vector<1x512xf32>
    %50 = vector.broadcast %49 : vector<1x512xf32> to vector<8x512xf32>
    %51 = arith.addf %48, %50 : vector<8x512xf32>
    %c0_39 = arith.constant 0 : index
    %c0_40 = arith.constant 0 : index
    %c0_41 = arith.constant 0 : index
    %52 = vector.load %arg2[%c0_39, %c0_40, %c0_41] : memref<1x1x16xf32, #tpu.memory_space<vmem>>, vector<1x1x16xf32>
    %53 = vector.shape_cast %52 : vector<1x1x16xf32> to vector<1x16xf32>
    %cst_42 = arith.constant 0.000000e+00 : f32
    %54 = vector.broadcast %cst_42 : f32 to vector<1x16xf32>
    %55 = arith.subf %54, %53 : vector<1x16xf32>
    %56 = math.exp %55 : vector<1x16xf32>
    %cst_43 = arith.constant 1.000000e+00 : f32
    %57 = vector.broadcast %cst_43 : f32 to vector<1x16xf32>
    %58 = arith.addf %57, %56 : vector<1x16xf32>
    %59 = tpu.reciprocal %58 {approx = true} : vector<1x16xf32> -> vector<1x16xf32>
    %60 = arith.mulf %53, %59 : vector<1x16xf32>
    %c0_44 = arith.constant 0 : index
    %c0_45 = arith.constant 0 : index
    %61 = vector.load %arg9[%c0_44, %c0_45] : memref<16x512xf32, #tpu.memory_space<vmem>>, vector<16x512xf32>
    %cst_46 = arith.constant dense<0.000000e+00> : vector<1x512xf32>
    %62 = tpu.matmul %60, %61, %cst_46 {dimension_numbers = #tpu.dot_dimension_numbers<[1], [0], [0], [1], [0, 0, 1, 1], [], []>} : vector<1x16xf32>, vector<16x512xf32>, vector<1x512xf32> -> vector<1x512xf32>
    %c0_47 = arith.constant 0 : index
    %c0_48 = arith.constant 0 : index
    %63 = vector.load %arg10[%c0_47, %c0_48] : memref<1x512xf32, #tpu.memory_space<vmem>>, vector<1x512xf32>
    %64 = arith.addf %62, %63 : vector<1x512xf32>
    %65 = vector.broadcast %64 : vector<1x512xf32> to vector<8x512xf32>
    %66 = arith.addf %51, %65 : vector<8x512xf32>
    %cst_49 = arith.constant dense<0.000000e+00> : vector<512xf32>
    %67 = vector.multi_reduction <add>, %66, %cst_49 [0] : vector<8x512xf32> to vector<512xf32>
    %68 = vector.shape_cast %67 : vector<512xf32> to vector<1x512xf32>
    %c0_50 = arith.constant 0 : index
    %c0_51 = arith.constant 0 : index
    %69 = vector.load %arg13[%c0_50, %c0_51] : memref<512x32xf32, #tpu.memory_space<vmem>>, vector<512x32xf32>
    %cst_52 = arith.constant dense<0.000000e+00> : vector<1x32xf32>
    %70 = tpu.matmul %68, %69, %cst_52 {dimension_numbers = #tpu.dot_dimension_numbers<[1], [0], [0], [1], [0, 0, 1, 1], [], []>} : vector<1x512xf32>, vector<512x32xf32>, vector<1x32xf32> -> vector<1x32xf32>
    %c0_53 = arith.constant 0 : index
    %c0_54 = arith.constant 0 : index
    %71 = vector.load %arg14[%c0_53, %c0_54] : memref<32x512xf32, #tpu.memory_space<vmem>>, vector<32x512xf32>
    %cst_55 = arith.constant dense<0.000000e+00> : vector<1x512xf32>
    %72 = tpu.matmul %70, %71, %cst_55 {dimension_numbers = #tpu.dot_dimension_numbers<[1], [0], [0], [1], [0, 0, 1, 1], [], []>} : vector<1x32xf32>, vector<32x512xf32>, vector<1x512xf32> -> vector<1x512xf32>
    %cst_56 = arith.constant 7.812500e-03 : f32
    %73 = vector.broadcast %cst_56 : f32 to vector<1x512xf32>
    %74 = arith.mulf %72, %73 : vector<1x512xf32>
    %75 = vector.broadcast %74 : vector<1x512xf32> to vector<8x512xf32>
    %76 = arith.subf %66, %75 : vector<8x512xf32>
    %77 = arith.mulf %76, %76 : vector<8x512xf32>
    %cst_57 = arith.constant dense<0.000000e+00> : vector<512xf32>
    %78 = vector.multi_reduction <add>, %77, %cst_57 [0] : vector<8x512xf32> to vector<512xf32>
    %79 = vector.shape_cast %78 : vector<512xf32> to vector<1x512xf32>
    %c0_58 = arith.constant 0 : index
    %c0_59 = arith.constant 0 : index
    %80 = vector.load %arg13[%c0_58, %c0_59] : memref<512x32xf32, #tpu.memory_space<vmem>>, vector<512x32xf32>
    %cst_60 = arith.constant dense<0.000000e+00> : vector<1x32xf32>
    %81 = tpu.matmul %79, %80, %cst_60 {dimension_numbers = #tpu.dot_dimension_numbers<[1], [0], [0], [1], [0, 0, 1, 1], [], []>} : vector<1x512xf32>, vector<512x32xf32>, vector<1x32xf32> -> vector<1x32xf32>
    %c0_61 = arith.constant 0 : index
    %c0_62 = arith.constant 0 : index
    %82 = vector.load %arg14[%c0_61, %c0_62] : memref<32x512xf32, #tpu.memory_space<vmem>>, vector<32x512xf32>
    %cst_63 = arith.constant dense<0.000000e+00> : vector<1x512xf32>
    %83 = tpu.matmul %81, %82, %cst_63 {dimension_numbers = #tpu.dot_dimension_numbers<[1], [0], [0], [1], [0, 0, 1, 1], [], []>} : vector<1x32xf32>, vector<32x512xf32>, vector<1x512xf32> -> vector<1x512xf32>
    %cst_64 = arith.constant 7.812500e-03 : f32
    %84 = vector.broadcast %cst_64 : f32 to vector<1x512xf32>
    %85 = arith.mulf %83, %84 : vector<1x512xf32>
    %cst_65 = arith.constant 9.99999974E-6 : f32
    %86 = vector.broadcast %cst_65 : f32 to vector<1x512xf32>
    %87 = arith.addf %85, %86 : vector<1x512xf32>
    %88 = math.rsqrt %87 : vector<1x512xf32>
    %89 = vector.broadcast %88 : vector<1x512xf32> to vector<8x512xf32>
    %90 = arith.mulf %76, %89 : vector<8x512xf32>
    %c0_66 = arith.constant 0 : index
    %c0_67 = arith.constant 0 : index
    %91 = vector.load %arg11[%c0_66, %c0_67] : memref<1x512xf32, #tpu.memory_space<vmem>>, vector<1x512xf32>
    %92 = vector.broadcast %91 : vector<1x512xf32> to vector<8x512xf32>
    %93 = arith.mulf %90, %92 : vector<8x512xf32>
    %c0_68 = arith.constant 0 : index
    %c0_69 = arith.constant 0 : index
    %94 = vector.load %arg12[%c0_68, %c0_69] : memref<1x512xf32, #tpu.memory_space<vmem>>, vector<1x512xf32>
    %95 = vector.broadcast %94 : vector<1x512xf32> to vector<8x512xf32>
    %96 = arith.addf %93, %95 : vector<8x512xf32>
    %cst_70 = arith.constant 0.000000e+00 : f32
    %97 = vector.broadcast %cst_70 : f32 to vector<8x512xf32>
    %98 = arith.subf %97, %96 : vector<8x512xf32>
    %99 = math.exp %98 : vector<8x512xf32>
    %cst_71 = arith.constant 1.000000e+00 : f32
    %100 = vector.broadcast %cst_71 : f32 to vector<8x512xf32>
    %101 = arith.addf %100, %99 : vector<8x512xf32>
    %102 = tpu.reciprocal %101 {approx = true} : vector<8x512xf32> -> vector<8x512xf32>
    %103 = arith.mulf %96, %102 : vector<8x512xf32>
    %c1_72 = arith.constant 1 : index
    %c0_73 = arith.constant 0 : index
    %104 = vector.load %arg18[%c1_72, %c0_73] : memref<10x512xf32, #tpu.memory_space<vmem>>, vector<8x512xf32>
    tpu.vector_store %arg18[%c1_72, %c0_73], %103 {strides = array<i32>} : memref<10x512xf32, #tpu.memory_space<vmem>>, vector<8x512xf32>,
    %c0_74 = arith.constant 0 : index
    %c0_75 = arith.constant 0 : index
    %105 = vector.load %arg18[%c0_74, %c0_75] : memref<10x512xf32, #tpu.memory_space<vmem>>, vector<8x512xf32>
    %c1_76 = arith.constant 1 : index
    %c0_77 = arith.constant 0 : index
    %106 = vector.load %arg18[%c1_76, %c0_77] : memref<10x512xf32, #tpu.memory_space<vmem>>, vector<8x512xf32>
    %c2_78 = arith.constant 2 : index
    %c0_79 = arith.constant 0 : index
    %107 = vector.load %arg18[%c2_78, %c0_79] : memref<10x512xf32, #tpu.memory_space<vmem>>, vector<8x512xf32>
    %108 = tpu.concatenate %105, %106, %107 in 1 : vector<8x512xf32>, vector<8x512xf32>, vector<8x512xf32> -> vector<8x1536xf32>
    %c0_80 = arith.constant 0 : index
    %c0_81 = arith.constant 0 : index
    %109 = vector.load %arg15[%c0_80, %c0_81] : memref<1536x512xf32, #tpu.memory_space<vmem>>, vector<1536x512xf32>
    %cst_82 = arith.constant dense<0.000000e+00> : vector<8x512xf32>
    %110 = tpu.matmul %108, %109, %cst_82 {dimension_numbers = #tpu.dot_dimension_numbers<[1], [0], [0], [1], [0, 0, 1, 1], [], []>} : vector<8x1536xf32>, vector<1536x512xf32>, vector<8x512xf32> -> vector<8x512xf32>
    %c0_83 = arith.constant 0 : index
    %c0_84 = arith.constant 0 : index
    %111 = vector.load %arg16[%c0_83, %c0_84] : memref<1x512xf32, #tpu.memory_space<vmem>>, vector<1x512xf32>
    %112 = vector.broadcast %111 : vector<1x512xf32> to vector<8x512xf32>
    %113 = arith.addf %110, %112 : vector<8x512xf32>
    %114 = arith.addf %4, %113 : vector<8x512xf32>
    %115 = vector.shape_cast %114 : vector<8x512xf32> to vector<1x8x512xf32>
    %c0_85 = arith.constant 0 : index
    %c0_86 = arith.constant 0 : index
    %c0_87 = arith.constant 0 : index
    %116 = vector.load %arg17[%c0_85, %c0_86, %c0_87] : memref<1x8x512xf32, #tpu.memory_space<vmem>>, vector<1x8x512xf32>
    tpu.vector_store %arg17[%c0_85, %c0_86, %c0_87], %115 {strides = array<i32>} : memref<1x8x512xf32, #tpu.memory_space<vmem>>, vector<1x8x512xf32>,
    return
  }
  func.func @transform_0(%arg0: i32) -> (i32, i32, i32) {
    %c0_i32 = arith.constant 0 : i32
    %c0_i32_0 = arith.constant 0 : i32
    %c0_i32_1 = arith.constant 0 : i32
    return %arg0, %c0_i32, %c0_i32_0 : i32, i32, i32
  }
  func.func @transform_1(%arg0: i32) -> (i32, i32, i32) {
    %c0_i32 = arith.constant 0 : i32
    %c0_i32_0 = arith.constant 0 : i32
    %c0_i32_1 = arith.constant 0 : i32
    return %arg0, %c0_i32, %c0_i32_0 : i32, i32, i32
  }
  func.func @transform_2(%arg0: i32) -> (i32, i32) {
    %c0_i32 = arith.constant 0 : i32
    %c0_i32_0 = arith.constant 0 : i32
    %c0_i32_1 = arith.constant 0 : i32
    return %c0_i32, %c0_i32_0 : i32, i32
  }
  func.func @transform_3(%arg0: i32) -> (i32, i32) {
    %c0_i32 = arith.constant 0 : i32
    %c0_i32_0 = arith.constant 0 : i32
    %c0_i32_1 = arith.constant 0 : i32
    return %c0_i32, %c0_i32_0 : i32, i32
  }
  func.func @transform_4(%arg0: i32) -> (i32, i32) {
    %c0_i32 = arith.constant 0 : i32
    %c0_i32_0 = arith.constant 0 : i32
    %c0_i32_1 = arith.constant 0 : i32
    return %c0_i32, %c0_i32_0 : i32, i32
  }
  func.func @transform_5(%arg0: i32) -> (i32, i32) {
    %c0_i32 = arith.constant 0 : i32
    %c0_i32_0 = arith.constant 0 : i32
    %c0_i32_1 = arith.constant 0 : i32
    return %c0_i32, %c0_i32_0 : i32, i32
  }
  func.func @transform_6(%arg0: i32) -> (i32, i32) {
    %c0_i32 = arith.constant 0 : i32
    %c0_i32_0 = arith.constant 0 : i32
    %c0_i32_1 = arith.constant 0 : i32
    return %c0_i32, %c0_i32_0 : i32, i32
  }
  func.func @transform_7(%arg0: i32) -> (i32, i32) {
    %c0_i32 = arith.constant 0 : i32
    %c0_i32_0 = arith.constant 0 : i32
    %c0_i32_1 = arith.constant 0 : i32
    return %c0_i32, %c0_i32_0 : i32, i32
  }
  func.func @transform_8(%arg0: i32) -> (i32, i32) {
    %c0_i32 = arith.constant 0 : i32
    %c0_i32_0 = arith.constant 0 : i32
    %c0_i32_1 = arith.constant 0 : i32
    return %c0_i32, %c0_i32_0 : i32, i32
  }
  func.func @transform_9(%arg0: i32) -> (i32, i32) {
    %c0_i32 = arith.constant 0 : i32
    %c0_i32_0 = arith.constant 0 : i32
    %c0_i32_1 = arith.constant 0 : i32
    return %c0_i32, %c0_i32_0 : i32, i32
  }
  func.func @transform_10(%arg0: i32) -> (i32, i32) {
    %c0_i32 = arith.constant 0 : i32
    %c0_i32_0 = arith.constant 0 : i32
    %c0_i32_1 = arith.constant 0 : i32
    return %c0_i32, %c0_i32_0 : i32, i32
  }
  func.func @transform_11(%arg0: i32) -> (i32, i32) {
    %c0_i32 = arith.constant 0 : i32
    %c0_i32_0 = arith.constant 0 : i32
    %c0_i32_1 = arith.constant 0 : i32
    return %c0_i32, %c0_i32_0 : i32, i32
  }
  func.func @transform_12(%arg0: i32) -> (i32, i32) {
    %c0_i32 = arith.constant 0 : i32
    %c0_i32_0 = arith.constant 0 : i32
    %c0_i32_1 = arith.constant 0 : i32
    return %c0_i32, %c0_i32_0 : i32, i32
  }
  func.func @transform_13(%arg0: i32) -> (i32, i32) {
    %c0_i32 = arith.constant 0 : i32
    %c0_i32_0 = arith.constant 0 : i32
    %c0_i32_1 = arith.constant 0 : i32
    return %c0_i32, %c0_i32_0 : i32, i32
  }
  func.func @transform_14(%arg0: i32) -> (i32, i32) {
    %c0_i32 = arith.constant 0 : i32
    %c0_i32_0 = arith.constant 0 : i32
    %c0_i32_1 = arith.constant 0 : i32
    return %c0_i32, %c0_i32_0 : i32, i32
  }
  func.func @transform_15(%arg0: i32) -> (i32, i32) {
    %c0_i32 = arith.constant 0 : i32
    %c0_i32_0 = arith.constant 0 : i32
    %c0_i32_1 = arith.constant 0 : i32
    return %c0_i32, %c0_i32_0 : i32, i32
  }
  func.func @transform_16(%arg0: i32) -> (i32, i32, i32) {
    %c0_i32 = arith.constant 0 : i32
    %c0_i32_0 = arith.constant 0 : i32
    %c0_i32_1 = arith.constant 0 : i32
    return %arg0, %c0_i32, %c0_i32_0 : i32, i32, i32
  }
}

</mosaic_0001>

<llo_original>
// kernel: tpu_custom_call.1
$region0: #{tpu_custom_call.1}
  #allocation0 [shape = 'u32[]', space=smem, size = 0x4, offset = 0x4, fixed_abs, tag = 'smem constant byte address 0x4 - core index']
  #allocation1 [shape = 'u32[144,128]{1,0:T(1,128)}', space=vmem, size = 0x12000, scoped, tag = 'internal scratch']
  #allocation2 [shape = 'f32[10,512]{1,0:T(8,128)}', space=vmem, size = 0x8000, scoped, tag = 'scratch operand']
  %s0 = inlined_call_operand.hbm [shape: f32[2,8,512], index: 0, kind: input, shape index: {}]
  %s1 = inlined_call_operand.hbm [shape: f32[2,1,16], index: 1, kind: input, shape index: {}]
  %s2 = inlined_call_operand.hbm [shape: f32[1,512], index: 2, kind: input, shape index: {}]
  %s3 = inlined_call_operand.hbm [shape: f32[1,512], index: 3, kind: input, shape index: {}]
  %s4 = inlined_call_operand.vmem [shape: f32[512,32], index: 4, kind: input, shape index: {}]
  %s5 = inlined_call_operand.hbm [shape: f32[32,512], index: 5, kind: input, shape index: {}]
  %s6 = inlined_call_operand.hbm [shape: f32[1536,512], index: 6, kind: input, shape index: {}]
  %s7 = inlined_call_operand.hbm [shape: f32[1,512], index: 7, kind: input, shape index: {}]
  %s8 = inlined_call_operand.hbm [shape: f32[16,512], index: 8, kind: input, shape index: {}]
  %s9 = inlined_call_operand.hbm [shape: f32[1,512], index: 9, kind: input, shape index: {}]
  %s10 = inlined_call_operand.hbm [shape: f32[1,512], index: 10, kind: input, shape index: {}]
  %s11 = inlined_call_operand.hbm [shape: f32[1,512], index: 11, kind: input, shape index: {}]
  %s12 = inlined_call_operand.vmem [shape: f32[512,32], index: 12, kind: input, shape index: {}]
  %s13 = inlined_call_operand.hbm [shape: f32[32,512], index: 13, kind: input, shape index: {}]
  %s14 = inlined_call_operand.hbm [shape: f32[1536,512], index: 14, kind: input, shape index: {}]
  %s15 = inlined_call_operand.hbm [shape: f32[1,512], index: 15, kind: input, shape index: {}]
  %s16 = inlined_call_operand.hbm [shape: f32[2,8,512], index: 16, kind: output, shape index: {}]
  %s17 = sld [smem:[#allocation0]]
  $region153: #{tpu_custom_call.1} parent=0
    _
  %s19 = ssub.s32 1, %s17
  %s20 = scalar_select 0, %s19, %s17
  $region1: #{tpu_custom_call.1} parent=0
    #allocation3 [shape = 'u8[32768]{0}', space=vmem, size = 0x8000, scoped, tag = 'input window, operand 0']
    #allocation4 [shape = 's32[2]{0}', space=sflag, size = 0x8, scoped, tag = 'scoped memory for tpu_custom_call.1']
    #allocation5 [shape = 's32[2]{0}', space=sflag, size = 0x8, scoped, tag = 'scoped memory for tpu_custom_call.1']
    #allocation6 [shape = 'u8[1024]{0}', space=vmem, size = 0x400, scoped, tag = 'input window, operand 1']
    #allocation7 [shape = 's32[2]{0}', space=sflag, size = 0x8, scoped, tag = 'scoped memory for tpu_custom_call.1']
    #allocation8 [shape = 'u8[2048]{0}', space=vmem, size = 0x800, scoped, tag = 'input window, operand 2, single buffered']
    #allocation9 [shape = 'u8[2048]{0}', space=vmem, size = 0x800, scoped, tag = 'input window, operand 3, single buffered']
    #allocation10 [shape = 's32[1]{0}', space=sflag, size = 0x4, scoped, tag = 'scoped memory for tpu_custom_call.1']
    #allocation11 [shape = 'u8[65536]{0}', space=vmem, size = 0x10000, scoped, tag = 'input window, operand 5, single buffered']
    #allocation12 [shape = 'u8[3145728]{0}', space=vmem, size = 0x300000, scoped, tag = 'input window, operand 6, single buffered']
    #allocation13 [shape = 's32[1]{0}', space=sflag, size = 0x4, scoped, tag = 'scoped memory for tpu_custom_call.1']
    #allocation14 [shape = 'u8[2048]{0}', space=vmem, size = 0x800, scoped, tag = 'input window, operand 7, single buffered']
    #allocation15 [shape = 'u8[32768]{0}', space=vmem, size = 0x8000, scoped, tag = 'input window, operand 8, single buffered']
    #allocation16 [shape = 's32[1]{0}', space=sflag, size = 0x4, scoped, tag = 'scoped memory for tpu_custom_call.1']
    #allocation17 [shape = 'u8[2048]{0}', space=vmem, size = 0x800, scoped, tag = 'input window, operand 9, single buffered']
    #allocation18 [shape = 'u8[2048]{0}', space=vmem, size = 0x800, scoped, tag = 'input window, operand 10, single buffered']
    #allocation19 [shape = 's32[1]{0}', space=sflag, size = 0x4, scoped, tag = 'scoped memory for tpu_custom_call.1']
    #allocation20 [shape = 'u8[2048]{0}', space=vmem, size = 0x800, scoped, tag = 'input window, operand 11, single buffered']
    #allocation21 [shape = 'u8[65536]{0}', space=vmem, size = 0x10000, scoped, tag = 'input window, operand 13, single buffered']
    #allocation22 [shape = 's32[1]{0}', space=sflag, size = 0x4, scoped, tag = 'scoped memory for tpu_custom_call.1']
    #allocation23 [shape = 'u8[3145728]{0}', space=vmem, size = 0x300000, scoped, tag = 'input window, operand 14, single buffered']
    #allocation24 [shape = 'u8[2048]{0}', space=vmem, size = 0x800, scoped, tag = 'input window, operand 15, single buffered']
    #allocation25 [shape = 's32[1]{0}', space=sflag, size = 0x4, scoped, tag = 'scoped memory for tpu_custom_call.1']
    #allocation26 [shape = 'u8[32768]{0}', space=vmem, size = 0x8000, scoped, tag = 'output window, operand 0']
    %21 = vsyncpa [#allocation4], 0
    %s22 = scalar_lea.sflag [#allocation4], 1
    %23 = vsyncpa %s22, 0
    %24 = vsyncpa [#allocation7], 0
    %s25 = scalar_lea.sflag [#allocation7], 1
    %26 = vsyncpa %s25, 0
    %27 = vsyncpa [#allocation10], 0
    %28 = vsyncpa [#allocation13], 0
    %29 = vsyncpa [#allocation16], 0
    %30 = vsyncpa [#allocation19], 0
    %31 = vsyncpa [#allocation22], 0
    %32 = vsyncpa [#allocation25], 0
    %33 = vsyncpa [#allocation5], 0
    %s34 = scalar_lea.sflag [#allocation5], 1
    %35 = vsyncpa %s34, 0
    loop: start=0, step=1, limit=4
    $region2: #{tpu_custom_call.1} parent=1 // loop_pre_header
      _
    $region3: #{tpu_custom_call.1} parent=1 // loop_header
      %s37 = sphi 0, %s41
      %p38 = scmp.ge.s32.totalorder %s37, 4
      %s47 = sphi 0, %s49
      %s50 = sphi 0, %s47
      %s51 = sphi 0, %s50
      %s67 = sphi 0, %s51
      %s73 = sphi 0, %s75
      %s76 = sphi 0, %s73
      %s77 = sphi 0, %s76
      %s93 = sphi 0, %s77
      %s97 = sphi 0, %s97
      %s99 = sphi 0, %s97
      %s100 = sphi 0, %s99
      %s114 = sphi 0, %s100
      %s118 = sphi 0, %s118
      %s120 = sphi 0, %s118
      %s121 = sphi 0, %s120
      %s135 = sphi 0, %s121
      %s139 = sphi 0, %s139
      %s141 = sphi 0, %s139
      %s142 = sphi 0, %s141
      %s156 = sphi 0, %s142
      %s160 = sphi 0, %s160
      %s162 = sphi 0, %s160
      %s163 = sphi 0, %s162
      %s177 = sphi 0, %s163
      %s181 = sphi 0, %s181
      %s183 = sphi 0, %s181
      %s184 = sphi 0, %s183
      %s198 = sphi 0, %s184
      %s202 = sphi 0, %s202
      %s204 = sphi 0, %s202
      %s205 = sphi 0, %s204
      %s219 = sphi 0, %s205
      %s223 = sphi 0, %s223
      %s225 = sphi 0, %s223
      %s226 = sphi 0, %s225
      %s240 = sphi 0, %s226
      %s244 = sphi 0, %s244
      %s246 = sphi 0, %s244
      %s247 = sphi 0, %s246
      %s261 = sphi 0, %s247
      %s265 = sphi 0, %s265
      %s267 = sphi 0, %s265
      %s268 = sphi 0, %s267
      %s282 = sphi 0, %s268
      %s286 = sphi 0, %s286
      %s288 = sphi 0, %s286
      %s289 = sphi 0, %s288
      %s303 = sphi 0, %s289
      %s307 = sphi 0, %s307
      %s309 = sphi 0, %s307
      %s310 = sphi 0, %s309
      %s324 = sphi 0, %s310
      %s328 = sphi 0, %s328
      %s330 = sphi 0, %s328
      %s331 = sphi 0, %s330
      %s345 = sphi 0, %s331
      %s349 = sphi 0, %s349
      %s351 = sphi 0, %s349
      %s352 = sphi 0, %s351
      %s366 = sphi 0, %s352
      %s370 = sphi 0, %s370
      %s372 = sphi 0, %s370
      %s373 = sphi 0, %s372
      %s387 = sphi 0, %s373
      %s393 = sphi 0, %s395
      %s396 = sphi 0, %s393
      %s397 = sphi 0, %s396
      %s413 = sphi 0, %s397
    $region4: #{tpu_custom_call.1} parent=1 // loop_header_branch
      %40 = sbr.rel (%p38) target = $region8
    $region5: #{tpu_custom_call.1} parent=1 // loop_body
      %s42 = ssub.s32 %s37, 1
      %s43 = ssub.s32 %s37, 2
      %s44 = sadd.s32 %s37, 1
      %s45 = ssub.s32 %s37, %s44
      %p46 = scmp.eq.s32.totalorder %s45, 0
      %s48 = sadd.s32 %s47, 1
      %s49 = scalar_select %p46, %s47, %s48
      %p52 = pneg %p46
      %p53 = scmp.eq.s32.totalorder %s37, 1
      %p54 = por %p52, %p53
      %p55 = scmp.ne.s32.totalorder %s47, %s50
      %p56 = scmp.eq.s32.totalorder %s37, 0
      %p57 = por %p55, %p56
      %p58 = scmp.ne.s32.totalorder %s47, %s50
      %p59 = scmp.eq.s32.totalorder %s42, 1
      %p60 = por %p58, %p59
      %p61 = scmp.ne.s32.totalorder %s50, %s51
      %p62 = scmp.eq.s32.totalorder %s42, 0
      %p63 = por %p61, %p62
      %p64 = scmp.ne.s32.totalorder %s50, %s51
      %p65 = scmp.eq.s32.totalorder %s43, 1
      %p66 = por %p64, %p65
      %p68 = scmp.ne.s32.totalorder %s51, %s67
      %p69 = scmp.eq.s32.totalorder %s43, 0
      %p70 = por %p68, %p69
      %s71 = ssub.s32 %s37, %s44
      %p72 = scmp.eq.s32.totalorder %s71, 0
      %s74 = sadd.s32 %s73, 1
      %s75 = scalar_select %p72, %s73, %s74
      %p78 = pneg %p72
      %p79 = scmp.eq.s32.totalorder %s37, 1
      %p80 = por %p78, %p79
      %p81 = scmp.ne.s32.totalorder %s73, %s76
      %p82 = scmp.eq.s32.totalorder %s37, 0
      %p83 = por %p81, %p82
      %p84 = scmp.ne.s32.totalorder %s73, %s76
      %p85 = scmp.eq.s32.totalorder %s42, 1
      %p86 = por %p84, %p85
      %p87 = scmp.ne.s32.totalorder %s76, %s77
      %p88 = scmp.eq.s32.totalorder %s42, 0
      %p89 = por %p87, %p88
      %p90 = scmp.ne.s32.totalorder %s76, %s77
      %p91 = scmp.eq.s32.totalorder %s43, 1
      %p92 = por %p90, %p91
      %p94 = scmp.ne.s32.totalorder %s77, %s93
      %p95 = scmp.eq.s32.totalorder %s43, 0
      %p96 = por %p94, %p95
      %s98 = sadd.s32 %s97, 1
      %p101 = scmp.eq.s32.totalorder %s37, 1
      %p102 = scmp.ne.s32.totalorder %s97, %s99
      %p103 = scmp.eq.s32.totalorder %s37, 0
      %p104 = por %p102, %p103
      %p105 = scmp.ne.s32.totalorder %s97, %s99
      %p106 = scmp.eq.s32.totalorder %s42, 1
      %p107 = por %p105, %p106
      %p108 = scmp.ne.s32.totalorder %s99, %s100
      %p109 = scmp.eq.s32.totalorder %s42, 0
      %p110 = por %p108, %p109
      %p111 = scmp.ne.s32.totalorder %s99, %s100
      %p112 = scmp.eq.s32.totalorder %s43, 1
      %p113 = por %p111, %p112
      %p115 = scmp.ne.s32.totalorder %s100, %s114
      %p116 = scmp.eq.s32.totalorder %s43, 0
      %p117 = por %p115, %p116
      %s119 = sadd.s32 %s118, 1
      %p122 = scmp.eq.s32.totalorder %s37, 1
      %p123 = scmp.ne.s32.totalorder %s118, %s120
      %p124 = scmp.eq.s32.totalorder %s37, 0
      %p125 = por %p123, %p124
      %p126 = scmp.ne.s32.totalorder %s118, %s120
      %p127 = scmp.eq.s32.totalorder %s42, 1
      %p128 = por %p126, %p127
      %p129 = scmp.ne.s32.totalorder %s120, %s121
      %p130 = scmp.eq.s32.totalorder %s42, 0
      %p131 = por %p129, %p130
      %p132 = scmp.ne.s32.totalorder %s120, %s121
      %p133 = scmp.eq.s32.totalorder %s43, 1
      %p134 = por %p132, %p133
      %p136 = scmp.ne.s32.totalorder %s121, %s135
      %p137 = scmp.eq.s32.totalorder %s43, 0
      %p138 = por %p136, %p137
      %s140 = sadd.s32 %s139, 1
      %p143 = scmp.eq.s32.totalorder %s37, 1
      %p144 = scmp.ne.s32.totalorder %s139, %s141
      %p145 = scmp.eq.s32.totalorder %s37, 0
      %p146 = por %p144, %p145
      %p147 = scmp.ne.s32.totalorder %s139, %s141
      %p148 = scmp.eq.s32.totalorder %s42, 1
      %p149 = por %p147, %p148
      %p150 = scmp.ne.s32.totalorder %s141, %s142
      %p151 = scmp.eq.s32.totalorder %s42, 0
      %p152 = por %p150, %p151
      %p153 = scmp.ne.s32.totalorder %s141, %s142
      %p154 = scmp.eq.s32.totalorder %s43, 1
      %p155 = por %p153, %p154
      %p157 = scmp.ne.s32.totalorder %s142, %s156
      %p158 = scmp.eq.s32.totalorder %s43, 0
      %p159 = por %p157, %p158
      %s161 = sadd.s32 %s160, 1
      %p164 = scmp.eq.s32.totalorder %s37, 1
      %p165 = scmp.ne.s32.totalorder %s160, %s162
      %p166 = scmp.eq.s32.totalorder %s37, 0
      %p167 = por %p165, %p166
      %p168 = scmp.ne.s32.totalorder %s160, %s162
      %p169 = scmp.eq.s32.totalorder %s42, 1
      %p170 = por %p168, %p169
      %p171 = scmp.ne.s32.totalorder %s162, %s163
      %p172 = scmp.eq.s32.totalorder %s42, 0
      %p173 = por %p171, %p172
      %p174 = scmp.ne.s32.totalorder %s162, %s163
      %p175 = scmp.eq.s32.totalorder %s43, 1
      %p176 = por %p174, %p175
      %p178 = scmp.ne.s32.totalorder %s163, %s177
      %p179 = scmp.eq.s32.totalorder %s43, 0
      %p180 = por %p178, %p179
      %s182 = sadd.s32 %s181, 1
      %p185 = scmp.eq.s32.totalorder %s37, 1
      %p186 = scmp.ne.s32.totalorder %s181, %s183
      %p187 = scmp.eq.s32.totalorder %s37, 0
      %p188 = por %p186, %p187
      %p189 = scmp.ne.s32.totalorder %s181, %s183
      %p190 = scmp.eq.s32.totalorder %s42, 1
      %p191 = por %p189, %p190
      %p192 = scmp.ne.s32.totalorder %s183, %s184
      %p193 = scmp.eq.s32.totalorder %s42, 0
      %p194 = por %p192, %p193
      %p195 = scmp.ne.s32.totalorder %s183, %s184
      %p196 = scmp.eq.s32.totalorder %s43, 1
      %p197 = por %p195, %p196
      %p199 = scmp.ne.s32.totalorder %s184, %s198
      %p200 = scmp.eq.s32.totalorder %s43, 0
      %p201 = por %p199, %p200
      %s203 = sadd.s32 %s202, 1
      %p206 = scmp.eq.s32.totalorder %s37, 1
      %p207 = scmp.ne.s32.totalorder %s202, %s204
      %p208 = scmp.eq.s32.totalorder %s37, 0
      %p209 = por %p207, %p208
      %p210 = scmp.ne.s32.totalorder %s202, %s204
      %p211 = scmp.eq.s32.totalorder %s42, 1
      %p212 = por %p210, %p211
      %p213 = scmp.ne.s32.totalorder %s204, %s205
      %p214 = scmp.eq.s32.totalorder %s42, 0
      %p215 = por %p213, %p214
      %p216 = scmp.ne.s32.totalorder %s204, %s205
      %p217 = scmp.eq.s32.totalorder %s43, 1
      %p218 = por %p216, %p217
      %p220 = scmp.ne.s32.totalorder %s205, %s219
      %p221 = scmp.eq.s32.totalorder %s43, 0
      %p222 = por %p220, %p221
      %s224 = sadd.s32 %s223, 1
      %p227 = scmp.eq.s32.totalorder %s37, 1
      %p228 = scmp.ne.s32.totalorder %s223, %s225
      %p229 = scmp.eq.s32.totalorder %s37, 0
      %p230 = por %p228, %p229
      %p231 = scmp.ne.s32.totalorder %s223, %s225
      %p232 = scmp.eq.s32.totalorder %s42, 1
      %p233 = por %p231, %p232
      %p234 = scmp.ne.s32.totalorder %s225, %s226
      %p235 = scmp.eq.s32.totalorder %s42, 0
      %p236 = por %p234, %p235
      %p237 = scmp.ne.s32.totalorder %s225, %s226
      %p238 = scmp.eq.s32.totalorder %s43, 1
      %p239 = por %p237, %p238
      %p241 = scmp.ne.s32.totalorder %s226, %s240
      %p242 = scmp.eq.s32.totalorder %s43, 0
      %p243 = por %p241, %p242
      %s245 = sadd.s32 %s244, 1
      %p248 = scmp.eq.s32.totalorder %s37, 1
      %p249 = scmp.ne.s32.totalorder %s244, %s246
      %p250 = scmp.eq.s32.totalorder %s37, 0
      %p251 = por %p249, %p250
      %p252 = scmp.ne.s32.totalorder %s244, %s246
      %p253 = scmp.eq.s32.totalorder %s42, 1
      %p254 = por %p252, %p253
      %p255 = scmp.ne.s32.totalorder %s246, %s247
      %p256 = scmp.eq.s32.totalorder %s42, 0
      %p257 = por %p255, %p256
      %p258 = scmp.ne.s32.totalorder %s246, %s247
      %p259 = scmp.eq.s32.totalorder %s43, 1
      %p260 = por %p258, %p259
      %p262 = scmp.ne.s32.totalorder %s247, %s261
      %p263 = scmp.eq.s32.totalorder %s43, 0
      %p264 = por %p262, %p263
      %s266 = sadd.s32 %s265, 1
      %p269 = scmp.eq.s32.totalorder %s37, 1
      %p270 = scmp.ne.s32.totalorder %s265, %s267
      %p271 = scmp.eq.s32.totalorder %s37, 0
      %p272 = por %p270, %p271
      %p273 = scmp.ne.s32.totalorder %s265, %s267
      %p274 = scmp.eq.s32.totalorder %s42, 1
      %p275 = por %p273, %p274
      %p276 = scmp.ne.s32.totalorder %s267, %s268
      %p277 = scmp.eq.s32.totalorder %s42, 0
      %p278 = por %p276, %p277
      %p279 = scmp.ne.s32.totalorder %s267, %s268
      %p280 = scmp.eq.s32.totalorder %s43, 1
      %p281 = por %p279, %p280
      %p283 = scmp.ne.s32.totalorder %s268, %s282
      %p284 = scmp.eq.s32.totalorder %s43, 0
      %p285 = por %p283, %p284
      %s287 = sadd.s32 %s286, 1
      %p290 = scmp.eq.s32.totalorder %s37, 1
      %p291 = scmp.ne.s32.totalorder %s286, %s288
      %p292 = scmp.eq.s32.totalorder %s37, 0
      %p293 = por %p291, %p292
      %p294 = scmp.ne.s32.totalorder %s286, %s288
      %p295 = scmp.eq.s32.totalorder %s42, 1
      %p296 = por %p294, %p295
      %p297 = scmp.ne.s32.totalorder %s288, %s289
      %p298 = scmp.eq.s32.totalorder %s42, 0
      %p299 = por %p297, %p298
      %p300 = scmp.ne.s32.totalorder %s288, %s289
      %p301 = scmp.eq.s32.totalorder %s43, 1
      %p302 = por %p300, %p301
      %p304 = scmp.ne.s32.totalorder %s289, %s303
      %p305 = scmp.eq.s32.totalorder %s43, 0
      %p306 = por %p304, %p305
      %s308 = sadd.s32 %s307, 1
      %p311 = scmp.eq.s32.totalorder %s37, 1
      %p312 = scmp.ne.s32.totalorder %s307, %s309
      %p313 = scmp.eq.s32.totalorder %s37, 0
      %p314 = por %p312, %p313
      %p315 = scmp.ne.s32.totalorder %s307, %s309
      %p316 = scmp.eq.s32.totalorder %s42, 1
      %p317 = por %p315, %p316
      %p318 = scmp.ne.s32.totalorder %s309, %s310
      %p319 = scmp.eq.s32.totalorder %s42, 0
      %p320 = por %p318, %p319
      %p321 = scmp.ne.s32.totalorder %s309, %s310
      %p322 = scmp.eq.s32.totalorder %s43, 1
      %p323 = por %p321, %p322
      %p325 = scmp.ne.s32.totalorder %s310, %s324
      %p326 = scmp.eq.s32.totalorder %s43, 0
      %p327 = por %p325, %p326
      %s329 = sadd.s32 %s328, 1
      %p332 = scmp.eq.s32.totalorder %s37, 1
      %p333 = scmp.ne.s32.totalorder %s328, %s330
      %p334 = scmp.eq.s32.totalorder %s37, 0
      %p335 = por %p333, %p334
      %p336 = scmp.ne.s32.totalorder %s328, %s330
      %p337 = scmp.eq.s32.totalorder %s42, 1
      %p338 = por %p336, %p337
      %p339 = scmp.ne.s32.totalorder %s330, %s331
      %p340 = scmp.eq.s32.totalorder %s42, 0
      %p341 = por %p339, %p340
      %p342 = scmp.ne.s32.totalorder %s330, %s331
      %p343 = scmp.eq.s32.totalorder %s43, 1
      %p344 = por %p342, %p343
      %p346 = scmp.ne.s32.totalorder %s331, %s345
      %p347 = scmp.eq.s32.totalorder %s43, 0
      %p348 = por %p346, %p347
      %s350 = sadd.s32 %s349, 1
      %p353 = scmp.eq.s32.totalorder %s37, 1
      %p354 = scmp.ne.s32.totalorder %s349, %s351
      %p355 = scmp.eq.s32.totalorder %s37, 0
      %p356 = por %p354, %p355
      %p357 = scmp.ne.s32.totalorder %s349, %s351
      %p358 = scmp.eq.s32.totalorder %s42, 1
      %p359 = por %p357, %p358
      %p360 = scmp.ne.s32.totalorder %s351, %s352
      %p361 = scmp.eq.s32.totalorder %s42, 0
      %p362 = por %p360, %p361
      %p363 = scmp.ne.s32.totalorder %s351, %s352
      %p364 = scmp.eq.s32.totalorder %s43, 1
      %p365 = por %p363, %p364
      %p367 = scmp.ne.s32.totalorder %s352, %s366
      %p368 = scmp.eq.s32.totalorder %s43, 0
      %p369 = por %p367, %p368
      %s371 = sadd.s32 %s370, 1
      %p374 = scmp.eq.s32.totalorder %s37, 1
      %p375 = scmp.ne.s32.totalorder %s370, %s372
      %p376 = scmp.eq.s32.totalorder %s37, 0
      %p377 = por %p375, %p376
      %p378 = scmp.ne.s32.totalorder %s370, %s372
      %p379 = scmp.eq.s32.totalorder %s42, 1
      %p380 = por %p378, %p379
      %p381 = scmp.ne.s32.totalorder %s372, %s373
      %p382 = scmp.eq.s32.totalorder %s42, 0
      %p383 = por %p381, %p382
      %p384 = scmp.ne.s32.totalorder %s372, %s373
      %p385 = scmp.eq.s32.totalorder %s43, 1
      %p386 = por %p384, %p385
      %p388 = scmp.ne.s32.totalorder %s373, %s387
      %p389 = scmp.eq.s32.totalorder %s43, 0
      %p390 = por %p388, %p389
      %s391 = ssub.s32 %s37, %s44
      %p392 = scmp.eq.s32.totalorder %s391, 0
      %s394 = sadd.s32 %s393, 1
      %s395 = scalar_select %p392, %s393, %s394
      %p398 = pneg %p392
      %p399 = scmp.eq.s32.totalorder %s37, 1
      %p400 = por %p398, %p399
      %p401 = scmp.ne.s32.totalorder %s393, %s396
      %p402 = scmp.eq.s32.totalorder %s37, 0
      %p403 = por %p401, %p402
      %p404 = scmp.ne.s32.totalorder %s393, %s396
      %p405 = scmp.eq.s32.totalorder %s42, 1
      %p406 = por %p404, %p405
      %p407 = scmp.ne.s32.totalorder %s396, %s397
      %p408 = scmp.eq.s32.totalorder %s42, 0
      %p409 = por %p407, %p408
      %p410 = scmp.ne.s32.totalorder %s396, %s397
      %p411 = scmp.eq.s32.totalorder %s43, 1
      %p412 = por %p410, %p411
      %p414 = scmp.ne.s32.totalorder %s397, %s413
      %p415 = scmp.eq.s32.totalorder %s43, 0
      %p416 = por %p414, %p415
      %p417 = scmp.le.s32.totalorder 1, %s37
      %p418 = scmp.lt.s32.totalorder %s37, 3
      %p419 = pnand %p417, %p418
      %p420 = pneg %p419
      // Predicated region
      $region9: #{tpu_custom_call.1} parent=5 // pred_check
        _
      $region10: #{tpu_custom_call.1} parent=5 // pred_check_branch
        %422 = sbr.rel (%p419) target = $region12
      $region11: #{tpu_custom_call.1} parent=5 // pred_region
        %s423 = ssub.s32 %s37, 1
        // Predicated region
        $region13: #{tpu_custom_call.1} parent=11 // pred_check
          %p424 = pneg %p110
        $region14: #{tpu_custom_call.1} parent=11 // pred_check_branch
          %426 = sbr.rel (%p424) target = $region16
        $region15: #{tpu_custom_call.1} parent=11 // pred_region
          %s428 = ssub.s32 64, 64
          %429 = vsyncadd [#allocation7], %s428
          %s431 = sshll.u32 [#allocation8], 4
          %s432 = int_to_ptr.vmem [resolvable:$true] %s431
          %434 = dma.hbm_to_vmem [thread:$0]  %s2, 64, %s432, [#allocation7]
        $region16: #{tpu_custom_call.1} parent=11 // pred_fallthru
          _
        // Predicated region
        $region17: #{tpu_custom_call.1} parent=11 // pred_check
          %p435 = pneg %p131
        $region18: #{tpu_custom_call.1} parent=11 // pred_check_branch
          %437 = sbr.rel (%p435) target = $region20
        $region19: #{tpu_custom_call.1} parent=11 // pred_region
          %s439 = ssub.s32 64, 64
          %440 = vsyncadd [#allocation10], %s439
          %s442 = sshll.u32 [#allocation9], 4
          %s443 = int_to_ptr.vmem [resolvable:$true] %s442
          %445 = dma.hbm_to_vmem [thread:$0]  %s3, 64, %s443, [#allocation10]
        $region20: #{tpu_custom_call.1} parent=11 // pred_fallthru
          _
        // Predicated region
        $region21: #{tpu_custom_call.1} parent=11 // pred_check
          %p446 = pneg %p152
        $region22: #{tpu_custom_call.1} parent=11 // pred_check_branch
          %448 = sbr.rel (%p446) target = $region24
        $region23: #{tpu_custom_call.1} parent=11 // pred_region
          _
        $region24: #{tpu_custom_call.1} parent=11 // pred_fallthru
          _
        // Predicated region
        $region25: #{tpu_custom_call.1} parent=11 // pred_check
          %p449 = pneg %p173
        $region26: #{tpu_custom_call.1} parent=11 // pred_check_branch
          %451 = sbr.rel (%p449) target = $region28
        $region27: #{tpu_custom_call.1} parent=11 // pred_region
          %s453 = ssub.s32 2048, 2048
          %454 = vsyncadd [#allocation10], %s453
          %s455 = sshll.u32 [#allocation11], 4
          %s456 = int_to_ptr.vmem [resolvable:$true] %s455
          %461 = dma.hbm_to_vmem [thread:$0]  %s5, 2048, %s456, [#allocation10], 512, 512, 32
        $region28: #{tpu_custom_call.1} parent=11 // pred_fallthru
          _
        // Predicated region
        $region29: #{tpu_custom_call.1} parent=11 // pred_check
          %p462 = pneg %p194
        $region30: #{tpu_custom_call.1} parent=11 // pred_check_branch
          %464 = sbr.rel (%p462) target = $region32
        $region31: #{tpu_custom_call.1} parent=11 // pred_region
          %s466 = ssub.s32 98304, 98304
          %467 = vsyncadd [#allocation13], %s466
          %s468 = sshll.u32 [#allocation12], 4
          %s469 = int_to_ptr.vmem [resolvable:$true] %s468
          %474 = dma.hbm_to_vmem [thread:$0]  %s6, 98304, %s469, [#allocation13], 512, 512, 32
        $region32: #{tpu_custom_call.1} parent=11 // pred_fallthru
          _
        // Predicated region
        $region33: #{tpu_custom_call.1} parent=11 // pred_check
          %p475 = pneg %p215
        $region34: #{tpu_custom_call.1} parent=11 // pred_check_branch
          %477 = sbr.rel (%p475) target = $region36
        $region35: #{tpu_custom_call.1} parent=11 // pred_region
          %s479 = ssub.s32 64, 64
          %480 = vsyncadd [#allocation13], %s479
          %s482 = sshll.u32 [#allocation14], 4
          %s483 = int_to_ptr.vmem [resolvable:$true] %s482
          %485 = dma.hbm_to_vmem [thread:$0]  %s7, 64, %s483, [#allocation13]
        $region36: #{tpu_custom_call.1} parent=11 // pred_fallthru
          _
        // Predicated region
        $region37: #{tpu_custom_call.1} parent=11 // pred_check
          %p486 = pneg %p236
        $region38: #{tpu_custom_call.1} parent=11 // pred_check_branch
          %488 = sbr.rel (%p486) target = $region40
        $region39: #{tpu_custom_call.1} parent=11 // pred_region
          %s490 = ssub.s32 1024, 1024
          %491 = vsyncadd [#allocation16], %s490
          %s492 = sshll.u32 [#allocation15], 4
          %s493 = int_to_ptr.vmem [resolvable:$true] %s492
          %498 = dma.hbm_to_vmem [thread:$0]  %s8, 1024, %s493, [#allocation16], 512, 512, 32
        $region40: #{tpu_custom_call.1} parent=11 // pred_fallthru
          _
        // Predicated region
        $region41: #{tpu_custom_call.1} parent=11 // pred_check
          %p499 = pneg %p257
        $region42: #{tpu_custom_call.1} parent=11 // pred_check_branch
          %501 = sbr.rel (%p499) target = $region44
        $region43: #{tpu_custom_call.1} parent=11 // pred_region
          %s503 = ssub.s32 64, 64
          %504 = vsyncadd [#allocation16], %s503
          %s506 = sshll.u32 [#allocation17], 4
          %s507 = int_to_ptr.vmem [resolvable:$true] %s506
          %509 = dma.hbm_to_vmem [thread:$0]  %s9, 64, %s507, [#allocation16]
        $region44: #{tpu_custom_call.1} parent=11 // pred_fallthru
          _
        // Predicated region
        $region45: #{tpu_custom_call.1} parent=11 // pred_check
          %p510 = pneg %p278
        $region46: #{tpu_custom_call.1} parent=11 // pred_check_branch
          %512 = sbr.rel (%p510) target = $region48
        $region47: #{tpu_custom_call.1} parent=11 // pred_region
          %s514 = ssub.s32 64, 64
          %515 = vsyncadd [#allocation19], %s514
          %s517 = sshll.u32 [#allocation18], 4
          %s518 = int_to_ptr.vmem [resolvable:$true] %s517
          %520 = dma.hbm_to_vmem [thread:$0]  %s10, 64, %s518, [#allocation19]
        $region48: #{tpu_custom_call.1} parent=11 // pred_fallthru
          _
        // Predicated region
        $region49: #{tpu_custom_call.1} parent=11 // pred_check
          %p521 = pneg %p299
        $region50: #{tpu_custom_call.1} parent=11 // pred_check_branch
          %523 = sbr.rel (%p521) target = $region52
        $region51: #{tpu_custom_call.1} parent=11 // pred_region
          %s525 = ssub.s32 64, 64
          %526 = vsyncadd [#allocation19], %s525
          %s528 = sshll.u32 [#allocation20], 4
          %s529 = int_to_ptr.vmem [resolvable:$true] %s528
          %531 = dma.hbm_to_vmem [thread:$0]  %s11, 64, %s529, [#allocation19]
        $region52: #{tpu_custom_call.1} parent=11 // pred_fallthru
          _
        // Predicated region
        $region53: #{tpu_custom_call.1} parent=11 // pred_check
          %p532 = pneg %p320
        $region54: #{tpu_custom_call.1} parent=11 // pred_check_branch
          %534 = sbr.rel (%p532) target = $region56
        $region55: #{tpu_custom_call.1} parent=11 // pred_region
          _
        $region56: #{tpu_custom_call.1} parent=11 // pred_fallthru
          _
        // Predicated region
        $region57: #{tpu_custom_call.1} parent=11 // pred_check
          %p535 = pneg %p341
        $region58: #{tpu_custom_call.1} parent=11 // pred_check_branch
          %537 = sbr.rel (%p535) target = $region60
        $region59: #{tpu_custom_call.1} parent=11 // pred_region
          %s539 = ssub.s32 2048, 2048
          %540 = vsyncadd [#allocation22], %s539
          %s541 = sshll.u32 [#allocation21], 4
          %s542 = int_to_ptr.vmem [resolvable:$true] %s541
          %547 = dma.hbm_to_vmem [thread:$0]  %s13, 2048, %s542, [#allocation22], 512, 512, 32
        $region60: #{tpu_custom_call.1} parent=11 // pred_fallthru
          _
        // Predicated region
        $region61: #{tpu_custom_call.1} parent=11 // pred_check
          %p548 = pneg %p362
        $region62: #{tpu_custom_call.1} parent=11 // pred_check_branch
          %550 = sbr.rel (%p548) target = $region64
        $region63: #{tpu_custom_call.1} parent=11 // pred_region
          %s552 = ssub.s32 98304, 98304
          %553 = vsyncadd [#allocation22], %s552
          %s554 = sshll.u32 [#allocation23], 4
          %s555 = int_to_ptr.vmem [resolvable:$true] %s554
          %560 = dma.hbm_to_vmem [thread:$0]  %s14, 98304, %s555, [#allocation22], 512, 512, 32
        $region64: #{tpu_custom_call.1} parent=11 // pred_fallthru
          _
        // Predicated region
        $region65: #{tpu_custom_call.1} parent=11 // pred_check
          %p561 = pneg %p383
        $region66: #{tpu_custom_call.1} parent=11 // pred_check_branch
          %563 = sbr.rel (%p561) target = $region68
        $region67: #{tpu_custom_call.1} parent=11 // pred_region
          %s565 = ssub.s32 64, 64
          %566 = vsyncadd [#allocation25], %s565
          %s568 = sshll.u32 [#allocation24], 4
          %s569 = int_to_ptr.vmem [resolvable:$true] %s568
          %571 = dma.hbm_to_vmem [thread:$0]  %s15, 64, %s569, [#allocation25]
        $region68: #{tpu_custom_call.1} parent=11 // pred_fallthru
          _
      $region12: #{tpu_custom_call.1} parent=5 // pred_fallthru
        _
      %p572 = scmp.lt.s32.totalorder %s37, 2
      // Predicated region
      $region69: #{tpu_custom_call.1} parent=5 // pred_check
        %p573 = pneg %p572
      $region70: #{tpu_custom_call.1} parent=5 // pred_check_branch
        %575 = sbr.rel (%p573) target = $region72
      $region71: #{tpu_custom_call.1} parent=5 // pred_region
        // Predicated region
        $region73: #{tpu_custom_call.1} parent=71 // pred_check
          %p576 = pneg %p57
        $region74: #{tpu_custom_call.1} parent=71 // pred_check_branch
          %578 = sbr.rel (%p576) target = $region76
        $region75: #{tpu_custom_call.1} parent=71 // pred_region
          %s579 = sand.u32 %s47, 1
          %s580 = scalar_lea.sflag [#allocation4], %s579
          %s581 = sand.u32 %s47, 1
          %s582 = smul.addr %s581, 32
          %s583 = scalar_lea.vmem [#allocation3], %s582
          %s585 = ssub.s32 512, 512
          %586 = vsyncadd %s580, %s585
          %s587 = smul.addr %s37, 4
          %s588 = smul.addr %s587, 128
          %s589 = scalar_lea.hbm %s0, %s588
          %s591 = sshll.u32 %s583, 4
          %s592 = int_to_ptr.vmem [resolvable:$true] %s591
          %594 = dma.hbm_to_vmem [thread:$0]  %s589, 512, %s592, %s580
        $region76: #{tpu_custom_call.1} parent=71 // pred_fallthru
          _
        // Predicated region
        $region77: #{tpu_custom_call.1} parent=71 // pred_check
          %p595 = pneg %p83
        $region78: #{tpu_custom_call.1} parent=71 // pred_check_branch
          %597 = sbr.rel (%p595) target = $region80
        $region79: #{tpu_custom_call.1} parent=71 // pred_region
          %s598 = sand.u32 %s37, 1
          %s599 = scalar_lea.sflag [#allocation7], %s598
          %s600 = sand.u32 %s73, 1
          %s601 = scalar_lea.vmem [#allocation6], %s600
          %s603 = ssub.s32 16, 16
          %604 = vsyncadd %s599, %s603
          %s605 = smul.addr %s37, 16
          %s606 = scalar_lea.hbm %s1, %s605
          %s608 = sshll.u32 %s601, 4
          %s609 = int_to_ptr.vmem [resolvable:$true] %s608
          %611 = dma.hbm_to_vmem [thread:$0]  %s606, 16, %s609, %s599
        $region80: #{tpu_custom_call.1} parent=71 // pred_fallthru
          _
      $region72: #{tpu_custom_call.1} parent=5 // pred_fallthru
        _
      %p612 = scmp.le.s32.totalorder 1, %s37
      %p613 = scmp.lt.s32.totalorder %s37, 3
      %p614 = pnand %p612, %p613
      %p615 = pneg %p614
      // Predicated region
      $region81: #{tpu_custom_call.1} parent=5 // pred_check
        _
      $region82: #{tpu_custom_call.1} parent=5 // pred_check_branch
        %617 = sbr.rel (%p614) target = $region84
      $region83: #{tpu_custom_call.1} parent=5 // pred_region
        %s618 = ssub.s32 %s37, 1
        %s619 = sand.u32 %s50, 1
        %s620 = scalar_lea.sflag [#allocation4], %s619
        %s621 = sand.u32 %s50, 1
        %s622 = smul.addr %s621, 32
        %s623 = scalar_lea.vmem [#allocation3], %s622
        // Predicated region
        $region85: #{tpu_custom_call.1} parent=83 // pred_check
          %p624 = pneg %p63
        $region86: #{tpu_custom_call.1} parent=83 // pred_check_branch
          %626 = sbr.rel (%p624) target = $region88
        $region87: #{tpu_custom_call.1} parent=83 // pred_region
          %627 = dma.done %s620, 512
        $region88: #{tpu_custom_call.1} parent=83 // pred_fallthru
          _
        %s628 = sand.u32 %s42, 1
        %s629 = scalar_lea.sflag [#allocation7], %s628
        %s630 = sand.u32 %s76, 1
        %s631 = scalar_lea.vmem [#allocation6], %s630
        // Predicated region
        $region89: #{tpu_custom_call.1} parent=83 // pred_check
          %p632 = pneg %p89
        $region90: #{tpu_custom_call.1} parent=83 // pred_check_branch
          %634 = sbr.rel (%p632) target = $region92
        $region91: #{tpu_custom_call.1} parent=83 // pred_region
          %635 = dma.done %s629, 16
        $region92: #{tpu_custom_call.1} parent=83 // pred_fallthru
          _
        // Predicated region
        $region93: #{tpu_custom_call.1} parent=83 // pred_check
          %p636 = pneg %p110
        $region94: #{tpu_custom_call.1} parent=83 // pred_check_branch
          %638 = sbr.rel (%p636) target = $region96
        $region95: #{tpu_custom_call.1} parent=83 // pred_region
          %639 = dma.done [#allocation7], 64
        $region96: #{tpu_custom_call.1} parent=83 // pred_fallthru
          _
        // Predicated region
        $region97: #{tpu_custom_call.1} parent=83 // pred_check
          %p640 = pneg %p131
        $region98: #{tpu_custom_call.1} parent=83 // pred_check_branch
          %642 = sbr.rel (%p640) target = $region100
        $region99: #{tpu_custom_call.1} parent=83 // pred_region
          %643 = dma.done [#allocation10], 64
        $region100: #{tpu_custom_call.1} parent=83 // pred_fallthru
          _
        // Predicated region
        $region101: #{tpu_custom_call.1} parent=83 // pred_check
          %p644 = pneg %p173
        $region102: #{tpu_custom_call.1} parent=83 // pred_check_branch
          %646 = sbr.rel (%p644) target = $region104
        $region103: #{tpu_custom_call.1} parent=83 // pred_region
          %647 = dma.done [#allocation10], 2048
        $region104: #{tpu_custom_call.1} parent=83 // pred_fallthru
          _
        // Predicated region
        $region105: #{tpu_custom_call.1} parent=83 // pred_check
          %p648 = pneg %p194
        $region106: #{tpu_custom_call.1} parent=83 // pred_check_branch
          %650 = sbr.rel (%p648) target = $region108
        $region107: #{tpu_custom_call.1} parent=83 // pred_region
          %651 = dma.done [#allocation13], 98304
        $region108: #{tpu_custom_call.1} parent=83 // pred_fallthru
          _
        // Predicated region
        $region109: #{tpu_custom_call.1} parent=83 // pred_check
          %p652 = pneg %p215
        $region110: #{tpu_custom_call.1} parent=83 // pred_check_branch
          %654 = sbr.rel (%p652) target = $region112
        $region111: #{tpu_custom_call.1} parent=83 // pred_region
          %655 = dma.done [#allocation13], 64
        $region112: #{tpu_custom_call.1} parent=83 // pred_fallthru
          _
        // Predicated region
        $region113: #{tpu_custom_call.1} parent=83 // pred_check
          %p656 = pneg %p236
        $region114: #{tpu_custom_call.1} parent=83 // pred_check_branch
          %658 = sbr.rel (%p656) target = $region116
        $region115: #{tpu_custom_call.1} parent=83 // pred_region
          %659 = dma.done [#allocation16], 1024
        $region116: #{tpu_custom_call.1} parent=83 // pred_fallthru
          _
        // Predicated region
        $region117: #{tpu_custom_call.1} parent=83 // pred_check
          %p660 = pneg %p257
        $region118: #{tpu_custom_call.1} parent=83 // pred_check_branch
          %662 = sbr.rel (%p660) target = $region120
        $region119: #{tpu_custom_call.1} parent=83 // pred_region
          %663 = dma.done [#allocation16], 64
        $region120: #{tpu_custom_call.1} parent=83 // pred_fallthru
          _
        // Predicated region
        $region121: #{tpu_custom_call.1} parent=83 // pred_check
          %p664 = pneg %p278
        $region122: #{tpu_custom_call.1} parent=83 // pred_check_branch
          %666 = sbr.rel (%p664) target = $region124
        $region123: #{tpu_custom_call.1} parent=83 // pred_region
          %667 = dma.done [#allocation19], 64
        $region124: #{tpu_custom_call.1} parent=83 // pred_fallthru
          _
        // Predicated region
        $region125: #{tpu_custom_call.1} parent=83 // pred_check
          %p668 = pneg %p299
        $region126: #{tpu_custom_call.1} parent=83 // pred_check_branch
          %670 = sbr.rel (%p668) target = $region128
        $region127: #{tpu_custom_call.1} parent=83 // pred_region
          %671 = dma.done [#allocation19], 64
        $region128: #{tpu_custom_call.1} parent=83 // pred_fallthru
          _
        // Predicated region
        $region129: #{tpu_custom_call.1} parent=83 // pred_check
          %p672 = pneg %p341
        $region130: #{tpu_custom_call.1} parent=83 // pred_check_branch
          %674 = sbr.rel (%p672) target = $region132
        $region131: #{tpu_custom_call.1} parent=83 // pred_region
          %675 = dma.done [#allocation22], 2048
        $region132: #{tpu_custom_call.1} parent=83 // pred_fallthru
          _
        // Predicated region
        $region133: #{tpu_custom_call.1} parent=83 // pred_check
          %p676 = pneg %p362
        $region134: #{tpu_custom_call.1} parent=83 // pred_check_branch
          %678 = sbr.rel (%p676) target = $region136
        $region135: #{tpu_custom_call.1} parent=83 // pred_region
          %679 = dma.done [#allocation22], 98304
        $region136: #{tpu_custom_call.1} parent=83 // pred_fallthru
          _
        // Predicated region
        $region137: #{tpu_custom_call.1} parent=83 // pred_check
          %p680 = pneg %p383
        $region138: #{tpu_custom_call.1} parent=83 // pred_check_branch
          %682 = sbr.rel (%p680) target = $region140
        $region139: #{tpu_custom_call.1} parent=83 // pred_region
          %683 = dma.done [#allocation25], 64
        $region140: #{tpu_custom_call.1} parent=83 // pred_fallthru
          _
        %s684 = sand.u32 %s50, 1
        %s685 = scalar_lea.sflag [#allocation4], %s684
        %s686 = sand.u32 %s50, 1
        %s687 = smul.addr %s686, 32
        %s688 = scalar_lea.vmem [#allocation3], %s687
        %p689 = pneg %p63
        %p690 = pneg %p60
        %s691 = sand.u32 %s42, 1
        %s692 = scalar_lea.sflag [#allocation7], %s691
        %s693 = sand.u32 %s76, 1
        %s694 = scalar_lea.vmem [#allocation6], %s693
        %p695 = pneg %p89
        %p696 = pneg %p86
        %p697 = pneg %p110
        %p698 = pneg %p107
        %p699 = pneg %p131
        %p700 = pneg %p128
        %p701 = pneg %p152
        %p702 = pneg %p149
        %p703 = pneg %p173
        %p704 = pneg %p170
        %p705 = pneg %p194
        %p706 = pneg %p191
        %p707 = pneg %p215
        %p708 = pneg %p212
        %p709 = pneg %p236
        %p710 = pneg %p233
        %p711 = pneg %p257
        %p712 = pneg %p254
        %p713 = pneg %p278
        %p714 = pneg %p275
        %p715 = pneg %p299
        %p716 = pneg %p296
        %p717 = pneg %p320
        %p718 = pneg %p317
        %p719 = pneg %p341
        %p720 = pneg %p338
        %p721 = pneg %p362
        %p722 = pneg %p359
        %p723 = pneg %p383
        %p724 = pneg %p380
        %p725 = pneg %p409
        %p726 = pneg %p406
        %s727 = sand.u32 %s396, 1
        %s728 = scalar_lea.sflag [#allocation5], %s727
        %s729 = sand.u32 %s396, 1
        %s730 = smul.addr %s729, 32
        %s731 = scalar_lea.vmem [#allocation26], %s730
        %v732 = vlaneseq
        %vm733 = vcmp.ge.s32.totalorder %v732, 0
        %vm734 = vcmp.lt.s32.totalorder %v732, 512
        %vm735 = vmand %vm733, %vm734
        %736 = vst.msk [vmem:[#allocation2] ss:$8 sm:$0xf] %vm735, 0.0
        %737 = vst.msk [vmem:[#allocation2] ss:$8 sm:$0x0] %vm735, 0.0
        %s738 = scalar_lea.vmem [#allocation2], 33
        %739 = vst.msk [vmem:[%s738] ss:$8 sm:$0xf] %vm735, 0.0
        %740 = vst.msk [vmem:[%s738] ss:$8 sm:$0x0] %vm735, 0.0
        %v741 = vld [vmem:[%s623] sm:$0xff]
        %v742 = vld [vmem:[%s623 + $0x8] sm:$0xff]
        %v743 = vld [vmem:[%s623 + $0x10] sm:$0xff]
        %v744 = vld [vmem:[%s623 + $0x18] sm:$0xff]
        %v745 = vrot.slane %v741, 4
        %v746 = vadd.f32 %v741, %v745
        %v747 = vrot.slane %v746, 2
        %v748 = vadd.f32 %v746, %v747
        %v749 = vrot.slane %v748, 1
        %v750 = vadd.f32 %v748, %v749
        %v751 = vrot.slane %v742, 4
        %v752 = vadd.f32 %v742, %v751
        %v753 = vrot.slane %v752, 2
        %v754 = vadd.f32 %v752, %v753
        %v755 = vrot.slane %v754, 1
        %v756 = vadd.f32 %v754, %v755
        %v757 = vrot.slane %v743, 4
        %v758 = vadd.f32 %v743, %v757
        %v759 = vrot.slane %v758, 2
        %v760 = vadd.f32 %v758, %v759
        %v761 = vrot.slane %v760, 1
        %v762 = vadd.f32 %v760, %v761
        %v763 = vrot.slane %v744, 4
        %v764 = vadd.f32 %v744, %v763
        %v765 = vrot.slane %v764, 2
        %v766 = vadd.f32 %v764, %v765
        %v767 = vrot.slane %v766, 1
        %v768 = vadd.f32 %v766, %v767
        %v769 = vld [vmem:[%s4] sm:$0xff]
        %v770 = vld [vmem:[%s4 + $0x8] sm:$0xff]
        %v771 = vld [vmem:[%s4 + $0x10] sm:$0xff]
        %v772 = vld [vmem:[%s4 + $0x18] sm:$0xff]
        %v773 = vld [vmem:[%s4 + $0x20] sm:$0xff]
        %v774 = vld [vmem:[%s4 + $0x28] sm:$0xff]
        %v775 = vld [vmem:[%s4 + $0x30] sm:$0xff]
        %v776 = vld [vmem:[%s4 + $0x38] sm:$0xff]
        %v777 = vld [vmem:[%s4 + $0x40] sm:$0xff]
        %v778 = vld [vmem:[%s4 + $0x48] sm:$0xff]
        %v779 = vld [vmem:[%s4 + $0x50] sm:$0xff]
        %v780 = vld [vmem:[%s4 + $0x58] sm:$0xff]
        %v781 = vld [vmem:[%s4 + $0x60] sm:$0xff]
        %v782 = vld [vmem:[%s4 + $0x68] sm:$0xff]
        %v783 = vld [vmem:[%s4 + $0x70] sm:$0xff]
        %v784 = vld [vmem:[%s4 + $0x78] sm:$0xff]
        %v785 = vld [vmem:[%s4 + $0x80] sm:$0xff]
        %v786 = vld [vmem:[%s4 + $0x88] sm:$0xff]
        %v787 = vld [vmem:[%s4 + $0x90] sm:$0xff]
        %v788 = vld [vmem:[%s4 + $0x98] sm:$0xff]
        %v789 = vld [vmem:[%s4 + $0xa0] sm:$0xff]
        %v790 = vld [vmem:[%s4 + $0xa8] sm:$0xff]
        %v791 = vld [vmem:[%s4 + $0xb0] sm:$0xff]
        %v792 = vld [vmem:[%s4 + $0xb8] sm:$0xff]
        %v793 = vld [vmem:[%s4 + $0xc0] sm:$0xff]
        %v794 = vld [vmem:[%s4 + $0xc8] sm:$0xff]
        %v795 = vld [vmem:[%s4 + $0xd0] sm:$0xff]
        %v796 = vld [vmem:[%s4 + $0xd8] sm:$0xff]
        %v797 = vld [vmem:[%s4 + $0xe0] sm:$0xff]
        %v798 = vld [vmem:[%s4 + $0xe8] sm:$0xff]
        %v799 = vld [vmem:[%s4 + $0xf0] sm:$0xff]
        %v800 = vld [vmem:[%s4 + $0xf8] sm:$0xff]
        %v801 = vld [vmem:[%s4 + $0x100] sm:$0xff]
        %v802 = vld [vmem:[%s4 + $0x108] sm:$0xff]
        %v803 = vld [vmem:[%s4 + $0x110] sm:$0xff]
        %v804 = vld [vmem:[%s4 + $0x118] sm:$0xff]
        %v805 = vld [vmem:[%s4 + $0x120] sm:$0xff]
        %v806 = vld [vmem:[%s4 + $0x128] sm:$0xff]
        %v807 = vld [vmem:[%s4 + $0x130] sm:$0xff]
        %v808 = vld [vmem:[%s4 + $0x138] sm:$0xff]
        %v809 = vld [vmem:[%s4 + $0x140] sm:$0xff]
        %v810 = vld [vmem:[%s4 + $0x148] sm:$0xff]
        %v811 = vld [vmem:[%s4 + $0x150] sm:$0xff]
        %v812 = vld [vmem:[%s4 + $0x158] sm:$0xff]
        %v813 = vld [vmem:[%s4 + $0x160] sm:$0xff]
        %v814 = vld [vmem:[%s4 + $0x168] sm:$0xff]
        %v815 = vld [vmem:[%s4 + $0x170] sm:$0xff]
        %v816 = vld [vmem:[%s4 + $0x178] sm:$0xff]
        %v817 = vld [vmem:[%s4 + $0x180] sm:$0xff]
        %v818 = vld [vmem:[%s4 + $0x188] sm:$0xff]
        %v819 = vld [vmem:[%s4 + $0x190] sm:$0xff]
        %v820 = vld [vmem:[%s4 + $0x198] sm:$0xff]
        %v821 = vld [vmem:[%s4 + $0x1a0] sm:$0xff]
        %v822 = vld [vmem:[%s4 + $0x1a8] sm:$0xff]
        %v823 = vld [vmem:[%s4 + $0x1b0] sm:$0xff]
        %v824 = vld [vmem:[%s4 + $0x1b8] sm:$0xff]
        %v825 = vld [vmem:[%s4 + $0x1c0] sm:$0xff]
        %v826 = vld [vmem:[%s4 + $0x1c8] sm:$0xff]
        %v827 = vld [vmem:[%s4 + $0x1d0] sm:$0xff]
        %v828 = vld [vmem:[%s4 + $0x1d8] sm:$0xff]
        %v829 = vld [vmem:[%s4 + $0x1e0] sm:$0xff]
        %v830 = vld [vmem:[%s4 + $0x1e8] sm:$0xff]
        %v831 = vld [vmem:[%s4 + $0x1f0] sm:$0xff]
        %v832 = vld [vmem:[%s4 + $0x1f8] sm:$0xff]
        %833 = vmatprep.subr.mxu0 0.0
        %834 = vmatpush1.msra.mxu0 %v769
        %835 = vmatprep.subr.mxu0 0.0
        %836 = vmatpush1.msra.mxu0 %v770
        %837 = vmatprep.subr.mxu0 0.0
        %838 = vmatpush1.msra.mxu0 %v771
        %839 = vmatprep.subr.mxu0 0.0
        %840 = vmatpush1.msra.mxu0 %v772
        %841 = vmatprep.subr.mxu0 0.0
        %842 = vmatpush1.msra.mxu0 %v773
        %843 = vmatprep.subr.mxu0 0.0
        %844 = vmatpush1.msra.mxu0 %v774
        %845 = vmatprep.subr.mxu0 0.0
        %846 = vmatpush1.msra.mxu0 %v775
        %847 = vmatprep.subr.mxu0 0.0
        %848 = vmatpush1.msra.mxu0 %v776
        %849 = vmatprep.subr.mxu0 0.0
        %850 = vmatpush1.msra.mxu0 %v777
        %851 = vmatprep.subr.mxu0 0.0
        %852 = vmatpush1.msra.mxu0 %v778
        %853 = vmatprep.subr.mxu0 0.0
        %854 = vmatpush1.msra.mxu0 %v779
        %855 = vmatprep.subr.mxu0 0.0
        %856 = vmatpush1.msra.mxu0 %v780
        %857 = vmatprep.subr.mxu0 0.0
        %858 = vmatpush1.msra.mxu0 %v781
        %859 = vmatprep.subr.mxu0 0.0
        %860 = vmatpush1.msra.mxu0 %v782
        %861 = vmatprep.subr.mxu0 0.0
        %862 = vmatpush1.msra.mxu0 %v783
        %863 = vmatprep.subr.mxu0 0.0
        %864 = vmatpush1.msra.mxu0 %v784
        %865 = vmatprep.subr.mxu0 0.0
        %866 = vmatpush1.msra.mxu0 %v785
        %867 = vmatprep.subr.mxu0 0.0
        %868 = vmatpush1.msra.mxu0 %v786
        %869 = vmatprep.subr.mxu0 0.0
        %870 = vmatpush1.msra.mxu0 %v787
        %871 = vmatprep.subr.mxu0 0.0
        %872 = vmatpush1.msra.mxu0 %v788
        %873 = vmatprep.subr.mxu0 0.0
        %874 = vmatpush1.msra.mxu0 %v789
        %875 = vmatprep.subr.mxu0 0.0
        %876 = vmatpush1.msra.mxu0 %v790
        %877 = vmatprep.subr.mxu0 0.0
        %878 = vmatpush1.msra.mxu0 %v791
        %879 = vmatprep.subr.mxu0 0.0
        %880 = vmatpush1.msra.mxu0 %v792
        %881 = vmatprep.subr.mxu0 0.0
        %882 = vmatpush1.msra.mxu0 %v793
        %883 = vmatprep.subr.mxu0 0.0
        %884 = vmatpush1.msra.mxu0 %v794
        %885 = vmatprep.subr.mxu0 0.0
        %886 = vmatpush1.msra.mxu0 %v795
        %887 = vmatprep.subr.mxu0 0.0
        %888 = vmatpush1.msra.mxu0 %v796
        %889 = vmatprep.subr.mxu0 0.0
        %890 = vmatpush1.msra.mxu0 %v797
        %891 = vmatprep.subr.mxu0 0.0
        %892 = vmatpush1.msra.mxu0 %v798
        %893 = vmatprep.subr.mxu0 0.0
        %894 = vmatpush1.msra.mxu0 %v799
        %895 = vmatprep.subr.mxu0 0.0
        %896 = vmatpush1.msra.mxu0 %v800
        %897 = vmatprep.mubr.f32.mxu0 %v756
        %898 = vmatmul.mubr.f32.gmra.mrb[0].mxu0 %v750
        %v899 = vpop.f32.mrb[0].mxu0
        %v900 = vadd.f32 0.0, %v899
        %v901 = vpop.f32.mrb[0].mxu0
        %902 = vdwg.mxu0
        %903 = vmatprep.subr.mxu0 0.0
        %904 = vmatpush1.msra.mxu0 %v801
        %905 = vmatprep.subr.mxu0 0.0
        %906 = vmatpush1.msra.mxu0 %v802
        %907 = vmatprep.subr.mxu0 0.0
        %908 = vmatpush1.msra.mxu0 %v803
        %909 = vmatprep.subr.mxu0 0.0
        %910 = vmatpush1.msra.mxu0 %v804
        %911 = vmatprep.subr.mxu0 0.0
        %912 = vmatpush1.msra.mxu0 %v805
        %913 = vmatprep.subr.mxu0 0.0
        %914 = vmatpush1.msra.mxu0 %v806
        %915 = vmatprep.subr.mxu0 0.0
        %916 = vmatpush1.msra.mxu0 %v807
        %917 = vmatprep.subr.mxu0 0.0
        %918 = vmatpush1.msra.mxu0 %v808
        %919 = vmatprep.subr.mxu0 0.0
        %920 = vmatpush1.msra.mxu0 %v809
        %921 = vmatprep.subr.mxu0 0.0
        %922 = vmatpush1.msra.mxu0 %v810
        %923 = vmatprep.subr.mxu0 0.0
        %924 = vmatpush1.msra.mxu0 %v811
        %925 = vmatprep.subr.mxu0 0.0
        %926 = vmatpush1.msra.mxu0 %v812
        %927 = vmatprep.subr.mxu0 0.0
        %928 = vmatpush1.msra.mxu0 %v813
        %929 = vmatprep.subr.mxu0 0.0
        %930 = vmatpush1.msra.mxu0 %v814
        %931 = vmatprep.subr.mxu0 0.0
        %932 = vmatpush1.msra.mxu0 %v815
        %933 = vmatprep.subr.mxu0 0.0
        %934 = vmatpush1.msra.mxu0 %v816
        %935 = vmatprep.subr.mxu0 0.0
        %936 = vmatpush1.msra.mxu0 %v817
        %937 = vmatprep.subr.mxu0 0.0
        %938 = vmatpush1.msra.mxu0 %v818
        %939 = vmatprep.subr.mxu0 0.0
        %940 = vmatpush1.msra.mxu0 %v819
        %941 = vmatprep.subr.mxu0 0.0
        %942 = vmatpush1.msra.mxu0 %v820
        %943 = vmatprep.subr.mxu0 0.0
        %944 = vmatpush1.msra.mxu0 %v821
        %945 = vmatprep.subr.mxu0 0.0
        %946 = vmatpush1.msra.mxu0 %v822
        %947 = vmatprep.subr.mxu0 0.0
        %948 = vmatpush1.msra.mxu0 %v823
        %949 = vmatprep.subr.mxu0 0.0
        %950 = vmatpush1.msra.mxu0 %v824
        %951 = vmatprep.subr.mxu0 0.0
        %952 = vmatpush1.msra.mxu0 %v825
        %953 = vmatprep.subr.mxu0 0.0
        %954 = vmatpush1.msra.mxu0 %v826
        %955 = vmatprep.subr.mxu0 0.0
        %956 = vmatpush1.msra.mxu0 %v827
        %957 = vmatprep.subr.mxu0 0.0
        %958 = vmatpush1.msra.mxu0 %v828
        %959 = vmatprep.subr.mxu0 0.0
        %960 = vmatpush1.msra.mxu0 %v829
        %961 = vmatprep.subr.mxu0 0.0
        %962 = vmatpush1.msra.mxu0 %v830
        %963 = vmatprep.subr.mxu0 0.0
        %964 = vmatpush1.msra.mxu0 %v831
        %965 = vmatprep.subr.mxu0 0.0
        %966 = vmatpush1.msra.mxu0 %v832
        %967 = vmatprep.mubr.f32.mxu0 %v768
        %968 = vmatmul.mubr.f32.gmra.mrb[0].mxu0 %v762
        %v969 = vpop.f32.mrb[0].mxu0
        %v970 = vadd.f32 %v900, %v969
        %v971 = vpop.f32.mrb[0].mxu0
        %972 = vdwg.mxu0
        %v973 = vld [vmem:[#allocation11] sm:$0xff]
        %v974 = vld [vmem:[#allocation11 + $0x8] sm:$0xff]
        %v975 = vld [vmem:[#allocation11 + $0x10] sm:$0xff]
        %v976 = vld [vmem:[#allocation11 + $0x18] sm:$0xff]
        %v977 = vld [vmem:[#allocation11 + $0x20] sm:$0xff]
        %v978 = vld [vmem:[#allocation11 + $0x28] sm:$0xff]
        %v979 = vld [vmem:[#allocation11 + $0x30] sm:$0xff]
        %v980 = vld [vmem:[#allocation11 + $0x38] sm:$0xff]
        %v981 = vld [vmem:[#allocation11 + $0x40] sm:$0xff]
        %v982 = vld [vmem:[#allocation11 + $0x48] sm:$0xff]
        %v983 = vld [vmem:[#allocation11 + $0x50] sm:$0xff]
        %v984 = vld [vmem:[#allocation11 + $0x58] sm:$0xff]
        %v985 = vld [vmem:[#allocation11 + $0x60] sm:$0xff]
        %v986 = vld [vmem:[#allocation11 + $0x68] sm:$0xff]
        %v987 = vld [vmem:[#allocation11 + $0x70] sm:$0xff]
        %v988 = vld [vmem:[#allocation11 + $0x78] sm:$0xff]
        %vm989 = vcmask 261120
        %v991 = vsel %vm989, %v970, 0
        %993 = vmatprep.subr.mxu0 %v974
        %994 = vmatpush1.msra.mxu0 %v973
        %995 = vmatprep.subr.mxu0 %v978
        %996 = vmatpush1.msra.mxu0 %v977
        %997 = vmatprep.subr.mxu0 %v982
        %998 = vmatpush1.msra.mxu0 %v981
        %999 = vmatprep.subr.mxu0 %v986
        %1000 = vmatpush1.msra.mxu0 %v985
        %1001 = vmatprep.subr.mxu0 0.0
        %1002 = vmatpush1.msra.mxu0 0.0
        %1003 = vmatprep.subr.mxu0 0.0
        %1004 = vmatpush1.msra.mxu0 0.0
        %1005 = vmatprep.subr.mxu0 0.0
        %1006 = vmatpush1.msra.mxu0 0.0
        %1007 = vmatprep.subr.mxu0 0.0
        %1008 = vmatpush1.msra.mxu0 0.0
        %1009 = vmatprep.subr.mxu0 0.0
        %1010 = vmatpush1.msra.mxu0 0.0
        %1011 = vmatprep.subr.mxu0 0.0
        %1012 = vmatpush1.msra.mxu0 0.0
        %1013 = vmatprep.subr.mxu0 0.0
        %1014 = vmatpush1.msra.mxu0 0.0
        %1015 = vmatprep.subr.mxu0 0.0
        %1016 = vmatpush1.msra.mxu0 0.0
        %1017 = vmatprep.subr.mxu0 0.0
        %1018 = vmatpush1.msra.mxu0 0.0
        %1019 = vmatprep.subr.mxu0 0.0
        %1020 = vmatpush1.msra.mxu0 0.0
        %1021 = vmatprep.subr.mxu0 0.0
        %1022 = vmatpush1.msra.mxu0 0.0
        %1023 = vmatprep.subr.mxu0 0.0
        %1024 = vmatpush1.msra.mxu0 0.0
        %1025 = vmatprep.subr.mxu0 0.0
        %1026 = vmatpush1.msra.mxu0 0.0
        %1027 = vmatprep.subr.mxu0 0.0
        %1028 = vmatpush1.msra.mxu0 0.0
        %1029 = vmatprep.subr.mxu0 0.0
        %1030 = vmatpush1.msra.mxu0 0.0
        %1031 = vmatprep.subr.mxu0 0.0
        %1032 = vmatpush1.msra.mxu0 0.0
        %1033 = vmatprep.subr.mxu0 0.0
        %1034 = vmatpush1.msra.mxu0 0.0
        %1035 = vmatprep.subr.mxu0 0.0
        %1036 = vmatpush1.msra.mxu0 0.0
        %1037 = vmatprep.subr.mxu0 0.0
        %1038 = vmatpush1.msra.mxu0 0.0
        %1039 = vmatprep.subr.mxu0 0.0
        %1040 = vmatpush1.msra.mxu0 0.0
        %1041 = vmatprep.subr.mxu0 0.0
        %1042 = vmatpush1.msra.mxu0 0.0
        %1043 = vmatprep.subr.mxu0 0.0
        %1044 = vmatpush1.msra.mxu0 0.0
        %1045 = vmatprep.subr.mxu0 0.0
        %1046 = vmatpush1.msra.mxu0 0.0
        %1047 = vmatprep.subr.mxu0 0.0
        %1048 = vmatpush1.msra.mxu0 0.0
        %1049 = vmatprep.subr.mxu0 0.0
        %1050 = vmatpush1.msra.mxu0 0.0
        %1051 = vmatprep.subr.mxu0 0.0
        %1052 = vmatpush1.msra.mxu0 0.0
        %1053 = vmatprep.subr.mxu0 0.0
        %1054 = vmatpush1.msra.mxu0 0.0
        %1055 = vmatprep.subr.mxu0 0.0
        %1056 = vmatpush1.msra.mxu0 0.0
        %1057 = vmatprep.mubr.f32.mxu0 0.0
        %1058 = vmatmul.mubr.f32.gmra.mrb[0].mxu0 %v991
        %v1059 = vpop.f32.mrb[0].mxu0
        %v1060 = vadd.f32 0.0, %v1059
        %v1061 = vpop.f32.mrb[0].mxu0
        %v1062 = vadd.f32 0.0, %v1061
        %1063 = vdwg.mxu0
        %1064 = vmatprep.subr.mxu0 %v976
        %1065 = vmatpush1.msra.mxu0 %v975
        %1066 = vmatprep.subr.mxu0 %v980
        %1067 = vmatpush1.msra.mxu0 %v979
        %1068 = vmatprep.subr.mxu0 %v984
        %1069 = vmatpush1.msra.mxu0 %v983
        %1070 = vmatprep.subr.mxu0 %v988
        %1071 = vmatpush1.msra.mxu0 %v987
        %1072 = vmatprep.subr.mxu0 0.0
        %1073 = vmatpush1.msra.mxu0 0.0
        %1074 = vmatprep.subr.mxu0 0.0
        %1075 = vmatpush1.msra.mxu0 0.0
        %1076 = vmatprep.subr.mxu0 0.0
        %1077 = vmatpush1.msra.mxu0 0.0
        %1078 = vmatprep.subr.mxu0 0.0
        %1079 = vmatpush1.msra.mxu0 0.0
        %1080 = vmatprep.subr.mxu0 0.0
        %1081 = vmatpush1.msra.mxu0 0.0
        %1082 = vmatprep.subr.mxu0 0.0
        %1083 = vmatpush1.msra.mxu0 0.0
        %1084 = vmatprep.subr.mxu0 0.0
        %1085 = vmatpush1.msra.mxu0 0.0
        %1086 = vmatprep.subr.mxu0 0.0
        %1087 = vmatpush1.msra.mxu0 0.0
        %1088 = vmatprep.subr.mxu0 0.0
        %1089 = vmatpush1.msra.mxu0 0.0
        %1090 = vmatprep.subr.mxu0 0.0
        %1091 = vmatpush1.msra.mxu0 0.0
        %1092 = vmatprep.subr.mxu0 0.0
        %1093 = vmatpush1.msra.mxu0 0.0
        %1094 = vmatprep.subr.mxu0 0.0
        %1095 = vmatpush1.msra.mxu0 0.0
        %1096 = vmatprep.subr.mxu0 0.0
        %1097 = vmatpush1.msra.mxu0 0.0
        %1098 = vmatprep.subr.mxu0 0.0
        %1099 = vmatpush1.msra.mxu0 0.0
        %1100 = vmatprep.subr.mxu0 0.0
        %1101 = vmatpush1.msra.mxu0 0.0
        %1102 = vmatprep.subr.mxu0 0.0
        %1103 = vmatpush1.msra.mxu0 0.0
        %1104 = vmatprep.subr.mxu0 0.0
        %1105 = vmatpush1.msra.mxu0 0.0
        %1106 = vmatprep.subr.mxu0 0.0
        %1107 = vmatpush1.msra.mxu0 0.0
        %1108 = vmatprep.subr.mxu0 0.0
        %1109 = vmatpush1.msra.mxu0 0.0
        %1110 = vmatprep.subr.mxu0 0.0
        %1111 = vmatpush1.msra.mxu0 0.0
        %1112 = vmatprep.subr.mxu0 0.0
        %1113 = vmatpush1.msra.mxu0 0.0
        %1114 = vmatprep.subr.mxu0 0.0
        %1115 = vmatpush1.msra.mxu0 0.0
        %1116 = vmatprep.subr.mxu0 0.0
        %1117 = vmatpush1.msra.mxu0 0.0
        %1118 = vmatprep.subr.mxu0 0.0
        %1119 = vmatpush1.msra.mxu0 0.0
        %1120 = vmatprep.subr.mxu0 0.0
        %1121 = vmatpush1.msra.mxu0 0.0
        %1122 = vmatprep.subr.mxu0 0.0
        %1123 = vmatpush1.msra.mxu0 0.0
        %1124 = vmatprep.subr.mxu0 0.0
        %1125 = vmatpush1.msra.mxu0 0.0
        %1126 = vmatprep.subr.mxu0 0.0
        %1127 = vmatpush1.msra.mxu0 0.0
        %1128 = vmatprep.mubr.f32.mxu0 0.0
        %1129 = vmatmul.mubr.f32.gmra.mrb[0].mxu0 %v991
        %v1130 = vpop.f32.mrb[0].mxu0
        %v1131 = vadd.f32 0.0, %v1130
        %v1132 = vpop.f32.mrb[0].mxu0
        %v1133 = vadd.f32 0.0, %v1132
        %1134 = vdwg.mxu0
        %v1135 = vmul.f32 %v1060, 0.0078125
        %v1136 = vmul.f32 %v1062, 0.0078125
        %v1137 = vmul.f32 %v1131, 0.0078125
        %v1138 = vmul.f32 %v1133, 0.0078125
        %v1139 = vlaneseq
        %v1140 = vshrl.u32 %v1139, 7
        %v1141 = vsub.s32 0, %v1140
        %v1142 = vrot.slane %v1135, %v1141
        %v1143 = vlaneseq
        %v1144 = vshrl.u32 %v1143, 7
        %v1145 = vsub.s32 0, %v1144
        %v1146 = vrot.slane %v1136, %v1145
        %v1147 = vlaneseq
        %v1148 = vshrl.u32 %v1147, 7
        %v1149 = vsub.s32 0, %v1148
        %v1150 = vrot.slane %v1137, %v1149
        %v1151 = vlaneseq
        %v1152 = vshrl.u32 %v1151, 7
        %v1153 = vsub.s32 0, %v1152
        %v1154 = vrot.slane %v1138, %v1153
        %v1155 = vsub.f32 %v741, %v1142
        %v1156 = vsub.f32 %v742, %v1146
        %v1157 = vsub.f32 %v743, %v1150
        %v1158 = vsub.f32 %v744, %v1154
        %v1159 = vmul.f32 %v1155, %v1155
        %v1160 = vmul.f32 %v1156, %v1156
        %v1161 = vmul.f32 %v1157, %v1157
        %v1162 = vmul.f32 %v1158, %v1158
        %v1163 = vrot.slane %v1159, 4
        %v1164 = vadd.f32 %v1159, %v1163
        %v1165 = vrot.slane %v1164, 2
        %v1166 = vadd.f32 %v1164, %v1165
        %v1167 = vrot.slane %v1166, 1
        %v1168 = vadd.f32 %v1166, %v1167
        %v1169 = vrot.slane %v1160, 4
        %v1170 = vadd.f32 %v1160, %v1169
        %v1171 = vrot.slane %v1170, 2
        %v1172 = vadd.f32 %v1170, %v1171
        %v1173 = vrot.slane %v1172, 1
        %v1174 = vadd.f32 %v1172, %v1173
        %v1175 = vrot.slane %v1161, 4
        %v1176 = vadd.f32 %v1161, %v1175
        %v1177 = vrot.slane %v1176, 2
        %v1178 = vadd.f32 %v1176, %v1177
        %v1179 = vrot.slane %v1178, 1
        %v1180 = vadd.f32 %v1178, %v1179
        %v1181 = vrot.slane %v1162, 4
        %v1182 = vadd.f32 %v1162, %v1181
        %v1183 = vrot.slane %v1182, 2
        %v1184 = vadd.f32 %v1182, %v1183
        %v1185 = vrot.slane %v1184, 1
        %v1186 = vadd.f32 %v1184, %v1185
        %1187 = vmatprep.subr.mxu0 0.0
        %1188 = vmatpush1.msra.mxu0 %v769
        %1189 = vmatprep.subr.mxu0 0.0
        %1190 = vmatpush1.msra.mxu0 %v770
        %1191 = vmatprep.subr.mxu0 0.0
        %1192 = vmatpush1.msra.mxu0 %v771
        %1193 = vmatprep.subr.mxu0 0.0
        %1194 = vmatpush1.msra.mxu0 %v772
        %1195 = vmatprep.subr.mxu0 0.0
        %1196 = vmatpush1.msra.mxu0 %v773
        %1197 = vmatprep.subr.mxu0 0.0
        %1198 = vmatpush1.msra.mxu0 %v774
        %1199 = vmatprep.subr.mxu0 0.0
        %1200 = vmatpush1.msra.mxu0 %v775
        %1201 = vmatprep.subr.mxu0 0.0
        %1202 = vmatpush1.msra.mxu0 %v776
        %1203 = vmatprep.subr.mxu0 0.0
        %1204 = vmatpush1.msra.mxu0 %v777
        %1205 = vmatprep.subr.mxu0 0.0
        %1206 = vmatpush1.msra.mxu0 %v778
        %1207 = vmatprep.subr.mxu0 0.0
        %1208 = vmatpush1.msra.mxu0 %v779
        %1209 = vmatprep.subr.mxu0 0.0
        %1210 = vmatpush1.msra.mxu0 %v780
        %1211 = vmatprep.subr.mxu0 0.0
        %1212 = vmatpush1.msra.mxu0 %v781
        %1213 = vmatprep.subr.mxu0 0.0
        %1214 = vmatpush1.msra.mxu0 %v782
        %1215 = vmatprep.subr.mxu0 0.0
        %1216 = vmatpush1.msra.mxu0 %v783
        %1217 = vmatprep.subr.mxu0 0.0
        %1218 = vmatpush1.msra.mxu0 %v784
        %1219 = vmatprep.subr.mxu0 0.0
        %1220 = vmatpush1.msra.mxu0 %v785
        %1221 = vmatprep.subr.mxu0 0.0
        %1222 = vmatpush1.msra.mxu0 %v786
        %1223 = vmatprep.subr.mxu0 0.0
        %1224 = vmatpush1.msra.mxu0 %v787
        %1225 = vmatprep.subr.mxu0 0.0
        %1226 = vmatpush1.msra.mxu0 %v788
        %1227 = vmatprep.subr.mxu0 0.0
        %1228 = vmatpush1.msra.mxu0 %v789
        %1229 = vmatprep.subr.mxu0 0.0
        %1230 = vmatpush1.msra.mxu0 %v790
        %1231 = vmatprep.subr.mxu0 0.0
        %1232 = vmatpush1.msra.mxu0 %v791
        %1233 = vmatprep.subr.mxu0 0.0
        %1234 = vmatpush1.msra.mxu0 %v792
        %1235 = vmatprep.subr.mxu0 0.0
        %1236 = vmatpush1.msra.mxu0 %v793
        %1237 = vmatprep.subr.mxu0 0.0
        %1238 = vmatpush1.msra.mxu0 %v794
        %1239 = vmatprep.subr.mxu0 0.0
        %1240 = vmatpush1.msra.mxu0 %v795
        %1241 = vmatprep.subr.mxu0 0.0
        %1242 = vmatpush1.msra.mxu0 %v796
        %1243 = vmatprep.subr.mxu0 0.0
        %1244 = vmatpush1.msra.mxu0 %v797
        %1245 = vmatprep.subr.mxu0 0.0
        %1246 = vmatpush1.msra.mxu0 %v798
        %1247 = vmatprep.subr.mxu0 0.0
        %1248 = vmatpush1.msra.mxu0 %v799
        %1249 = vmatprep.subr.mxu0 0.0
        %1250 = vmatpush1.msra.mxu0 %v800
        %1251 = vmatprep.mubr.f32.mxu0 %v1174
        %1252 = vmatmul.mubr.f32.gmra.mrb[0].mxu0 %v1168
        %v1253 = vpop.f32.mrb[0].mxu0
        %v1254 = vadd.f32 0.0, %v1253
        %v1255 = vpop.f32.mrb[0].mxu0
        %1256 = vdwg.mxu0
        %1257 = vmatprep.subr.mxu0 0.0
        %1258 = vmatpush1.msra.mxu0 %v801
        %1259 = vmatprep.subr.mxu0 0.0
        %1260 = vmatpush1.msra.mxu0 %v802
        %1261 = vmatprep.subr.mxu0 0.0
        %1262 = vmatpush1.msra.mxu0 %v803
        %1263 = vmatprep.subr.mxu0 0.0
        %1264 = vmatpush1.msra.mxu0 %v804
        %1265 = vmatprep.subr.mxu0 0.0
        %1266 = vmatpush1.msra.mxu0 %v805
        %1267 = vmatprep.subr.mxu0 0.0
        %1268 = vmatpush1.msra.mxu0 %v806
        %1269 = vmatprep.subr.mxu0 0.0
        %1270 = vmatpush1.msra.mxu0 %v807
        %1271 = vmatprep.subr.mxu0 0.0
        %1272 = vmatpush1.msra.mxu0 %v808
        %1273 = vmatprep.subr.mxu0 0.0
        %1274 = vmatpush1.msra.mxu0 %v809
        %1275 = vmatprep.subr.mxu0 0.0
        %1276 = vmatpush1.msra.mxu0 %v810
        %1277 = vmatprep.subr.mxu0 0.0
        %1278 = vmatpush1.msra.mxu0 %v811
        %1279 = vmatprep.subr.mxu0 0.0
        %1280 = vmatpush1.msra.mxu0 %v812
        %1281 = vmatprep.subr.mxu0 0.0
        %1282 = vmatpush1.msra.mxu0 %v813
        %1283 = vmatprep.subr.mxu0 0.0
        %1284 = vmatpush1.msra.mxu0 %v814
        %1285 = vmatprep.subr.mxu0 0.0
        %1286 = vmatpush1.msra.mxu0 %v815
        %1287 = vmatprep.subr.mxu0 0.0
        %1288 = vmatpush1.msra.mxu0 %v816
        %1289 = vmatprep.subr.mxu0 0.0
        %1290 = vmatpush1.msra.mxu0 %v817
        %1291 = vmatprep.subr.mxu0 0.0
        %1292 = vmatpush1.msra.mxu0 %v818
        %1293 = vmatprep.subr.mxu0 0.0
        %1294 = vmatpush1.msra.mxu0 %v819
        %1295 = vmatprep.subr.mxu0 0.0
        %1296 = vmatpush1.msra.mxu0 %v820
        %1297 = vmatprep.subr.mxu0 0.0
        %1298 = vmatpush1.msra.mxu0 %v821
        %1299 = vmatprep.subr.mxu0 0.0
        %1300 = vmatpush1.msra.mxu0 %v822
        %1301 = vmatprep.subr.mxu0 0.0
        %1302 = vmatpush1.msra.mxu0 %v823
        %1303 = vmatprep.subr.mxu0 0.0
        %1304 = vmatpush1.msra.mxu0 %v824
        %1305 = vmatprep.subr.mxu0 0.0
        %1306 = vmatpush1.msra.mxu0 %v825
        %1307 = vmatprep.subr.mxu0 0.0
        %1308 = vmatpush1.msra.mxu0 %v826
        %1309 = vmatprep.subr.mxu0 0.0
        %1310 = vmatpush1.msra.mxu0 %v827
        %1311 = vmatprep.subr.mxu0 0.0
        %1312 = vmatpush1.msra.mxu0 %v828
        %1313 = vmatprep.subr.mxu0 0.0
        %1314 = vmatpush1.msra.mxu0 %v829
        %1315 = vmatprep.subr.mxu0 0.0
        %1316 = vmatpush1.msra.mxu0 %v830
        %1317 = vmatprep.subr.mxu0 0.0
        %1318 = vmatpush1.msra.mxu0 %v831
        %1319 = vmatprep.subr.mxu0 0.0
        %1320 = vmatpush1.msra.mxu0 %v832
        %1321 = vmatprep.mubr.f32.mxu0 %v1186
        %1322 = vmatmul.mubr.f32.gmra.mrb[0].mxu0 %v1180
        %v1323 = vpop.f32.mrb[0].mxu0
        %v1324 = vadd.f32 %v1254, %v1323
        %v1325 = vpop.f32.mrb[0].mxu0
        %1326 = vdwg.mxu0
        %v1328 = vsel %vm989, %v1324, 0
        %1330 = vmatprep.subr.mxu0 %v974
        %1331 = vmatpush1.msra.mxu0 %v973
        %1332 = vmatprep.subr.mxu0 %v978
        %1333 = vmatpush1.msra.mxu0 %v977
        %1334 = vmatprep.subr.mxu0 %v982
        %1335 = vmatpush1.msra.mxu0 %v981
        %1336 = vmatprep.subr.mxu0 %v986
        %1337 = vmatpush1.msra.mxu0 %v985
        %1338 = vmatprep.subr.mxu0 0.0
        %1339 = vmatpush1.msra.mxu0 0.0
        %1340 = vmatprep.subr.mxu0 0.0
        %1341 = vmatpush1.msra.mxu0 0.0
        %1342 = vmatprep.subr.mxu0 0.0
        %1343 = vmatpush1.msra.mxu0 0.0
        %1344 = vmatprep.subr.mxu0 0.0
        %1345 = vmatpush1.msra.mxu0 0.0
        %1346 = vmatprep.subr.mxu0 0.0
        %1347 = vmatpush1.msra.mxu0 0.0
        %1348 = vmatprep.subr.mxu0 0.0
        %1349 = vmatpush1.msra.mxu0 0.0
        %1350 = vmatprep.subr.mxu0 0.0
        %1351 = vmatpush1.msra.mxu0 0.0
        %1352 = vmatprep.subr.mxu0 0.0
        %1353 = vmatpush1.msra.mxu0 0.0
        %1354 = vmatprep.subr.mxu0 0.0
        %1355 = vmatpush1.msra.mxu0 0.0
        %1356 = vmatprep.subr.mxu0 0.0
        %1357 = vmatpush1.msra.mxu0 0.0
        %1358 = vmatprep.subr.mxu0 0.0
        %1359 = vmatpush1.msra.mxu0 0.0
        %1360 = vmatprep.subr.mxu0 0.0
        %1361 = vmatpush1.msra.mxu0 0.0
        %1362 = vmatprep.subr.mxu0 0.0
        %1363 = vmatpush1.msra.mxu0 0.0
        %1364 = vmatprep.subr.mxu0 0.0
        %1365 = vmatpush1.msra.mxu0 0.0
        %1366 = vmatprep.subr.mxu0 0.0
        %1367 = vmatpush1.msra.mxu0 0.0
        %1368 = vmatprep.subr.mxu0 0.0
        %1369 = vmatpush1.msra.mxu0 0.0
        %1370 = vmatprep.subr.mxu0 0.0
        %1371 = vmatpush1.msra.mxu0 0.0
        %1372 = vmatprep.subr.mxu0 0.0
        %1373 = vmatpush1.msra.mxu0 0.0
        %1374 = vmatprep.subr.mxu0 0.0
        %1375 = vmatpush1.msra.mxu0 0.0
        %1376 = vmatprep.subr.mxu0 0.0
        %1377 = vmatpush1.msra.mxu0 0.0
        %1378 = vmatprep.subr.mxu0 0.0
        %1379 = vmatpush1.msra.mxu0 0.0
        %1380 = vmatprep.subr.mxu0 0.0
        %1381 = vmatpush1.msra.mxu0 0.0
        %1382 = vmatprep.subr.mxu0 0.0
        %1383 = vmatpush1.msra.mxu0 0.0
        %1384 = vmatprep.subr.mxu0 0.0
        %1385 = vmatpush1.msra.mxu0 0.0
        %1386 = vmatprep.subr.mxu0 0.0
        %1387 = vmatpush1.msra.mxu0 0.0
        %1388 = vmatprep.subr.mxu0 0.0
        %1389 = vmatpush1.msra.mxu0 0.0
        %1390 = vmatprep.subr.mxu0 0.0
        %1391 = vmatpush1.msra.mxu0 0.0
        %1392 = vmatprep.subr.mxu0 0.0
        %1393 = vmatpush1.msra.mxu0 0.0
        %1394 = vmatprep.mubr.f32.mxu0 0.0
        %1395 = vmatmul.mubr.f32.gmra.mrb[0].mxu0 %v1328
        %v1396 = vpop.f32.mrb[0].mxu0
        %v1397 = vadd.f32 0.0, %v1396
        %v1398 = vpop.f32.mrb[0].mxu0
        %v1399 = vadd.f32 0.0, %v1398
        %1400 = vdwg.mxu0
        %1401 = vmatprep.subr.mxu0 %v976
        %1402 = vmatpush1.msra.mxu0 %v975
        %1403 = vmatprep.subr.mxu0 %v980
        %1404 = vmatpush1.msra.mxu0 %v979
        %1405 = vmatprep.subr.mxu0 %v984
        %1406 = vmatpush1.msra.mxu0 %v983
        %1407 = vmatprep.subr.mxu0 %v988
        %1408 = vmatpush1.msra.mxu0 %v987
        %1409 = vmatprep.subr.mxu0 0.0
        %1410 = vmatpush1.msra.mxu0 0.0
        %1411 = vmatprep.subr.mxu0 0.0
        %1412 = vmatpush1.msra.mxu0 0.0
        %1413 = vmatprep.subr.mxu0 0.0
        %1414 = vmatpush1.msra.mxu0 0.0
        %1415 = vmatprep.subr.mxu0 0.0
        %1416 = vmatpush1.msra.mxu0 0.0
        %1417 = vmatprep.subr.mxu0 0.0
        %1418 = vmatpush1.msra.mxu0 0.0
        %1419 = vmatprep.subr.mxu0 0.0
        %1420 = vmatpush1.msra.mxu0 0.0
        %1421 = vmatprep.subr.mxu0 0.0
        %1422 = vmatpush1.msra.mxu0 0.0
        %1423 = vmatprep.subr.mxu0 0.0
        %1424 = vmatpush1.msra.mxu0 0.0
        %1425 = vmatprep.subr.mxu0 0.0
        %1426 = vmatpush1.msra.mxu0 0.0
        %1427 = vmatprep.subr.mxu0 0.0
        %1428 = vmatpush1.msra.mxu0 0.0
        %1429 = vmatprep.subr.mxu0 0.0
        %1430 = vmatpush1.msra.mxu0 0.0
        %1431 = vmatprep.subr.mxu0 0.0
        %1432 = vmatpush1.msra.mxu0 0.0
        %1433 = vmatprep.subr.mxu0 0.0
        %1434 = vmatpush1.msra.mxu0 0.0
        %1435 = vmatprep.subr.mxu0 0.0
        %1436 = vmatpush1.msra.mxu0 0.0
        %1437 = vmatprep.subr.mxu0 0.0
        %1438 = vmatpush1.msra.mxu0 0.0
        %1439 = vmatprep.subr.mxu0 0.0
        %1440 = vmatpush1.msra.mxu0 0.0
        %1441 = vmatprep.subr.mxu0 0.0
        %1442 = vmatpush1.msra.mxu0 0.0
        %1443 = vmatprep.subr.mxu0 0.0
        %1444 = vmatpush1.msra.mxu0 0.0
        %1445 = vmatprep.subr.mxu0 0.0
        %1446 = vmatpush1.msra.mxu0 0.0
        %1447 = vmatprep.subr.mxu0 0.0
        %1448 = vmatpush1.msra.mxu0 0.0
        %1449 = vmatprep.subr.mxu0 0.0
        %1450 = vmatpush1.msra.mxu0 0.0
        %1451 = vmatprep.subr.mxu0 0.0
        %1452 = vmatpush1.msra.mxu0 0.0
        %1453 = vmatprep.subr.mxu0 0.0
        %1454 = vmatpush1.msra.mxu0 0.0
        %1455 = vmatprep.subr.mxu0 0.0
        %1456 = vmatpush1.msra.mxu0 0.0
        %1457 = vmatprep.subr.mxu0 0.0
        %1458 = vmatpush1.msra.mxu0 0.0
        %1459 = vmatprep.subr.mxu0 0.0
        %1460 = vmatpush1.msra.mxu0 0.0
        %1461 = vmatprep.subr.mxu0 0.0
        %1462 = vmatpush1.msra.mxu0 0.0
        %1463 = vmatprep.subr.mxu0 0.0
        %1464 = vmatpush1.msra.mxu0 0.0
        %1465 = vmatprep.mubr.f32.mxu0 0.0
        %1466 = vmatmul.mubr.f32.gmra.mrb[0].mxu0 %v1328
        %v1467 = vpop.f32.mrb[0].mxu0
        %v1468 = vadd.f32 0.0, %v1467
        %v1469 = vpop.f32.mrb[0].mxu0
        %v1470 = vadd.f32 0.0, %v1469
        %1471 = vdwg.mxu0
        %v1472 = vmul.f32 %v1397, 0.0078125
        %v1473 = vmul.f32 %v1399, 0.0078125
        %v1474 = vmul.f32 %v1468, 0.0078125
        %v1475 = vmul.f32 %v1470, 0.0078125
        %v1476 = vadd.f32 %v1472, 1e-05
        %v1477 = vadd.f32 %v1473, 1e-05
        %v1478 = vadd.f32 %v1474, 1e-05
        %v1479 = vadd.f32 %v1475, 1e-05
        %v1480 = vrsqrt.pop %v1476
        %v1481 = vrsqrt.pop %v1477
        %v1482 = vrsqrt.pop %v1478
        %v1483 = vrsqrt.pop %v1479
        %v1484 = vlaneseq
        %v1485 = vshrl.u32 %v1484, 7
        %v1486 = vsub.s32 0, %v1485
        %v1487 = vrot.slane %v1480, %v1486
        %v1488 = vlaneseq
        %v1489 = vshrl.u32 %v1488, 7
        %v1490 = vsub.s32 0, %v1489
        %v1491 = vrot.slane %v1481, %v1490
        %v1492 = vlaneseq
        %v1493 = vshrl.u32 %v1492, 7
        %v1494 = vsub.s32 0, %v1493
        %v1495 = vrot.slane %v1482, %v1494
        %v1496 = vlaneseq
        %v1497 = vshrl.u32 %v1496, 7
        %v1498 = vsub.s32 0, %v1497
        %v1499 = vrot.slane %v1483, %v1498
        %v1500 = vmul.f32 %v1155, %v1487
        %v1501 = vmul.f32 %v1156, %v1491
        %v1502 = vmul.f32 %v1157, %v1495
        %v1503 = vmul.f32 %v1158, %v1499
        %v1504 = vld [vmem:[#allocation8] sm:$0xf]
        %v1506 = vlaneseq
        %v1507 = vshrl.u32 %v1506, 7
        %v1508 = vsub.s32 0, %v1507
        %v1509 = vrot.slane %v1504, %v1508
        %v1510 = vlaneseq
        %v1511 = vshrl.u32 %v1510, 7
        %v1512 = vsub.s32 1, %v1511
        %v1513 = vrot.slane %v1504, %v1512
        %v1514 = vlaneseq
        %v1515 = vshrl.u32 %v1514, 7
        %v1516 = vsub.s32 2, %v1515
        %v1517 = vrot.slane %v1504, %v1516
        %v1518 = vlaneseq
        %v1519 = vshrl.u32 %v1518, 7
        %v1520 = vsub.s32 3, %v1519
        %v1521 = vrot.slane %v1504, %v1520
        %v1526 = vmul.f32 %v1500, %v1509
        %v1527 = vmul.f32 %v1501, %v1513
        %v1528 = vmul.f32 %v1502, %v1517
        %v1529 = vmul.f32 %v1503, %v1521
        %v1530 = vld [vmem:[#allocation9] sm:$0xf]
        %v1532 = vlaneseq
        %v1533 = vshrl.u32 %v1532, 7
        %v1534 = vsub.s32 0, %v1533
        %v1535 = vrot.slane %v1530, %v1534
        %v1536 = vlaneseq
        %v1537 = vshrl.u32 %v1536, 7
        %v1538 = vsub.s32 1, %v1537
        %v1539 = vrot.slane %v1530, %v1538
        %v1540 = vlaneseq
        %v1541 = vshrl.u32 %v1540, 7
        %v1542 = vsub.s32 2, %v1541
        %v1543 = vrot.slane %v1530, %v1542
        %v1544 = vlaneseq
        %v1545 = vshrl.u32 %v1544, 7
        %v1546 = vsub.s32 3, %v1545
        %v1547 = vrot.slane %v1530, %v1546
        %v1552 = vadd.f32 %v1526, %v1535
        %v1553 = vadd.f32 %v1527, %v1539
        %v1554 = vadd.f32 %v1528, %v1543
        %v1555 = vadd.f32 %v1529, %v1547
        %v1556 = vsub.f32 0.0, %v1552
        %v1557 = vsub.f32 0.0, %v1553
        %v1558 = vsub.f32 0.0, %v1554
        %v1559 = vsub.f32 0.0, %v1555
        %v1560 = vmul.f32 %v1556, 1.442695
        %v1561 = vpow.pop %v1560
        %v1562 = vmul.f32 %v1557, 1.442695
        %v1563 = vpow.pop %v1562
        %v1564 = vmul.f32 %v1558, 1.442695
        %v1565 = vpow.pop %v1564
        %v1566 = vmul.f32 %v1559, 1.442695
        %v1567 = vpow.pop %v1566
        %v1568 = vadd.f32 %v1561, 1.0
        %v1569 = vadd.f32 %v1563, 1.0
        %v1570 = vadd.f32 %v1565, 1.0
        %v1571 = vadd.f32 %v1567, 1.0
        %v1572 = vrcp.pop %v1568
        %v1573 = vrcp.pop %v1569
        %v1574 = vrcp.pop %v1570
        %v1575 = vrcp.pop %v1571
        %v1576 = vmul.f32 %v1552, %v1572
        %v1577 = vmul.f32 %v1553, %v1573
        %v1578 = vmul.f32 %v1554, %v1574
        %v1579 = vmul.f32 %v1555, %v1575
        %v1584 = vrot.slane %v1576, 7
        %v1585 = vrot.slane %v1577, 7
        %v1586 = vrot.slane %v1578, 7
        %v1587 = vrot.slane %v1579, 7
        %1592 = vst [vmem:[#allocation2] sm:$0xfe] %v1584
        %1593 = vst [vmem:[#allocation2 + $0x8] sm:$0xfe] %v1585
        %1594 = vst [vmem:[#allocation2 + $0x10] sm:$0xfe] %v1586
        %1595 = vst [vmem:[#allocation2 + $0x18] sm:$0xfe] %v1587
        %1596 = vst [vmem:[#allocation2 + $0x20] sm:$0x1] %v1584
        %1597 = vst [vmem:[#allocation2 + $0x28] sm:$0x1] %v1585
        %1598 = vst [vmem:[#allocation2 + $0x30] sm:$0x1] %v1586
        %1599 = vst [vmem:[#allocation2 + $0x38] sm:$0x1] %v1587
        %v1600 = vld [vmem:[#allocation2] sm:$0xff]
        %v1601 = vld [vmem:[#allocation2 + $0x8] sm:$0xff]
        %v1602 = vld [vmem:[#allocation2 + $0x10] sm:$0xff]
        %v1603 = vld [vmem:[#allocation2 + $0x18] sm:$0xff]
        %v1604 = vld [vmem:[#allocation2] sm:$0xfe]
        %v1605 = vld [vmem:[#allocation2 + $0x8] sm:$0xfe]
        %v1606 = vld [vmem:[#allocation2 + $0x10] sm:$0xfe]
        %v1607 = vld [vmem:[#allocation2 + $0x18] sm:$0xfe]
        %v1608 = vld [vmem:[#allocation2 + $0x20] sm:$0x1]
        %v1609 = vld [vmem:[#allocation2 + $0x28] sm:$0x1]
        %v1610 = vld [vmem:[#allocation2 + $0x30] sm:$0x1]
        %v1611 = vld [vmem:[#allocation2 + $0x38] sm:$0x1]
        %v1612 = vld [vmem:[#allocation2] sm:$0xfc]
        %v1613 = vld [vmem:[#allocation2 + $0x8] sm:$0xfc]
        %v1614 = vld [vmem:[#allocation2 + $0x10] sm:$0xfc]
        %v1615 = vld [vmem:[#allocation2 + $0x18] sm:$0xfc]
        %v1616 = vld [vmem:[#allocation2 + $0x20] sm:$0x3]
        %v1617 = vld [vmem:[#allocation2 + $0x28] sm:$0x3]
        %v1618 = vld [vmem:[#allocation2 + $0x30] sm:$0x3]
        %v1619 = vld [vmem:[#allocation2 + $0x38] sm:$0x3]
        %vm1628 = vcmask 1046528
        %v1629 = vrot.slane %v1604, 1
        %v1630 = vrot.slane %v1608, 1
        %v1631 = vsel %vm1628, %v1629, %v1630
        %v1632 = vrot.slane %v1605, 1
        %v1633 = vrot.slane %v1609, 1
        %v1634 = vsel %vm1628, %v1632, %v1633
        %v1635 = vrot.slane %v1606, 1
        %v1636 = vrot.slane %v1610, 1
        %v1637 = vsel %vm1628, %v1635, %v1636
        %v1638 = vrot.slane %v1607, 1
        %v1639 = vrot.slane %v1611, 1
        %v1640 = vsel %vm1628, %v1638, %v1639
        %vm1653 = vcmask 1045504
        %v1654 = vrot.slane %v1612, 2
        %v1655 = vrot.slane %v1616, 2
        %v1656 = vsel %vm1653, %v1654, %v1655
        %v1657 = vrot.slane %v1613, 2
        %v1658 = vrot.slane %v1617, 2
        %v1659 = vsel %vm1653, %v1657, %v1658
        %v1660 = vrot.slane %v1614, 2
        %v1661 = vrot.slane %v1618, 2
        %v1662 = vsel %vm1653, %v1660, %v1661
        %v1663 = vrot.slane %v1615, 2
        %v1664 = vrot.slane %v1619, 2
        %v1665 = vsel %vm1653, %v1663, %v1664
        %v1670 = vld [vmem:[#allocation12] sm:$0xff]
        %v1671 = vld [vmem:[#allocation12 + $0x8] sm:$0xff]
        %v1672 = vld [vmem:[#allocation12 + $0x10] sm:$0xff]
        %v1673 = vld [vmem:[#allocation12 + $0x18] sm:$0xff]
        %v1674 = vld [vmem:[#allocation12 + $0x20] sm:$0xff]
        %v1675 = vld [vmem:[#allocation12 + $0x28] sm:$0xff]
        %v1676 = vld [vmem:[#allocation12 + $0x30] sm:$0xff]
        %v1677 = vld [vmem:[#allocation12 + $0x38] sm:$0xff]
        %v1678 = vld [vmem:[#allocation12 + $0x40] sm:$0xff]
        %v1679 = vld [vmem:[#allocation12 + $0x48] sm:$0xff]
        %v1680 = vld [vmem:[#allocation12 + $0x50] sm:$0xff]
        %v1681 = vld [vmem:[#allocation12 + $0x58] sm:$0xff]
        %v1682 = vld [vmem:[#allocation12 + $0x60] sm:$0xff]
        %v1683 = vld [vmem:[#allocation12 + $0x68] sm:$0xff]
        %v1684 = vld [vmem:[#allocation12 + $0x70] sm:$0xff]
        %v1685 = vld [vmem:[#allocation12 + $0x78] sm:$0xff]
        %v1686 = vld [vmem:[#allocation12 + $0x80] sm:$0xff]
        %v1687 = vld [vmem:[#allocation12 + $0x88] sm:$0xff]
        %v1688 = vld [vmem:[#allocation12 + $0x90] sm:$0xff]
        %v1689 = vld [vmem:[#allocation12 + $0x98] sm:$0xff]
        %v1690 = vld [vmem:[#allocation12 + $0xa0] sm:$0xff]
        %v1691 = vld [vmem:[#allocation12 + $0xa8] sm:$0xff]
        %v1692 = vld [vmem:[#allocation12 + $0xb0] sm:$0xff]
        %v1693 = vld [vmem:[#allocation12 + $0xb8] sm:$0xff]
        %v1694 = vld [vmem:[#allocation12 + $0xc0] sm:$0xff]
        %v1695 = vld [vmem:[#allocation12 + $0xc8] sm:$0xff]
        %v1696 = vld [vmem:[#allocation12 + $0xd0] sm:$0xff]
        %v1697 = vld [vmem:[#allocation12 + $0xd8] sm:$0xff]
        %v1698 = vld [vmem:[#allocation12 + $0xe0] sm:$0xff]
        %v1699 = vld [vmem:[#allocation12 + $0xe8] sm:$0xff]
        %v1700 = vld [vmem:[#allocation12 + $0xf0] sm:$0xff]
        %v1701 = vld [vmem:[#allocation12 + $0xf8] sm:$0xff]
        %v1702 = vld [vmem:[#allocation12 + $0x100] sm:$0xff]
        %v1703 = vld [vmem:[#allocation12 + $0x108] sm:$0xff]
        %v1704 = vld [vmem:[#allocation12 + $0x110] sm:$0xff]
        %v1705 = vld [vmem:[#allocation12 + $0x118] sm:$0xff]
        %v1706 = vld [vmem:[#allocation12 + $0x120] sm:$0xff]
        %v1707 = vld [vmem:[#allocation12 + $0x128] sm:$0xff]
        %v1708 = vld [vmem:[#allocation12 + $0x130] sm:$0xff]
        %v1709 = vld [vmem:[#allocation12 + $0x138] sm:$0xff]
        %v1710 = vld [vmem:[#allocation12 + $0x140] sm:$0xff]
        %v1711 = vld [vmem:[#allocation12 + $0x148] sm:$0xff]
        %v1712 = vld [vmem:[#allocation12 + $0x150] sm:$0xff]
        %v1713 = vld [vmem:[#allocation12 + $0x158] sm:$0xff]
        %v1714 = vld [vmem:[#allocation12 + $0x160] sm:$0xff]
        %v1715 = vld [vmem:[#allocation12 + $0x168] sm:$0xff]
        %v1716 = vld [vmem:[#allocation12 + $0x170] sm:$0xff]
        %v1717 = vld [vmem:[#allocation12 + $0x178] sm:$0xff]
        %v1718 = vld [vmem:[#allocation12 + $0x180] sm:$0xff]
        %v1719 = vld [vmem:[#allocation12 + $0x188] sm:$0xff]
        %v1720 = vld [vmem:[#allocation12 + $0x190] sm:$0xff]
        %v1721 = vld [vmem:[#allocation12 + $0x198] sm:$0xff]
        %v1722 = vld [vmem:[#allocation12 + $0x1a0] sm:$0xff]
        %v1723 = vld [vmem:[#allocation12 + $0x1a8] sm:$0xff]
        %v1724 = vld [vmem:[#allocation12 + $0x1b0] sm:$0xff]
        %v1725 = vld [vmem:[#allocation12 + $0x1b8] sm:$0xff]
        %v1726 = vld [vmem:[#allocation12 + $0x1c0] sm:$0xff]
        %v1727 = vld [vmem:[#allocation12 + $0x1c8] sm:$0xff]
        %v1728 = vld [vmem:[#allocation12 + $0x1d0] sm:$0xff]
        %v1729 = vld [vmem:[#allocation12 + $0x1d8] sm:$0xff]
        %v1730 = vld [vmem:[#allocation12 + $0x1e0] sm:$0xff]
        %v1731 = vld [vmem:[#allocation12 + $0x1e8] sm:$0xff]
        %v1732 = vld [vmem:[#allocation12 + $0x1f0] sm:$0xff]
        %v1733 = vld [vmem:[#allocation12 + $0x1f8] sm:$0xff]
        %v1734 = vld [vmem:[#allocation12 + $0x200] sm:$0xff]
        %v1735 = vld [vmem:[#allocation12 + $0x208] sm:$0xff]
        %v1736 = vld [vmem:[#allocation12 + $0x210] sm:$0xff]
        %v1737 = vld [vmem:[#allocation12 + $0x218] sm:$0xff]
        %v1738 = vld [vmem:[#allocation12 + $0x220] sm:$0xff]
        %v1739 = vld [vmem:[#allocation12 + $0x228] sm:$0xff]
        %v1740 = vld [vmem:[#allocation12 + $0x230] sm:$0xff]
        %v1741 = vld [vmem:[#allocation12 + $0x238] sm:$0xff]
        %v1742 = vld [vmem:[#allocation12 + $0x240] sm:$0xff]
        %v1743 = vld [vmem:[#allocation12 + $0x248] sm:$0xff]
        %v1744 = vld [vmem:[#allocation12 + $0x250] sm:$0xff]
        %v1745 = vld [vmem:[#allocation12 + $0x258] sm:$0xff]
        %v1746 = vld [vmem:[#allocation12 + $0x260] sm:$0xff]
        %v1747 = vld [vmem:[#allocation12 + $0x268] sm:$0xff]
        %v1748 = vld [vmem:[#allocation12 + $0x270] sm:$0xff]
        %v1749 = vld [vmem:[#allocation12 + $0x278] sm:$0xff]
        %v1750 = vld [vmem:[#allocation12 + $0x280] sm:$0xff]
        %v1751 = vld [vmem:[#allocation12 + $0x288] sm:$0xff]
        %v1752 = vld [vmem:[#allocation12 + $0x290] sm:$0xff]
        %v1753 = vld [vmem:[#allocation12 + $0x298] sm:$0xff]
        %v1754 = vld [vmem:[#allocation12 + $0x2a0] sm:$0xff]
        %v1755 = vld [vmem:[#allocation12 + $0x2a8] sm:$0xff]
        %v1756 = vld [vmem:[#allocation12 + $0x2b0] sm:$0xff]
        %v1757 = vld [vmem:[#allocation12 + $0x2b8] sm:$0xff]
        %v1758 = vld [vmem:[#allocation12 + $0x2c0] sm:$0xff]
        %v1759 = vld [vmem:[#allocation12 + $0x2c8] sm:$0xff]
        %v1760 = vld [vmem:[#allocation12 + $0x2d0] sm:$0xff]
        %v1761 = vld [vmem:[#allocation12 + $0x2d8] sm:$0xff]
        %v1762 = vld [vmem:[#allocation12 + $0x2e0] sm:$0xff]
        %v1763 = vld [vmem:[#allocation12 + $0x2e8] sm:$0xff]
        %v1764 = vld [vmem:[#allocation12 + $0x2f0] sm:$0xff]
        %v1765 = vld [vmem:[#allocation12 + $0x2f8] sm:$0xff]
        %v1766 = vld [vmem:[#allocation12 + $0x300] sm:$0xff]
        %v1767 = vld [vmem:[#allocation12 + $0x308] sm:$0xff]
        %v1768 = vld [vmem:[#allocation12 + $0x310] sm:$0xff]
        %v1769 = vld [vmem:[#allocation12 + $0x318] sm:$0xff]
        %v1770 = vld [vmem:[#allocation12 + $0x320] sm:$0xff]
        %v1771 = vld [vmem:[#allocation12 + $0x328] sm:$0xff]
        %v1772 = vld [vmem:[#allocation12 + $0x330] sm:$0xff]
        %v1773 = vld [vmem:[#allocation12 + $0x338] sm:$0xff]
        %v1774 = vld [vmem:[#allocation12 + $0x340] sm:$0xff]
        %v1775 = vld [vmem:[#allocation12 + $0x348] sm:$0xff]
        %v1776 = vld [vmem:[#allocation12 + $0x350] sm:$0xff]
        %v1777 = vld [vmem:[#allocation12 + $0x358] sm:$0xff]
        %v1778 = vld [vmem:[#allocation12 + $0x360] sm:$0xff]
        %v1779 = vld [vmem:[#allocation12 + $0x368] sm:$0xff]
        %v1780 = vld [vmem:[#allocation12 + $0x370] sm:$0xff]
        %v1781 = vld [vmem:[#allocation12 + $0x378] sm:$0xff]
        %v1782 = vld [vmem:[#allocation12 + $0x380] sm:$0xff]
        %v1783 = vld [vmem:[#allocation12 + $0x388] sm:$0xff]
        %v1784 = vld [vmem:[#allocation12 + $0x390] sm:$0xff]
        %v1785 = vld [vmem:[#allocation12 + $0x398] sm:$0xff]
        %v1786 = vld [vmem:[#allocation12 + $0x3a0] sm:$0xff]
        %v1787 = vld [vmem:[#allocation12 + $0x3a8] sm:$0xff]
        %v1788 = vld [vmem:[#allocation12 + $0x3b0] sm:$0xff]
        %v1789 = vld [vmem:[#allocation12 + $0x3b8] sm:$0xff]
        %v1790 = vld [vmem:[#allocation12 + $0x3c0] sm:$0xff]
        %v1791 = vld [vmem:[#allocation12 + $0x3c8] sm:$0xff]
        %v1792 = vld [vmem:[#allocation12 + $0x3d0] sm:$0xff]
        %v1793 = vld [vmem:[#allocation12 + $0x3d8] sm:$0xff]
        %v1794 = vld [vmem:[#allocation12 + $0x3e0] sm:$0xff]
        %v1795 = vld [vmem:[#allocation12 + $0x3e8] sm:$0xff]
        %v1796 = vld [vmem:[#allocation12 + $0x3f0] sm:$0xff]
        %v1797 = vld [vmem:[#allocation12 + $0x3f8] sm:$0xff]
        %v1798 = vld [vmem:[#allocation12 + $0x400] sm:$0xff]
        %v1799 = vld [vmem:[#allocation12 + $0x408] sm:$0xff]
        %v1800 = vld [vmem:[#allocation12 + $0x410] sm:$0xff]
        %v1801 = vld [vmem:[#allocation12 + $0x418] sm:$0xff]
        %v1802 = vld [vmem:[#allocation12 + $0x420] sm:$0xff]
        %v1803 = vld [vmem:[#allocation12 + $0x428] sm:$0xff]
        %v1804 = vld [vmem:[#allocation12 + $0x430] sm:$0xff]
        %v1805 = vld [vmem:[#allocation12 + $0x438] sm:$0xff]
        %v1806 = vld [vmem:[#allocation12 + $0x440] sm:$0xff]
        %v1807 = vld [vmem:[#allocation12 + $0x448] sm:$0xff]
        %v1808 = vld [vmem:[#allocation12 + $0x450] sm:$0xff]
        %v1809 = vld [vmem:[#allocation12 + $0x458] sm:$0xff]
        %v1810 = vld [vmem:[#allocation12 + $0x460] sm:$0xff]
        %v1811 = vld [vmem:[#allocation12 + $0x468] sm:$0xff]
        %v1812 = vld [vmem:[#allocation12 + $0x470] sm:$0xff]
        %v1813 = vld [vmem:[#allocation12 + $0x478] sm:$0xff]
        %v1814 = vld [vmem:[#allocation12 + $0x480] sm:$0xff]
        %v1815 = vld [vmem:[#allocation12 + $0x488] sm:$0xff]
        %v1816 = vld [vmem:[#allocation12 + $0x490] sm:$0xff]
        %v1817 = vld [vmem:[#allocation12 + $0x498] sm:$0xff]
        %v1818 = vld [vmem:[#allocation12 + $0x4a0] sm:$0xff]
        %v1819 = vld [vmem:[#allocation12 + $0x4a8] sm:$0xff]
        %v1820 = vld [vmem:[#allocation12 + $0x4b0] sm:$0xff]
        %v1821 = vld [vmem:[#allocation12 + $0x4b8] sm:$0xff]
        %v1822 = vld [vmem:[#allocation12 + $0x4c0] sm:$0xff]
        %v1823 = vld [vmem:[#allocation12 + $0x4c8] sm:$0xff]
        %v1824 = vld [vmem:[#allocation12 + $0x4d0] sm:$0xff]
        %v1825 = vld [vmem:[#allocation12 + $0x4d8] sm:$0xff]
        %v1826 = vld [vmem:[#allocation12 + $0x4e0] sm:$0xff]
        %v1827 = vld [vmem:[#allocation12 + $0x4e8] sm:$0xff]
        %v1828 = vld [vmem:[#allocation12 + $0x4f0] sm:$0xff]
        %v1829 = vld [vmem:[#allocation12 + $0x4f8] sm:$0xff]
        %v1830 = vld [vmem:[#allocation12 + $0x500] sm:$0xff]
        %v1831 = vld [vmem:[#allocation12 + $0x508] sm:$0xff]
        %v1832 = vld [vmem:[#allocation12 + $0x510] sm:$0xff]
        %v1833 = vld [vmem:[#allocation12 + $0x518] sm:$0xff]
        %v1834 = vld [vmem:[#allocation12 + $0x520] sm:$0xff]
        %v1835 = vld [vmem:[#allocation12 + $0x528] sm:$0xff]
        %v1836 = vld [vmem:[#allocation12 + $0x530] sm:$0xff]
        %v1837 = vld [vmem:[#allocation12 + $0x538] sm:$0xff]
        %v1838 = vld [vmem:[#allocation12 + $0x540] sm:$0xff]
        %v1839 = vld [vmem:[#allocation12 + $0x548] sm:$0xff]
        %v1840 = vld [vmem:[#allocation12 + $0x550] sm:$0xff]
        %v1841 = vld [vmem:[#allocation12 + $0x558] sm:$0xff]
        %v1842 = vld [vmem:[#allocation12 + $0x560] sm:$0xff]
        %v1843 = vld [vmem:[#allocation12 + $0x568] sm:$0xff]
        %v1844 = vld [vmem:[#allocation12 + $0x570] sm:$0xff]
        %v1845 = vld [vmem:[#allocation12 + $0x578] sm:$0xff]
        %v1846 = vld [vmem:[#allocation12 + $0x580] sm:$0xff]
        %v1847 = vld [vmem:[#allocation12 + $0x588] sm:$0xff]
        %v1848 = vld [vmem:[#allocation12 + $0x590] sm:$0xff]
        %v1849 = vld [vmem:[#allocation12 + $0x598] sm:$0xff]
        %v1850 = vld [vmem:[#allocation12 + $0x5a0] sm:$0xff]
        %v1851 = vld [vmem:[#allocation12 + $0x5a8] sm:$0xff]
        %v1852 = vld [vmem:[#allocation12 + $0x5b0] sm:$0xff]
        %v1853 = vld [vmem:[#allocation12 + $0x5b8] sm:$0xff]
        %v1854 = vld [vmem:[#allocation12 + $0x5c0] sm:$0xff]
        %v1855 = vld [vmem:[#allocation12 + $0x5c8] sm:$0xff]
        %v1856 = vld [vmem:[#allocation12 + $0x5d0] sm:$0xff]
        %v1857 = vld [vmem:[#allocation12 + $0x5d8] sm:$0xff]
        %v1858 = vld [vmem:[#allocation12 + $0x5e0] sm:$0xff]
        %v1859 = vld [vmem:[#allocation12 + $0x5e8] sm:$0xff]
        %v1860 = vld [vmem:[#allocation12 + $0x5f0] sm:$0xff]
        %v1861 = vld [vmem:[#allocation12 + $0x5f8] sm:$0xff]
        %v1862 = vld [vmem:[#allocation12 + $0x600] sm:$0xff]
        %v1863 = vld [vmem:[#allocation12 + $0x608] sm:$0xff]
        %v1864 = vld [vmem:[#allocation12 + $0x610] sm:$0xff]
        %v1865 = vld [vmem:[#allocation12 + $0x618] sm:$0xff]
        %v1866 = vld [vmem:[#allocation12 + $0x620] sm:$0xff]
        %v1867 = vld [vmem:[#allocation12 + $0x628] sm:$0xff]
        %v1868 = vld [vmem:[#allocation12 + $0x630] sm:$0xff]
        %v1869 = vld [vmem:[#allocation12 + $0x638] sm:$0xff]
        %v1870 = vld [vmem:[#allocation12 + $0x640] sm:$0xff]
        %v1871 = vld [vmem:[#allocation12 + $0x648] sm:$0xff]
        %v1872 = vld [vmem:[#allocation12 + $0x650] sm:$0xff]
        %v1873 = vld [vmem:[#allocation12 + $0x658] sm:$0xff]
        %v1874 = vld [vmem:[#allocation12 + $0x660] sm:$0xff]
        %v1875 = vld [vmem:[#allocation12 + $0x668] sm:$0xff]
        %v1876 = vld [vmem:[#allocation12 + $0x670] sm:$0xff]
        %v1877 = vld [vmem:[#allocation12 + $0x678] sm:$0xff]
        %v1878 = vld [vmem:[#allocation12 + $0x680] sm:$0xff]
        %v1879 = vld [vmem:[#allocation12 + $0x688] sm:$0xff]
        %v1880 = vld [vmem:[#allocation12 + $0x690] sm:$0xff]
        %v1881 = vld [vmem:[#allocation12 + $0x698] sm:$0xff]
        %v1882 = vld [vmem:[#allocation12 + $0x6a0] sm:$0xff]
        %v1883 = vld [vmem:[#allocation12 + $0x6a8] sm:$0xff]
        %v1884 = vld [vmem:[#allocation12 + $0x6b0] sm:$0xff]
        %v1885 = vld [vmem:[#allocation12 + $0x6b8] sm:$0xff]
        %v1886 = vld [vmem:[#allocation12 + $0x6c0] sm:$0xff]
        %v1887 = vld [vmem:[#allocation12 + $0x6c8] sm:$0xff]
        %v1888 = vld [vmem:[#allocation12 + $0x6d0] sm:$0xff]
        %v1889 = vld [vmem:[#allocation12 + $0x6d8] sm:$0xff]
        %v1890 = vld [vmem:[#allocation12 + $0x6e0] sm:$0xff]
        %v1891 = vld [vmem:[#allocation12 + $0x6e8] sm:$0xff]
        %v1892 = vld [vmem:[#allocation12 + $0x6f0] sm:$0xff]
        %v1893 = vld [vmem:[#allocation12 + $0x6f8] sm:$0xff]
        %v1894 = vld [vmem:[#allocation12 + $0x700] sm:$0xff]
        %v1895 = vld [vmem:[#allocation12 + $0x708] sm:$0xff]
        %v1896 = vld [vmem:[#allocation12 + $0x710] sm:$0xff]
        %v1897 = vld [vmem:[#allocation12 + $0x718] sm:$0xff]
        %v1898 = vld [vmem:[#allocation12 + $0x720] sm:$0xff]
        %v1899 = vld [vmem:[#allocation12 + $0x728] sm:$0xff]
        %v1900 = vld [vmem:[#allocation12 + $0x730] sm:$0xff]
        %v1901 = vld [vmem:[#allocation12 + $0x738] sm:$0xff]
        %v1902 = vld [vmem:[#allocation12 + $0x740] sm:$0xff]
        %v1903 = vld [vmem:[#allocation12 + $0x748] sm:$0xff]
        %v1904 = vld [vmem:[#allocation12 + $0x750] sm:$0xff]
        %v1905 = vld [vmem:[#allocation12 + $0x758] sm:$0xff]
        %v1906 = vld [vmem:[#allocation12 + $0x760] sm:$0xff]
        %v1907 = vld [vmem:[#allocation12 + $0x768] sm:$0xff]
        %v1908 = vld [vmem:[#allocation12 + $0x770] sm:$0xff]
        %v1909 = vld [vmem:[#allocation12 + $0x778] sm:$0xff]
        %v1910 = vld [vmem:[#allocation12 + $0x780] sm:$0xff]
        %v1911 = vld [vmem:[#allocation12 + $0x788] sm:$0xff]
        %v1912 = vld [vmem:[#allocation12 + $0x790] sm:$0xff]
        %v1913 = vld [vmem:[#allocation12 + $0x798] sm:$0xff]
        %v1914 = vld [vmem:[#allocation12 + $0x7a0] sm:$0xff]
        %v1915 = vld [vmem:[#allocation12 + $0x7a8] sm:$0xff]
        %v1916 = vld [vmem:[#allocation12 + $0x7b0] sm:$0xff]
        %v1917 = vld [vmem:[#allocation12 + $0x7b8] sm:$0xff]
        %v1918 = vld [vmem:[#allocation12 + $0x7c0] sm:$0xff]
        %v1919 = vld [vmem:[#allocation12 + $0x7c8] sm:$0xff]
        %v1920 = vld [vmem:[#allocation12 + $0x7d0] sm:$0xff]
        %v1921 = vld [vmem:[#allocation12 + $0x7d8] sm:$0xff]
        %v1922 = vld [vmem:[#allocation12 + $0x7e0] sm:$0xff]
        %v1923 = vld [vmem:[#allocation12 + $0x7e8] sm:$0xff]
        %v1924 = vld [vmem:[#allocation12 + $0x7f0] sm:$0xff]
        %v1925 = vld [vmem:[#allocation12 + $0x7f8] sm:$0xff]
        %v1926 = vld [vmem:[#allocation12 + $0x800] sm:$0xff]
        %v1927 = vld [vmem:[#allocation12 + $0x808] sm:$0xff]
        %v1928 = vld [vmem:[#allocation12 + $0x810] sm:$0xff]
        %v1929 = vld [vmem:[#allocation12 + $0x818] sm:$0xff]
        %v1930 = vld [vmem:[#allocation12 + $0x820] sm:$0xff]
        %v1931 = vld [vmem:[#allocation12 + $0x828] sm:$0xff]
        %v1932 = vld [vmem:[#allocation12 + $0x830] sm:$0xff]
        %v1933 = vld [vmem:[#allocation12 + $0x838] sm:$0xff]
        %v1934 = vld [vmem:[#allocation12 + $0x840] sm:$0xff]
        %v1935 = vld [vmem:[#allocation12 + $0x848] sm:$0xff]
        %v1936 = vld [vmem:[#allocation12 + $0x850] sm:$0xff]
        %v1937 = vld [vmem:[#allocation12 + $0x858] sm:$0xff]
        %v1938 = vld [vmem:[#allocation12 + $0x860] sm:$0xff]
        %v1939 = vld [vmem:[#allocation12 + $0x868] sm:$0xff]
        %v1940 = vld [vmem:[#allocation12 + $0x870] sm:$0xff]
        %v1941 = vld [vmem:[#allocation12 + $0x878] sm:$0xff]
        %v1942 = vld [vmem:[#allocation12 + $0x880] sm:$0xff]
        %v1943 = vld [vmem:[#allocation12 + $0x888] sm:$0xff]
        %v1944 = vld [vmem:[#allocation12 + $0x890] sm:$0xff]
        %v1945 = vld [vmem:[#allocation12 + $0x898] sm:$0xff]
        %v1946 = vld [vmem:[#allocation12 + $0x8a0] sm:$0xff]
        %v1947 = vld [vmem:[#allocation12 + $0x8a8] sm:$0xff]
        %v1948 = vld [vmem:[#allocation12 + $0x8b0] sm:$0xff]
        %v1949 = vld [vmem:[#allocation12 + $0x8b8] sm:$0xff]
        %v1950 = vld [vmem:[#allocation12 + $0x8c0] sm:$0xff]
        %v1951 = vld [vmem:[#allocation12 + $0x8c8] sm:$0xff]
        %v1952 = vld [vmem:[#allocation12 + $0x8d0] sm:$0xff]
        %v1953 = vld [vmem:[#allocation12 + $0x8d8] sm:$0xff]
        %v1954 = vld [vmem:[#allocation12 + $0x8e0] sm:$0xff]
        %v1955 = vld [vmem:[#allocation12 + $0x8e8] sm:$0xff]
        %v1956 = vld [vmem:[#allocation12 + $0x8f0] sm:$0xff]
        %v1957 = vld [vmem:[#allocation12 + $0x8f8] sm:$0xff]
        %v1958 = vld [vmem:[#allocation12 + $0x900] sm:$0xff]
        %v1959 = vld [vmem:[#allocation12 + $0x908] sm:$0xff]
        %v1960 = vld [vmem:[#allocation12 + $0x910] sm:$0xff]
        %v1961 = vld [vmem:[#allocation12 + $0x918] sm:$0xff]
        %v1962 = vld [vmem:[#allocation12 + $0x920] sm:$0xff]
        %v1963 = vld [vmem:[#allocation12 + $0x928] sm:$0xff]
        %v1964 = vld [vmem:[#allocation12 + $0x930] sm:$0xff]
        %v1965 = vld [vmem:[#allocation12 + $0x938] sm:$0xff]
        %v1966 = vld [vmem:[#allocation12 + $0x940] sm:$0xff]
        %v1967 = vld [vmem:[#allocation12 + $0x948] sm:$0xff]
        %v1968 = vld [vmem:[#allocation12 + $0x950] sm:$0xff]
        %v1969 = vld [vmem:[#allocation12 + $0x958] sm:$0xff]
        %v1970 = vld [vmem:[#allocation12 + $0x960] sm:$0xff]
        %v1971 = vld [vmem:[#allocation12 + $0x968] sm:$0xff]
        %v1972 = vld [vmem:[#allocation12 + $0x970] sm:$0xff]
        %v1973 = vld [vmem:[#allocation12 + $0x978] sm:$0xff]
        %v1974 = vld [vmem:[#allocation12 + $0x980] sm:$0xff]
        %v1975 = vld [vmem:[#allocation12 + $0x988] sm:$0xff]
        %v1976 = vld [vmem:[#allocation12 + $0x990] sm:$0xff]
        %v1977 = vld [vmem:[#allocation12 + $0x998] sm:$0xff]
        %v1978 = vld [vmem:[#allocation12 + $0x9a0] sm:$0xff]
        %v1979 = vld [vmem:[#allocation12 + $0x9a8] sm:$0xff]
        %v1980 = vld [vmem:[#allocation12 + $0x9b0] sm:$0xff]
        %v1981 = vld [vmem:[#allocation12 + $0x9b8] sm:$0xff]
        %v1982 = vld [vmem:[#allocation12 + $0x9c0] sm:$0xff]
        %v1983 = vld [vmem:[#allocation12 + $0x9c8] sm:$0xff]
        %v1984 = vld [vmem:[#allocation12 + $0x9d0] sm:$0xff]
        %v1985 = vld [vmem:[#allocation12 + $0x9d8] sm:$0xff]
        %v1986 = vld [vmem:[#allocation12 + $0x9e0] sm:$0xff]
        %v1987 = vld [vmem:[#allocation12 + $0x9e8] sm:$0xff]
        %v1988 = vld [vmem:[#allocation12 + $0x9f0] sm:$0xff]
        %v1989 = vld [vmem:[#allocation12 + $0x9f8] sm:$0xff]
        %v1990 = vld [vmem:[#allocation12 + $0xa00] sm:$0xff]
        %v1991 = vld [vmem:[#allocation12 + $0xa08] sm:$0xff]
        %v1992 = vld [vmem:[#allocation12 + $0xa10] sm:$0xff]
        %v1993 = vld [vmem:[#allocation12 + $0xa18] sm:$0xff]
        %v1994 = vld [vmem:[#allocation12 + $0xa20] sm:$0xff]
        %v1995 = vld [vmem:[#allocation12 + $0xa28] sm:$0xff]
        %v1996 = vld [vmem:[#allocation12 + $0xa30] sm:$0xff]
        %v1997 = vld [vmem:[#allocation12 + $0xa38] sm:$0xff]
        %v1998 = vld [vmem:[#allocation12 + $0xa40] sm:$0xff]
        %v1999 = vld [vmem:[#allocation12 + $0xa48] sm:$0xff]
        %v2000 = vld [vmem:[#allocation12 + $0xa50] sm:$0xff]
        %v2001 = vld [vmem:[#allocation12 + $0xa58] sm:$0xff]
        %v2002 = vld [vmem:[#allocation12 + $0xa60] sm:$0xff]
        %v2003 = vld [vmem:[#allocation12 + $0xa68] sm:$0xff]
        %v2004 = vld [vmem:[#allocation12 + $0xa70] sm:$0xff]
        %v2005 = vld [vmem:[#allocation12 + $0xa78] sm:$0xff]
        %v2006 = vld [vmem:[#allocation12 + $0xa80] sm:$0xff]
        %v2007 = vld [vmem:[#allocation12 + $0xa88] sm:$0xff]
        %v2008 = vld [vmem:[#allocation12 + $0xa90] sm:$0xff]
        %v2009 = vld [vmem:[#allocation12 + $0xa98] sm:$0xff]
        %v2010 = vld [vmem:[#allocation12 + $0xaa0] sm:$0xff]
        %v2011 = vld [vmem:[#allocation12 + $0xaa8] sm:$0xff]
        %v2012 = vld [vmem:[#allocation12 + $0xab0] sm:$0xff]
        %v2013 = vld [vmem:[#allocation12 + $0xab8] sm:$0xff]
        %v2014 = vld [vmem:[#allocation12 + $0xac0] sm:$0xff]
        %v2015 = vld [vmem:[#allocation12 + $0xac8] sm:$0xff]
        %v2016 = vld [vmem:[#allocation12 + $0xad0] sm:$0xff]
        %v2017 = vld [vmem:[#allocation12 + $0xad8] sm:$0xff]
        %v2018 = vld [vmem:[#allocation12 + $0xae0] sm:$0xff]
        %v2019 = vld [vmem:[#allocation12 + $0xae8] sm:$0xff]
        %v2020 = vld [vmem:[#allocation12 + $0xaf0] sm:$0xff]
        %v2021 = vld [vmem:[#allocation12 + $0xaf8] sm:$0xff]
        %v2022 = vld [vmem:[#allocation12 + $0xb00] sm:$0xff]
        %v2023 = vld [vmem:[#allocation12 + $0xb08] sm:$0xff]
        %v2024 = vld [vmem:[#allocation12 + $0xb10] sm:$0xff]
        %v2025 = vld [vmem:[#allocation12 + $0xb18] sm:$0xff]
        %v2026 = vld [vmem:[#allocation12 + $0xb20] sm:$0xff]
        %v2027 = vld [vmem:[#allocation12 + $0xb28] sm:$0xff]
        %v2028 = vld [vmem:[#allocation12 + $0xb30] sm:$0xff]
        %v2029 = vld [vmem:[#allocation12 + $0xb38] sm:$0xff]
        %v2030 = vld [vmem:[#allocation12 + $0xb40] sm:$0xff]
        %v2031 = vld [vmem:[#allocation12 + $0xb48] sm:$0xff]
        %v2032 = vld [vmem:[#allocation12 + $0xb50] sm:$0xff]
        %v2033 = vld [vmem:[#allocation12 + $0xb58] sm:$0xff]
        %v2034 = vld [vmem:[#allocation12 + $0xb60] sm:$0xff]
        %v2035 = vld [vmem:[#allocation12 + $0xb68] sm:$0xff]
        %v2036 = vld [vmem:[#allocation12 + $0xb70] sm:$0xff]
        %v2037 = vld [vmem:[#allocation12 + $0xb78] sm:$0xff]
        %v2038 = vld [vmem:[#allocation12 + $0xb80] sm:$0xff]
        %v2039 = vld [vmem:[#allocation12 + $0xb88] sm:$0xff]
        %v2040 = vld [vmem:[#allocation12 + $0xb90] sm:$0xff]
        %v2041 = vld [vmem:[#allocation12 + $0xb98] sm:$0xff]
        %v2042 = vld [vmem:[#allocation12 + $0xba0] sm:$0xff]
        %v2043 = vld [vmem:[#allocation12 + $0xba8] sm:$0xff]
        %v2044 = vld [vmem:[#allocation12 + $0xbb0] sm:$0xff]
        %v2045 = vld [vmem:[#allocation12 + $0xbb8] sm:$0xff]
        %v2046 = vld [vmem:[#allocation12 + $0xbc0] sm:$0xff]
        %v2047 = vld [vmem:[#allocation12 + $0xbc8] sm:$0xff]
        %v2048 = vld [vmem:[#allocation12 + $0xbd0] sm:$0xff]
        %v2049 = vld [vmem:[#allocation12 + $0xbd8] sm:$0xff]
        %v2050 = vld [vmem:[#allocation12 + $0xbe0] sm:$0xff]
        %v2051 = vld [vmem:[#allocation12 + $0xbe8] sm:$0xff]
        %v2052 = vld [vmem:[#allocation12 + $0xbf0] sm:$0xff]
        %v2053 = vld [vmem:[#allocation12 + $0xbf8] sm:$0xff]
        %v2054 = vld [vmem:[#allocation12 + $0xc00] sm:$0xff]
        %v2055 = vld [vmem:[#allocation12 + $0xc08] sm:$0xff]
        %v2056 = vld [vmem:[#allocation12 + $0xc10] sm:$0xff]
        %v2057 = vld [vmem:[#allocation12 + $0xc18] sm:$0xff]
        %v2058 = vld [vmem:[#allocation12 + $0xc20] sm:$0xff]
        %v2059 = vld [vmem:[#allocation12 + $0xc28] sm:$0xff]
        %v2060 = vld [vmem:[#allocation12 + $0xc30] sm:$0xff]
        %v2061 = vld [vmem:[#allocation12 + $0xc38] sm:$0xff]
        %v2062 = vld [vmem:[#allocation12 + $0xc40] sm:$0xff]
        %v2063 = vld [vmem:[#allocation12 + $0xc48] sm:$0xff]
        %v2064 = vld [vmem:[#allocation12 + $0xc50] sm:$0xff]
        %v2065 = vld [vmem:[#allocation12 + $0xc58] sm:$0xff]
        %v2066 = vld [vmem:[#allocation12 + $0xc60] sm:$0xff]
        %v2067 = vld [vmem:[#allocation12 + $0xc68] sm:$0xff]
        %v2068 = vld [vmem:[#allocation12 + $0xc70] sm:$0xff]
        %v2069 = vld [vmem:[#allocation12 + $0xc78] sm:$0xff]
        %v2070 = vld [vmem:[#allocation12 + $0xc80] sm:$0xff]
        %v2071 = vld [vmem:[#allocation12 + $0xc88] sm:$0xff]
        %v2072 = vld [vmem:[#allocation12 + $0xc90] sm:$0xff]
        %v2073 = vld [vmem:[#allocation12 + $0xc98] sm:$0xff]
        %v2074 = vld [vmem:[#allocation12 + $0xca0] sm:$0xff]
        %v2075 = vld [vmem:[#allocation12 + $0xca8] sm:$0xff]
        %v2076 = vld [vmem:[#allocation12 + $0xcb0] sm:$0xff]
        %v2077 = vld [vmem:[#allocation12 + $0xcb8] sm:$0xff]
        %v2078 = vld [vmem:[#allocation12 + $0xcc0] sm:$0xff]
        %v2079 = vld [vmem:[#allocation12 + $0xcc8] sm:$0xff]
        %v2080 = vld [vmem:[#allocation12 + $0xcd0] sm:$0xff]
        %v2081 = vld [vmem:[#allocation12 + $0xcd8] sm:$0xff]
        %v2082 = vld [vmem:[#allocation12 + $0xce0] sm:$0xff]
        %v2083 = vld [vmem:[#allocation12 + $0xce8] sm:$0xff]
        %v2084 = vld [vmem:[#allocation12 + $0xcf0] sm:$0xff]
        %v2085 = vld [vmem:[#allocation12 + $0xcf8] sm:$0xff]
        %v2086 = vld [vmem:[#allocation12 + $0xd00] sm:$0xff]
        %v2087 = vld [vmem:[#allocation12 + $0xd08] sm:$0xff]
        %v2088 = vld [vmem:[#allocation12 + $0xd10] sm:$0xff]
        %v2089 = vld [vmem:[#allocation12 + $0xd18] sm:$0xff]
        %v2090 = vld [vmem:[#allocation12 + $0xd20] sm:$0xff]
        %v2091 = vld [vmem:[#allocation12 + $0xd28] sm:$0xff]
        %v2092 = vld [vmem:[#allocation12 + $0xd30] sm:$0xff]
        %v2093 = vld [vmem:[#allocation12 + $0xd38] sm:$0xff]
        %v2094 = vld [vmem:[#allocation12 + $0xd40] sm:$0xff]
        %v2095 = vld [vmem:[#allocation12 + $0xd48] sm:$0xff]
        %v2096 = vld [vmem:[#allocation12 + $0xd50] sm:$0xff]
        %v2097 = vld [vmem:[#allocation12 + $0xd58] sm:$0xff]
        %v2098 = vld [vmem:[#allocation12 + $0xd60] sm:$0xff]
        %v2099 = vld [vmem:[#allocation12 + $0xd68] sm:$0xff]
        %v2100 = vld [vmem:[#allocation12 + $0xd70] sm:$0xff]
        %v2101 = vld [vmem:[#allocation12 + $0xd78] sm:$0xff]
        %v2102 = vld [vmem:[#allocation12 + $0xd80] sm:$0xff]
        %v2103 = vld [vmem:[#allocation12 + $0xd88] sm:$0xff]
        %v2104 = vld [vmem:[#allocation12 + $0xd90] sm:$0xff]
        %v2105 = vld [vmem:[#allocation12 + $0xd98] sm:$0xff]
        %v2106 = vld [vmem:[#allocation12 + $0xda0] sm:$0xff]
        %v2107 = vld [vmem:[#allocation12 + $0xda8] sm:$0xff]
        %v2108 = vld [vmem:[#allocation12 + $0xdb0] sm:$0xff]
        %v2109 = vld [vmem:[#allocation12 + $0xdb8] sm:$0xff]
        %v2110 = vld [vmem:[#allocation12 + $0xdc0] sm:$0xff]
        %v2111 = vld [vmem:[#allocation12 + $0xdc8] sm:$0xff]
        %v2112 = vld [vmem:[#allocation12 + $0xdd0] sm:$0xff]
        %v2113 = vld [vmem:[#allocation12 + $0xdd8] sm:$0xff]
        %v2114 = vld [vmem:[#allocation12 + $0xde0] sm:$0xff]
        %v2115 = vld [vmem:[#allocation12 + $0xde8] sm:$0xff]
        %v2116 = vld [vmem:[#allocation12 + $0xdf0] sm:$0xff]
        %v2117 = vld [vmem:[#allocation12 + $0xdf8] sm:$0xff]
        %v2118 = vld [vmem:[#allocation12 + $0xe00] sm:$0xff]
        %v2119 = vld [vmem:[#allocation12 + $0xe08] sm:$0xff]
        %v2120 = vld [vmem:[#allocation12 + $0xe10] sm:$0xff]
        %v2121 = vld [vmem:[#allocation12 + $0xe18] sm:$0xff]
        %v2122 = vld [vmem:[#allocation12 + $0xe20] sm:$0xff]
        %v2123 = vld [vmem:[#allocation12 + $0xe28] sm:$0xff]
        %v2124 = vld [vmem:[#allocation12 + $0xe30] sm:$0xff]
        %v2125 = vld [vmem:[#allocation12 + $0xe38] sm:$0xff]
        %v2126 = vld [vmem:[#allocation12 + $0xe40] sm:$0xff]
        %v2127 = vld [vmem:[#allocation12 + $0xe48] sm:$0xff]
        %v2128 = vld [vmem:[#allocation12 + $0xe50] sm:$0xff]
        %v2129 = vld [vmem:[#allocation12 + $0xe58] sm:$0xff]
        %v2130 = vld [vmem:[#allocation12 + $0xe60] sm:$0xff]
        %v2131 = vld [vmem:[#allocation12 + $0xe68] sm:$0xff]
        %v2132 = vld [vmem:[#allocation12 + $0xe70] sm:$0xff]
        %v2133 = vld [vmem:[#allocation12 + $0xe78] sm:$0xff]
        %v2134 = vld [vmem:[#allocation12 + $0xe80] sm:$0xff]
        %v2135 = vld [vmem:[#allocation12 + $0xe88] sm:$0xff]
        %v2136 = vld [vmem:[#allocation12 + $0xe90] sm:$0xff]
        %v2137 = vld [vmem:[#allocation12 + $0xe98] sm:$0xff]
        %v2138 = vld [vmem:[#allocation12 + $0xea0] sm:$0xff]
        %v2139 = vld [vmem:[#allocation12 + $0xea8] sm:$0xff]
        %v2140 = vld [vmem:[#allocation12 + $0xeb0] sm:$0xff]
        %v2141 = vld [vmem:[#allocation12 + $0xeb8] sm:$0xff]
        %v2142 = vld [vmem:[#allocation12 + $0xec0] sm:$0xff]
        %v2143 = vld [vmem:[#allocation12 + $0xec8] sm:$0xff]
        %v2144 = vld [vmem:[#allocation12 + $0xed0] sm:$0xff]
        %v2145 = vld [vmem:[#allocation12 + $0xed8] sm:$0xff]
        %v2146 = vld [vmem:[#allocation12 + $0xee0] sm:$0xff]
        %v2147 = vld [vmem:[#allocation12 + $0xee8] sm:$0xff]
        %v2148 = vld [vmem:[#allocation12 + $0xef0] sm:$0xff]
        %v2149 = vld [vmem:[#allocation12 + $0xef8] sm:$0xff]
        %v2150 = vld [vmem:[#allocation12 + $0xf00] sm:$0xff]
        %v2151 = vld [vmem:[#allocation12 + $0xf08] sm:$0xff]
        %v2152 = vld [vmem:[#allocation12 + $0xf10] sm:$0xff]
        %v2153 = vld [vmem:[#allocation12 + $0xf18] sm:$0xff]
        %v2154 = vld [vmem:[#allocation12 + $0xf20] sm:$0xff]
        %v2155 = vld [vmem:[#allocation12 + $0xf28] sm:$0xff]
        %v2156 = vld [vmem:[#allocation12 + $0xf30] sm:$0xff]
        %v2157 = vld [vmem:[#allocation12 + $0xf38] sm:$0xff]
        %v2158 = vld [vmem:[#allocation12 + $0xf40] sm:$0xff]
        %v2159 = vld [vmem:[#allocation12 + $0xf48] sm:$0xff]
        %v2160 = vld [vmem:[#allocation12 + $0xf50] sm:$0xff]
        %v2161 = vld [vmem:[#allocation12 + $0xf58] sm:$0xff]
        %v2162 = vld [vmem:[#allocation12 + $0xf60] sm:$0xff]
        %v2163 = vld [vmem:[#allocation12 + $0xf68] sm:$0xff]
        %v2164 = vld [vmem:[#allocation12 + $0xf70] sm:$0xff]
        %v2165 = vld [vmem:[#allocation12 + $0xf78] sm:$0xff]
        %v2166 = vld [vmem:[#allocation12 + $0xf80] sm:$0xff]
        %v2167 = vld [vmem:[#allocation12 + $0xf88] sm:$0xff]
        %v2168 = vld [vmem:[#allocation12 + $0xf90] sm:$0xff]
        %v2169 = vld [vmem:[#allocation12 + $0xf98] sm:$0xff]
        %v2170 = vld [vmem:[#allocation12 + $0xfa0] sm:$0xff]
        %v2171 = vld [vmem:[#allocation12 + $0xfa8] sm:$0xff]
        %v2172 = vld [vmem:[#allocation12 + $0xfb0] sm:$0xff]
        %v2173 = vld [vmem:[#allocation12 + $0xfb8] sm:$0xff]
        %v2174 = vld [vmem:[#allocation12 + $0xfc0] sm:$0xff]
        %v2175 = vld [vmem:[#allocation12 + $0xfc8] sm:$0xff]
        %v2176 = vld [vmem:[#allocation12 + $0xfd0] sm:$0xff]
        %v2177 = vld [vmem:[#allocation12 + $0xfd8] sm:$0xff]
        %v2178 = vld [vmem:[#allocation12 + $0xfe0] sm:$0xff]
        %v2179 = vld [vmem:[#allocation12 + $0xfe8] sm:$0xff]
        %v2180 = vld [vmem:[#allocation12 + $0xff0] sm:$0xff]
        %v2181 = vld [vmem:[#allocation12 + $0xff8] sm:$0xff]
        %v2182 = vld [vmem:[#allocation12 + $0x1000] sm:$0xff]
        %v2183 = vld [vmem:[#allocation12 + $0x1008] sm:$0xff]
        %v2184 = vld [vmem:[#allocation12 + $0x1010] sm:$0xff]
        %v2185 = vld [vmem:[#allocation12 + $0x1018] sm:$0xff]
        %v2186 = vld [vmem:[#allocation12 + $0x1020] sm:$0xff]
        %v2187 = vld [vmem:[#allocation12 + $0x1028] sm:$0xff]
        %v2188 = vld [vmem:[#allocation12 + $0x1030] sm:$0xff]
        %v2189 = vld [vmem:[#allocation12 + $0x1038] sm:$0xff]
        %v2190 = vld [vmem:[#allocation12 + $0x1040] sm:$0xff]
        %v2191 = vld [vmem:[#allocation12 + $0x1048] sm:$0xff]
        %v2192 = vld [vmem:[#allocation12 + $0x1050] sm:$0xff]
        %v2193 = vld [vmem:[#allocation12 + $0x1058] sm:$0xff]
        %v2194 = vld [vmem:[#allocation12 + $0x1060] sm:$0xff]
        %v2195 = vld [vmem:[#allocation12 + $0x1068] sm:$0xff]
        %v2196 = vld [vmem:[#allocation12 + $0x1070] sm:$0xff]
        %v2197 = vld [vmem:[#allocation12 + $0x1078] sm:$0xff]
        %v2198 = vld [vmem:[#allocation12 + $0x1080] sm:$0xff]
        %v2199 = vld [vmem:[#allocation12 + $0x1088] sm:$0xff]
        %v2200 = vld [vmem:[#allocation12 + $0x1090] sm:$0xff]
        %v2201 = vld [vmem:[#allocation12 + $0x1098] sm:$0xff]
        %v2202 = vld [vmem:[#allocation12 + $0x10a0] sm:$0xff]
        %v2203 = vld [vmem:[#allocation12 + $0x10a8] sm:$0xff]
        %v2204 = vld [vmem:[#allocation12 + $0x10b0] sm:$0xff]
        %v2205 = vld [vmem:[#allocation12 + $0x10b8] sm:$0xff]
        %v2206 = vld [vmem:[#allocation12 + $0x10c0] sm:$0xff]
        %v2207 = vld [vmem:[#allocation12 + $0x10c8] sm:$0xff]
        %v2208 = vld [vmem:[#allocation12 + $0x10d0] sm:$0xff]
        %v2209 = vld [vmem:[#allocation12 + $0x10d8] sm:$0xff]
        %v2210 = vld [vmem:[#allocation12 + $0x10e0] sm:$0xff]
        %v2211 = vld [vmem:[#allocation12 + $0x10e8] sm:$0xff]
        %v2212 = vld [vmem:[#allocation12 + $0x10f0] sm:$0xff]
        %v2213 = vld [vmem:[#allocation12 + $0x10f8] sm:$0xff]
        %v2214 = vld [vmem:[#allocation12 + $0x1100] sm:$0xff]
        %v2215 = vld [vmem:[#allocation12 + $0x1108] sm:$0xff]
        %v2216 = vld [vmem:[#allocation12 + $0x1110] sm:$0xff]
        %v2217 = vld [vmem:[#allocation12 + $0x1118] sm:$0xff]
        %v2218 = vld [vmem:[#allocation12 + $0x1120] sm:$0xff]
        %v2219 = vld [vmem:[#allocation12 + $0x1128] sm:$0xff]
        %v2220 = vld [vmem:[#allocation12 + $0x1130] sm:$0xff]
        %v2221 = vld [vmem:[#allocation12 + $0x1138] sm:$0xff]
        %v2222 = vld [vmem:[#allocation12 + $0x1140] sm:$0xff]
        %v2223 = vld [vmem:[#allocation12 + $0x1148] sm:$0xff]
        %v2224 = vld [vmem:[#allocation12 + $0x1150] sm:$0xff]
        %v2225 = vld [vmem:[#allocation12 + $0x1158] sm:$0xff]
        %v2226 = vld [vmem:[#allocation12 + $0x1160] sm:$0xff]
        %v2227 = vld [vmem:[#allocation12 + $0x1168] sm:$0xff]
        %v2228 = vld [vmem:[#allocation12 + $0x1170] sm:$0xff]
        %v2229 = vld [vmem:[#allocation12 + $0x1178] sm:$0xff]
        %v2230 = vld [vmem:[#allocation12 + $0x1180] sm:$0xff]
        %v2231 = vld [vmem:[#allocation12 + $0x1188] sm:$0xff]
        %v2232 = vld [vmem:[#allocation12 + $0x1190] sm:$0xff]
        %v2233 = vld [vmem:[#allocation12 + $0x1198] sm:$0xff]
        %v2234 = vld [vmem:[#allocation12 + $0x11a0] sm:$0xff]
        %v2235 = vld [vmem:[#allocation12 + $0x11a8] sm:$0xff]
        %v2236 = vld [vmem:[#allocation12 + $0x11b0] sm:$0xff]
        %v2237 = vld [vmem:[#allocation12 + $0x11b8] sm:$0xff]
        %v2238 = vld [vmem:[#allocation12 + $0x11c0] sm:$0xff]
        %v2239 = vld [vmem:[#allocation12 + $0x11c8] sm:$0xff]
        %v2240 = vld [vmem:[#allocation12 + $0x11d0] sm:$0xff]
        %v2241 = vld [vmem:[#allocation12 + $0x11d8] sm:$0xff]
        %v2242 = vld [vmem:[#allocation12 + $0x11e0] sm:$0xff]
        %v2243 = vld [vmem:[#allocation12 + $0x11e8] sm:$0xff]
        %v2244 = vld [vmem:[#allocation12 + $0x11f0] sm:$0xff]
        %v2245 = vld [vmem:[#allocation12 + $0x11f8] sm:$0xff]
        %v2246 = vld [vmem:[#allocation12 + $0x1200] sm:$0xff]
        %v2247 = vld [vmem:[#allocation12 + $0x1208] sm:$0xff]
        %v2248 = vld [vmem:[#allocation12 + $0x1210] sm:$0xff]
        %v2249 = vld [vmem:[#allocation12 + $0x1218] sm:$0xff]
        %v2250 = vld [vmem:[#allocation12 + $0x1220] sm:$0xff]
        %v2251 = vld [vmem:[#allocation12 + $0x1228] sm:$0xff]
        %v2252 = vld [vmem:[#allocation12 + $0x1230] sm:$0xff]
        %v2253 = vld [vmem:[#allocation12 + $0x1238] sm:$0xff]
        %v2254 = vld [vmem:[#allocation12 + $0x1240] sm:$0xff]
        %v2255 = vld [vmem:[#allocation12 + $0x1248] sm:$0xff]
        %v2256 = vld [vmem:[#allocation12 + $0x1250] sm:$0xff]
        %v2257 = vld [vmem:[#allocation12 + $0x1258] sm:$0xff]
        %v2258 = vld [vmem:[#allocation12 + $0x1260] sm:$0xff]
        %v2259 = vld [vmem:[#allocation12 + $0x1268] sm:$0xff]
        %v2260 = vld [vmem:[#allocation12 + $0x1270] sm:$0xff]
        %v2261 = vld [vmem:[#allocation12 + $0x1278] sm:$0xff]
        %v2262 = vld [vmem:[#allocation12 + $0x1280] sm:$0xff]
        %v2263 = vld [vmem:[#allocation12 + $0x1288] sm:$0xff]
        %v2264 = vld [vmem:[#allocation12 + $0x1290] sm:$0xff]
        %v2265 = vld [vmem:[#allocation12 + $0x1298] sm:$0xff]
        %v2266 = vld [vmem:[#allocation12 + $0x12a0] sm:$0xff]
        %v2267 = vld [vmem:[#allocation12 + $0x12a8] sm:$0xff]
        %v2268 = vld [vmem:[#allocation12 + $0x12b0] sm:$0xff]
        %v2269 = vld [vmem:[#allocation12 + $0x12b8] sm:$0xff]
        %v2270 = vld [vmem:[#allocation12 + $0x12c0] sm:$0xff]
        %v2271 = vld [vmem:[#allocation12 + $0x12c8] sm:$0xff]
        %v2272 = vld [vmem:[#allocation12 + $0x12d0] sm:$0xff]
        %v2273 = vld [vmem:[#allocation12 + $0x12d8] sm:$0xff]
        %v2274 = vld [vmem:[#allocation12 + $0x12e0] sm:$0xff]
        %v2275 = vld [vmem:[#allocation12 + $0x12e8] sm:$0xff]
        %v2276 = vld [vmem:[#allocation12 + $0x12f0] sm:$0xff]
        %v2277 = vld [vmem:[#allocation12 + $0x12f8] sm:$0xff]
        %v2278 = vld [vmem:[#allocation12 + $0x1300] sm:$0xff]
        %v2279 = vld [vmem:[#allocation12 + $0x1308] sm:$0xff]
        %v2280 = vld [vmem:[#allocation12 + $0x1310] sm:$0xff]
        %v2281 = vld [vmem:[#allocation12 + $0x1318] sm:$0xff]
        %v2282 = vld [vmem:[#allocation12 + $0x1320] sm:$0xff]
        %v2283 = vld [vmem:[#allocation12 + $0x1328] sm:$0xff]
        %v2284 = vld [vmem:[#allocation12 + $0x1330] sm:$0xff]
        %v2285 = vld [vmem:[#allocation12 + $0x1338] sm:$0xff]
        %v2286 = vld [vmem:[#allocation12 + $0x1340] sm:$0xff]
        %v2287 = vld [vmem:[#allocation12 + $0x1348] sm:$0xff]
        %v2288 = vld [vmem:[#allocation12 + $0x1350] sm:$0xff]
        %v2289 = vld [vmem:[#allocation12 + $0x1358] sm:$0xff]
        %v2290 = vld [vmem:[#allocation12 + $0x1360] sm:$0xff]
        %v2291 = vld [vmem:[#allocation12 + $0x1368] sm:$0xff]
        %v2292 = vld [vmem:[#allocation12 + $0x1370] sm:$0xff]
        %v2293 = vld [vmem:[#allocation12 + $0x1378] sm:$0xff]
        %v2294 = vld [vmem:[#allocation12 + $0x1380] sm:$0xff]
        %v2295 = vld [vmem:[#allocation12 + $0x1388] sm:$0xff]
        %v2296 = vld [vmem:[#allocation12 + $0x1390] sm:$0xff]
        %v2297 = vld [vmem:[#allocation12 + $0x1398] sm:$0xff]
        %v2298 = vld [vmem:[#allocation12 + $0x13a0] sm:$0xff]
        %v2299 = vld [vmem:[#allocation12 + $0x13a8] sm:$0xff]
        %v2300 = vld [vmem:[#allocation12 + $0x13b0] sm:$0xff]
        %v2301 = vld [vmem:[#allocation12 + $0x13b8] sm:$0xff]
        %v2302 = vld [vmem:[#allocation12 + $0x13c0] sm:$0xff]
        %v2303 = vld [vmem:[#allocation12 + $0x13c8] sm:$0xff]
        %v2304 = vld [vmem:[#allocation12 + $0x13d0] sm:$0xff]
        %v2305 = vld [vmem:[#allocation12 + $0x13d8] sm:$0xff]
        %v2306 = vld [vmem:[#allocation12 + $0x13e0] sm:$0xff]
        %v2307 = vld [vmem:[#allocation12 + $0x13e8] sm:$0xff]
        %v2308 = vld [vmem:[#allocation12 + $0x13f0] sm:$0xff]
        %v2309 = vld [vmem:[#allocation12 + $0x13f8] sm:$0xff]
        %v2310 = vld [vmem:[#allocation12 + $0x1400] sm:$0xff]
        %v2311 = vld [vmem:[#allocation12 + $0x1408] sm:$0xff]
        %v2312 = vld [vmem:[#allocation12 + $0x1410] sm:$0xff]
        %v2313 = vld [vmem:[#allocation12 + $0x1418] sm:$0xff]
        %v2314 = vld [vmem:[#allocation12 + $0x1420] sm:$0xff]
        %v2315 = vld [vmem:[#allocation12 + $0x1428] sm:$0xff]
        %v2316 = vld [vmem:[#allocation12 + $0x1430] sm:$0xff]
        %v2317 = vld [vmem:[#allocation12 + $0x1438] sm:$0xff]
        %v2318 = vld [vmem:[#allocation12 + $0x1440] sm:$0xff]
        %v2319 = vld [vmem:[#allocation12 + $0x1448] sm:$0xff]
        %v2320 = vld [vmem:[#allocation12 + $0x1450] sm:$0xff]
        %v2321 = vld [vmem:[#allocation12 + $0x1458] sm:$0xff]
        %v2322 = vld [vmem:[#allocation12 + $0x1460] sm:$0xff]
        %v2323 = vld [vmem:[#allocation12 + $0x1468] sm:$0xff]
        %v2324 = vld [vmem:[#allocation12 + $0x1470] sm:$0xff]
        %v2325 = vld [vmem:[#allocation12 + $0x1478] sm:$0xff]
        %v2326 = vld [vmem:[#allocation12 + $0x1480] sm:$0xff]
        %v2327 = vld [vmem:[#allocation12 + $0x1488] sm:$0xff]
        %v2328 = vld [vmem:[#allocation12 + $0x1490] sm:$0xff]
        %v2329 = vld [vmem:[#allocation12 + $0x1498] sm:$0xff]
        %v2330 = vld [vmem:[#allocation12 + $0x14a0] sm:$0xff]
        %v2331 = vld [vmem:[#allocation12 + $0x14a8] sm:$0xff]
        %v2332 = vld [vmem:[#allocation12 + $0x14b0] sm:$0xff]
        %v2333 = vld [vmem:[#allocation12 + $0x14b8] sm:$0xff]
        %v2334 = vld [vmem:[#allocation12 + $0x14c0] sm:$0xff]
        %v2335 = vld [vmem:[#allocation12 + $0x14c8] sm:$0xff]
        %v2336 = vld [vmem:[#allocation12 + $0x14d0] sm:$0xff]
        %v2337 = vld [vmem:[#allocation12 + $0x14d8] sm:$0xff]
        %v2338 = vld [vmem:[#allocation12 + $0x14e0] sm:$0xff]
        %v2339 = vld [vmem:[#allocation12 + $0x14e8] sm:$0xff]
        %v2340 = vld [vmem:[#allocation12 + $0x14f0] sm:$0xff]
        %v2341 = vld [vmem:[#allocation12 + $0x14f8] sm:$0xff]
        %v2342 = vld [vmem:[#allocation12 + $0x1500] sm:$0xff]
        %v2343 = vld [vmem:[#allocation12 + $0x1508] sm:$0xff]
        %v2344 = vld [vmem:[#allocation12 + $0x1510] sm:$0xff]
        %v2345 = vld [vmem:[#allocation12 + $0x1518] sm:$0xff]
        %v2346 = vld [vmem:[#allocation12 + $0x1520] sm:$0xff]
        %v2347 = vld [vmem:[#allocation12 + $0x1528] sm:$0xff]
        %v2348 = vld [vmem:[#allocation12 + $0x1530] sm:$0xff]
        %v2349 = vld [vmem:[#allocation12 + $0x1538] sm:$0xff]
        %v2350 = vld [vmem:[#allocation12 + $0x1540] sm:$0xff]
        %v2351 = vld [vmem:[#allocation12 + $0x1548] sm:$0xff]
        %v2352 = vld [vmem:[#allocation12 + $0x1550] sm:$0xff]
        %v2353 = vld [vmem:[#allocation12 + $0x1558] sm:$0xff]
        %v2354 = vld [vmem:[#allocation12 + $0x1560] sm:$0xff]
        %v2355 = vld [vmem:[#allocation12 + $0x1568] sm:$0xff]
        %v2356 = vld [vmem:[#allocation12 + $0x1570] sm:$0xff]
        %v2357 = vld [vmem:[#allocation12 + $0x1578] sm:$0xff]
        %v2358 = vld [vmem:[#allocation12 + $0x1580] sm:$0xff]
        %v2359 = vld [vmem:[#allocation12 + $0x1588] sm:$0xff]
        %v2360 = vld [vmem:[#allocation12 + $0x1590] sm:$0xff]
        %v2361 = vld [vmem:[#allocation12 + $0x1598] sm:$0xff]
        %v2362 = vld [vmem:[#allocation12 + $0x15a0] sm:$0xff]
        %v2363 = vld [vmem:[#allocation12 + $0x15a8] sm:$0xff]
        %v2364 = vld [vmem:[#allocation12 + $0x15b0] sm:$0xff]
        %v2365 = vld [vmem:[#allocation12 + $0x15b8] sm:$0xff]
        %v2366 = vld [vmem:[#allocation12 + $0x15c0] sm:$0xff]
        %v2367 = vld [vmem:[#allocation12 + $0x15c8] sm:$0xff]
        %v2368 = vld [vmem:[#allocation12 + $0x15d0] sm:$0xff]
        %v2369 = vld [vmem:[#allocation12 + $0x15d8] sm:$0xff]
        %v2370 = vld [vmem:[#allocation12 + $0x15e0] sm:$0xff]
        %v2371 = vld [vmem:[#allocation12 + $0x15e8] sm:$0xff]
        %v2372 = vld [vmem:[#allocation12 + $0x15f0] sm:$0xff]
        %v2373 = vld [vmem:[#allocation12 + $0x15f8] sm:$0xff]
        %v2374 = vld [vmem:[#allocation12 + $0x1600] sm:$0xff]
        %v2375 = vld [vmem:[#allocation12 + $0x1608] sm:$0xff]
        %v2376 = vld [vmem:[#allocation12 + $0x1610] sm:$0xff]
        %v2377 = vld [vmem:[#allocation12 + $0x1618] sm:$0xff]
        %v2378 = vld [vmem:[#allocation12 + $0x1620] sm:$0xff]
        %v2379 = vld [vmem:[#allocation12 + $0x1628] sm:$0xff]
        %v2380 = vld [vmem:[#allocation12 + $0x1630] sm:$0xff]
        %v2381 = vld [vmem:[#allocation12 + $0x1638] sm:$0xff]
        %v2382 = vld [vmem:[#allocation12 + $0x1640] sm:$0xff]
        %v2383 = vld [vmem:[#allocation12 + $0x1648] sm:$0xff]
        %v2384 = vld [vmem:[#allocation12 + $0x1650] sm:$0xff]
        %v2385 = vld [vmem:[#allocation12 + $0x1658] sm:$0xff]
        %v2386 = vld [vmem:[#allocation12 + $0x1660] sm:$0xff]
        %v2387 = vld [vmem:[#allocation12 + $0x1668] sm:$0xff]
        %v2388 = vld [vmem:[#allocation12 + $0x1670] sm:$0xff]
        %v2389 = vld [vmem:[#allocation12 + $0x1678] sm:$0xff]
        %v2390 = vld [vmem:[#allocation12 + $0x1680] sm:$0xff]
        %v2391 = vld [vmem:[#allocation12 + $0x1688] sm:$0xff]
        %v2392 = vld [vmem:[#allocation12 + $0x1690] sm:$0xff]
        %v2393 = vld [vmem:[#allocation12 + $0x1698] sm:$0xff]
        %v2394 = vld [vmem:[#allocation12 + $0x16a0] sm:$0xff]
        %v2395 = vld [vmem:[#allocation12 + $0x16a8] sm:$0xff]
        %v2396 = vld [vmem:[#allocation12 + $0x16b0] sm:$0xff]
        %v2397 = vld [vmem:[#allocation12 + $0x16b8] sm:$0xff]
        %v2398 = vld [vmem:[#allocation12 + $0x16c0] sm:$0xff]
        %v2399 = vld [vmem:[#allocation12 + $0x16c8] sm:$0xff]
        %v2400 = vld [vmem:[#allocation12 + $0x16d0] sm:$0xff]
        %v2401 = vld [vmem:[#allocation12 + $0x16d8] sm:$0xff]
        %v2402 = vld [vmem:[#allocation12 + $0x16e0] sm:$0xff]
        %v2403 = vld [vmem:[#allocation12 + $0x16e8] sm:$0xff]
        %v2404 = vld [vmem:[#allocation12 + $0x16f0] sm:$0xff]
        %v2405 = vld [vmem:[#allocation12 + $0x16f8] sm:$0xff]
        %v2406 = vld [vmem:[#allocation12 + $0x1700] sm:$0xff]
        %v2407 = vld [vmem:[#allocation12 + $0x1708] sm:$0xff]
        %v2408 = vld [vmem:[#allocation12 + $0x1710] sm:$0xff]
        %v2409 = vld [vmem:[#allocation12 + $0x1718] sm:$0xff]
        %v2410 = vld [vmem:[#allocation12 + $0x1720] sm:$0xff]
        %v2411 = vld [vmem:[#allocation12 + $0x1728] sm:$0xff]
        %v2412 = vld [vmem:[#allocation12 + $0x1730] sm:$0xff]
        %v2413 = vld [vmem:[#allocation12 + $0x1738] sm:$0xff]
        %v2414 = vld [vmem:[#allocation12 + $0x1740] sm:$0xff]
        %v2415 = vld [vmem:[#allocation12 + $0x1748] sm:$0xff]
        %v2416 = vld [vmem:[#allocation12 + $0x1750] sm:$0xff]
        %v2417 = vld [vmem:[#allocation12 + $0x1758] sm:$0xff]
        %v2418 = vld [vmem:[#allocation12 + $0x1760] sm:$0xff]
        %v2419 = vld [vmem:[#allocation12 + $0x1768] sm:$0xff]
        %v2420 = vld [vmem:[#allocation12 + $0x1770] sm:$0xff]
        %v2421 = vld [vmem:[#allocation12 + $0x1778] sm:$0xff]
        %v2422 = vld [vmem:[#allocation12 + $0x1780] sm:$0xff]
        %v2423 = vld [vmem:[#allocation12 + $0x1788] sm:$0xff]
        %v2424 = vld [vmem:[#allocation12 + $0x1790] sm:$0xff]
        %v2425 = vld [vmem:[#allocation12 + $0x1798] sm:$0xff]
        %v2426 = vld [vmem:[#allocation12 + $0x17a0] sm:$0xff]
        %v2427 = vld [vmem:[#allocation12 + $0x17a8] sm:$0xff]
        %v2428 = vld [vmem:[#allocation12 + $0x17b0] sm:$0xff]
        %v2429 = vld [vmem:[#allocation12 + $0x17b8] sm:$0xff]
        %v2430 = vld [vmem:[#allocation12 + $0x17c0] sm:$0xff]
        %v2431 = vld [vmem:[#allocation12 + $0x17c8] sm:$0xff]
        %v2432 = vld [vmem:[#allocation12 + $0x17d0] sm:$0xff]
        %v2433 = vld [vmem:[#allocation12 + $0x17d8] sm:$0xff]
        %v2434 = vld [vmem:[#allocation12 + $0x17e0] sm:$0xff]
        %v2435 = vld [vmem:[#allocation12 + $0x17e8] sm:$0xff]
        %v2436 = vld [vmem:[#allocation12 + $0x17f0] sm:$0xff]
        %v2437 = vld [vmem:[#allocation12 + $0x17f8] sm:$0xff]
        %v2438 = vld [vmem:[#allocation14] sm:$0xf]
        %v2440 = vlaneseq
        %v2441 = vshrl.u32 %v2440, 7
        %v2442 = vsub.s32 0, %v2441
        %v2443 = vrot.slane %v2438, %v2442
        %v2444 = vlaneseq
        %v2445 = vshrl.u32 %v2444, 7
        %v2446 = vsub.s32 1, %v2445
        %v2447 = vrot.slane %v2438, %v2446
        %v2448 = vlaneseq
        %v2449 = vshrl.u32 %v2448, 7
        %v2450 = vsub.s32 2, %v2449
        %v2451 = vrot.slane %v2438, %v2450
        %v2452 = vlaneseq
        %v2453 = vshrl.u32 %v2452, 7
        %v2454 = vsub.s32 3, %v2453
        %v2455 = vrot.slane %v2438, %v2454
        %2460 = vmatprep.subr.mxu0 %v1671
        %2461 = vmatpush1.msra.mxu0 %v1670
        %2462 = vmatprep.subr.mxu0 %v1675
        %2463 = vmatpush1.msra.mxu0 %v1674
        %2464 = vmatprep.subr.mxu0 %v1679
        %2465 = vmatpush1.msra.mxu0 %v1678
        %2466 = vmatprep.subr.mxu0 %v1683
        %2467 = vmatpush1.msra.mxu0 %v1682
        %2468 = vmatprep.subr.mxu0 %v1687
        %2469 = vmatpush1.msra.mxu0 %v1686
        %2470 = vmatprep.subr.mxu0 %v1691
        %2471 = vmatpush1.msra.mxu0 %v1690
        %2472 = vmatprep.subr.mxu0 %v1695
        %2473 = vmatpush1.msra.mxu0 %v1694
        %2474 = vmatprep.subr.mxu0 %v1699
        %2475 = vmatpush1.msra.mxu0 %v1698
        %2476 = vmatprep.subr.mxu0 %v1703
        %2477 = vmatpush1.msra.mxu0 %v1702
        %2478 = vmatprep.subr.mxu0 %v1707
        %2479 = vmatpush1.msra.mxu0 %v1706
        %2480 = vmatprep.subr.mxu0 %v1711
        %2481 = vmatpush1.msra.mxu0 %v1710
        %2482 = vmatprep.subr.mxu0 %v1715
        %2483 = vmatpush1.msra.mxu0 %v1714
        %2484 = vmatprep.subr.mxu0 %v1719
        %2485 = vmatpush1.msra.mxu0 %v1718
        %2486 = vmatprep.subr.mxu0 %v1723
        %2487 = vmatpush1.msra.mxu0 %v1722
        %2488 = vmatprep.subr.mxu0 %v1727
        %2489 = vmatpush1.msra.mxu0 %v1726
        %2490 = vmatprep.subr.mxu0 %v1731
        %2491 = vmatpush1.msra.mxu0 %v1730
        %2492 = vmatprep.subr.mxu0 %v1735
        %2493 = vmatpush1.msra.mxu0 %v1734
        %2494 = vmatprep.subr.mxu0 %v1739
        %2495 = vmatpush1.msra.mxu0 %v1738
        %2496 = vmatprep.subr.mxu0 %v1743
        %2497 = vmatpush1.msra.mxu0 %v1742
        %2498 = vmatprep.subr.mxu0 %v1747
        %2499 = vmatpush1.msra.mxu0 %v1746
        %2500 = vmatprep.subr.mxu0 %v1751
        %2501 = vmatpush1.msra.mxu0 %v1750
        %2502 = vmatprep.subr.mxu0 %v1755
        %2503 = vmatpush1.msra.mxu0 %v1754
        %2504 = vmatprep.subr.mxu0 %v1759
        %2505 = vmatpush1.msra.mxu0 %v1758
        %2506 = vmatprep.subr.mxu0 %v1763
        %2507 = vmatpush1.msra.mxu0 %v1762
        %2508 = vmatprep.subr.mxu0 %v1767
        %2509 = vmatpush1.msra.mxu0 %v1766
        %2510 = vmatprep.subr.mxu0 %v1771
        %2511 = vmatpush1.msra.mxu0 %v1770
        %2512 = vmatprep.subr.mxu0 %v1775
        %2513 = vmatpush1.msra.mxu0 %v1774
        %2514 = vmatprep.subr.mxu0 %v1779
        %2515 = vmatpush1.msra.mxu0 %v1778
        %2516 = vmatprep.subr.mxu0 %v1783
        %2517 = vmatpush1.msra.mxu0 %v1782
        %2518 = vmatprep.subr.mxu0 %v1787
        %2519 = vmatpush1.msra.mxu0 %v1786
        %2520 = vmatprep.subr.mxu0 %v1791
        %2521 = vmatpush1.msra.mxu0 %v1790
        %2522 = vmatprep.subr.mxu0 %v1795
        %2523 = vmatpush1.msra.mxu0 %v1794
        %2524 = vmatprep.mubr.f32.mxu0 %v1601
        %2525 = vmatmul.mubr.f32.gmra.mrb[0].mxu0 %v1600
        %v2526 = vpop.f32.mrb[0].mxu0
        %v2527 = vadd.f32 %v2443, %v2526
        %v2528 = vpop.f32.mrb[0].mxu0
        %v2529 = vadd.f32 %v2447, %v2528
        %2530 = vdwg.mxu0
        %2531 = vmatprep.subr.mxu0 %v1799
        %2532 = vmatpush1.msra.mxu0 %v1798
        %2533 = vmatprep.subr.mxu0 %v1803
        %2534 = vmatpush1.msra.mxu0 %v1802
        %2535 = vmatprep.subr.mxu0 %v1807
        %2536 = vmatpush1.msra.mxu0 %v1806
        %2537 = vmatprep.subr.mxu0 %v1811
        %2538 = vmatpush1.msra.mxu0 %v1810
        %2539 = vmatprep.subr.mxu0 %v1815
        %2540 = vmatpush1.msra.mxu0 %v1814
        %2541 = vmatprep.subr.mxu0 %v1819
        %2542 = vmatpush1.msra.mxu0 %v1818
        %2543 = vmatprep.subr.mxu0 %v1823
        %2544 = vmatpush1.msra.mxu0 %v1822
        %2545 = vmatprep.subr.mxu0 %v1827
        %2546 = vmatpush1.msra.mxu0 %v1826
        %2547 = vmatprep.subr.mxu0 %v1831
        %2548 = vmatpush1.msra.mxu0 %v1830
        %2549 = vmatprep.subr.mxu0 %v1835
        %2550 = vmatpush1.msra.mxu0 %v1834
        %2551 = vmatprep.subr.mxu0 %v1839
        %2552 = vmatpush1.msra.mxu0 %v1838
        %2553 = vmatprep.subr.mxu0 %v1843
        %2554 = vmatpush1.msra.mxu0 %v1842
        %2555 = vmatprep.subr.mxu0 %v1847
        %2556 = vmatpush1.msra.mxu0 %v1846
        %2557 = vmatprep.subr.mxu0 %v1851
        %2558 = vmatpush1.msra.mxu0 %v1850
        %2559 = vmatprep.subr.mxu0 %v1855
        %2560 = vmatpush1.msra.mxu0 %v1854
        %2561 = vmatprep.subr.mxu0 %v1859
        %2562 = vmatpush1.msra.mxu0 %v1858
        %2563 = vmatprep.subr.mxu0 %v1863
        %2564 = vmatpush1.msra.mxu0 %v1862
        %2565 = vmatprep.subr.mxu0 %v1867
        %2566 = vmatpush1.msra.mxu0 %v1866
        %2567 = vmatprep.subr.mxu0 %v1871
        %2568 = vmatpush1.msra.mxu0 %v1870
        %2569 = vmatprep.subr.mxu0 %v1875
        %2570 = vmatpush1.msra.mxu0 %v1874
        %2571 = vmatprep.subr.mxu0 %v1879
        %2572 = vmatpush1.msra.mxu0 %v1878
        %2573 = vmatprep.subr.mxu0 %v1883
        %2574 = vmatpush1.msra.mxu0 %v1882
        %2575 = vmatprep.subr.mxu0 %v1887
        %2576 = vmatpush1.msra.mxu0 %v1886
        %2577 = vmatprep.subr.mxu0 %v1891
        %2578 = vmatpush1.msra.mxu0 %v1890
        %2579 = vmatprep.subr.mxu0 %v1895
        %2580 = vmatpush1.msra.mxu0 %v1894
        %2581 = vmatprep.subr.mxu0 %v1899
        %2582 = vmatpush1.msra.mxu0 %v1898
        %2583 = vmatprep.subr.mxu0 %v1903
        %2584 = vmatpush1.msra.mxu0 %v1902
        %2585 = vmatprep.subr.mxu0 %v1907
        %2586 = vmatpush1.msra.mxu0 %v1906
        %2587 = vmatprep.subr.mxu0 %v1911
        %2588 = vmatpush1.msra.mxu0 %v1910
        %2589 = vmatprep.subr.mxu0 %v1915
        %2590 = vmatpush1.msra.mxu0 %v1914
        %2591 = vmatprep.subr.mxu0 %v1919
        %2592 = vmatpush1.msra.mxu0 %v1918
        %2593 = vmatprep.subr.mxu0 %v1923
        %2594 = vmatpush1.msra.mxu0 %v1922
        %2595 = vmatprep.mubr.f32.mxu0 %v1603
        %2596 = vmatmul.mubr.f32.gmra.mrb[0].mxu0 %v1602
        %v2597 = vpop.f32.mrb[0].mxu0
        %v2598 = vadd.f32 %v2527, %v2597
        %v2599 = vpop.f32.mrb[0].mxu0
        %v2600 = vadd.f32 %v2529, %v2599
        %2601 = vdwg.mxu0
        %2602 = vmatprep.subr.mxu0 %v1927
        %2603 = vmatpush1.msra.mxu0 %v1926
        %2604 = vmatprep.subr.mxu0 %v1931
        %2605 = vmatpush1.msra.mxu0 %v1930
        %2606 = vmatprep.subr.mxu0 %v1935
        %2607 = vmatpush1.msra.mxu0 %v1934
        %2608 = vmatprep.subr.mxu0 %v1939
        %2609 = vmatpush1.msra.mxu0 %v1938
        %2610 = vmatprep.subr.mxu0 %v1943
        %2611 = vmatpush1.msra.mxu0 %v1942
        %2612 = vmatprep.subr.mxu0 %v1947
        %2613 = vmatpush1.msra.mxu0 %v1946
        %2614 = vmatprep.subr.mxu0 %v1951
        %2615 = vmatpush1.msra.mxu0 %v1950
        %2616 = vmatprep.subr.mxu0 %v1955
        %2617 = vmatpush1.msra.mxu0 %v1954
        %2618 = vmatprep.subr.mxu0 %v1959
        %2619 = vmatpush1.msra.mxu0 %v1958
        %2620 = vmatprep.subr.mxu0 %v1963
        %2621 = vmatpush1.msra.mxu0 %v1962
        %2622 = vmatprep.subr.mxu0 %v1967
        %2623 = vmatpush1.msra.mxu0 %v1966
        %2624 = vmatprep.subr.mxu0 %v1971
        %2625 = vmatpush1.msra.mxu0 %v1970
        %2626 = vmatprep.subr.mxu0 %v1975
        %2627 = vmatpush1.msra.mxu0 %v1974
        %2628 = vmatprep.subr.mxu0 %v1979
        %2629 = vmatpush1.msra.mxu0 %v1978
        %2630 = vmatprep.subr.mxu0 %v1983
        %2631 = vmatpush1.msra.mxu0 %v1982
        %2632 = vmatprep.subr.mxu0 %v1987
        %2633 = vmatpush1.msra.mxu0 %v1986
        %2634 = vmatprep.subr.mxu0 %v1991
        %2635 = vmatpush1.msra.mxu0 %v1990
        %2636 = vmatprep.subr.mxu0 %v1995
        %2637 = vmatpush1.msra.mxu0 %v1994
        %2638 = vmatprep.subr.mxu0 %v1999
        %2639 = vmatpush1.msra.mxu0 %v1998
        %2640 = vmatprep.subr.mxu0 %v2003
        %2641 = vmatpush1.msra.mxu0 %v2002
        %2642 = vmatprep.subr.mxu0 %v2007
        %2643 = vmatpush1.msra.mxu0 %v2006
        %2644 = vmatprep.subr.mxu0 %v2011
        %2645 = vmatpush1.msra.mxu0 %v2010
        %2646 = vmatprep.subr.mxu0 %v2015
        %2647 = vmatpush1.msra.mxu0 %v2014
        %2648 = vmatprep.subr.mxu0 %v2019
        %2649 = vmatpush1.msra.mxu0 %v2018
        %2650 = vmatprep.subr.mxu0 %v2023
        %2651 = vmatpush1.msra.mxu0 %v2022
        %2652 = vmatprep.subr.mxu0 %v2027
        %2653 = vmatpush1.msra.mxu0 %v2026
        %2654 = vmatprep.subr.mxu0 %v2031
        %2655 = vmatpush1.msra.mxu0 %v2030
        %2656 = vmatprep.subr.mxu0 %v2035
        %2657 = vmatpush1.msra.mxu0 %v2034
        %2658 = vmatprep.subr.mxu0 %v2039
        %2659 = vmatpush1.msra.mxu0 %v2038
        %2660 = vmatprep.subr.mxu0 %v2043
        %2661 = vmatpush1.msra.mxu0 %v2042
        %2662 = vmatprep.subr.mxu0 %v2047
        %2663 = vmatpush1.msra.mxu0 %v2046
        %2664 = vmatprep.subr.mxu0 %v2051
        %2665 = vmatpush1.msra.mxu0 %v2050
        %2666 = vmatprep.mubr.f32.mxu0 %v1634
        %2667 = vmatmul.mubr.f32.gmra.mrb[0].mxu0 %v1631
        %v2668 = vpop.f32.mrb[0].mxu0
        %v2669 = vadd.f32 %v2598, %v2668
        %v2670 = vpop.f32.mrb[0].mxu0
        %v2671 = vadd.f32 %v2600, %v2670
        %2672 = vdwg.mxu0
        %2673 = vmatprep.subr.mxu0 %v2055
        %2674 = vmatpush1.msra.mxu0 %v2054
        %2675 = vmatprep.subr.mxu0 %v2059
        %2676 = vmatpush1.msra.mxu0 %v2058
        %2677 = vmatprep.subr.mxu0 %v2063
        %2678 = vmatpush1.msra.mxu0 %v2062
        %2679 = vmatprep.subr.mxu0 %v2067
        %2680 = vmatpush1.msra.mxu0 %v2066
        %2681 = vmatprep.subr.mxu0 %v2071
        %2682 = vmatpush1.msra.mxu0 %v2070
        %2683 = vmatprep.subr.mxu0 %v2075
        %2684 = vmatpush1.msra.mxu0 %v2074
        %2685 = vmatprep.subr.mxu0 %v2079
        %2686 = vmatpush1.msra.mxu0 %v2078
        %2687 = vmatprep.subr.mxu0 %v2083
        %2688 = vmatpush1.msra.mxu0 %v2082
        %2689 = vmatprep.subr.mxu0 %v2087
        %2690 = vmatpush1.msra.mxu0 %v2086
        %2691 = vmatprep.subr.mxu0 %v2091
        %2692 = vmatpush1.msra.mxu0 %v2090
        %2693 = vmatprep.subr.mxu0 %v2095
        %2694 = vmatpush1.msra.mxu0 %v2094
        %2695 = vmatprep.subr.mxu0 %v2099
        %2696 = vmatpush1.msra.mxu0 %v2098
        %2697 = vmatprep.subr.mxu0 %v2103
        %2698 = vmatpush1.msra.mxu0 %v2102
        %2699 = vmatprep.subr.mxu0 %v2107
        %2700 = vmatpush1.msra.mxu0 %v2106
        %2701 = vmatprep.subr.mxu0 %v2111
        %2702 = vmatpush1.msra.mxu0 %v2110
        %2703 = vmatprep.subr.mxu0 %v2115
        %2704 = vmatpush1.msra.mxu0 %v2114
        %2705 = vmatprep.subr.mxu0 %v2119
        %2706 = vmatpush1.msra.mxu0 %v2118
        %2707 = vmatprep.subr.mxu0 %v2123
        %2708 = vmatpush1.msra.mxu0 %v2122
        %2709 = vmatprep.subr.mxu0 %v2127
        %2710 = vmatpush1.msra.mxu0 %v2126
        %2711 = vmatprep.subr.mxu0 %v2131
        %2712 = vmatpush1.msra.mxu0 %v2130
        %2713 = vmatprep.subr.mxu0 %v2135
        %2714 = vmatpush1.msra.mxu0 %v2134
        %2715 = vmatprep.subr.mxu0 %v2139
        %2716 = vmatpush1.msra.mxu0 %v2138
        %2717 = vmatprep.subr.mxu0 %v2143
        %2718 = vmatpush1.msra.mxu0 %v2142
        %2719 = vmatprep.subr.mxu0 %v2147
        %2720 = vmatpush1.msra.mxu0 %v2146
        %2721 = vmatprep.subr.mxu0 %v2151
        %2722 = vmatpush1.msra.mxu0 %v2150
        %2723 = vmatprep.subr.mxu0 %v2155
        %2724 = vmatpush1.msra.mxu0 %v2154
        %2725 = vmatprep.subr.mxu0 %v2159
        %2726 = vmatpush1.msra.mxu0 %v2158
        %2727 = vmatprep.subr.mxu0 %v2163
        %2728 = vmatpush1.msra.mxu0 %v2162
        %2729 = vmatprep.subr.mxu0 %v2167
        %2730 = vmatpush1.msra.mxu0 %v2166
        %2731 = vmatprep.subr.mxu0 %v2171
        %2732 = vmatpush1.msra.mxu0 %v2170
        %2733 = vmatprep.subr.mxu0 %v2175
        %2734 = vmatpush1.msra.mxu0 %v2174
        %2735 = vmatprep.subr.mxu0 %v2179
        %2736 = vmatpush1.msra.mxu0 %v2178
        %2737 = vmatprep.mubr.f32.mxu0 %v1640
        %2738 = vmatmul.mubr.f32.gmra.mrb[0].mxu0 %v1637
        %v2739 = vpop.f32.mrb[0].mxu0
        %v2740 = vadd.f32 %v2669, %v2739
        %v2741 = vpop.f32.mrb[0].mxu0
        %v2742 = vadd.f32 %v2671, %v2741
        %2743 = vdwg.mxu0
        %2744 = vmatprep.subr.mxu0 %v2183
        %2745 = vmatpush1.msra.mxu0 %v2182
        %2746 = vmatprep.subr.mxu0 %v2187
        %2747 = vmatpush1.msra.mxu0 %v2186
        %2748 = vmatprep.subr.mxu0 %v2191
        %2749 = vmatpush1.msra.mxu0 %v2190
        %2750 = vmatprep.subr.mxu0 %v2195
        %2751 = vmatpush1.msra.mxu0 %v2194
        %2752 = vmatprep.subr.mxu0 %v2199
        %2753 = vmatpush1.msra.mxu0 %v2198
        %2754 = vmatprep.subr.mxu0 %v2203
        %2755 = vmatpush1.msra.mxu0 %v2202
        %2756 = vmatprep.subr.mxu0 %v2207
        %2757 = vmatpush1.msra.mxu0 %v2206
        %2758 = vmatprep.subr.mxu0 %v2211
        %2759 = vmatpush1.msra.mxu0 %v2210
        %2760 = vmatprep.subr.mxu0 %v2215
        %2761 = vmatpush1.msra.mxu0 %v2214
        %2762 = vmatprep.subr.mxu0 %v2219
        %2763 = vmatpush1.msra.mxu0 %v2218
        %2764 = vmatprep.subr.mxu0 %v2223
        %2765 = vmatpush1.msra.mxu0 %v2222
        %2766 = vmatprep.subr.mxu0 %v2227
        %2767 = vmatpush1.msra.mxu0 %v2226
        %2768 = vmatprep.subr.mxu0 %v2231
        %2769 = vmatpush1.msra.mxu0 %v2230
        %2770 = vmatprep.subr.mxu0 %v2235
        %2771 = vmatpush1.msra.mxu0 %v2234
        %2772 = vmatprep.subr.mxu0 %v2239
        %2773 = vmatpush1.msra.mxu0 %v2238
        %2774 = vmatprep.subr.mxu0 %v2243
        %2775 = vmatpush1.msra.mxu0 %v2242
        %2776 = vmatprep.subr.mxu0 %v2247
        %2777 = vmatpush1.msra.mxu0 %v2246
        %2778 = vmatprep.subr.mxu0 %v2251
        %2779 = vmatpush1.msra.mxu0 %v2250
        %2780 = vmatprep.subr.mxu0 %v2255
        %2781 = vmatpush1.msra.mxu0 %v2254
        %2782 = vmatprep.subr.mxu0 %v2259
        %2783 = vmatpush1.msra.mxu0 %v2258
        %2784 = vmatprep.subr.mxu0 %v2263
        %2785 = vmatpush1.msra.mxu0 %v2262
        %2786 = vmatprep.subr.mxu0 %v2267
        %2787 = vmatpush1.msra.mxu0 %v2266
        %2788 = vmatprep.subr.mxu0 %v2271
        %2789 = vmatpush1.msra.mxu0 %v2270
        %2790 = vmatprep.subr.mxu0 %v2275
        %2791 = vmatpush1.msra.mxu0 %v2274
        %2792 = vmatprep.subr.mxu0 %v2279
        %2793 = vmatpush1.msra.mxu0 %v2278
        %2794 = vmatprep.subr.mxu0 %v2283
        %2795 = vmatpush1.msra.mxu0 %v2282
        %2796 = vmatprep.subr.mxu0 %v2287
        %2797 = vmatpush1.msra.mxu0 %v2286
        %2798 = vmatprep.subr.mxu0 %v2291
        %2799 = vmatpush1.msra.mxu0 %v2290
        %2800 = vmatprep.subr.mxu0 %v2295
        %2801 = vmatpush1.msra.mxu0 %v2294
        %2802 = vmatprep.subr.mxu0 %v2299
        %2803 = vmatpush1.msra.mxu0 %v2298
        %2804 = vmatprep.subr.mxu0 %v2303
        %2805 = vmatpush1.msra.mxu0 %v2302
        %2806 = vmatprep.subr.mxu0 %v2307
        %2807 = vmatpush1.msra.mxu0 %v2306
        %2808 = vmatprep.mubr.f32.mxu0 %v1659
        %2809 = vmatmul.mubr.f32.gmra.mrb[0].mxu0 %v1656
        %v2810 = vpop.f32.mrb[0].mxu0
        %v2811 = vadd.f32 %v2740, %v2810
        %v2812 = vpop.f32.mrb[0].mxu0
        %v2813 = vadd.f32 %v2742, %v2812
        %2814 = vdwg.mxu0
        %2815 = vmatprep.subr.mxu0 %v2311
        %2816 = vmatpush1.msra.mxu0 %v2310
        %2817 = vmatprep.subr.mxu0 %v2315
        %2818 = vmatpush1.msra.mxu0 %v2314
        %2819 = vmatprep.subr.mxu0 %v2319
        %2820 = vmatpush1.msra.mxu0 %v2318
        %2821 = vmatprep.subr.mxu0 %v2323
        %2822 = vmatpush1.msra.mxu0 %v2322
        %2823 = vmatprep.subr.mxu0 %v2327
        %2824 = vmatpush1.msra.mxu0 %v2326
        %2825 = vmatprep.subr.mxu0 %v2331
        %2826 = vmatpush1.msra.mxu0 %v2330
        %2827 = vmatprep.subr.mxu0 %v2335
        %2828 = vmatpush1.msra.mxu0 %v2334
        %2829 = vmatprep.subr.mxu0 %v2339
        %2830 = vmatpush1.msra.mxu0 %v2338
        %2831 = vmatprep.subr.mxu0 %v2343
        %2832 = vmatpush1.msra.mxu0 %v2342
        %2833 = vmatprep.subr.mxu0 %v2347
        %2834 = vmatpush1.msra.mxu0 %v2346
        %2835 = vmatprep.subr.mxu0 %v2351
        %2836 = vmatpush1.msra.mxu0 %v2350
        %2837 = vmatprep.subr.mxu0 %v2355
        %2838 = vmatpush1.msra.mxu0 %v2354
        %2839 = vmatprep.subr.mxu0 %v2359
        %2840 = vmatpush1.msra.mxu0 %v2358
        %2841 = vmatprep.subr.mxu0 %v2363
        %2842 = vmatpush1.msra.mxu0 %v2362
        %2843 = vmatprep.subr.mxu0 %v2367
        %2844 = vmatpush1.msra.mxu0 %v2366
        %2845 = vmatprep.subr.mxu0 %v2371
        %2846 = vmatpush1.msra.mxu0 %v2370
        %2847 = vmatprep.subr.mxu0 %v2375
        %2848 = vmatpush1.msra.mxu0 %v2374
        %2849 = vmatprep.subr.mxu0 %v2379
        %2850 = vmatpush1.msra.mxu0 %v2378
        %2851 = vmatprep.subr.mxu0 %v2383
        %2852 = vmatpush1.msra.mxu0 %v2382
        %2853 = vmatprep.subr.mxu0 %v2387
        %2854 = vmatpush1.msra.mxu0 %v2386
        %2855 = vmatprep.subr.mxu0 %v2391
        %2856 = vmatpush1.msra.mxu0 %v2390
        %2857 = vmatprep.subr.mxu0 %v2395
        %2858 = vmatpush1.msra.mxu0 %v2394
        %2859 = vmatprep.subr.mxu0 %v2399
        %2860 = vmatpush1.msra.mxu0 %v2398
        %2861 = vmatprep.subr.mxu0 %v2403
        %2862 = vmatpush1.msra.mxu0 %v2402
        %2863 = vmatprep.subr.mxu0 %v2407
        %2864 = vmatpush1.msra.mxu0 %v2406
        %2865 = vmatprep.subr.mxu0 %v2411
        %2866 = vmatpush1.msra.mxu0 %v2410
        %2867 = vmatprep.subr.mxu0 %v2415
        %2868 = vmatpush1.msra.mxu0 %v2414
        %2869 = vmatprep.subr.mxu0 %v2419
        %2870 = vmatpush1.msra.mxu0 %v2418
        %2871 = vmatprep.subr.mxu0 %v2423
        %2872 = vmatpush1.msra.mxu0 %v2422
        %2873 = vmatprep.subr.mxu0 %v2427
        %2874 = vmatpush1.msra.mxu0 %v2426
        %2875 = vmatprep.subr.mxu0 %v2431
        %2876 = vmatpush1.msra.mxu0 %v2430
        %2877 = vmatprep.subr.mxu0 %v2435
        %2878 = vmatpush1.msra.mxu0 %v2434
        %2879 = vmatprep.mubr.f32.mxu0 %v1665
        %2880 = vmatmul.mubr.f32.gmra.mrb[0].mxu0 %v1662
        %v2881 = vpop.f32.mrb[0].mxu0
        %v2882 = vadd.f32 %v2811, %v2881
        %v2883 = vpop.f32.mrb[0].mxu0
        %v2884 = vadd.f32 %v2813, %v2883
        %2885 = vdwg.mxu0
        %2886 = vmatprep.subr.mxu0 %v1673
        %2887 = vmatpush1.msra.mxu0 %v1672
        %2888 = vmatprep.subr.mxu0 %v1677
        %2889 = vmatpush1.msra.mxu0 %v1676
        %2890 = vmatprep.subr.mxu0 %v1681
        %2891 = vmatpush1.msra.mxu0 %v1680
        %2892 = vmatprep.subr.mxu0 %v1685
        %2893 = vmatpush1.msra.mxu0 %v1684
        %2894 = vmatprep.subr.mxu0 %v1689
        %2895 = vmatpush1.msra.mxu0 %v1688
        %2896 = vmatprep.subr.mxu0 %v1693
        %2897 = vmatpush1.msra.mxu0 %v1692
        %2898 = vmatprep.subr.mxu0 %v1697
        %2899 = vmatpush1.msra.mxu0 %v1696
        %2900 = vmatprep.subr.mxu0 %v1701
        %2901 = vmatpush1.msra.mxu0 %v1700
        %2902 = vmatprep.subr.mxu0 %v1705
        %2903 = vmatpush1.msra.mxu0 %v1704
        %2904 = vmatprep.subr.mxu0 %v1709
        %2905 = vmatpush1.msra.mxu0 %v1708
        %2906 = vmatprep.subr.mxu0 %v1713
        %2907 = vmatpush1.msra.mxu0 %v1712
        %2908 = vmatprep.subr.mxu0 %v1717
        %2909 = vmatpush1.msra.mxu0 %v1716
        %2910 = vmatprep.subr.mxu0 %v1721
        %2911 = vmatpush1.msra.mxu0 %v1720
        %2912 = vmatprep.subr.mxu0 %v1725
        %2913 = vmatpush1.msra.mxu0 %v1724
        %2914 = vmatprep.subr.mxu0 %v1729
        %2915 = vmatpush1.msra.mxu0 %v1728
        %2916 = vmatprep.subr.mxu0 %v1733
        %2917 = vmatpush1.msra.mxu0 %v1732
        %2918 = vmatprep.subr.mxu0 %v1737
        %2919 = vmatpush1.msra.mxu0 %v1736
        %2920 = vmatprep.subr.mxu0 %v1741
        %2921 = vmatpush1.msra.mxu0 %v1740
        %2922 = vmatprep.subr.mxu0 %v1745
        %2923 = vmatpush1.msra.mxu0 %v1744
        %2924 = vmatprep.subr.mxu0 %v1749
        %2925 = vmatpush1.msra.mxu0 %v1748
        %2926 = vmatprep.subr.mxu0 %v1753
        %2927 = vmatpush1.msra.mxu0 %v1752
        %2928 = vmatprep.subr.mxu0 %v1757
        %2929 = vmatpush1.msra.mxu0 %v1756
        %2930 = vmatprep.subr.mxu0 %v1761
        %2931 = vmatpush1.msra.mxu0 %v1760
        %2932 = vmatprep.subr.mxu0 %v1765
        %2933 = vmatpush1.msra.mxu0 %v1764
        %2934 = vmatprep.subr.mxu0 %v1769
        %2935 = vmatpush1.msra.mxu0 %v1768
        %2936 = vmatprep.subr.mxu0 %v1773
        %2937 = vmatpush1.msra.mxu0 %v1772
        %2938 = vmatprep.subr.mxu0 %v1777
        %2939 = vmatpush1.msra.mxu0 %v1776
        %2940 = vmatprep.subr.mxu0 %v1781
        %2941 = vmatpush1.msra.mxu0 %v1780
        %2942 = vmatprep.subr.mxu0 %v1785
        %2943 = vmatpush1.msra.mxu0 %v1784
        %2944 = vmatprep.subr.mxu0 %v1789
        %2945 = vmatpush1.msra.mxu0 %v1788
        %2946 = vmatprep.subr.mxu0 %v1793
        %2947 = vmatpush1.msra.mxu0 %v1792
        %2948 = vmatprep.subr.mxu0 %v1797
        %2949 = vmatpush1.msra.mxu0 %v1796
        %2950 = vmatprep.mubr.f32.mxu0 %v1601
        %2951 = vmatmul.mubr.f32.gmra.mrb[0].mxu0 %v1600
        %v2952 = vpop.f32.mrb[0].mxu0
        %v2953 = vadd.f32 %v2451, %v2952
        %v2954 = vpop.f32.mrb[0].mxu0
        %v2955 = vadd.f32 %v2455, %v2954
        %2956 = vdwg.mxu0
        %2957 = vmatprep.subr.mxu0 %v1801
        %2958 = vmatpush1.msra.mxu0 %v1800
        %2959 = vmatprep.subr.mxu0 %v1805
        %2960 = vmatpush1.msra.mxu0 %v1804
        %2961 = vmatprep.subr.mxu0 %v1809
        %2962 = vmatpush1.msra.mxu0 %v1808
        %2963 = vmatprep.subr.mxu0 %v1813
        %2964 = vmatpush1.msra.mxu0 %v1812
        %2965 = vmatprep.subr.mxu0 %v1817
        %2966 = vmatpush1.msra.mxu0 %v1816
        %2967 = vmatprep.subr.mxu0 %v1821
        %2968 = vmatpush1.msra.mxu0 %v1820
        %2969 = vmatprep.subr.mxu0 %v1825
        %2970 = vmatpush1.msra.mxu0 %v1824
        %2971 = vmatprep.subr.mxu0 %v1829
        %2972 = vmatpush1.msra.mxu0 %v1828
        %2973 = vmatprep.subr.mxu0 %v1833
        %2974 = vmatpush1.msra.mxu0 %v1832
        %2975 = vmatprep.subr.mxu0 %v1837
        %2976 = vmatpush1.msra.mxu0 %v1836
        %2977 = vmatprep.subr.mxu0 %v1841
        %2978 = vmatpush1.msra.mxu0 %v1840
        %2979 = vmatprep.subr.mxu0 %v1845
        %2980 = vmatpush1.msra.mxu0 %v1844
        %2981 = vmatprep.subr.mxu0 %v1849
        %2982 = vmatpush1.msra.mxu0 %v1848
        %2983 = vmatprep.subr.mxu0 %v1853
        %2984 = vmatpush1.msra.mxu0 %v1852
        %2985 = vmatprep.subr.mxu0 %v1857
        %2986 = vmatpush1.msra.mxu0 %v1856
        %2987 = vmatprep.subr.mxu0 %v1861
        %2988 = vmatpush1.msra.mxu0 %v1860
        %2989 = vmatprep.subr.mxu0 %v1865
        %2990 = vmatpush1.msra.mxu0 %v1864
        %2991 = vmatprep.subr.mxu0 %v1869
        %2992 = vmatpush1.msra.mxu0 %v1868
        %2993 = vmatprep.subr.mxu0 %v1873
        %2994 = vmatpush1.msra.mxu0 %v1872
        %2995 = vmatprep.subr.mxu0 %v1877
        %2996 = vmatpush1.msra.mxu0 %v1876
        %2997 = vmatprep.subr.mxu0 %v1881
        %2998 = vmatpush1.msra.mxu0 %v1880
        %2999 = vmatprep.subr.mxu0 %v1885
        %3000 = vmatpush1.msra.mxu0 %v1884
        %3001 = vmatprep.subr.mxu0 %v1889
        %3002 = vmatpush1.msra.mxu0 %v1888
        %3003 = vmatprep.subr.mxu0 %v1893
        %3004 = vmatpush1.msra.mxu0 %v1892
        %3005 = vmatprep.subr.mxu0 %v1897
        %3006 = vmatpush1.msra.mxu0 %v1896
        %3007 = vmatprep.subr.mxu0 %v1901
        %3008 = vmatpush1.msra.mxu0 %v1900
        %3009 = vmatprep.subr.mxu0 %v1905
        %3010 = vmatpush1.msra.mxu0 %v1904
        %3011 = vmatprep.subr.mxu0 %v1909
        %3012 = vmatpush1.msra.mxu0 %v1908
        %3013 = vmatprep.subr.mxu0 %v1913
        %3014 = vmatpush1.msra.mxu0 %v1912
        %3015 = vmatprep.subr.mxu0 %v1917
        %3016 = vmatpush1.msra.mxu0 %v1916
        %3017 = vmatprep.subr.mxu0 %v1921
        %3018 = vmatpush1.msra.mxu0 %v1920
        %3019 = vmatprep.subr.mxu0 %v1925
        %3020 = vmatpush1.msra.mxu0 %v1924
        %3021 = vmatprep.mubr.f32.mxu0 %v1603
        %3022 = vmatmul.mubr.f32.gmra.mrb[0].mxu0 %v1602
        %v3023 = vpop.f32.mrb[0].mxu0
        %v3024 = vadd.f32 %v2953, %v3023
        %v3025 = vpop.f32.mrb[0].mxu0
        %v3026 = vadd.f32 %v2955, %v3025
        %3027 = vdwg.mxu0
        %3028 = vmatprep.subr.mxu0 %v1929
        %3029 = vmatpush1.msra.mxu0 %v1928
        %3030 = vmatprep.subr.mxu0 %v1933
        %3031 = vmatpush1.msra.mxu0 %v1932
        %3032 = vmatprep.subr.mxu0 %v1937
        %3033 = vmatpush1.msra.mxu0 %v1936
        %3034 = vmatprep.subr.mxu0 %v1941
        %3035 = vmatpush1.msra.mxu0 %v1940
        %3036 = vmatprep.subr.mxu0 %v1945
        %3037 = vmatpush1.msra.mxu0 %v1944
        %3038 = vmatprep.subr.mxu0 %v1949
        %3039 = vmatpush1.msra.mxu0 %v1948
        %3040 = vmatprep.subr.mxu0 %v1953
        %3041 = vmatpush1.msra.mxu0 %v1952
        %3042 = vmatprep.subr.mxu0 %v1957
        %3043 = vmatpush1.msra.mxu0 %v1956
        %3044 = vmatprep.subr.mxu0 %v1961
        %3045 = vmatpush1.msra.mxu0 %v1960
        %3046 = vmatprep.subr.mxu0 %v1965
        %3047 = vmatpush1.msra.mxu0 %v1964
        %3048 = vmatprep.subr.mxu0 %v1969
        %3049 = vmatpush1.msra.mxu0 %v1968
        %3050 = vmatprep.subr.mxu0 %v1973
        %3051 = vmatpush1.msra.mxu0 %v1972
        %3052 = vmatprep.subr.mxu0 %v1977
        %3053 = vmatpush1.msra.mxu0 %v1976
        %3054 = vmatprep.subr.mxu0 %v1981
        %3055 = vmatpush1.msra.mxu0 %v1980
        %3056 = vmatprep.subr.mxu0 %v1985
        %3057 = vmatpush1.msra.mxu0 %v1984
        %3058 = vmatprep.subr.mxu0 %v1989
        %3059 = vmatpush1.msra.mxu0 %v1988
        %3060 = vmatprep.subr.mxu0 %v1993
        %3061 = vmatpush1.msra.mxu0 %v1992
        %3062 = vmatprep.subr.mxu0 %v1997
        %3063 = vmatpush1.msra.mxu0 %v1996
        %3064 = vmatprep.subr.mxu0 %v2001
        %3065 = vmatpush1.msra.mxu0 %v2000
        %3066 = vmatprep.subr.mxu0 %v2005
        %3067 = vmatpush1.msra.mxu0 %v2004
        %3068 = vmatprep.subr.mxu0 %v2009
        %3069 = vmatpush1.msra.mxu0 %v2008
        %3070 = vmatprep.subr.mxu0 %v2013
        %3071 = vmatpush1.msra.mxu0 %v2012
        %3072 = vmatprep.subr.mxu0 %v2017
        %3073 = vmatpush1.msra.mxu0 %v2016
        %3074 = vmatprep.subr.mxu0 %v2021
        %3075 = vmatpush1.msra.mxu0 %v2020
        %3076 = vmatprep.subr.mxu0 %v2025
        %3077 = vmatpush1.msra.mxu0 %v2024
        %3078 = vmatprep.subr.mxu0 %v2029
        %3079 = vmatpush1.msra.mxu0 %v2028
        %3080 = vmatprep.subr.mxu0 %v2033
        %3081 = vmatpush1.msra.mxu0 %v2032
        %3082 = vmatprep.subr.mxu0 %v2037
        %3083 = vmatpush1.msra.mxu0 %v2036
        %3084 = vmatprep.subr.mxu0 %v2041
        %3085 = vmatpush1.msra.mxu0 %v2040
        %3086 = vmatprep.subr.mxu0 %v2045
        %3087 = vmatpush1.msra.mxu0 %v2044
        %3088 = vmatprep.subr.mxu0 %v2049
        %3089 = vmatpush1.msra.mxu0 %v2048
        %3090 = vmatprep.subr.mxu0 %v2053
        %3091 = vmatpush1.msra.mxu0 %v2052
        %3092 = vmatprep.mubr.f32.mxu0 %v1634
        %3093 = vmatmul.mubr.f32.gmra.mrb[0].mxu0 %v1631
        %v3094 = vpop.f32.mrb[0].mxu0
        %v3095 = vadd.f32 %v3024, %v3094
        %v3096 = vpop.f32.mrb[0].mxu0
        %v3097 = vadd.f32 %v3026, %v3096
        %3098 = vdwg.mxu0
        %3099 = vmatprep.subr.mxu0 %v2057
        %3100 = vmatpush1.msra.mxu0 %v2056
        %3101 = vmatprep.subr.mxu0 %v2061
        %3102 = vmatpush1.msra.mxu0 %v2060
        %3103 = vmatprep.subr.mxu0 %v2065
        %3104 = vmatpush1.msra.mxu0 %v2064
        %3105 = vmatprep.subr.mxu0 %v2069
        %3106 = vmatpush1.msra.mxu0 %v2068
        %3107 = vmatprep.subr.mxu0 %v2073
        %3108 = vmatpush1.msra.mxu0 %v2072
        %3109 = vmatprep.subr.mxu0 %v2077
        %3110 = vmatpush1.msra.mxu0 %v2076
        %3111 = vmatprep.subr.mxu0 %v2081
        %3112 = vmatpush1.msra.mxu0 %v2080
        %3113 = vmatprep.subr.mxu0 %v2085
        %3114 = vmatpush1.msra.mxu0 %v2084
        %3115 = vmatprep.subr.mxu0 %v2089
        %3116 = vmatpush1.msra.mxu0 %v2088
        %3117 = vmatprep.subr.mxu0 %v2093
        %3118 = vmatpush1.msra.mxu0 %v2092
        %3119 = vmatprep.subr.mxu0 %v2097
        %3120 = vmatpush1.msra.mxu0 %v2096
        %3121 = vmatprep.subr.mxu0 %v2101
        %3122 = vmatpush1.msra.mxu0 %v2100
        %3123 = vmatprep.subr.mxu0 %v2105
        %3124 = vmatpush1.msra.mxu0 %v2104
        %3125 = vmatprep.subr.mxu0 %v2109
        %3126 = vmatpush1.msra.mxu0 %v2108
        %3127 = vmatprep.subr.mxu0 %v2113
        %3128 = vmatpush1.msra.mxu0 %v2112
        %3129 = vmatprep.subr.mxu0 %v2117
        %3130 = vmatpush1.msra.mxu0 %v2116
        %3131 = vmatprep.subr.mxu0 %v2121
        %3132 = vmatpush1.msra.mxu0 %v2120
        %3133 = vmatprep.subr.mxu0 %v2125
        %3134 = vmatpush1.msra.mxu0 %v2124
        %3135 = vmatprep.subr.mxu0 %v2129
        %3136 = vmatpush1.msra.mxu0 %v2128
        %3137 = vmatprep.subr.mxu0 %v2133
        %3138 = vmatpush1.msra.mxu0 %v2132
        %3139 = vmatprep.subr.mxu0 %v2137
        %3140 = vmatpush1.msra.mxu0 %v2136
        %3141 = vmatprep.subr.mxu0 %v2141
        %3142 = vmatpush1.msra.mxu0 %v2140
        %3143 = vmatprep.subr.mxu0 %v2145
        %3144 = vmatpush1.msra.mxu0 %v2144
        %3145 = vmatprep.subr.mxu0 %v2149
        %3146 = vmatpush1.msra.mxu0 %v2148
        %3147 = vmatprep.subr.mxu0 %v2153
        %3148 = vmatpush1.msra.mxu0 %v2152
        %3149 = vmatprep.subr.mxu0 %v2157
        %3150 = vmatpush1.msra.mxu0 %v2156
        %3151 = vmatprep.subr.mxu0 %v2161
        %3152 = vmatpush1.msra.mxu0 %v2160
        %3153 = vmatprep.subr.mxu0 %v2165
        %3154 = vmatpush1.msra.mxu0 %v2164
        %3155 = vmatprep.subr.mxu0 %v2169
        %3156 = vmatpush1.msra.mxu0 %v2168
        %3157 = vmatprep.subr.mxu0 %v2173
        %3158 = vmatpush1.msra.mxu0 %v2172
        %3159 = vmatprep.subr.mxu0 %v2177
        %3160 = vmatpush1.msra.mxu0 %v2176
        %3161 = vmatprep.subr.mxu0 %v2181
        %3162 = vmatpush1.msra.mxu0 %v2180
        %3163 = vmatprep.mubr.f32.mxu0 %v1640
        %3164 = vmatmul.mubr.f32.gmra.mrb[0].mxu0 %v1637
        %v3165 = vpop.f32.mrb[0].mxu0
        %v3166 = vadd.f32 %v3095, %v3165
        %v3167 = vpop.f32.mrb[0].mxu0
        %v3168 = vadd.f32 %v3097, %v3167
        %3169 = vdwg.mxu0
        %3170 = vmatprep.subr.mxu0 %v2185
        %3171 = vmatpush1.msra.mxu0 %v2184
        %3172 = vmatprep.subr.mxu0 %v2189
        %3173 = vmatpush1.msra.mxu0 %v2188
        %3174 = vmatprep.subr.mxu0 %v2193
        %3175 = vmatpush1.msra.mxu0 %v2192
        %3176 = vmatprep.subr.mxu0 %v2197
        %3177 = vmatpush1.msra.mxu0 %v2196
        %3178 = vmatprep.subr.mxu0 %v2201
        %3179 = vmatpush1.msra.mxu0 %v2200
        %3180 = vmatprep.subr.mxu0 %v2205
        %3181 = vmatpush1.msra.mxu0 %v2204
        %3182 = vmatprep.subr.mxu0 %v2209
        %3183 = vmatpush1.msra.mxu0 %v2208
        %3184 = vmatprep.subr.mxu0 %v2213
        %3185 = vmatpush1.msra.mxu0 %v2212
        %3186 = vmatprep.subr.mxu0 %v2217
        %3187 = vmatpush1.msra.mxu0 %v2216
        %3188 = vmatprep.subr.mxu0 %v2221
        %3189 = vmatpush1.msra.mxu0 %v2220
        %3190 = vmatprep.subr.mxu0 %v2225
        %3191 = vmatpush1.msra.mxu0 %v2224
        %3192 = vmatprep.subr.mxu0 %v2229
        %3193 = vmatpush1.msra.mxu0 %v2228
        %3194 = vmatprep.subr.mxu0 %v2233
        %3195 = vmatpush1.msra.mxu0 %v2232
        %3196 = vmatprep.subr.mxu0 %v2237
        %3197 = vmatpush1.msra.mxu0 %v2236
        %3198 = vmatprep.subr.mxu0 %v2241
        %3199 = vmatpush1.msra.mxu0 %v2240
        %3200 = vmatprep.subr.mxu0 %v2245
        %3201 = vmatpush1.msra.mxu0 %v2244
        %3202 = vmatprep.subr.mxu0 %v2249
        %3203 = vmatpush1.msra.mxu0 %v2248
        %3204 = vmatprep.subr.mxu0 %v2253
        %3205 = vmatpush1.msra.mxu0 %v2252
        %3206 = vmatprep.subr.mxu0 %v2257
        %3207 = vmatpush1.msra.mxu0 %v2256
        %3208 = vmatprep.subr.mxu0 %v2261
        %3209 = vmatpush1.msra.mxu0 %v2260
        %3210 = vmatprep.subr.mxu0 %v2265
        %3211 = vmatpush1.msra.mxu0 %v2264
        %3212 = vmatprep.subr.mxu0 %v2269
        %3213 = vmatpush1.msra.mxu0 %v2268
        %3214 = vmatprep.subr.mxu0 %v2273
        %3215 = vmatpush1.msra.mxu0 %v2272
        %3216 = vmatprep.subr.mxu0 %v2277
        %3217 = vmatpush1.msra.mxu0 %v2276
        %3218 = vmatprep.subr.mxu0 %v2281
        %3219 = vmatpush1.msra.mxu0 %v2280
        %3220 = vmatprep.subr.mxu0 %v2285
        %3221 = vmatpush1.msra.mxu0 %v2284
        %3222 = vmatprep.subr.mxu0 %v2289
        %3223 = vmatpush1.msra.mxu0 %v2288
        %3224 = vmatprep.subr.mxu0 %v2293
        %3225 = vmatpush1.msra.mxu0 %v2292
        %3226 = vmatprep.subr.mxu0 %v2297
        %3227 = vmatpush1.msra.mxu0 %v2296
        %3228 = vmatprep.subr.mxu0 %v2301
        %3229 = vmatpush1.msra.mxu0 %v2300
        %3230 = vmatprep.subr.mxu0 %v2305
        %3231 = vmatpush1.msra.mxu0 %v2304
        %3232 = vmatprep.subr.mxu0 %v2309
        %3233 = vmatpush1.msra.mxu0 %v2308
        %3234 = vmatprep.mubr.f32.mxu0 %v1659
        %3235 = vmatmul.mubr.f32.gmra.mrb[0].mxu0 %v1656
        %v3236 = vpop.f32.mrb[0].mxu0
        %v3237 = vadd.f32 %v3166, %v3236
        %v3238 = vpop.f32.mrb[0].mxu0
        %v3239 = vadd.f32 %v3168, %v3238
        %3240 = vdwg.mxu0
        %3241 = vmatprep.subr.mxu0 %v2313
        %3242 = vmatpush1.msra.mxu0 %v2312
        %3243 = vmatprep.subr.mxu0 %v2317
        %3244 = vmatpush1.msra.mxu0 %v2316
        %3245 = vmatprep.subr.mxu0 %v2321
        %3246 = vmatpush1.msra.mxu0 %v2320
        %3247 = vmatprep.subr.mxu0 %v2325
        %3248 = vmatpush1.msra.mxu0 %v2324
        %3249 = vmatprep.subr.mxu0 %v2329
        %3250 = vmatpush1.msra.mxu0 %v2328
        %3251 = vmatprep.subr.mxu0 %v2333
        %3252 = vmatpush1.msra.mxu0 %v2332
        %3253 = vmatprep.subr.mxu0 %v2337
        %3254 = vmatpush1.msra.mxu0 %v2336
        %3255 = vmatprep.subr.mxu0 %v2341
        %3256 = vmatpush1.msra.mxu0 %v2340
        %3257 = vmatprep.subr.mxu0 %v2345
        %3258 = vmatpush1.msra.mxu0 %v2344
        %3259 = vmatprep.subr.mxu0 %v2349
        %3260 = vmatpush1.msra.mxu0 %v2348
        %3261 = vmatprep.subr.mxu0 %v2353
        %3262 = vmatpush1.msra.mxu0 %v2352
        %3263 = vmatprep.subr.mxu0 %v2357
        %3264 = vmatpush1.msra.mxu0 %v2356
        %3265 = vmatprep.subr.mxu0 %v2361
        %3266 = vmatpush1.msra.mxu0 %v2360
        %3267 = vmatprep.subr.mxu0 %v2365
        %3268 = vmatpush1.msra.mxu0 %v2364
        %3269 = vmatprep.subr.mxu0 %v2369
        %3270 = vmatpush1.msra.mxu0 %v2368
        %3271 = vmatprep.subr.mxu0 %v2373
        %3272 = vmatpush1.msra.mxu0 %v2372
        %3273 = vmatprep.subr.mxu0 %v2377
        %3274 = vmatpush1.msra.mxu0 %v2376
        %3275 = vmatprep.subr.mxu0 %v2381
        %3276 = vmatpush1.msra.mxu0 %v2380
        %3277 = vmatprep.subr.mxu0 %v2385
        %3278 = vmatpush1.msra.mxu0 %v2384
        %3279 = vmatprep.subr.mxu0 %v2389
        %3280 = vmatpush1.msra.mxu0 %v2388
        %3281 = vmatprep.subr.mxu0 %v2393
        %3282 = vmatpush1.msra.mxu0 %v2392
        %3283 = vmatprep.subr.mxu0 %v2397
        %3284 = vmatpush1.msra.mxu0 %v2396
        %3285 = vmatprep.subr.mxu0 %v2401
        %3286 = vmatpush1.msra.mxu0 %v2400
        %3287 = vmatprep.subr.mxu0 %v2405
        %3288 = vmatpush1.msra.mxu0 %v2404
        %3289 = vmatprep.subr.mxu0 %v2409
        %3290 = vmatpush1.msra.mxu0 %v2408
        %3291 = vmatprep.subr.mxu0 %v2413
        %3292 = vmatpush1.msra.mxu0 %v2412
        %3293 = vmatprep.subr.mxu0 %v2417
        %3294 = vmatpush1.msra.mxu0 %v2416
        %3295 = vmatprep.subr.mxu0 %v2421
        %3296 = vmatpush1.msra.mxu0 %v2420
        %3297 = vmatprep.subr.mxu0 %v2425
        %3298 = vmatpush1.msra.mxu0 %v2424
        %3299 = vmatprep.subr.mxu0 %v2429
        %3300 = vmatpush1.msra.mxu0 %v2428
        %3301 = vmatprep.subr.mxu0 %v2433
        %3302 = vmatpush1.msra.mxu0 %v2432
        %3303 = vmatprep.subr.mxu0 %v2437
        %3304 = vmatpush1.msra.mxu0 %v2436
        %3305 = vmatprep.mubr.f32.mxu0 %v1665
        %3306 = vmatmul.mubr.f32.gmra.mrb[0].mxu0 %v1662
        %v3307 = vpop.f32.mrb[0].mxu0
        %v3308 = vadd.f32 %v3237, %v3307
        %v3309 = vpop.f32.mrb[0].mxu0
        %v3310 = vadd.f32 %v3239, %v3309
        %3311 = vdwg.mxu0
        %v3312 = vld [vmem:[%s631] sm:$0x1]
        %v3313 = vsub.f32 0.0, %v3312
        %v3314 = vmul.f32 %v3313, 1.442695
        %v3315 = vpow.pop %v3314
        %v3316 = vadd.f32 %v3315, 1.0
        %v3317 = vrcp.pop %v3316
        %v3318 = vmul.f32 %v3312, %v3317
        %v3319 = vld [vmem:[#allocation15] sm:$0xff]
        %v3320 = vld [vmem:[#allocation15 + $0x8] sm:$0xff]
        %v3321 = vld [vmem:[#allocation15 + $0x10] sm:$0xff]
        %v3322 = vld [vmem:[#allocation15 + $0x18] sm:$0xff]
        %v3323 = vld [vmem:[#allocation15 + $0x20] sm:$0xff]
        %v3324 = vld [vmem:[#allocation15 + $0x28] sm:$0xff]
        %v3325 = vld [vmem:[#allocation15 + $0x30] sm:$0xff]
        %v3326 = vld [vmem:[#allocation15 + $0x38] sm:$0xff]
        %v3327 = vld [vmem:[#allocation17] sm:$0xf]
        %v3329 = vlaneseq
        %v3330 = vshrl.u32 %v3329, 7
        %v3331 = vsub.s32 0, %v3330
        %v3332 = vrot.slane %v3327, %v3331
        %v3333 = vlaneseq
        %v3334 = vshrl.u32 %v3333, 7
        %v3335 = vsub.s32 1, %v3334
        %v3336 = vrot.slane %v3327, %v3335
        %v3337 = vlaneseq
        %v3338 = vshrl.u32 %v3337, 7
        %v3339 = vsub.s32 2, %v3338
        %v3340 = vrot.slane %v3327, %v3339
        %v3341 = vlaneseq
        %v3342 = vshrl.u32 %v3341, 7
        %v3343 = vsub.s32 3, %v3342
        %v3344 = vrot.slane %v3327, %v3343
        %vm3349 = vcmask 130048
        %v3351 = vsel %vm3349, %v3318, 0
        %3353 = vmatprep.subr.mxu0 %v3320
        %3354 = vmatpush1.msra.mxu0 %v3319
        %3355 = vmatprep.subr.mxu0 %v3324
        %3356 = vmatpush1.msra.mxu0 %v3323
        %3357 = vmatprep.subr.mxu0 0.0
        %3358 = vmatpush1.msra.mxu0 0.0
        %3359 = vmatprep.subr.mxu0 0.0
        %3360 = vmatpush1.msra.mxu0 0.0
        %3361 = vmatprep.subr.mxu0 0.0
        %3362 = vmatpush1.msra.mxu0 0.0
        %3363 = vmatprep.subr.mxu0 0.0
        %3364 = vmatpush1.msra.mxu0 0.0
        %3365 = vmatprep.subr.mxu0 0.0
        %3366 = vmatpush1.msra.mxu0 0.0
        %3367 = vmatprep.subr.mxu0 0.0
        %3368 = vmatpush1.msra.mxu0 0.0
        %3369 = vmatprep.subr.mxu0 0.0
        %3370 = vmatpush1.msra.mxu0 0.0
        %3371 = vmatprep.subr.mxu0 0.0
        %3372 = vmatpush1.msra.mxu0 0.0
        %3373 = vmatprep.subr.mxu0 0.0
        %3374 = vmatpush1.msra.mxu0 0.0
        %3375 = vmatprep.subr.mxu0 0.0
        %3376 = vmatpush1.msra.mxu0 0.0
        %3377 = vmatprep.subr.mxu0 0.0
        %3378 = vmatpush1.msra.mxu0 0.0
        %3379 = vmatprep.subr.mxu0 0.0
        %3380 = vmatpush1.msra.mxu0 0.0
        %3381 = vmatprep.subr.mxu0 0.0
        %3382 = vmatpush1.msra.mxu0 0.0
        %3383 = vmatprep.subr.mxu0 0.0
        %3384 = vmatpush1.msra.mxu0 0.0
        %3385 = vmatprep.subr.mxu0 0.0
        %3386 = vmatpush1.msra.mxu0 0.0
        %3387 = vmatprep.subr.mxu0 0.0
        %3388 = vmatpush1.msra.mxu0 0.0
        %3389 = vmatprep.subr.mxu0 0.0
        %3390 = vmatpush1.msra.mxu0 0.0
        %3391 = vmatprep.subr.mxu0 0.0
        %3392 = vmatpush1.msra.mxu0 0.0
        %3393 = vmatprep.subr.mxu0 0.0
        %3394 = vmatpush1.msra.mxu0 0.0
        %3395 = vmatprep.subr.mxu0 0.0
        %3396 = vmatpush1.msra.mxu0 0.0
        %3397 = vmatprep.subr.mxu0 0.0
        %3398 = vmatpush1.msra.mxu0 0.0
        %3399 = vmatprep.subr.mxu0 0.0
        %3400 = vmatpush1.msra.mxu0 0.0
        %3401 = vmatprep.subr.mxu0 0.0
        %3402 = vmatpush1.msra.mxu0 0.0
        %3403 = vmatprep.subr.mxu0 0.0
        %3404 = vmatpush1.msra.mxu0 0.0
        %3405 = vmatprep.subr.mxu0 0.0
        %3406 = vmatpush1.msra.mxu0 0.0
        %3407 = vmatprep.subr.mxu0 0.0
        %3408 = vmatpush1.msra.mxu0 0.0
        %3409 = vmatprep.subr.mxu0 0.0
        %3410 = vmatpush1.msra.mxu0 0.0
        %3411 = vmatprep.subr.mxu0 0.0
        %3412 = vmatpush1.msra.mxu0 0.0
        %3413 = vmatprep.subr.mxu0 0.0
        %3414 = vmatpush1.msra.mxu0 0.0
        %3415 = vmatprep.subr.mxu0 0.0
        %3416 = vmatpush1.msra.mxu0 0.0
        %3417 = vmatprep.mubr.f32.mxu0 0.0
        %3418 = vmatmul.mubr.f32.gmra.mrb[0].mxu0 %v3351
        %v3419 = vpop.f32.mrb[0].mxu0
        %v3420 = vadd.f32 %v3332, %v3419
        %v3421 = vpop.f32.mrb[0].mxu0
        %v3422 = vadd.f32 %v3336, %v3421
        %3423 = vdwg.mxu0
        %3424 = vmatprep.subr.mxu0 %v3322
        %3425 = vmatpush1.msra.mxu0 %v3321
        %3426 = vmatprep.subr.mxu0 %v3326
        %3427 = vmatpush1.msra.mxu0 %v3325
        %3428 = vmatprep.subr.mxu0 0.0
        %3429 = vmatpush1.msra.mxu0 0.0
        %3430 = vmatprep.subr.mxu0 0.0
        %3431 = vmatpush1.msra.mxu0 0.0
        %3432 = vmatprep.subr.mxu0 0.0
        %3433 = vmatpush1.msra.mxu0 0.0
        %3434 = vmatprep.subr.mxu0 0.0
        %3435 = vmatpush1.msra.mxu0 0.0
        %3436 = vmatprep.subr.mxu0 0.0
        %3437 = vmatpush1.msra.mxu0 0.0
        %3438 = vmatprep.subr.mxu0 0.0
        %3439 = vmatpush1.msra.mxu0 0.0
        %3440 = vmatprep.subr.mxu0 0.0
        %3441 = vmatpush1.msra.mxu0 0.0
        %3442 = vmatprep.subr.mxu0 0.0
        %3443 = vmatpush1.msra.mxu0 0.0
        %3444 = vmatprep.subr.mxu0 0.0
        %3445 = vmatpush1.msra.mxu0 0.0
        %3446 = vmatprep.subr.mxu0 0.0
        %3447 = vmatpush1.msra.mxu0 0.0
        %3448 = vmatprep.subr.mxu0 0.0
        %3449 = vmatpush1.msra.mxu0 0.0
        %3450 = vmatprep.subr.mxu0 0.0
        %3451 = vmatpush1.msra.mxu0 0.0
        %3452 = vmatprep.subr.mxu0 0.0
        %3453 = vmatpush1.msra.mxu0 0.0
        %3454 = vmatprep.subr.mxu0 0.0
        %3455 = vmatpush1.msra.mxu0 0.0
        %3456 = vmatprep.subr.mxu0 0.0
        %3457 = vmatpush1.msra.mxu0 0.0
        %3458 = vmatprep.subr.mxu0 0.0
        %3459 = vmatpush1.msra.mxu0 0.0
        %3460 = vmatprep.subr.mxu0 0.0
        %3461 = vmatpush1.msra.mxu0 0.0
        %3462 = vmatprep.subr.mxu0 0.0
        %3463 = vmatpush1.msra.mxu0 0.0
        %3464 = vmatprep.subr.mxu0 0.0
        %3465 = vmatpush1.msra.mxu0 0.0
        %3466 = vmatprep.subr.mxu0 0.0
        %3467 = vmatpush1.msra.mxu0 0.0
        %3468 = vmatprep.subr.mxu0 0.0
        %3469 = vmatpush1.msra.mxu0 0.0
        %3470 = vmatprep.subr.mxu0 0.0
        %3471 = vmatpush1.msra.mxu0 0.0
        %3472 = vmatprep.subr.mxu0 0.0
        %3473 = vmatpush1.msra.mxu0 0.0
        %3474 = vmatprep.subr.mxu0 0.0
        %3475 = vmatpush1.msra.mxu0 0.0
        %3476 = vmatprep.subr.mxu0 0.0
        %3477 = vmatpush1.msra.mxu0 0.0
        %3478 = vmatprep.subr.mxu0 0.0
        %3479 = vmatpush1.msra.mxu0 0.0
        %3480 = vmatprep.subr.mxu0 0.0
        %3481 = vmatpush1.msra.mxu0 0.0
        %3482 = vmatprep.subr.mxu0 0.0
        %3483 = vmatpush1.msra.mxu0 0.0
        %3484 = vmatprep.subr.mxu0 0.0
        %3485 = vmatpush1.msra.mxu0 0.0
        %3486 = vmatprep.subr.mxu0 0.0
        %3487 = vmatpush1.msra.mxu0 0.0
        %3488 = vmatprep.mubr.f32.mxu0 0.0
        %3489 = vmatmul.mubr.f32.gmra.mrb[0].mxu0 %v3351
        %v3490 = vpop.f32.mrb[0].mxu0
        %v3491 = vadd.f32 %v3340, %v3490
        %v3492 = vpop.f32.mrb[0].mxu0
        %v3493 = vadd.f32 %v3344, %v3492
        %3494 = vdwg.mxu0
        %v3495 = vlaneseq
        %v3496 = vshrl.u32 %v3495, 7
        %v3497 = vsub.s32 0, %v3496
        %v3498 = vrot.slane %v3420, %v3497
        %v3499 = vlaneseq
        %v3500 = vshrl.u32 %v3499, 7
        %v3501 = vsub.s32 0, %v3500
        %v3502 = vrot.slane %v3422, %v3501
        %v3503 = vlaneseq
        %v3504 = vshrl.u32 %v3503, 7
        %v3505 = vsub.s32 0, %v3504
        %v3506 = vrot.slane %v3491, %v3505
        %v3507 = vlaneseq
        %v3508 = vshrl.u32 %v3507, 7
        %v3509 = vsub.s32 0, %v3508
        %v3510 = vrot.slane %v3493, %v3509
        %v3511 = vadd.f32 %v2882, %v3498
        %v3512 = vadd.f32 %v2884, %v3502
        %v3513 = vadd.f32 %v3308, %v3506
        %v3514 = vadd.f32 %v3310, %v3510
        %v3515 = vrot.slane %v3511, 4
        %v3516 = vadd.f32 %v3511, %v3515
        %v3517 = vrot.slane %v3516, 2
        %v3518 = vadd.f32 %v3516, %v3517
        %v3519 = vrot.slane %v3518, 1
        %v3520 = vadd.f32 %v3518, %v3519
        %v3521 = vrot.slane %v3512, 4
        %v3522 = vadd.f32 %v3512, %v3521
        %v3523 = vrot.slane %v3522, 2
        %v3524 = vadd.f32 %v3522, %v3523
        %v3525 = vrot.slane %v3524, 1
        %v3526 = vadd.f32 %v3524, %v3525
        %v3527 = vrot.slane %v3513, 4
        %v3528 = vadd.f32 %v3513, %v3527
        %v3529 = vrot.slane %v3528, 2
        %v3530 = vadd.f32 %v3528, %v3529
        %v3531 = vrot.slane %v3530, 1
        %v3532 = vadd.f32 %v3530, %v3531
        %v3533 = vrot.slane %v3514, 4
        %v3534 = vadd.f32 %v3514, %v3533
        %v3535 = vrot.slane %v3534, 2
        %v3536 = vadd.f32 %v3534, %v3535
        %v3537 = vrot.slane %v3536, 1
        %v3538 = vadd.f32 %v3536, %v3537
        %v3539 = vld [vmem:[%s12] sm:$0xff]
        %v3540 = vld [vmem:[%s12 + $0x8] sm:$0xff]
        %v3541 = vld [vmem:[%s12 + $0x10] sm:$0xff]
        %v3542 = vld [vmem:[%s12 + $0x18] sm:$0xff]
        %v3543 = vld [vmem:[%s12 + $0x20] sm:$0xff]
        %v3544 = vld [vmem:[%s12 + $0x28] sm:$0xff]
        %v3545 = vld [vmem:[%s12 + $0x30] sm:$0xff]
        %v3546 = vld [vmem:[%s12 + $0x38] sm:$0xff]
        %v3547 = vld [vmem:[%s12 + $0x40] sm:$0xff]
        %v3548 = vld [vmem:[%s12 + $0x48] sm:$0xff]
        %v3549 = vld [vmem:[%s12 + $0x50] sm:$0xff]
        %v3550 = vld [vmem:[%s12 + $0x58] sm:$0xff]
        %v3551 = vld [vmem:[%s12 + $0x60] sm:$0xff]
        %v3552 = vld [vmem:[%s12 + $0x68] sm:$0xff]
        %v3553 = vld [vmem:[%s12 + $0x70] sm:$0xff]
        %v3554 = vld [vmem:[%s12 + $0x78] sm:$0xff]
        %v3555 = vld [vmem:[%s12 + $0x80] sm:$0xff]
        %v3556 = vld [vmem:[%s12 + $0x88] sm:$0xff]
        %v3557 = vld [vmem:[%s12 + $0x90] sm:$0xff]
        %v3558 = vld [vmem:[%s12 + $0x98] sm:$0xff]
        %v3559 = vld [vmem:[%s12 + $0xa0] sm:$0xff]
        %v3560 = vld [vmem:[%s12 + $0xa8] sm:$0xff]
        %v3561 = vld [vmem:[%s12 + $0xb0] sm:$0xff]
        %v3562 = vld [vmem:[%s12 + $0xb8] sm:$0xff]
        %v3563 = vld [vmem:[%s12 + $0xc0] sm:$0xff]
        %v3564 = vld [vmem:[%s12 + $0xc8] sm:$0xff]
        %v3565 = vld [vmem:[%s12 + $0xd0] sm:$0xff]
        %v3566 = vld [vmem:[%s12 + $0xd8] sm:$0xff]
        %v3567 = vld [vmem:[%s12 + $0xe0] sm:$0xff]
        %v3568 = vld [vmem:[%s12 + $0xe8] sm:$0xff]
        %v3569 = vld [vmem:[%s12 + $0xf0] sm:$0xff]
        %v3570 = vld [vmem:[%s12 + $0xf8] sm:$0xff]
        %v3571 = vld [vmem:[%s12 + $0x100] sm:$0xff]
        %v3572 = vld [vmem:[%s12 + $0x108] sm:$0xff]
        %v3573 = vld [vmem:[%s12 + $0x110] sm:$0xff]
        %v3574 = vld [vmem:[%s12 + $0x118] sm:$0xff]
        %v3575 = vld [vmem:[%s12 + $0x120] sm:$0xff]
        %v3576 = vld [vmem:[%s12 + $0x128] sm:$0xff]
        %v3577 = vld [vmem:[%s12 + $0x130] sm:$0xff]
        %v3578 = vld [vmem:[%s12 + $0x138] sm:$0xff]
        %v3579 = vld [vmem:[%s12 + $0x140] sm:$0xff]
        %v3580 = vld [vmem:[%s12 + $0x148] sm:$0xff]
        %v3581 = vld [vmem:[%s12 + $0x150] sm:$0xff]
        %v3582 = vld [vmem:[%s12 + $0x158] sm:$0xff]
        %v3583 = vld [vmem:[%s12 + $0x160] sm:$0xff]
        %v3584 = vld [vmem:[%s12 + $0x168] sm:$0xff]
        %v3585 = vld [vmem:[%s12 + $0x170] sm:$0xff]
        %v3586 = vld [vmem:[%s12 + $0x178] sm:$0xff]
        %v3587 = vld [vmem:[%s12 + $0x180] sm:$0xff]
        %v3588 = vld [vmem:[%s12 + $0x188] sm:$0xff]
        %v3589 = vld [vmem:[%s12 + $0x190] sm:$0xff]
        %v3590 = vld [vmem:[%s12 + $0x198] sm:$0xff]
        %v3591 = vld [vmem:[%s12 + $0x1a0] sm:$0xff]
        %v3592 = vld [vmem:[%s12 + $0x1a8] sm:$0xff]
        %v3593 = vld [vmem:[%s12 + $0x1b0] sm:$0xff]
        %v3594 = vld [vmem:[%s12 + $0x1b8] sm:$0xff]
        %v3595 = vld [vmem:[%s12 + $0x1c0] sm:$0xff]
        %v3596 = vld [vmem:[%s12 + $0x1c8] sm:$0xff]
        %v3597 = vld [vmem:[%s12 + $0x1d0] sm:$0xff]
        %v3598 = vld [vmem:[%s12 + $0x1d8] sm:$0xff]
        %v3599 = vld [vmem:[%s12 + $0x1e0] sm:$0xff]
        %v3600 = vld [vmem:[%s12 + $0x1e8] sm:$0xff]
        %v3601 = vld [vmem:[%s12 + $0x1f0] sm:$0xff]
        %v3602 = vld [vmem:[%s12 + $0x1f8] sm:$0xff]
        %3603 = vmatprep.subr.mxu0 0.0
        %3604 = vmatpush1.msra.mxu0 %v3539
        %3605 = vmatprep.subr.mxu0 0.0
        %3606 = vmatpush1.msra.mxu0 %v3540
        %3607 = vmatprep.subr.mxu0 0.0
        %3608 = vmatpush1.msra.mxu0 %v3541
        %3609 = vmatprep.subr.mxu0 0.0
        %3610 = vmatpush1.msra.mxu0 %v3542
        %3611 = vmatprep.subr.mxu0 0.0
        %3612 = vmatpush1.msra.mxu0 %v3543
        %3613 = vmatprep.subr.mxu0 0.0
        %3614 = vmatpush1.msra.mxu0 %v3544
        %3615 = vmatprep.subr.mxu0 0.0
        %3616 = vmatpush1.msra.mxu0 %v3545
        %3617 = vmatprep.subr.mxu0 0.0
        %3618 = vmatpush1.msra.mxu0 %v3546
        %3619 = vmatprep.subr.mxu0 0.0
        %3620 = vmatpush1.msra.mxu0 %v3547
        %3621 = vmatprep.subr.mxu0 0.0
        %3622 = vmatpush1.msra.mxu0 %v3548
        %3623 = vmatprep.subr.mxu0 0.0
        %3624 = vmatpush1.msra.mxu0 %v3549
        %3625 = vmatprep.subr.mxu0 0.0
        %3626 = vmatpush1.msra.mxu0 %v3550
        %3627 = vmatprep.subr.mxu0 0.0
        %3628 = vmatpush1.msra.mxu0 %v3551
        %3629 = vmatprep.subr.mxu0 0.0
        %3630 = vmatpush1.msra.mxu0 %v3552
        %3631 = vmatprep.subr.mxu0 0.0
        %3632 = vmatpush1.msra.mxu0 %v3553
        %3633 = vmatprep.subr.mxu0 0.0
        %3634 = vmatpush1.msra.mxu0 %v3554
        %3635 = vmatprep.subr.mxu0 0.0
        %3636 = vmatpush1.msra.mxu0 %v3555
        %3637 = vmatprep.subr.mxu0 0.0
        %3638 = vmatpush1.msra.mxu0 %v3556
        %3639 = vmatprep.subr.mxu0 0.0
        %3640 = vmatpush1.msra.mxu0 %v3557
        %3641 = vmatprep.subr.mxu0 0.0
        %3642 = vmatpush1.msra.mxu0 %v3558
        %3643 = vmatprep.subr.mxu0 0.0
        %3644 = vmatpush1.msra.mxu0 %v3559
        %3645 = vmatprep.subr.mxu0 0.0
        %3646 = vmatpush1.msra.mxu0 %v3560
        %3647 = vmatprep.subr.mxu0 0.0
        %3648 = vmatpush1.msra.mxu0 %v3561
        %3649 = vmatprep.subr.mxu0 0.0
        %3650 = vmatpush1.msra.mxu0 %v3562
        %3651 = vmatprep.subr.mxu0 0.0
        %3652 = vmatpush1.msra.mxu0 %v3563
        %3653 = vmatprep.subr.mxu0 0.0
        %3654 = vmatpush1.msra.mxu0 %v3564
        %3655 = vmatprep.subr.mxu0 0.0
        %3656 = vmatpush1.msra.mxu0 %v3565
        %3657 = vmatprep.subr.mxu0 0.0
        %3658 = vmatpush1.msra.mxu0 %v3566
        %3659 = vmatprep.subr.mxu0 0.0
        %3660 = vmatpush1.msra.mxu0 %v3567
        %3661 = vmatprep.subr.mxu0 0.0
        %3662 = vmatpush1.msra.mxu0 %v3568
        %3663 = vmatprep.subr.mxu0 0.0
        %3664 = vmatpush1.msra.mxu0 %v3569
        %3665 = vmatprep.subr.mxu0 0.0
        %3666 = vmatpush1.msra.mxu0 %v3570
        %3667 = vmatprep.mubr.f32.mxu0 %v3526
        %3668 = vmatmul.mubr.f32.gmra.mrb[0].mxu0 %v3520
        %v3669 = vpop.f32.mrb[0].mxu0
        %v3670 = vadd.f32 0.0, %v3669
        %v3671 = vpop.f32.mrb[0].mxu0
        %3672 = vdwg.mxu0
        %3673 = vmatprep.subr.mxu0 0.0
        %3674 = vmatpush1.msra.mxu0 %v3571
        %3675 = vmatprep.subr.mxu0 0.0
        %3676 = vmatpush1.msra.mxu0 %v3572
        %3677 = vmatprep.subr.mxu0 0.0
        %3678 = vmatpush1.msra.mxu0 %v3573
        %3679 = vmatprep.subr.mxu0 0.0
        %3680 = vmatpush1.msra.mxu0 %v3574
        %3681 = vmatprep.subr.mxu0 0.0
        %3682 = vmatpush1.msra.mxu0 %v3575
        %3683 = vmatprep.subr.mxu0 0.0
        %3684 = vmatpush1.msra.mxu0 %v3576
        %3685 = vmatprep.subr.mxu0 0.0
        %3686 = vmatpush1.msra.mxu0 %v3577
        %3687 = vmatprep.subr.mxu0 0.0
        %3688 = vmatpush1.msra.mxu0 %v3578
        %3689 = vmatprep.subr.mxu0 0.0
        %3690 = vmatpush1.msra.mxu0 %v3579
        %3691 = vmatprep.subr.mxu0 0.0
        %3692 = vmatpush1.msra.mxu0 %v3580
        %3693 = vmatprep.subr.mxu0 0.0
        %3694 = vmatpush1.msra.mxu0 %v3581
        %3695 = vmatprep.subr.mxu0 0.0
        %3696 = vmatpush1.msra.mxu0 %v3582
        %3697 = vmatprep.subr.mxu0 0.0
        %3698 = vmatpush1.msra.mxu0 %v3583
        %3699 = vmatprep.subr.mxu0 0.0
        %3700 = vmatpush1.msra.mxu0 %v3584
        %3701 = vmatprep.subr.mxu0 0.0
        %3702 = vmatpush1.msra.mxu0 %v3585
        %3703 = vmatprep.subr.mxu0 0.0
        %3704 = vmatpush1.msra.mxu0 %v3586
        %3705 = vmatprep.subr.mxu0 0.0
        %3706 = vmatpush1.msra.mxu0 %v3587
        %3707 = vmatprep.subr.mxu0 0.0
        %3708 = vmatpush1.msra.mxu0 %v3588
        %3709 = vmatprep.subr.mxu0 0.0
        %3710 = vmatpush1.msra.mxu0 %v3589
        %3711 = vmatprep.subr.mxu0 0.0
        %3712 = vmatpush1.msra.mxu0 %v3590
        %3713 = vmatprep.subr.mxu0 0.0
        %3714 = vmatpush1.msra.mxu0 %v3591
        %3715 = vmatprep.subr.mxu0 0.0
        %3716 = vmatpush1.msra.mxu0 %v3592
        %3717 = vmatprep.subr.mxu0 0.0
        %3718 = vmatpush1.msra.mxu0 %v3593
        %3719 = vmatprep.subr.mxu0 0.0
        %3720 = vmatpush1.msra.mxu0 %v3594
        %3721 = vmatprep.subr.mxu0 0.0
        %3722 = vmatpush1.msra.mxu0 %v3595
        %3723 = vmatprep.subr.mxu0 0.0
        %3724 = vmatpush1.msra.mxu0 %v3596
        %3725 = vmatprep.subr.mxu0 0.0
        %3726 = vmatpush1.msra.mxu0 %v3597
        %3727 = vmatprep.subr.mxu0 0.0
        %3728 = vmatpush1.msra.mxu0 %v3598
        %3729 = vmatprep.subr.mxu0 0.0
        %3730 = vmatpush1.msra.mxu0 %v3599
        %3731 = vmatprep.subr.mxu0 0.0
        %3732 = vmatpush1.msra.mxu0 %v3600
        %3733 = vmatprep.subr.mxu0 0.0
        %3734 = vmatpush1.msra.mxu0 %v3601
        %3735 = vmatprep.subr.mxu0 0.0
        %3736 = vmatpush1.msra.mxu0 %v3602
        %3737 = vmatprep.mubr.f32.mxu0 %v3538
        %3738 = vmatmul.mubr.f32.gmra.mrb[0].mxu0 %v3532
        %v3739 = vpop.f32.mrb[0].mxu0
        %v3740 = vadd.f32 %v3670, %v3739
        %v3741 = vpop.f32.mrb[0].mxu0
        %3742 = vdwg.mxu0
        %v3743 = vld [vmem:[#allocation21] sm:$0xff]
        %v3744 = vld [vmem:[#allocation21 + $0x8] sm:$0xff]
        %v3745 = vld [vmem:[#allocation21 + $0x10] sm:$0xff]
        %v3746 = vld [vmem:[#allocation21 + $0x18] sm:$0xff]
        %v3747 = vld [vmem:[#allocation21 + $0x20] sm:$0xff]
        %v3748 = vld [vmem:[#allocation21 + $0x28] sm:$0xff]
        %v3749 = vld [vmem:[#allocation21 + $0x30] sm:$0xff]
        %v3750 = vld [vmem:[#allocation21 + $0x38] sm:$0xff]
        %v3751 = vld [vmem:[#allocation21 + $0x40] sm:$0xff]
        %v3752 = vld [vmem:[#allocation21 + $0x48] sm:$0xff]
        %v3753 = vld [vmem:[#allocation21 + $0x50] sm:$0xff]
        %v3754 = vld [vmem:[#allocation21 + $0x58] sm:$0xff]
        %v3755 = vld [vmem:[#allocation21 + $0x60] sm:$0xff]
        %v3756 = vld [vmem:[#allocation21 + $0x68] sm:$0xff]
        %v3757 = vld [vmem:[#allocation21 + $0x70] sm:$0xff]
        %v3758 = vld [vmem:[#allocation21 + $0x78] sm:$0xff]
        %v3760 = vsel %vm989, %v3740, 0
        %3762 = vmatprep.subr.mxu0 %v3744
        %3763 = vmatpush1.msra.mxu0 %v3743
        %3764 = vmatprep.subr.mxu0 %v3748
        %3765 = vmatpush1.msra.mxu0 %v3747
        %3766 = vmatprep.subr.mxu0 %v3752
        %3767 = vmatpush1.msra.mxu0 %v3751
        %3768 = vmatprep.subr.mxu0 %v3756
        %3769 = vmatpush1.msra.mxu0 %v3755
        %3770 = vmatprep.subr.mxu0 0.0
        %3771 = vmatpush1.msra.mxu0 0.0
        %3772 = vmatprep.subr.mxu0 0.0
        %3773 = vmatpush1.msra.mxu0 0.0
        %3774 = vmatprep.subr.mxu0 0.0
        %3775 = vmatpush1.msra.mxu0 0.0
        %3776 = vmatprep.subr.mxu0 0.0
        %3777 = vmatpush1.msra.mxu0 0.0
        %3778 = vmatprep.subr.mxu0 0.0
        %3779 = vmatpush1.msra.mxu0 0.0
        %3780 = vmatprep.subr.mxu0 0.0
        %3781 = vmatpush1.msra.mxu0 0.0
        %3782 = vmatprep.subr.mxu0 0.0
        %3783 = vmatpush1.msra.mxu0 0.0
        %3784 = vmatprep.subr.mxu0 0.0
        %3785 = vmatpush1.msra.mxu0 0.0
        %3786 = vmatprep.subr.mxu0 0.0
        %3787 = vmatpush1.msra.mxu0 0.0
        %3788 = vmatprep.subr.mxu0 0.0
        %3789 = vmatpush1.msra.mxu0 0.0
        %3790 = vmatprep.subr.mxu0 0.0
        %3791 = vmatpush1.msra.mxu0 0.0
        %3792 = vmatprep.subr.mxu0 0.0
        %3793 = vmatpush1.msra.mxu0 0.0
        %3794 = vmatprep.subr.mxu0 0.0
        %3795 = vmatpush1.msra.mxu0 0.0
        %3796 = vmatprep.subr.mxu0 0.0
        %3797 = vmatpush1.msra.mxu0 0.0
        %3798 = vmatprep.subr.mxu0 0.0
        %3799 = vmatpush1.msra.mxu0 0.0
        %3800 = vmatprep.subr.mxu0 0.0
        %3801 = vmatpush1.msra.mxu0 0.0
        %3802 = vmatprep.subr.mxu0 0.0
        %3803 = vmatpush1.msra.mxu0 0.0
        %3804 = vmatprep.subr.mxu0 0.0
        %3805 = vmatpush1.msra.mxu0 0.0
        %3806 = vmatprep.subr.mxu0 0.0
        %3807 = vmatpush1.msra.mxu0 0.0
        %3808 = vmatprep.subr.mxu0 0.0
        %3809 = vmatpush1.msra.mxu0 0.0
        %3810 = vmatprep.subr.mxu0 0.0
        %3811 = vmatpush1.msra.mxu0 0.0
        %3812 = vmatprep.subr.mxu0 0.0
        %3813 = vmatpush1.msra.mxu0 0.0
        %3814 = vmatprep.subr.mxu0 0.0
        %3815 = vmatpush1.msra.mxu0 0.0
        %3816 = vmatprep.subr.mxu0 0.0
        %3817 = vmatpush1.msra.mxu0 0.0
        %3818 = vmatprep.subr.mxu0 0.0
        %3819 = vmatpush1.msra.mxu0 0.0
        %3820 = vmatprep.subr.mxu0 0.0
        %3821 = vmatpush1.msra.mxu0 0.0
        %3822 = vmatprep.subr.mxu0 0.0
        %3823 = vmatpush1.msra.mxu0 0.0
        %3824 = vmatprep.subr.mxu0 0.0
        %3825 = vmatpush1.msra.mxu0 0.0
        %3826 = vmatprep.mubr.f32.mxu0 0.0
        %3827 = vmatmul.mubr.f32.gmra.mrb[0].mxu0 %v3760
        %v3828 = vpop.f32.mrb[0].mxu0
        %v3829 = vadd.f32 0.0, %v3828
        %v3830 = vpop.f32.mrb[0].mxu0
        %v3831 = vadd.f32 0.0, %v3830
        %3832 = vdwg.mxu0
        %3833 = vmatprep.subr.mxu0 %v3746
        %3834 = vmatpush1.msra.mxu0 %v3745
        %3835 = vmatprep.subr.mxu0 %v3750
        %3836 = vmatpush1.msra.mxu0 %v3749
        %3837 = vmatprep.subr.mxu0 %v3754
        %3838 = vmatpush1.msra.mxu0 %v3753
        %3839 = vmatprep.subr.mxu0 %v3758
        %3840 = vmatpush1.msra.mxu0 %v3757
        %3841 = vmatprep.subr.mxu0 0.0
        %3842 = vmatpush1.msra.mxu0 0.0
        %3843 = vmatprep.subr.mxu0 0.0
        %3844 = vmatpush1.msra.mxu0 0.0
        %3845 = vmatprep.subr.mxu0 0.0
        %3846 = vmatpush1.msra.mxu0 0.0
        %3847 = vmatprep.subr.mxu0 0.0
        %3848 = vmatpush1.msra.mxu0 0.0
        %3849 = vmatprep.subr.mxu0 0.0
        %3850 = vmatpush1.msra.mxu0 0.0
        %3851 = vmatprep.subr.mxu0 0.0
        %3852 = vmatpush1.msra.mxu0 0.0
        %3853 = vmatprep.subr.mxu0 0.0
        %3854 = vmatpush1.msra.mxu0 0.0
        %3855 = vmatprep.subr.mxu0 0.0
        %3856 = vmatpush1.msra.mxu0 0.0
        %3857 = vmatprep.subr.mxu0 0.0
        %3858 = vmatpush1.msra.mxu0 0.0
        %3859 = vmatprep.subr.mxu0 0.0
        %3860 = vmatpush1.msra.mxu0 0.0
        %3861 = vmatprep.subr.mxu0 0.0
        %3862 = vmatpush1.msra.mxu0 0.0
        %3863 = vmatprep.subr.mxu0 0.0
        %3864 = vmatpush1.msra.mxu0 0.0
        %3865 = vmatprep.subr.mxu0 0.0
        %3866 = vmatpush1.msra.mxu0 0.0
        %3867 = vmatprep.subr.mxu0 0.0
        %3868 = vmatpush1.msra.mxu0 0.0
        %3869 = vmatprep.subr.mxu0 0.0
        %3870 = vmatpush1.msra.mxu0 0.0
        %3871 = vmatprep.subr.mxu0 0.0
        %3872 = vmatpush1.msra.mxu0 0.0
        %3873 = vmatprep.subr.mxu0 0.0
        %3874 = vmatpush1.msra.mxu0 0.0
        %3875 = vmatprep.subr.mxu0 0.0
        %3876 = vmatpush1.msra.mxu0 0.0
        %3877 = vmatprep.subr.mxu0 0.0
        %3878 = vmatpush1.msra.mxu0 0.0
        %3879 = vmatprep.subr.mxu0 0.0
        %3880 = vmatpush1.msra.mxu0 0.0
        %3881 = vmatprep.subr.mxu0 0.0
        %3882 = vmatpush1.msra.mxu0 0.0
        %3883 = vmatprep.subr.mxu0 0.0
        %3884 = vmatpush1.msra.mxu0 0.0
        %3885 = vmatprep.subr.mxu0 0.0
        %3886 = vmatpush1.msra.mxu0 0.0
        %3887 = vmatprep.subr.mxu0 0.0
        %3888 = vmatpush1.msra.mxu0 0.0
        %3889 = vmatprep.subr.mxu0 0.0
        %3890 = vmatpush1.msra.mxu0 0.0
        %3891 = vmatprep.subr.mxu0 0.0
        %3892 = vmatpush1.msra.mxu0 0.0
        %3893 = vmatprep.subr.mxu0 0.0
        %3894 = vmatpush1.msra.mxu0 0.0
        %3895 = vmatprep.subr.mxu0 0.0
        %3896 = vmatpush1.msra.mxu0 0.0
        %3897 = vmatprep.mubr.f32.mxu0 0.0
        %3898 = vmatmul.mubr.f32.gmra.mrb[0].mxu0 %v3760
        %v3899 = vpop.f32.mrb[0].mxu0
        %v3900 = vadd.f32 0.0, %v3899
        %v3901 = vpop.f32.mrb[0].mxu0
        %v3902 = vadd.f32 0.0, %v3901
        %3903 = vdwg.mxu0
        %v3904 = vmul.f32 %v3829, 0.0078125
        %v3905 = vmul.f32 %v3831, 0.0078125
        %v3906 = vmul.f32 %v3900, 0.0078125
        %v3907 = vmul.f32 %v3902, 0.0078125
        %v3908 = vlaneseq
        %v3909 = vshrl.u32 %v3908, 7
        %v3910 = vsub.s32 0, %v3909
        %v3911 = vrot.slane %v3904, %v3910
        %v3912 = vlaneseq
        %v3913 = vshrl.u32 %v3912, 7
        %v3914 = vsub.s32 0, %v3913
        %v3915 = vrot.slane %v3905, %v3914
        %v3916 = vlaneseq
        %v3917 = vshrl.u32 %v3916, 7
        %v3918 = vsub.s32 0, %v3917
        %v3919 = vrot.slane %v3906, %v3918
        %v3920 = vlaneseq
        %v3921 = vshrl.u32 %v3920, 7
        %v3922 = vsub.s32 0, %v3921
        %v3923 = vrot.slane %v3907, %v3922
        %v3924 = vsub.f32 %v3511, %v3911
        %v3925 = vsub.f32 %v3512, %v3915
        %v3926 = vsub.f32 %v3513, %v3919
        %v3927 = vsub.f32 %v3514, %v3923
        %v3928 = vmul.f32 %v3924, %v3924
        %v3929 = vmul.f32 %v3925, %v3925
        %v3930 = vmul.f32 %v3926, %v3926
        %v3931 = vmul.f32 %v3927, %v3927
        %v3932 = vrot.slane %v3928, 4
        %v3933 = vadd.f32 %v3928, %v3932
        %v3934 = vrot.slane %v3933, 2
        %v3935 = vadd.f32 %v3933, %v3934
        %v3936 = vrot.slane %v3935, 1
        %v3937 = vadd.f32 %v3935, %v3936
        %v3938 = vrot.slane %v3929, 4
        %v3939 = vadd.f32 %v3929, %v3938
        %v3940 = vrot.slane %v3939, 2
        %v3941 = vadd.f32 %v3939, %v3940
        %v3942 = vrot.slane %v3941, 1
        %v3943 = vadd.f32 %v3941, %v3942
        %v3944 = vrot.slane %v3930, 4
        %v3945 = vadd.f32 %v3930, %v3944
        %v3946 = vrot.slane %v3945, 2
        %v3947 = vadd.f32 %v3945, %v3946
        %v3948 = vrot.slane %v3947, 1
        %v3949 = vadd.f32 %v3947, %v3948
        %v3950 = vrot.slane %v3931, 4
        %v3951 = vadd.f32 %v3931, %v3950
        %v3952 = vrot.slane %v3951, 2
        %v3953 = vadd.f32 %v3951, %v3952
        %v3954 = vrot.slane %v3953, 1
        %v3955 = vadd.f32 %v3953, %v3954
        %3956 = vmatprep.subr.mxu0 0.0
        %3957 = vmatpush1.msra.mxu0 %v3539
        %3958 = vmatprep.subr.mxu0 0.0
        %3959 = vmatpush1.msra.mxu0 %v3540
        %3960 = vmatprep.subr.mxu0 0.0
        %3961 = vmatpush1.msra.mxu0 %v3541
        %3962 = vmatprep.subr.mxu0 0.0
        %3963 = vmatpush1.msra.mxu0 %v3542
        %3964 = vmatprep.subr.mxu0 0.0
        %3965 = vmatpush1.msra.mxu0 %v3543
        %3966 = vmatprep.subr.mxu0 0.0
        %3967 = vmatpush1.msra.mxu0 %v3544
        %3968 = vmatprep.subr.mxu0 0.0
        %3969 = vmatpush1.msra.mxu0 %v3545
        %3970 = vmatprep.subr.mxu0 0.0
        %3971 = vmatpush1.msra.mxu0 %v3546
        %3972 = vmatprep.subr.mxu0 0.0
        %3973 = vmatpush1.msra.mxu0 %v3547
        %3974 = vmatprep.subr.mxu0 0.0
        %3975 = vmatpush1.msra.mxu0 %v3548
        %3976 = vmatprep.subr.mxu0 0.0
        %3977 = vmatpush1.msra.mxu0 %v3549
        %3978 = vmatprep.subr.mxu0 0.0
        %3979 = vmatpush1.msra.mxu0 %v3550
        %3980 = vmatprep.subr.mxu0 0.0
        %3981 = vmatpush1.msra.mxu0 %v3551
        %3982 = vmatprep.subr.mxu0 0.0
        %3983 = vmatpush1.msra.mxu0 %v3552
        %3984 = vmatprep.subr.mxu0 0.0
        %3985 = vmatpush1.msra.mxu0 %v3553
        %3986 = vmatprep.subr.mxu0 0.0
        %3987 = vmatpush1.msra.mxu0 %v3554
        %3988 = vmatprep.subr.mxu0 0.0
        %3989 = vmatpush1.msra.mxu0 %v3555
        %3990 = vmatprep.subr.mxu0 0.0
        %3991 = vmatpush1.msra.mxu0 %v3556
        %3992 = vmatprep.subr.mxu0 0.0
        %3993 = vmatpush1.msra.mxu0 %v3557
        %3994 = vmatprep.subr.mxu0 0.0
        %3995 = vmatpush1.msra.mxu0 %v3558
        %3996 = vmatprep.subr.mxu0 0.0
        %3997 = vmatpush1.msra.mxu0 %v3559
        %3998 = vmatprep.subr.mxu0 0.0
        %3999 = vmatpush1.msra.mxu0 %v3560
        %4000 = vmatprep.subr.mxu0 0.0
        %4001 = vmatpush1.msra.mxu0 %v3561
        %4002 = vmatprep.subr.mxu0 0.0
        %4003 = vmatpush1.msra.mxu0 %v3562
        %4004 = vmatprep.subr.mxu0 0.0
        %4005 = vmatpush1.msra.mxu0 %v3563
        %4006 = vmatprep.subr.mxu0 0.0
        %4007 = vmatpush1.msra.mxu0 %v3564
        %4008 = vmatprep.subr.mxu0 0.0
        %4009 = vmatpush1.msra.mxu0 %v3565
        %4010 = vmatprep.subr.mxu0 0.0
        %4011 = vmatpush1.msra.mxu0 %v3566
        %4012 = vmatprep.subr.mxu0 0.0
        %4013 = vmatpush1.msra.mxu0 %v3567
        %4014 = vmatprep.subr.mxu0 0.0
        %4015 = vmatpush1.msra.mxu0 %v3568
        %4016 = vmatprep.subr.mxu0 0.0
        %4017 = vmatpush1.msra.mxu0 %v3569
        %4018 = vmatprep.subr.mxu0 0.0
        %4019 = vmatpush1.msra.mxu0 %v3570
        %4020 = vmatprep.mubr.f32.mxu0 %v3943
        %4021 = vmatmul.mubr.f32.gmra.mrb[0].mxu0 %v3937
        %v4022 = vpop.f32.mrb[0].mxu0
        %v4023 = vadd.f32 0.0, %v4022
        %v4024 = vpop.f32.mrb[0].mxu0
        %4025 = vdwg.mxu0
        %4026 = vmatprep.subr.mxu0 0.0
        %4027 = vmatpush1.msra.mxu0 %v3571
        %4028 = vmatprep.subr.mxu0 0.0
        %4029 = vmatpush1.msra.mxu0 %v3572
        %4030 = vmatprep.subr.mxu0 0.0
        %4031 = vmatpush1.msra.mxu0 %v3573
        %4032 = vmatprep.subr.mxu0 0.0
        %4033 = vmatpush1.msra.mxu0 %v3574
        %4034 = vmatprep.subr.mxu0 0.0
        %4035 = vmatpush1.msra.mxu0 %v3575
        %4036 = vmatprep.subr.mxu0 0.0
        %4037 = vmatpush1.msra.mxu0 %v3576
        %4038 = vmatprep.subr.mxu0 0.0
        %4039 = vmatpush1.msra.mxu0 %v3577
        %4040 = vmatprep.subr.mxu0 0.0
        %4041 = vmatpush1.msra.mxu0 %v3578
        %4042 = vmatprep.subr.mxu0 0.0
        %4043 = vmatpush1.msra.mxu0 %v3579
        %4044 = vmatprep.subr.mxu0 0.0
        %4045 = vmatpush1.msra.mxu0 %v3580
        %4046 = vmatprep.subr.mxu0 0.0
        %4047 = vmatpush1.msra.mxu0 %v3581
        %4048 = vmatprep.subr.mxu0 0.0
        %4049 = vmatpush1.msra.mxu0 %v3582
        %4050 = vmatprep.subr.mxu0 0.0
        %4051 = vmatpush1.msra.mxu0 %v3583
        %4052 = vmatprep.subr.mxu0 0.0
        %4053 = vmatpush1.msra.mxu0 %v3584
        %4054 = vmatprep.subr.mxu0 0.0
        %4055 = vmatpush1.msra.mxu0 %v3585
        %4056 = vmatprep.subr.mxu0 0.0
        %4057 = vmatpush1.msra.mxu0 %v3586
        %4058 = vmatprep.subr.mxu0 0.0
        %4059 = vmatpush1.msra.mxu0 %v3587
        %4060 = vmatprep.subr.mxu0 0.0
        %4061 = vmatpush1.msra.mxu0 %v3588
        %4062 = vmatprep.subr.mxu0 0.0
        %4063 = vmatpush1.msra.mxu0 %v3589
        %4064 = vmatprep.subr.mxu0 0.0
        %4065 = vmatpush1.msra.mxu0 %v3590
        %4066 = vmatprep.subr.mxu0 0.0
        %4067 = vmatpush1.msra.mxu0 %v3591
        %4068 = vmatprep.subr.mxu0 0.0
        %4069 = vmatpush1.msra.mxu0 %v3592
        %4070 = vmatprep.subr.mxu0 0.0
        %4071 = vmatpush1.msra.mxu0 %v3593
        %4072 = vmatprep.subr.mxu0 0.0
        %4073 = vmatpush1.msra.mxu0 %v3594
        %4074 = vmatprep.subr.mxu0 0.0
        %4075 = vmatpush1.msra.mxu0 %v3595
        %4076 = vmatprep.subr.mxu0 0.0
        %4077 = vmatpush1.msra.mxu0 %v3596
        %4078 = vmatprep.subr.mxu0 0.0
        %4079 = vmatpush1.msra.mxu0 %v3597
        %4080 = vmatprep.subr.mxu0 0.0
        %4081 = vmatpush1.msra.mxu0 %v3598
        %4082 = vmatprep.subr.mxu0 0.0
        %4083 = vmatpush1.msra.mxu0 %v3599
        %4084 = vmatprep.subr.mxu0 0.0
        %4085 = vmatpush1.msra.mxu0 %v3600
        %4086 = vmatprep.subr.mxu0 0.0
        %4087 = vmatpush1.msra.mxu0 %v3601
        %4088 = vmatprep.subr.mxu0 0.0
        %4089 = vmatpush1.msra.mxu0 %v3602
        %4090 = vmatprep.mubr.f32.mxu0 %v3955
        %4091 = vmatmul.mubr.f32.gmra.mrb[0].mxu0 %v3949
        %v4092 = vpop.f32.mrb[0].mxu0
        %v4093 = vadd.f32 %v4023, %v4092
        %v4094 = vpop.f32.mrb[0].mxu0
        %4095 = vdwg.mxu0
        %v4097 = vsel %vm989, %v4093, 0
        %4099 = vmatprep.subr.mxu0 %v3744
        %4100 = vmatpush1.msra.mxu0 %v3743
        %4101 = vmatprep.subr.mxu0 %v3748
        %4102 = vmatpush1.msra.mxu0 %v3747
        %4103 = vmatprep.subr.mxu0 %v3752
        %4104 = vmatpush1.msra.mxu0 %v3751
        %4105 = vmatprep.subr.mxu0 %v3756
        %4106 = vmatpush1.msra.mxu0 %v3755
        %4107 = vmatprep.subr.mxu0 0.0
        %4108 = vmatpush1.msra.mxu0 0.0
        %4109 = vmatprep.subr.mxu0 0.0
        %4110 = vmatpush1.msra.mxu0 0.0
        %4111 = vmatprep.subr.mxu0 0.0
        %4112 = vmatpush1.msra.mxu0 0.0
        %4113 = vmatprep.subr.mxu0 0.0
        %4114 = vmatpush1.msra.mxu0 0.0
        %4115 = vmatprep.subr.mxu0 0.0
        %4116 = vmatpush1.msra.mxu0 0.0
        %4117 = vmatprep.subr.mxu0 0.0
        %4118 = vmatpush1.msra.mxu0 0.0
        %4119 = vmatprep.subr.mxu0 0.0
        %4120 = vmatpush1.msra.mxu0 0.0
        %4121 = vmatprep.subr.mxu0 0.0
        %4122 = vmatpush1.msra.mxu0 0.0
        %4123 = vmatprep.subr.mxu0 0.0
        %4124 = vmatpush1.msra.mxu0 0.0
        %4125 = vmatprep.subr.mxu0 0.0
        %4126 = vmatpush1.msra.mxu0 0.0
        %4127 = vmatprep.subr.mxu0 0.0
        %4128 = vmatpush1.msra.mxu0 0.0
        %4129 = vmatprep.subr.mxu0 0.0
        %4130 = vmatpush1.msra.mxu0 0.0
        %4131 = vmatprep.subr.mxu0 0.0
        %4132 = vmatpush1.msra.mxu0 0.0
        %4133 = vmatprep.subr.mxu0 0.0
        %4134 = vmatpush1.msra.mxu0 0.0
        %4135 = vmatprep.subr.mxu0 0.0
        %4136 = vmatpush1.msra.mxu0 0.0
        %4137 = vmatprep.subr.mxu0 0.0
        %4138 = vmatpush1.msra.mxu0 0.0
        %4139 = vmatprep.subr.mxu0 0.0
        %4140 = vmatpush1.msra.mxu0 0.0
        %4141 = vmatprep.subr.mxu0 0.0
        %4142 = vmatpush1.msra.mxu0 0.0
        %4143 = vmatprep.subr.mxu0 0.0
        %4144 = vmatpush1.msra.mxu0 0.0
        %4145 = vmatprep.subr.mxu0 0.0
        %4146 = vmatpush1.msra.mxu0 0.0
        %4147 = vmatprep.subr.mxu0 0.0
        %4148 = vmatpush1.msra.mxu0 0.0
        %4149 = vmatprep.subr.mxu0 0.0
        %4150 = vmatpush1.msra.mxu0 0.0
        %4151 = vmatprep.subr.mxu0 0.0
        %4152 = vmatpush1.msra.mxu0 0.0
        %4153 = vmatprep.subr.mxu0 0.0
        %4154 = vmatpush1.msra.mxu0 0.0
        %4155 = vmatprep.subr.mxu0 0.0
        %4156 = vmatpush1.msra.mxu0 0.0
        %4157 = vmatprep.subr.mxu0 0.0
        %4158 = vmatpush1.msra.mxu0 0.0
        %4159 = vmatprep.subr.mxu0 0.0
        %4160 = vmatpush1.msra.mxu0 0.0
        %4161 = vmatprep.subr.mxu0 0.0
        %4162 = vmatpush1.msra.mxu0 0.0
        %4163 = vmatprep.mubr.f32.mxu0 0.0
        %4164 = vmatmul.mubr.f32.gmra.mrb[0].mxu0 %v4097
        %v4165 = vpop.f32.mrb[0].mxu0
        %v4166 = vadd.f32 0.0, %v4165
        %v4167 = vpop.f32.mrb[0].mxu0
        %v4168 = vadd.f32 0.0, %v4167
        %4169 = vdwg.mxu0
        %4170 = vmatprep.subr.mxu0 %v3746
        %4171 = vmatpush1.msra.mxu0 %v3745
        %4172 = vmatprep.subr.mxu0 %v3750
        %4173 = vmatpush1.msra.mxu0 %v3749
        %4174 = vmatprep.subr.mxu0 %v3754
        %4175 = vmatpush1.msra.mxu0 %v3753
        %4176 = vmatprep.subr.mxu0 %v3758
        %4177 = vmatpush1.msra.mxu0 %v3757
        %4178 = vmatprep.subr.mxu0 0.0
        %4179 = vmatpush1.msra.mxu0 0.0
        %4180 = vmatprep.subr.mxu0 0.0
        %4181 = vmatpush1.msra.mxu0 0.0
        %4182 = vmatprep.subr.mxu0 0.0
        %4183 = vmatpush1.msra.mxu0 0.0
        %4184 = vmatprep.subr.mxu0 0.0
        %4185 = vmatpush1.msra.mxu0 0.0
        %4186 = vmatprep.subr.mxu0 0.0
        %4187 = vmatpush1.msra.mxu0 0.0
        %4188 = vmatprep.subr.mxu0 0.0
        %4189 = vmatpush1.msra.mxu0 0.0
        %4190 = vmatprep.subr.mxu0 0.0
        %4191 = vmatpush1.msra.mxu0 0.0
        %4192 = vmatprep.subr.mxu0 0.0
        %4193 = vmatpush1.msra.mxu0 0.0
        %4194 = vmatprep.subr.mxu0 0.0
        %4195 = vmatpush1.msra.mxu0 0.0
        %4196 = vmatprep.subr.mxu0 0.0
        %4197 = vmatpush1.msra.mxu0 0.0
        %4198 = vmatprep.subr.mxu0 0.0
        %4199 = vmatpush1.msra.mxu0 0.0
        %4200 = vmatprep.subr.mxu0 0.0
        %4201 = vmatpush1.msra.mxu0 0.0
        %4202 = vmatprep.subr.mxu0 0.0
        %4203 = vmatpush1.msra.mxu0 0.0
        %4204 = vmatprep.subr.mxu0 0.0
        %4205 = vmatpush1.msra.mxu0 0.0
        %4206 = vmatprep.subr.mxu0 0.0
        %4207 = vmatpush1.msra.mxu0 0.0
        %4208 = vmatprep.subr.mxu0 0.0
        %4209 = vmatpush1.msra.mxu0 0.0
        %4210 = vmatprep.subr.mxu0 0.0
        %4211 = vmatpush1.msra.mxu0 0.0
        %4212 = vmatprep.subr.mxu0 0.0
        %4213 = vmatpush1.msra.mxu0 0.0
        %4214 = vmatprep.subr.mxu0 0.0
        %4215 = vmatpush1.msra.mxu0 0.0
        %4216 = vmatprep.subr.mxu0 0.0
        %4217 = vmatpush1.msra.mxu0 0.0
        %4218 = vmatprep.subr.mxu0 0.0
        %4219 = vmatpush1.msra.mxu0 0.0
        %4220 = vmatprep.subr.mxu0 0.0
        %4221 = vmatpush1.msra.mxu0 0.0
        %4222 = vmatprep.subr.mxu0 0.0
        %4223 = vmatpush1.msra.mxu0 0.0
        %4224 = vmatprep.subr.mxu0 0.0
        %4225 = vmatpush1.msra.mxu0 0.0
        %4226 = vmatprep.subr.mxu0 0.0
        %4227 = vmatpush1.msra.mxu0 0.0
        %4228 = vmatprep.subr.mxu0 0.0
        %4229 = vmatpush1.msra.mxu0 0.0
        %4230 = vmatprep.subr.mxu0 0.0
        %4231 = vmatpush1.msra.mxu0 0.0
        %4232 = vmatprep.subr.mxu0 0.0
        %4233 = vmatpush1.msra.mxu0 0.0
        %4234 = vmatprep.mubr.f32.mxu0 0.0
        %4235 = vmatmul.mubr.f32.gmra.mrb[0].mxu0 %v4097
        %v4236 = vpop.f32.mrb[0].mxu0
        %v4237 = vadd.f32 0.0, %v4236
        %v4238 = vpop.f32.mrb[0].mxu0
        %v4239 = vadd.f32 0.0, %v4238
        %4240 = vdwg.mxu0
        %v4241 = vmul.f32 %v4166, 0.0078125
        %v4242 = vmul.f32 %v4168, 0.0078125
        %v4243 = vmul.f32 %v4237, 0.0078125
        %v4244 = vmul.f32 %v4239, 0.0078125
        %v4245 = vadd.f32 %v4241, 1e-05
        %v4246 = vadd.f32 %v4242, 1e-05
        %v4247 = vadd.f32 %v4243, 1e-05
        %v4248 = vadd.f32 %v4244, 1e-05
        %v4249 = vrsqrt.pop %v4245
        %v4250 = vrsqrt.pop %v4246
        %v4251 = vrsqrt.pop %v4247
        %v4252 = vrsqrt.pop %v4248
        %v4253 = vlaneseq
        %v4254 = vshrl.u32 %v4253, 7
        %v4255 = vsub.s32 0, %v4254
        %v4256 = vrot.slane %v4249, %v4255
        %v4257 = vlaneseq
        %v4258 = vshrl.u32 %v4257, 7
        %v4259 = vsub.s32 0, %v4258
        %v4260 = vrot.slane %v4250, %v4259
        %v4261 = vlaneseq
        %v4262 = vshrl.u32 %v4261, 7
        %v4263 = vsub.s32 0, %v4262
        %v4264 = vrot.slane %v4251, %v4263
        %v4265 = vlaneseq
        %v4266 = vshrl.u32 %v4265, 7
        %v4267 = vsub.s32 0, %v4266
        %v4268 = vrot.slane %v4252, %v4267
        %v4269 = vmul.f32 %v3924, %v4256
        %v4270 = vmul.f32 %v3925, %v4260
        %v4271 = vmul.f32 %v3926, %v4264
        %v4272 = vmul.f32 %v3927, %v4268
        %v4273 = vld [vmem:[#allocation18] sm:$0xf]
        %v4275 = vlaneseq
        %v4276 = vshrl.u32 %v4275, 7
        %v4277 = vsub.s32 0, %v4276
        %v4278 = vrot.slane %v4273, %v4277
        %v4279 = vlaneseq
        %v4280 = vshrl.u32 %v4279, 7
        %v4281 = vsub.s32 1, %v4280
        %v4282 = vrot.slane %v4273, %v4281
        %v4283 = vlaneseq
        %v4284 = vshrl.u32 %v4283, 7
        %v4285 = vsub.s32 2, %v4284
        %v4286 = vrot.slane %v4273, %v4285
        %v4287 = vlaneseq
        %v4288 = vshrl.u32 %v4287, 7
        %v4289 = vsub.s32 3, %v4288
        %v4290 = vrot.slane %v4273, %v4289
        %v4295 = vmul.f32 %v4269, %v4278
        %v4296 = vmul.f32 %v4270, %v4282
        %v4297 = vmul.f32 %v4271, %v4286
        %v4298 = vmul.f32 %v4272, %v4290
        %v4299 = vld [vmem:[#allocation20] sm:$0xf]
        %v4301 = vlaneseq
        %v4302 = vshrl.u32 %v4301, 7
        %v4303 = vsub.s32 0, %v4302
        %v4304 = vrot.slane %v4299, %v4303
        %v4305 = vlaneseq
        %v4306 = vshrl.u32 %v4305, 7
        %v4307 = vsub.s32 1, %v4306
        %v4308 = vrot.slane %v4299, %v4307
        %v4309 = vlaneseq
        %v4310 = vshrl.u32 %v4309, 7
        %v4311 = vsub.s32 2, %v4310
        %v4312 = vrot.slane %v4299, %v4311
        %v4313 = vlaneseq
        %v4314 = vshrl.u32 %v4313, 7
        %v4315 = vsub.s32 3, %v4314
        %v4316 = vrot.slane %v4299, %v4315
        %v4321 = vadd.f32 %v4295, %v4304
        %v4322 = vadd.f32 %v4296, %v4308
        %v4323 = vadd.f32 %v4297, %v4312
        %v4324 = vadd.f32 %v4298, %v4316
        %v4325 = vsub.f32 0.0, %v4321
        %v4326 = vsub.f32 0.0, %v4322
        %v4327 = vsub.f32 0.0, %v4323
        %v4328 = vsub.f32 0.0, %v4324
        %v4329 = vmul.f32 %v4325, 1.442695
        %v4330 = vpow.pop %v4329
        %v4331 = vmul.f32 %v4326, 1.442695
        %v4332 = vpow.pop %v4331
        %v4333 = vmul.f32 %v4327, 1.442695
        %v4334 = vpow.pop %v4333
        %v4335 = vmul.f32 %v4328, 1.442695
        %v4336 = vpow.pop %v4335
        %v4337 = vadd.f32 %v4330, 1.0
        %v4338 = vadd.f32 %v4332, 1.0
        %v4339 = vadd.f32 %v4334, 1.0
        %v4340 = vadd.f32 %v4336, 1.0
        %v4341 = vrcp.pop %v4337
        %v4342 = vrcp.pop %v4338
        %v4343 = vrcp.pop %v4339
        %v4344 = vrcp.pop %v4340
        %v4345 = vmul.f32 %v4321, %v4341
        %v4346 = vmul.f32 %v4322, %v4342
        %v4347 = vmul.f32 %v4323, %v4343
        %v4348 = vmul.f32 %v4324, %v4344
        %v4353 = vrot.slane %v4345, 7
        %v4354 = vrot.slane %v4346, 7
        %v4355 = vrot.slane %v4347, 7
        %v4356 = vrot.slane %v4348, 7
        %4361 = vst [vmem:[#allocation2] sm:$0xfe] %v4353
        %4362 = vst [vmem:[#allocation2 + $0x8] sm:$0xfe] %v4354
        %4363 = vst [vmem:[#allocation2 + $0x10] sm:$0xfe] %v4355
        %4364 = vst [vmem:[#allocation2 + $0x18] sm:$0xfe] %v4356
        %4365 = vst [vmem:[#allocation2 + $0x20] sm:$0x1] %v4353
        %4366 = vst [vmem:[#allocation2 + $0x28] sm:$0x1] %v4354
        %4367 = vst [vmem:[#allocation2 + $0x30] sm:$0x1] %v4355
        %4368 = vst [vmem:[#allocation2 + $0x38] sm:$0x1] %v4356
        %v4369 = vld [vmem:[#allocation2] sm:$0xff]
        %v4370 = vld [vmem:[#allocation2 + $0x8] sm:$0xff]
        %v4371 = vld [vmem:[#allocation2 + $0x10] sm:$0xff]
        %v4372 = vld [vmem:[#allocation2 + $0x18] sm:$0xff]
        %v4373 = vld [vmem:[#allocation2] sm:$0xfe]
        %v4374 = vld [vmem:[#allocation2 + $0x8] sm:$0xfe]
        %v4375 = vld [vmem:[#allocation2 + $0x10] sm:$0xfe]
        %v4376 = vld [vmem:[#allocation2 + $0x18] sm:$0xfe]
        %v4377 = vld [vmem:[#allocation2 + $0x20] sm:$0x1]
        %v4378 = vld [vmem:[#allocation2 + $0x28] sm:$0x1]
        %v4379 = vld [vmem:[#allocation2 + $0x30] sm:$0x1]
        %v4380 = vld [vmem:[#allocation2 + $0x38] sm:$0x1]
        %v4381 = vld [vmem:[#allocation2] sm:$0xfc]
        %v4382 = vld [vmem:[#allocation2 + $0x8] sm:$0xfc]
        %v4383 = vld [vmem:[#allocation2 + $0x10] sm:$0xfc]
        %v4384 = vld [vmem:[#allocation2 + $0x18] sm:$0xfc]
        %v4385 = vld [vmem:[#allocation2 + $0x20] sm:$0x3]
        %v4386 = vld [vmem:[#allocation2 + $0x28] sm:$0x3]
        %v4387 = vld [vmem:[#allocation2 + $0x30] sm:$0x3]
        %v4388 = vld [vmem:[#allocation2 + $0x38] sm:$0x3]
        %v4397 = vrot.slane %v4373, 1
        %v4398 = vrot.slane %v4377, 1
        %v4399 = vsel %vm1628, %v4397, %v4398
        %v4400 = vrot.slane %v4374, 1
        %v4401 = vrot.slane %v4378, 1
        %v4402 = vsel %vm1628, %v4400, %v4401
        %v4403 = vrot.slane %v4375, 1
        %v4404 = vrot.slane %v4379, 1
        %v4405 = vsel %vm1628, %v4403, %v4404
        %v4406 = vrot.slane %v4376, 1
        %v4407 = vrot.slane %v4380, 1
        %v4408 = vsel %vm1628, %v4406, %v4407
        %v4421 = vrot.slane %v4381, 2
        %v4422 = vrot.slane %v4385, 2
        %v4423 = vsel %vm1653, %v4421, %v4422
        %v4424 = vrot.slane %v4382, 2
        %v4425 = vrot.slane %v4386, 2
        %v4426 = vsel %vm1653, %v4424, %v4425
        %v4427 = vrot.slane %v4383, 2
        %v4428 = vrot.slane %v4387, 2
        %v4429 = vsel %vm1653, %v4427, %v4428
        %v4430 = vrot.slane %v4384, 2
        %v4431 = vrot.slane %v4388, 2
        %v4432 = vsel %vm1653, %v4430, %v4431
        %v4437 = vld [vmem:[#allocation23] sm:$0xff]
        %v4438 = vld [vmem:[#allocation23 + $0x8] sm:$0xff]
        %v4439 = vld [vmem:[#allocation23 + $0x10] sm:$0xff]
        %v4440 = vld [vmem:[#allocation23 + $0x18] sm:$0xff]
        %v4441 = vld [vmem:[#allocation23 + $0x20] sm:$0xff]
        %v4442 = vld [vmem:[#allocation23 + $0x28] sm:$0xff]
        %v4443 = vld [vmem:[#allocation23 + $0x30] sm:$0xff]
        %v4444 = vld [vmem:[#allocation23 + $0x38] sm:$0xff]
        %v4445 = vld [vmem:[#allocation23 + $0x40] sm:$0xff]
        %v4446 = vld [vmem:[#allocation23 + $0x48] sm:$0xff]
        %v4447 = vld [vmem:[#allocation23 + $0x50] sm:$0xff]
        %v4448 = vld [vmem:[#allocation23 + $0x58] sm:$0xff]
        %v4449 = vld [vmem:[#allocation23 + $0x60] sm:$0xff]
        %v4450 = vld [vmem:[#allocation23 + $0x68] sm:$0xff]
        %v4451 = vld [vmem:[#allocation23 + $0x70] sm:$0xff]
        %v4452 = vld [vmem:[#allocation23 + $0x78] sm:$0xff]
        %v4453 = vld [vmem:[#allocation23 + $0x80] sm:$0xff]
        %v4454 = vld [vmem:[#allocation23 + $0x88] sm:$0xff]
        %v4455 = vld [vmem:[#allocation23 + $0x90] sm:$0xff]
        %v4456 = vld [vmem:[#allocation23 + $0x98] sm:$0xff]
        %v4457 = vld [vmem:[#allocation23 + $0xa0] sm:$0xff]
        %v4458 = vld [vmem:[#allocation23 + $0xa8] sm:$0xff]
        %v4459 = vld [vmem:[#allocation23 + $0xb0] sm:$0xff]
        %v4460 = vld [vmem:[#allocation23 + $0xb8] sm:$0xff]
        %v4461 = vld [vmem:[#allocation23 + $0xc0] sm:$0xff]
        %v4462 = vld [vmem:[#allocation23 + $0xc8] sm:$0xff]
        %v4463 = vld [vmem:[#allocation23 + $0xd0] sm:$0xff]
        %v4464 = vld [vmem:[#allocation23 + $0xd8] sm:$0xff]
        %v4465 = vld [vmem:[#allocation23 + $0xe0] sm:$0xff]
        %v4466 = vld [vmem:[#allocation23 + $0xe8] sm:$0xff]
        %v4467 = vld [vmem:[#allocation23 + $0xf0] sm:$0xff]
        %v4468 = vld [vmem:[#allocation23 + $0xf8] sm:$0xff]
        %v4469 = vld [vmem:[#allocation23 + $0x100] sm:$0xff]
        %v4470 = vld [vmem:[#allocation23 + $0x108] sm:$0xff]
        %v4471 = vld [vmem:[#allocation23 + $0x110] sm:$0xff]
        %v4472 = vld [vmem:[#allocation23 + $0x118] sm:$0xff]
        %v4473 = vld [vmem:[#allocation23 + $0x120] sm:$0xff]
        %v4474 = vld [vmem:[#allocation23 + $0x128] sm:$0xff]
        %v4475 = vld [vmem:[#allocation23 + $0x130] sm:$0xff]
        %v4476 = vld [vmem:[#allocation23 + $0x138] sm:$0xff]
        %v4477 = vld [vmem:[#allocation23 + $0x140] sm:$0xff]
        %v4478 = vld [vmem:[#allocation23 + $0x148] sm:$0xff]
        %v4479 = vld [vmem:[#allocation23 + $0x150] sm:$0xff]
        %v4480 = vld [vmem:[#allocation23 + $0x158] sm:$0xff]
        %v4481 = vld [vmem:[#allocation23 + $0x160] sm:$0xff]
        %v4482 = vld [vmem:[#allocation23 + $0x168] sm:$0xff]
        %v4483 = vld [vmem:[#allocation23 + $0x170] sm:$0xff]
        %v4484 = vld [vmem:[#allocation23 + $0x178] sm:$0xff]
        %v4485 = vld [vmem:[#allocation23 + $0x180] sm:$0xff]
        %v4486 = vld [vmem:[#allocation23 + $0x188] sm:$0xff]
        %v4487 = vld [vmem:[#allocation23 + $0x190] sm:$0xff]
        %v4488 = vld [vmem:[#allocation23 + $0x198] sm:$0xff]
        %v4489 = vld [vmem:[#allocation23 + $0x1a0] sm:$0xff]
        %v4490 = vld [vmem:[#allocation23 + $0x1a8] sm:$0xff]
        %v4491 = vld [vmem:[#allocation23 + $0x1b0] sm:$0xff]
        %v4492 = vld [vmem:[#allocation23 + $0x1b8] sm:$0xff]
        %v4493 = vld [vmem:[#allocation23 + $0x1c0] sm:$0xff]
        %v4494 = vld [vmem:[#allocation23 + $0x1c8] sm:$0xff]
        %v4495 = vld [vmem:[#allocation23 + $0x1d0] sm:$0xff]
        %v4496 = vld [vmem:[#allocation23 + $0x1d8] sm:$0xff]
        %v4497 = vld [vmem:[#allocation23 + $0x1e0] sm:$0xff]
        %v4498 = vld [vmem:[#allocation23 + $0x1e8] sm:$0xff]
        %v4499 = vld [vmem:[#allocation23 + $0x1f0] sm:$0xff]
        %v4500 = vld [vmem:[#allocation23 + $0x1f8] sm:$0xff]
        %v4501 = vld [vmem:[#allocation23 + $0x200] sm:$0xff]
        %v4502 = vld [vmem:[#allocation23 + $0x208] sm:$0xff]
        %v4503 = vld [vmem:[#allocation23 + $0x210] sm:$0xff]
        %v4504 = vld [vmem:[#allocation23 + $0x218] sm:$0xff]
        %v4505 = vld [vmem:[#allocation23 + $0x220] sm:$0xff]
        %v4506 = vld [vmem:[#allocation23 + $0x228] sm:$0xff]
        %v4507 = vld [vmem:[#allocation23 + $0x230] sm:$0xff]
        %v4508 = vld [vmem:[#allocation23 + $0x238] sm:$0xff]
        %v4509 = vld [vmem:[#allocation23 + $0x240] sm:$0xff]
        %v4510 = vld [vmem:[#allocation23 + $0x248] sm:$0xff]
        %v4511 = vld [vmem:[#allocation23 + $0x250] sm:$0xff]
        %v4512 = vld [vmem:[#allocation23 + $0x258] sm:$0xff]
        %v4513 = vld [vmem:[#allocation23 + $0x260] sm:$0xff]
        %v4514 = vld [vmem:[#allocation23 + $0x268] sm:$0xff]
        %v4515 = vld [vmem:[#allocation23 + $0x270] sm:$0xff]
        %v4516 = vld [vmem:[#allocation23 + $0x278] sm:$0xff]
        %v4517 = vld [vmem:[#allocation23 + $0x280] sm:$0xff]
        %v4518 = vld [vmem:[#allocation23 + $0x288] sm:$0xff]
        %v4519 = vld [vmem:[#allocation23 + $0x290] sm:$0xff]
        %v4520 = vld [vmem:[#allocation23 + $0x298] sm:$0xff]
        %v4521 = vld [vmem:[#allocation23 + $0x2a0] sm:$0xff]
        %v4522 = vld [vmem:[#allocation23 + $0x2a8] sm:$0xff]
        %v4523 = vld [vmem:[#allocation23 + $0x2b0] sm:$0xff]
        %v4524 = vld [vmem:[#allocation23 + $0x2b8] sm:$0xff]
        %v4525 = vld [vmem:[#allocation23 + $0x2c0] sm:$0xff]
        %v4526 = vld [vmem:[#allocation23 + $0x2c8] sm:$0xff]
        %v4527 = vld [vmem:[#allocation23 + $0x2d0] sm:$0xff]
        %v4528 = vld [vmem:[#allocation23 + $0x2d8] sm:$0xff]
        %v4529 = vld [vmem:[#allocation23 + $0x2e0] sm:$0xff]
        %v4530 = vld [vmem:[#allocation23 + $0x2e8] sm:$0xff]
        %v4531 = vld [vmem:[#allocation23 + $0x2f0] sm:$0xff]
        %v4532 = vld [vmem:[#allocation23 + $0x2f8] sm:$0xff]
        %v4533 = vld [vmem:[#allocation23 + $0x300] sm:$0xff]
        %v4534 = vld [vmem:[#allocation23 + $0x308] sm:$0xff]
        %v4535 = vld [vmem:[#allocation23 + $0x310] sm:$0xff]
        %v4536 = vld [vmem:[#allocation23 + $0x318] sm:$0xff]
        %v4537 = vld [vmem:[#allocation23 + $0x320] sm:$0xff]
        %v4538 = vld [vmem:[#allocation23 + $0x328] sm:$0xff]
        %v4539 = vld [vmem:[#allocation23 + $0x330] sm:$0xff]
        %v4540 = vld [vmem:[#allocation23 + $0x338] sm:$0xff]
        %v4541 = vld [vmem:[#allocation23 + $0x340] sm:$0xff]
        %v4542 = vld [vmem:[#allocation23 + $0x348] sm:$0xff]
        %v4543 = vld [vmem:[#allocation23 + $0x350] sm:$0xff]
        %v4544 = vld [vmem:[#allocation23 + $0x358] sm:$0xff]
        %v4545 = vld [vmem:[#allocation23 + $0x360] sm:$0xff]
        %v4546 = vld [vmem:[#allocation23 + $0x368] sm:$0xff]
        %v4547 = vld [vmem:[#allocation23 + $0x370] sm:$0xff]
        %v4548 = vld [vmem:[#allocation23 + $0x378] sm:$0xff]
        %v4549 = vld [vmem:[#allocation23 + $0x380] sm:$0xff]
        %v4550 = vld [vmem:[#allocation23 + $0x388] sm:$0xff]
        %v4551 = vld [vmem:[#allocation23 + $0x390] sm:$0xff]
        %v4552 = vld [vmem:[#allocation23 + $0x398] sm:$0xff]
        %v4553 = vld [vmem:[#allocation23 + $0x3a0] sm:$0xff]
        %v4554 = vld [vmem:[#allocation23 + $0x3a8] sm:$0xff]
        %v4555 = vld [vmem:[#allocation23 + $0x3b0] sm:$0xff]
        %v4556 = vld [vmem:[#allocation23 + $0x3b8] sm:$0xff]
        %v4557 = vld [vmem:[#allocation23 + $0x3c0] sm:$0xff]
        %v4558 = vld [vmem:[#allocation23 + $0x3c8] sm:$0xff]
        %v4559 = vld [vmem:[#allocation23 + $0x3d0] sm:$0xff]
        %v4560 = vld [vmem:[#allocation23 + $0x3d8] sm:$0xff]
        %v4561 = vld [vmem:[#allocation23 + $0x3e0] sm:$0xff]
        %v4562 = vld [vmem:[#allocation23 + $0x3e8] sm:$0xff]
        %v4563 = vld [vmem:[#allocation23 + $0x3f0] sm:$0xff]
        %v4564 = vld [vmem:[#allocation23 + $0x3f8] sm:$0xff]
        %v4565 = vld [vmem:[#allocation23 + $0x400] sm:$0xff]
        %v4566 = vld [vmem:[#allocation23 + $0x408] sm:$0xff]
        %v4567 = vld [vmem:[#allocation23 + $0x410] sm:$0xff]
        %v4568 = vld [vmem:[#allocation23 + $0x418] sm:$0xff]
        %v4569 = vld [vmem:[#allocation23 + $0x420] sm:$0xff]
        %v4570 = vld [vmem:[#allocation23 + $0x428] sm:$0xff]
        %v4571 = vld [vmem:[#allocation23 + $0x430] sm:$0xff]
        %v4572 = vld [vmem:[#allocation23 + $0x438] sm:$0xff]
        %v4573 = vld [vmem:[#allocation23 + $0x440] sm:$0xff]
        %v4574 = vld [vmem:[#allocation23 + $0x448] sm:$0xff]
        %v4575 = vld [vmem:[#allocation23 + $0x450] sm:$0xff]
        %v4576 = vld [vmem:[#allocation23 + $0x458] sm:$0xff]
        %v4577 = vld [vmem:[#allocation23 + $0x460] sm:$0xff]
        %v4578 = vld [vmem:[#allocation23 + $0x468] sm:$0xff]
        %v4579 = vld [vmem:[#allocation23 + $0x470] sm:$0xff]
        %v4580 = vld [vmem:[#allocation23 + $0x478] sm:$0xff]
        %v4581 = vld [vmem:[#allocation23 + $0x480] sm:$0xff]
        %v4582 = vld [vmem:[#allocation23 + $0x488] sm:$0xff]
        %v4583 = vld [vmem:[#allocation23 + $0x490] sm:$0xff]
        %v4584 = vld [vmem:[#allocation23 + $0x498] sm:$0xff]
        %v4585 = vld [vmem:[#allocation23 + $0x4a0] sm:$0xff]
        %v4586 = vld [vmem:[#allocation23 + $0x4a8] sm:$0xff]
        %v4587 = vld [vmem:[#allocation23 + $0x4b0] sm:$0xff]
        %v4588 = vld [vmem:[#allocation23 + $0x4b8] sm:$0xff]
        %v4589 = vld [vmem:[#allocation23 + $0x4c0] sm:$0xff]
        %v4590 = vld [vmem:[#allocation23 + $0x4c8] sm:$0xff]
        %v4591 = vld [vmem:[#allocation23 + $0x4d0] sm:$0xff]
        %v4592 = vld [vmem:[#allocation23 + $0x4d8] sm:$0xff]
        %v4593 = vld [vmem:[#allocation23 + $0x4e0] sm:$0xff]
        %v4594 = vld [vmem:[#allocation23 + $0x4e8] sm:$0xff]
        %v4595 = vld [vmem:[#allocation23 + $0x4f0] sm:$0xff]
        %v4596 = vld [vmem:[#allocation23 + $0x4f8] sm:$0xff]
        %v4597 = vld [vmem:[#allocation23 + $0x500] sm:$0xff]
        %v4598 = vld [vmem:[#allocation23 + $0x508] sm:$0xff]
        %v4599 = vld [vmem:[#allocation23 + $0x510] sm:$0xff]
        %v4600 = vld [vmem:[#allocation23 + $0x518] sm:$0xff]
        %v4601 = vld [vmem:[#allocation23 + $0x520] sm:$0xff]
        %v4602 = vld [vmem:[#allocation23 + $0x528] sm:$0xff]
        %v4603 = vld [vmem:[#allocation23 + $0x530] sm:$0xff]
        %v4604 = vld [vmem:[#allocation23 + $0x538] sm:$0xff]
        %v4605 = vld [vmem:[#allocation23 + $0x540] sm:$0xff]
        %v4606 = vld [vmem:[#allocation23 + $0x548] sm:$0xff]
        %v4607 = vld [vmem:[#allocation23 + $0x550] sm:$0xff]
        %v4608 = vld [vmem:[#allocation23 + $0x558] sm:$0xff]
        %v4609 = vld [vmem:[#allocation23 + $0x560] sm:$0xff]
        %v4610 = vld [vmem:[#allocation23 + $0x568] sm:$0xff]
        %v4611 = vld [vmem:[#allocation23 + $0x570] sm:$0xff]
        %v4612 = vld [vmem:[#allocation23 + $0x578] sm:$0xff]
        %v4613 = vld [vmem:[#allocation23 + $0x580] sm:$0xff]
        %v4614 = vld [vmem:[#allocation23 + $0x588] sm:$0xff]
        %v4615 = vld [vmem:[#allocation23 + $0x590] sm:$0xff]
        %v4616 = vld [vmem:[#allocation23 + $0x598] sm:$0xff]
        %v4617 = vld [vmem:[#allocation23 + $0x5a0] sm:$0xff]
        %v4618 = vld [vmem:[#allocation23 + $0x5a8] sm:$0xff]
        %v4619 = vld [vmem:[#allocation23 + $0x5b0] sm:$0xff]
        %v4620 = vld [vmem:[#allocation23 + $0x5b8] sm:$0xff]
        %v4621 = vld [vmem:[#allocation23 + $0x5c0] sm:$0xff]
        %v4622 = vld [vmem:[#allocation23 + $0x5c8] sm:$0xff]
        %v4623 = vld [vmem:[#allocation23 + $0x5d0] sm:$0xff]
        %v4624 = vld [vmem:[#allocation23 + $0x5d8] sm:$0xff]
        %v4625 = vld [vmem:[#allocation23 + $0x5e0] sm:$0xff]
        %v4626 = vld [vmem:[#allocation23 + $0x5e8] sm:$0xff]
        %v4627 = vld [vmem:[#allocation23 + $0x5f0] sm:$0xff]
        %v4628 = vld [vmem:[#allocation23 + $0x5f8] sm:$0xff]
        %v4629 = vld [vmem:[#allocation23 + $0x600] sm:$0xff]
        %v4630 = vld [vmem:[#allocation23 + $0x608] sm:$0xff]
        %v4631 = vld [vmem:[#allocation23 + $0x610] sm:$0xff]
        %v4632 = vld [vmem:[#allocation23 + $0x618] sm:$0xff]
        %v4633 = vld [vmem:[#allocation23 + $0x620] sm:$0xff]
        %v4634 = vld [vmem:[#allocation23 + $0x628] sm:$0xff]
        %v4635 = vld [vmem:[#allocation23 + $0x630] sm:$0xff]
        %v4636 = vld [vmem:[#allocation23 + $0x638] sm:$0xff]
        %v4637 = vld [vmem:[#allocation23 + $0x640] sm:$0xff]
        %v4638 = vld [vmem:[#allocation23 + $0x648] sm:$0xff]
        %v4639 = vld [vmem:[#allocation23 + $0x650] sm:$0xff]
        %v4640 = vld [vmem:[#allocation23 + $0x658] sm:$0xff]
        %v4641 = vld [vmem:[#allocation23 + $0x660] sm:$0xff]
        %v4642 = vld [vmem:[#allocation23 + $0x668] sm:$0xff]
        %v4643 = vld [vmem:[#allocation23 + $0x670] sm:$0xff]
        %v4644 = vld [vmem:[#allocation23 + $0x678] sm:$0xff]
        %v4645 = vld [vmem:[#allocation23 + $0x680] sm:$0xff]
        %v4646 = vld [vmem:[#allocation23 + $0x688] sm:$0xff]
        %v4647 = vld [vmem:[#allocation23 + $0x690] sm:$0xff]
        %v4648 = vld [vmem:[#allocation23 + $0x698] sm:$0xff]
        %v4649 = vld [vmem:[#allocation23 + $0x6a0] sm:$0xff]
        %v4650 = vld [vmem:[#allocation23 + $0x6a8] sm:$0xff]
        %v4651 = vld [vmem:[#allocation23 + $0x6b0] sm:$0xff]
        %v4652 = vld [vmem:[#allocation23 + $0x6b8] sm:$0xff]
        %v4653 = vld [vmem:[#allocation23 + $0x6c0] sm:$0xff]
        %v4654 = vld [vmem:[#allocation23 + $0x6c8] sm:$0xff]
        %v4655 = vld [vmem:[#allocation23 + $0x6d0] sm:$0xff]
        %v4656 = vld [vmem:[#allocation23 + $0x6d8] sm:$0xff]
        %v4657 = vld [vmem:[#allocation23 + $0x6e0] sm:$0xff]
        %v4658 = vld [vmem:[#allocation23 + $0x6e8] sm:$0xff]
        %v4659 = vld [vmem:[#allocation23 + $0x6f0] sm:$0xff]
        %v4660 = vld [vmem:[#allocation23 + $0x6f8] sm:$0xff]
        %v4661 = vld [vmem:[#allocation23 + $0x700] sm:$0xff]
        %v4662 = vld [vmem:[#allocation23 + $0x708] sm:$0xff]
        %v4663 = vld [vmem:[#allocation23 + $0x710] sm:$0xff]
        %v4664 = vld [vmem:[#allocation23 + $0x718] sm:$0xff]
        %v4665 = vld [vmem:[#allocation23 + $0x720] sm:$0xff]
        %v4666 = vld [vmem:[#allocation23 + $0x728] sm:$0xff]
        %v4667 = vld [vmem:[#allocation23 + $0x730] sm:$0xff]
        %v4668 = vld [vmem:[#allocation23 + $0x738] sm:$0xff]
        %v4669 = vld [vmem:[#allocation23 + $0x740] sm:$0xff]
        %v4670 = vld [vmem:[#allocation23 + $0x748] sm:$0xff]
        %v4671 = vld [vmem:[#allocation23 + $0x750] sm:$0xff]
        %v4672 = vld [vmem:[#allocation23 + $0x758] sm:$0xff]
        %v4673 = vld [vmem:[#allocation23 + $0x760] sm:$0xff]
        %v4674 = vld [vmem:[#allocation23 + $0x768] sm:$0xff]
        %v4675 = vld [vmem:[#allocation23 + $0x770] sm:$0xff]
        %v4676 = vld [vmem:[#allocation23 + $0x778] sm:$0xff]
        %v4677 = vld [vmem:[#allocation23 + $0x780] sm:$0xff]
        %v4678 = vld [vmem:[#allocation23 + $0x788] sm:$0xff]
        %v4679 = vld [vmem:[#allocation23 + $0x790] sm:$0xff]
        %v4680 = vld [vmem:[#allocation23 + $0x798] sm:$0xff]
        %v4681 = vld [vmem:[#allocation23 + $0x7a0] sm:$0xff]
        %v4682 = vld [vmem:[#allocation23 + $0x7a8] sm:$0xff]
        %v4683 = vld [vmem:[#allocation23 + $0x7b0] sm:$0xff]
        %v4684 = vld [vmem:[#allocation23 + $0x7b8] sm:$0xff]
        %v4685 = vld [vmem:[#allocation23 + $0x7c0] sm:$0xff]
        %v4686 = vld [vmem:[#allocation23 + $0x7c8] sm:$0xff]
        %v4687 = vld [vmem:[#allocation23 + $0x7d0] sm:$0xff]
        %v4688 = vld [vmem:[#allocation23 + $0x7d8] sm:$0xff]
        %v4689 = vld [vmem:[#allocation23 + $0x7e0] sm:$0xff]
        %v4690 = vld [vmem:[#allocation23 + $0x7e8] sm:$0xff]
        %v4691 = vld [vmem:[#allocation23 + $0x7f0] sm:$0xff]
        %v4692 = vld [vmem:[#allocation23 + $0x7f8] sm:$0xff]
        %v4693 = vld [vmem:[#allocation23 + $0x800] sm:$0xff]
        %v4694 = vld [vmem:[#allocation23 + $0x808] sm:$0xff]
        %v4695 = vld [vmem:[#allocation23 + $0x810] sm:$0xff]
        %v4696 = vld [vmem:[#allocation23 + $0x818] sm:$0xff]
        %v4697 = vld [vmem:[#allocation23 + $0x820] sm:$0xff]
        %v4698 = vld [vmem:[#allocation23 + $0x828] sm:$0xff]
        %v4699 = vld [vmem:[#allocation23 + $0x830] sm:$0xff]
        %v4700 = vld [vmem:[#allocation23 + $0x838] sm:$0xff]
        %v4701 = vld [vmem:[#allocation23 + $0x840] sm:$0xff]
        %v4702 = vld [vmem:[#allocation23 + $0x848] sm:$0xff]
        %v4703 = vld [vmem:[#allocation23 + $0x850] sm:$0xff]
        %v4704 = vld [vmem:[#allocation23 + $0x858] sm:$0xff]
        %v4705 = vld [vmem:[#allocation23 + $0x860] sm:$0xff]
        %v4706 = vld [vmem:[#allocation23 + $0x868] sm:$0xff]
        %v4707 = vld [vmem:[#allocation23 + $0x870] sm:$0xff]
        %v4708 = vld [vmem:[#allocation23 + $0x878] sm:$0xff]
        %v4709 = vld [vmem:[#allocation23 + $0x880] sm:$0xff]
        %v4710 = vld [vmem:[#allocation23 + $0x888] sm:$0xff]
        %v4711 = vld [vmem:[#allocation23 + $0x890] sm:$0xff]
        %v4712 = vld [vmem:[#allocation23 + $0x898] sm:$0xff]
        %v4713 = vld [vmem:[#allocation23 + $0x8a0] sm:$0xff]
        %v4714 = vld [vmem:[#allocation23 + $0x8a8] sm:$0xff]
        %v4715 = vld [vmem:[#allocation23 + $0x8b0] sm:$0xff]
        %v4716 = vld [vmem:[#allocation23 + $0x8b8] sm:$0xff]
        %v4717 = vld [vmem:[#allocation23 + $0x8c0] sm:$0xff]
        %v4718 = vld [vmem:[#allocation23 + $0x8c8] sm:$0xff]
        %v4719 = vld [vmem:[#allocation23 + $0x8d0] sm:$0xff]
        %v4720 = vld [vmem:[#allocation23 + $0x8d8] sm:$0xff]
        %v4721 = vld [vmem:[#allocation23 + $0x8e0] sm:$0xff]
        %v4722 = vld [vmem:[#allocation23 + $0x8e8] sm:$0xff]
        %v4723 = vld [vmem:[#allocation23 + $0x8f0] sm:$0xff]
        %v4724 = vld [vmem:[#allocation23 + $0x8f8] sm:$0xff]
        %v4725 = vld [vmem:[#allocation23 + $0x900] sm:$0xff]
        %v4726 = vld [vmem:[#allocation23 + $0x908] sm:$0xff]
        %v4727 = vld [vmem:[#allocation23 + $0x910] sm:$0xff]
        %v4728 = vld [vmem:[#allocation23 + $0x918] sm:$0xff]
        %v4729 = vld [vmem:[#allocation23 + $0x920] sm:$0xff]
        %v4730 = vld [vmem:[#allocation23 + $0x928] sm:$0xff]
        %v4731 = vld [vmem:[#allocation23 + $0x930] sm:$0xff]
        %v4732 = vld [vmem:[#allocation23 + $0x938] sm:$0xff]
        %v4733 = vld [vmem:[#allocation23 + $0x940] sm:$0xff]
        %v4734 = vld [vmem:[#allocation23 + $0x948] sm:$0xff]
        %v4735 = vld [vmem:[#allocation23 + $0x950] sm:$0xff]
        %v4736 = vld [vmem:[#allocation23 + $0x958] sm:$0xff]
        %v4737 = vld [vmem:[#allocation23 + $0x960] sm:$0xff]
        %v4738 = vld [vmem:[#allocation23 + $0x968] sm:$0xff]
        %v4739 = vld [vmem:[#allocation23 + $0x970] sm:$0xff]
        %v4740 = vld [vmem:[#allocation23 + $0x978] sm:$0xff]
        %v4741 = vld [vmem:[#allocation23 + $0x980] sm:$0xff]
        %v4742 = vld [vmem:[#allocation23 + $0x988] sm:$0xff]
        %v4743 = vld [vmem:[#allocation23 + $0x990] sm:$0xff]
        %v4744 = vld [vmem:[#allocation23 + $0x998] sm:$0xff]
        %v4745 = vld [vmem:[#allocation23 + $0x9a0] sm:$0xff]
        %v4746 = vld [vmem:[#allocation23 + $0x9a8] sm:$0xff]
        %v4747 = vld [vmem:[#allocation23 + $0x9b0] sm:$0xff]
        %v4748 = vld [vmem:[#allocation23 + $0x9b8] sm:$0xff]
        %v4749 = vld [vmem:[#allocation23 + $0x9c0] sm:$0xff]
        %v4750 = vld [vmem:[#allocation23 + $0x9c8] sm:$0xff]
        %v4751 = vld [vmem:[#allocation23 + $0x9d0] sm:$0xff]
        %v4752 = vld [vmem:[#allocation23 + $0x9d8] sm:$0xff]
        %v4753 = vld [vmem:[#allocation23 + $0x9e0] sm:$0xff]
        %v4754 = vld [vmem:[#allocation23 + $0x9e8] sm:$0xff]
        %v4755 = vld [vmem:[#allocation23 + $0x9f0] sm:$0xff]
        %v4756 = vld [vmem:[#allocation23 + $0x9f8] sm:$0xff]
        %v4757 = vld [vmem:[#allocation23 + $0xa00] sm:$0xff]
        %v4758 = vld [vmem:[#allocation23 + $0xa08] sm:$0xff]
        %v4759 = vld [vmem:[#allocation23 + $0xa10] sm:$0xff]
        %v4760 = vld [vmem:[#allocation23 + $0xa18] sm:$0xff]
        %v4761 = vld [vmem:[#allocation23 + $0xa20] sm:$0xff]
        %v4762 = vld [vmem:[#allocation23 + $0xa28] sm:$0xff]
        %v4763 = vld [vmem:[#allocation23 + $0xa30] sm:$0xff]
        %v4764 = vld [vmem:[#allocation23 + $0xa38] sm:$0xff]
        %v4765 = vld [vmem:[#allocation23 + $0xa40] sm:$0xff]
        %v4766 = vld [vmem:[#allocation23 + $0xa48] sm:$0xff]
        %v4767 = vld [vmem:[#allocation23 + $0xa50] sm:$0xff]
        %v4768 = vld [vmem:[#allocation23 + $0xa58] sm:$0xff]
        %v4769 = vld [vmem:[#allocation23 + $0xa60] sm:$0xff]
        %v4770 = vld [vmem:[#allocation23 + $0xa68] sm:$0xff]
        %v4771 = vld [vmem:[#allocation23 + $0xa70] sm:$0xff]
        %v4772 = vld [vmem:[#allocation23 + $0xa78] sm:$0xff]
        %v4773 = vld [vmem:[#allocation23 + $0xa80] sm:$0xff]
        %v4774 = vld [vmem:[#allocation23 + $0xa88] sm:$0xff]
        %v4775 = vld [vmem:[#allocation23 + $0xa90] sm:$0xff]
        %v4776 = vld [vmem:[#allocation23 + $0xa98] sm:$0xff]
        %v4777 = vld [vmem:[#allocation23 + $0xaa0] sm:$0xff]
        %v4778 = vld [vmem:[#allocation23 + $0xaa8] sm:$0xff]
        %v4779 = vld [vmem:[#allocation23 + $0xab0] sm:$0xff]
        %v4780 = vld [vmem:[#allocation23 + $0xab8] sm:$0xff]
        %v4781 = vld [vmem:[#allocation23 + $0xac0] sm:$0xff]
        %v4782 = vld [vmem:[#allocation23 + $0xac8] sm:$0xff]
        %v4783 = vld [vmem:[#allocation23 + $0xad0] sm:$0xff]
        %v4784 = vld [vmem:[#allocation23 + $0xad8] sm:$0xff]
        %v4785 = vld [vmem:[#allocation23 + $0xae0] sm:$0xff]
        %v4786 = vld [vmem:[#allocation23 + $0xae8] sm:$0xff]
        %v4787 = vld [vmem:[#allocation23 + $0xaf0] sm:$0xff]
        %v4788 = vld [vmem:[#allocation23 + $0xaf8] sm:$0xff]
        %v4789 = vld [vmem:[#allocation23 + $0xb00] sm:$0xff]
        %v4790 = vld [vmem:[#allocation23 + $0xb08] sm:$0xff]
        %v4791 = vld [vmem:[#allocation23 + $0xb10] sm:$0xff]
        %v4792 = vld [vmem:[#allocation23 + $0xb18] sm:$0xff]
        %v4793 = vld [vmem:[#allocation23 + $0xb20] sm:$0xff]
        %v4794 = vld [vmem:[#allocation23 + $0xb28] sm:$0xff]
        %v4795 = vld [vmem:[#allocation23 + $0xb30] sm:$0xff]
        %v4796 = vld [vmem:[#allocation23 + $0xb38] sm:$0xff]
        %v4797 = vld [vmem:[#allocation23 + $0xb40] sm:$0xff]
        %v4798 = vld [vmem:[#allocation23 + $0xb48] sm:$0xff]
        %v4799 = vld [vmem:[#allocation23 + $0xb50] sm:$0xff]
        %v4800 = vld [vmem:[#allocation23 + $0xb58] sm:$0xff]
        %v4801 = vld [vmem:[#allocation23 + $0xb60] sm:$0xff]
        %v4802 = vld [vmem:[#allocation23 + $0xb68] sm:$0xff]
        %v4803 = vld [vmem:[#allocation23 + $0xb70] sm:$0xff]
        %v4804 = vld [vmem:[#allocation23 + $0xb78] sm:$0xff]
        %v4805 = vld [vmem:[#allocation23 + $0xb80] sm:$0xff]
        %v4806 = vld [vmem:[#allocation23 + $0xb88] sm:$0xff]
        %v4807 = vld [vmem:[#allocation23 + $0xb90] sm:$0xff]
        %v4808 = vld [vmem:[#allocation23 + $0xb98] sm:$0xff]
        %v4809 = vld [vmem:[#allocation23 + $0xba0] sm:$0xff]
        %v4810 = vld [vmem:[#allocation23 + $0xba8] sm:$0xff]
        %v4811 = vld [vmem:[#allocation23 + $0xbb0] sm:$0xff]
        %v4812 = vld [vmem:[#allocation23 + $0xbb8] sm:$0xff]
        %v4813 = vld [vmem:[#allocation23 + $0xbc0] sm:$0xff]
        %v4814 = vld [vmem:[#allocation23 + $0xbc8] sm:$0xff]
        %v4815 = vld [vmem:[#allocation23 + $0xbd0] sm:$0xff]
        %v4816 = vld [vmem:[#allocation23 + $0xbd8] sm:$0xff]
        %v4817 = vld [vmem:[#allocation23 + $0xbe0] sm:$0xff]
        %v4818 = vld [vmem:[#allocation23 + $0xbe8] sm:$0xff]
        %v4819 = vld [vmem:[#allocation23 + $0xbf0] sm:$0xff]
        %v4820 = vld [vmem:[#allocation23 + $0xbf8] sm:$0xff]
        %v4821 = vld [vmem:[#allocation23 + $0xc00] sm:$0xff]
        %v4822 = vld [vmem:[#allocation23 + $0xc08] sm:$0xff]
        %v4823 = vld [vmem:[#allocation23 + $0xc10] sm:$0xff]
        %v4824 = vld [vmem:[#allocation23 + $0xc18] sm:$0xff]
        %v4825 = vld [vmem:[#allocation23 + $0xc20] sm:$0xff]
        %v4826 = vld [vmem:[#allocation23 + $0xc28] sm:$0xff]
        %v4827 = vld [vmem:[#allocation23 + $0xc30] sm:$0xff]
        %v4828 = vld [vmem:[#allocation23 + $0xc38] sm:$0xff]
        %v4829 = vld [vmem:[#allocation23 + $0xc40] sm:$0xff]
        %v4830 = vld [vmem:[#allocation23 + $0xc48] sm:$0xff]
        %v4831 = vld [vmem:[#allocation23 + $0xc50] sm:$0xff]
        %v4832 = vld [vmem:[#allocation23 + $0xc58] sm:$0xff]
        %v4833 = vld [vmem:[#allocation23 + $0xc60] sm:$0xff]
        %v4834 = vld [vmem:[#allocation23 + $0xc68] sm:$0xff]
        %v4835 = vld [vmem:[#allocation23 + $0xc70] sm:$0xff]
        %v4836 = vld [vmem:[#allocation23 + $0xc78] sm:$0xff]
        %v4837 = vld [vmem:[#allocation23 + $0xc80] sm:$0xff]
        %v4838 = vld [vmem:[#allocation23 + $0xc88] sm:$0xff]
        %v4839 = vld [vmem:[#allocation23 + $0xc90] sm:$0xff]
        %v4840 = vld [vmem:[#allocation23 + $0xc98] sm:$0xff]
        %v4841 = vld [vmem:[#allocation23 + $0xca0] sm:$0xff]
        %v4842 = vld [vmem:[#allocation23 + $0xca8] sm:$0xff]
        %v4843 = vld [vmem:[#allocation23 + $0xcb0] sm:$0xff]
        %v4844 = vld [vmem:[#allocation23 + $0xcb8] sm:$0xff]
        %v4845 = vld [vmem:[#allocation23 + $0xcc0] sm:$0xff]
        %v4846 = vld [vmem:[#allocation23 + $0xcc8] sm:$0xff]
        %v4847 = vld [vmem:[#allocation23 + $0xcd0] sm:$0xff]
        %v4848 = vld [vmem:[#allocation23 + $0xcd8] sm:$0xff]
        %v4849 = vld [vmem:[#allocation23 + $0xce0] sm:$0xff]
        %v4850 = vld [vmem:[#allocation23 + $0xce8] sm:$0xff]
        %v4851 = vld [vmem:[#allocation23 + $0xcf0] sm:$0xff]
        %v4852 = vld [vmem:[#allocation23 + $0xcf8] sm:$0xff]
        %v4853 = vld [vmem:[#allocation23 + $0xd00] sm:$0xff]
        %v4854 = vld [vmem:[#allocation23 + $0xd08] sm:$0xff]
        %v4855 = vld [vmem:[#allocation23 + $0xd10] sm:$0xff]
        %v4856 = vld [vmem:[#allocation23 + $0xd18] sm:$0xff]
        %v4857 = vld [vmem:[#allocation23 + $0xd20] sm:$0xff]
        %v4858 = vld [vmem:[#allocation23 + $0xd28] sm:$0xff]
        %v4859 = vld [vmem:[#allocation23 + $0xd30] sm:$0xff]
        %v4860 = vld [vmem:[#allocation23 + $0xd38] sm:$0xff]
        %v4861 = vld [vmem:[#allocation23 + $0xd40] sm:$0xff]
        %v4862 = vld [vmem:[#allocation23 + $0xd48] sm:$0xff]
        %v4863 = vld [vmem:[#allocation23 + $0xd50] sm:$0xff]
        %v4864 = vld [vmem:[#allocation23 + $0xd58] sm:$0xff]
        %v4865 = vld [vmem:[#allocation23 + $0xd60] sm:$0xff]
        %v4866 = vld [vmem:[#allocation23 + $0xd68] sm:$0xff]
        %v4867 = vld [vmem:[#allocation23 + $0xd70] sm:$0xff]
        %v4868 = vld [vmem:[#allocation23 + $0xd78] sm:$0xff]
        %v4869 = vld [vmem:[#allocation23 + $0xd80] sm:$0xff]
        %v4870 = vld [vmem:[#allocation23 + $0xd88] sm:$0xff]
        %v4871 = vld [vmem:[#allocation23 + $0xd90] sm:$0xff]
        %v4872 = vld [vmem:[#allocation23 + $0xd98] sm:$0xff]
        %v4873 = vld [vmem:[#allocation23 + $0xda0] sm:$0xff]
        %v4874 = vld [vmem:[#allocation23 + $0xda8] sm:$0xff]
        %v4875 = vld [vmem:[#allocation23 + $0xdb0] sm:$0xff]
        %v4876 = vld [vmem:[#allocation23 + $0xdb8] sm:$0xff]
        %v4877 = vld [vmem:[#allocation23 + $0xdc0] sm:$0xff]
        %v4878 = vld [vmem:[#allocation23 + $0xdc8] sm:$0xff]
        %v4879 = vld [vmem:[#allocation23 + $0xdd0] sm:$0xff]
        %v4880 = vld [vmem:[#allocation23 + $0xdd8] sm:$0xff]
        %v4881 = vld [vmem:[#allocation23 + $0xde0] sm:$0xff]
        %v4882 = vld [vmem:[#allocation23 + $0xde8] sm:$0xff]
        %v4883 = vld [vmem:[#allocation23 + $0xdf0] sm:$0xff]
        %v4884 = vld [vmem:[#allocation23 + $0xdf8] sm:$0xff]
        %v4885 = vld [vmem:[#allocation23 + $0xe00] sm:$0xff]
        %v4886 = vld [vmem:[#allocation23 + $0xe08] sm:$0xff]
        %v4887 = vld [vmem:[#allocation23 + $0xe10] sm:$0xff]
        %v4888 = vld [vmem:[#allocation23 + $0xe18] sm:$0xff]
        %v4889 = vld [vmem:[#allocation23 + $0xe20] sm:$0xff]
        %v4890 = vld [vmem:[#allocation23 + $0xe28] sm:$0xff]
        %v4891 = vld [vmem:[#allocation23 + $0xe30] sm:$0xff]
        %v4892 = vld [vmem:[#allocation23 + $0xe38] sm:$0xff]
        %v4893 = vld [vmem:[#allocation23 + $0xe40] sm:$0xff]
        %v4894 = vld [vmem:[#allocation23 + $0xe48] sm:$0xff]
        %v4895 = vld [vmem:[#allocation23 + $0xe50] sm:$0xff]
        %v4896 = vld [vmem:[#allocation23 + $0xe58] sm:$0xff]
        %v4897 = vld [vmem:[#allocation23 + $0xe60] sm:$0xff]
        %v4898 = vld [vmem:[#allocation23 + $0xe68] sm:$0xff]
        %v4899 = vld [vmem:[#allocation23 + $0xe70] sm:$0xff]
        %v4900 = vld [vmem:[#allocation23 + $0xe78] sm:$0xff]
        %v4901 = vld [vmem:[#allocation23 + $0xe80] sm:$0xff]
        %v4902 = vld [vmem:[#allocation23 + $0xe88] sm:$0xff]
        %v4903 = vld [vmem:[#allocation23 + $0xe90] sm:$0xff]
        %v4904 = vld [vmem:[#allocation23 + $0xe98] sm:$0xff]
        %v4905 = vld [vmem:[#allocation23 + $0xea0] sm:$0xff]
        %v4906 = vld [vmem:[#allocation23 + $0xea8] sm:$0xff]
        %v4907 = vld [vmem:[#allocation23 + $0xeb0] sm:$0xff]
        %v4908 = vld [vmem:[#allocation23 + $0xeb8] sm:$0xff]
        %v4909 = vld [vmem:[#allocation23 + $0xec0] sm:$0xff]
        %v4910 = vld [vmem:[#allocation23 + $0xec8] sm:$0xff]
        %v4911 = vld [vmem:[#allocation23 + $0xed0] sm:$0xff]
        %v4912 = vld [vmem:[#allocation23 + $0xed8] sm:$0xff]
        %v4913 = vld [vmem:[#allocation23 + $0xee0] sm:$0xff]
        %v4914 = vld [vmem:[#allocation23 + $0xee8] sm:$0xff]
        %v4915 = vld [vmem:[#allocation23 + $0xef0] sm:$0xff]
        %v4916 = vld [vmem:[#allocation23 + $0xef8] sm:$0xff]
        %v4917 = vld [vmem:[#allocation23 + $0xf00] sm:$0xff]
        %v4918 = vld [vmem:[#allocation23 + $0xf08] sm:$0xff]
        %v4919 = vld [vmem:[#allocation23 + $0xf10] sm:$0xff]
        %v4920 = vld [vmem:[#allocation23 + $0xf18] sm:$0xff]
        %v4921 = vld [vmem:[#allocation23 + $0xf20] sm:$0xff]
        %v4922 = vld [vmem:[#allocation23 + $0xf28] sm:$0xff]
        %v4923 = vld [vmem:[#allocation23 + $0xf30] sm:$0xff]
        %v4924 = vld [vmem:[#allocation23 + $0xf38] sm:$0xff]
        %v4925 = vld [vmem:[#allocation23 + $0xf40] sm:$0xff]
        %v4926 = vld [vmem:[#allocation23 + $0xf48] sm:$0xff]
        %v4927 = vld [vmem:[#allocation23 + $0xf50] sm:$0xff]
        %v4928 = vld [vmem:[#allocation23 + $0xf58] sm:$0xff]
        %v4929 = vld [vmem:[#allocation23 + $0xf60] sm:$0xff]
        %v4930 = vld [vmem:[#allocation23 + $0xf68] sm:$0xff]
        %v4931 = vld [vmem:[#allocation23 + $0xf70] sm:$0xff]
        %v4932 = vld [vmem:[#allocation23 + $0xf78] sm:$0xff]
        %v4933 = vld [vmem:[#allocation23 + $0xf80] sm:$0xff]
        %v4934 = vld [vmem:[#allocation23 + $0xf88] sm:$0xff]
        %v4935 = vld [vmem:[#allocation23 + $0xf90] sm:$0xff]
        %v4936 = vld [vmem:[#allocation23 + $0xf98] sm:$0xff]
        %v4937 = vld [vmem:[#allocation23 + $0xfa0] sm:$0xff]
        %v4938 = vld [vmem:[#allocation23 + $0xfa8] sm:$0xff]
        %v4939 = vld [vmem:[#allocation23 + $0xfb0] sm:$0xff]
        %v4940 = vld [vmem:[#allocation23 + $0xfb8] sm:$0xff]
        %v4941 = vld [vmem:[#allocation23 + $0xfc0] sm:$0xff]
        %v4942 = vld [vmem:[#allocation23 + $0xfc8] sm:$0xff]
        %v4943 = vld [vmem:[#allocation23 + $0xfd0] sm:$0xff]
        %v4944 = vld [vmem:[#allocation23 + $0xfd8] sm:$0xff]
        %v4945 = vld [vmem:[#allocation23 + $0xfe0] sm:$0xff]
        %v4946 = vld [vmem:[#allocation23 + $0xfe8] sm:$0xff]
        %v4947 = vld [vmem:[#allocation23 + $0xff0] sm:$0xff]
        %v4948 = vld [vmem:[#allocation23 + $0xff8] sm:$0xff]
        %v4949 = vld [vmem:[#allocation23 + $0x1000] sm:$0xff]
        %v4950 = vld [vmem:[#allocation23 + $0x1008] sm:$0xff]
        %v4951 = vld [vmem:[#allocation23 + $0x1010] sm:$0xff]
        %v4952 = vld [vmem:[#allocation23 + $0x1018] sm:$0xff]
        %v4953 = vld [vmem:[#allocation23 + $0x1020] sm:$0xff]
        %v4954 = vld [vmem:[#allocation23 + $0x1028] sm:$0xff]
        %v4955 = vld [vmem:[#allocation23 + $0x1030] sm:$0xff]
        %v4956 = vld [vmem:[#allocation23 + $0x1038] sm:$0xff]
        %v4957 = vld [vmem:[#allocation23 + $0x1040] sm:$0xff]
        %v4958 = vld [vmem:[#allocation23 + $0x1048] sm:$0xff]
        %v4959 = vld [vmem:[#allocation23 + $0x1050] sm:$0xff]
        %v4960 = vld [vmem:[#allocation23 + $0x1058] sm:$0xff]
        %v4961 = vld [vmem:[#allocation23 + $0x1060] sm:$0xff]
        %v4962 = vld [vmem:[#allocation23 + $0x1068] sm:$0xff]
        %v4963 = vld [vmem:[#allocation23 + $0x1070] sm:$0xff]
        %v4964 = vld [vmem:[#allocation23 + $0x1078] sm:$0xff]
        %v4965 = vld [vmem:[#allocation23 + $0x1080] sm:$0xff]
        %v4966 = vld [vmem:[#allocation23 + $0x1088] sm:$0xff]
        %v4967 = vld [vmem:[#allocation23 + $0x1090] sm:$0xff]
        %v4968 = vld [vmem:[#allocation23 + $0x1098] sm:$0xff]
        %v4969 = vld [vmem:[#allocation23 + $0x10a0] sm:$0xff]
        %v4970 = vld [vmem:[#allocation23 + $0x10a8] sm:$0xff]
        %v4971 = vld [vmem:[#allocation23 + $0x10b0] sm:$0xff]
        %v4972 = vld [vmem:[#allocation23 + $0x10b8] sm:$0xff]
        %v4973 = vld [vmem:[#allocation23 + $0x10c0] sm:$0xff]
        %v4974 = vld [vmem:[#allocation23 + $0x10c8] sm:$0xff]
        %v4975 = vld [vmem:[#allocation23 + $0x10d0] sm:$0xff]
        %v4976 = vld [vmem:[#allocation23 + $0x10d8] sm:$0xff]
        %v4977 = vld [vmem:[#allocation23 + $0x10e0] sm:$0xff]
        %v4978 = vld [vmem:[#allocation23 + $0x10e8] sm:$0xff]
        %v4979 = vld [vmem:[#allocation23 + $0x10f0] sm:$0xff]
        %v4980 = vld [vmem:[#allocation23 + $0x10f8] sm:$0xff]
        %v4981 = vld [vmem:[#allocation23 + $0x1100] sm:$0xff]
        %v4982 = vld [vmem:[#allocation23 + $0x1108] sm:$0xff]
        %v4983 = vld [vmem:[#allocation23 + $0x1110] sm:$0xff]
        %v4984 = vld [vmem:[#allocation23 + $0x1118] sm:$0xff]
        %v4985 = vld [vmem:[#allocation23 + $0x1120] sm:$0xff]
        %v4986 = vld [vmem:[#allocation23 + $0x1128] sm:$0xff]
        %v4987 = vld [vmem:[#allocation23 + $0x1130] sm:$0xff]
        %v4988 = vld [vmem:[#allocation23 + $0x1138] sm:$0xff]
        %v4989 = vld [vmem:[#allocation23 + $0x1140] sm:$0xff]
        %v4990 = vld [vmem:[#allocation23 + $0x1148] sm:$0xff]
        %v4991 = vld [vmem:[#allocation23 + $0x1150] sm:$0xff]
        %v4992 = vld [vmem:[#allocation23 + $0x1158] sm:$0xff]
        %v4993 = vld [vmem:[#allocation23 + $0x1160] sm:$0xff]
        %v4994 = vld [vmem:[#allocation23 + $0x1168] sm:$0xff]
        %v4995 = vld [vmem:[#allocation23 + $0x1170] sm:$0xff]
        %v4996 = vld [vmem:[#allocation23 + $0x1178] sm:$0xff]
        %v4997 = vld [vmem:[#allocation23 + $0x1180] sm:$0xff]
        %v4998 = vld [vmem:[#allocation23 + $0x1188] sm:$0xff]
        %v4999 = vld [vmem:[#allocation23 + $0x1190] sm:$0xff]
        %v5000 = vld [vmem:[#allocation23 + $0x1198] sm:$0xff]
        %v5001 = vld [vmem:[#allocation23 + $0x11a0] sm:$0xff]
        %v5002 = vld [vmem:[#allocation23 + $0x11a8] sm:$0xff]
        %v5003 = vld [vmem:[#allocation23 + $0x11b0] sm:$0xff]
        %v5004 = vld [vmem:[#allocation23 + $0x11b8] sm:$0xff]
        %v5005 = vld [vmem:[#allocation23 + $0x11c0] sm:$0xff]
        %v5006 = vld [vmem:[#allocation23 + $0x11c8] sm:$0xff]
        %v5007 = vld [vmem:[#allocation23 + $0x11d0] sm:$0xff]
        %v5008 = vld [vmem:[#allocation23 + $0x11d8] sm:$0xff]
        %v5009 = vld [vmem:[#allocation23 + $0x11e0] sm:$0xff]
        %v5010 = vld [vmem:[#allocation23 + $0x11e8] sm:$0xff]
        %v5011 = vld [vmem:[#allocation23 + $0x11f0] sm:$0xff]
        %v5012 = vld [vmem:[#allocation23 + $0x11f8] sm:$0xff]
        %v5013 = vld [vmem:[#allocation23 + $0x1200] sm:$0xff]
        %v5014 = vld [vmem:[#allocation23 + $0x1208] sm:$0xff]
        %v5015 = vld [vmem:[#allocation23 + $0x1210] sm:$0xff]
        %v5016 = vld [vmem:[#allocation23 + $0x1218] sm:$0xff]
        %v5017 = vld [vmem:[#allocation23 + $0x1220] sm:$0xff]
        %v5018 = vld [vmem:[#allocation23 + $0x1228] sm:$0xff]
        %v5019 = vld [vmem:[#allocation23 + $0x1230] sm:$0xff]
        %v5020 = vld [vmem:[#allocation23 + $0x1238] sm:$0xff]
        %v5021 = vld [vmem:[#allocation23 + $0x1240] sm:$0xff]
        %v5022 = vld [vmem:[#allocation23 + $0x1248] sm:$0xff]
        %v5023 = vld [vmem:[#allocation23 + $0x1250] sm:$0xff]
        %v5024 = vld [vmem:[#allocation23 + $0x1258] sm:$0xff]
        %v5025 = vld [vmem:[#allocation23 + $0x1260] sm:$0xff]
        %v5026 = vld [vmem:[#allocation23 + $0x1268] sm:$0xff]
        %v5027 = vld [vmem:[#allocation23 + $0x1270] sm:$0xff]
        %v5028 = vld [vmem:[#allocation23 + $0x1278] sm:$0xff]
        %v5029 = vld [vmem:[#allocation23 + $0x1280] sm:$0xff]
        %v5030 = vld [vmem:[#allocation23 + $0x1288] sm:$0xff]
        %v5031 = vld [vmem:[#allocation23 + $0x1290] sm:$0xff]
        %v5032 = vld [vmem:[#allocation23 + $0x1298] sm:$0xff]
        %v5033 = vld [vmem:[#allocation23 + $0x12a0] sm:$0xff]
        %v5034 = vld [vmem:[#allocation23 + $0x12a8] sm:$0xff]
        %v5035 = vld [vmem:[#allocation23 + $0x12b0] sm:$0xff]
        %v5036 = vld [vmem:[#allocation23 + $0x12b8] sm:$0xff]
        %v5037 = vld [vmem:[#allocation23 + $0x12c0] sm:$0xff]
        %v5038 = vld [vmem:[#allocation23 + $0x12c8] sm:$0xff]
        %v5039 = vld [vmem:[#allocation23 + $0x12d0] sm:$0xff]
        %v5040 = vld [vmem:[#allocation23 + $0x12d8] sm:$0xff]
        %v5041 = vld [vmem:[#allocation23 + $0x12e0] sm:$0xff]
        %v5042 = vld [vmem:[#allocation23 + $0x12e8] sm:$0xff]
        %v5043 = vld [vmem:[#allocation23 + $0x12f0] sm:$0xff]
        %v5044 = vld [vmem:[#allocation23 + $0x12f8] sm:$0xff]
        %v5045 = vld [vmem:[#allocation23 + $0x1300] sm:$0xff]
        %v5046 = vld [vmem:[#allocation23 + $0x1308] sm:$0xff]
        %v5047 = vld [vmem:[#allocation23 + $0x1310] sm:$0xff]
        %v5048 = vld [vmem:[#allocation23 + $0x1318] sm:$0xff]
        %v5049 = vld [vmem:[#allocation23 + $0x1320] sm:$0xff]
        %v5050 = vld [vmem:[#allocation23 + $0x1328] sm:$0xff]
        %v5051 = vld [vmem:[#allocation23 + $0x1330] sm:$0xff]
        %v5052 = vld [vmem:[#allocation23 + $0x1338] sm:$0xff]
        %v5053 = vld [vmem:[#allocation23 + $0x1340] sm:$0xff]
        %v5054 = vld [vmem:[#allocation23 + $0x1348] sm:$0xff]
        %v5055 = vld [vmem:[#allocation23 + $0x1350] sm:$0xff]
        %v5056 = vld [vmem:[#allocation23 + $0x1358] sm:$0xff]
        %v5057 = vld [vmem:[#allocation23 + $0x1360] sm:$0xff]
        %v5058 = vld [vmem:[#allocation23 + $0x1368] sm:$0xff]
        %v5059 = vld [vmem:[#allocation23 + $0x1370] sm:$0xff]
        %v5060 = vld [vmem:[#allocation23 + $0x1378] sm:$0xff]
        %v5061 = vld [vmem:[#allocation23 + $0x1380] sm:$0xff]
        %v5062 = vld [vmem:[#allocation23 + $0x1388] sm:$0xff]
        %v5063 = vld [vmem:[#allocation23 + $0x1390] sm:$0xff]
        %v5064 = vld [vmem:[#allocation23 + $0x1398] sm:$0xff]
        %v5065 = vld [vmem:[#allocation23 + $0x13a0] sm:$0xff]
        %v5066 = vld [vmem:[#allocation23 + $0x13a8] sm:$0xff]
        %v5067 = vld [vmem:[#allocation23 + $0x13b0] sm:$0xff]
        %v5068 = vld [vmem:[#allocation23 + $0x13b8] sm:$0xff]
        %v5069 = vld [vmem:[#allocation23 + $0x13c0] sm:$0xff]
        %v5070 = vld [vmem:[#allocation23 + $0x13c8] sm:$0xff]
        %v5071 = vld [vmem:[#allocation23 + $0x13d0] sm:$0xff]
        %v5072 = vld [vmem:[#allocation23 + $0x13d8] sm:$0xff]
        %v5073 = vld [vmem:[#allocation23 + $0x13e0] sm:$0xff]
        %v5074 = vld [vmem:[#allocation23 + $0x13e8] sm:$0xff]
        %v5075 = vld [vmem:[#allocation23 + $0x13f0] sm:$0xff]
        %v5076 = vld [vmem:[#allocation23 + $0x13f8] sm:$0xff]
        %v5077 = vld [vmem:[#allocation23 + $0x1400] sm:$0xff]
        %v5078 = vld [vmem:[#allocation23 + $0x1408] sm:$0xff]
        %v5079 = vld [vmem:[#allocation23 + $0x1410] sm:$0xff]
        %v5080 = vld [vmem:[#allocation23 + $0x1418] sm:$0xff]
        %v5081 = vld [vmem:[#allocation23 + $0x1420] sm:$0xff]
        %v5082 = vld [vmem:[#allocation23 + $0x1428] sm:$0xff]
        %v5083 = vld [vmem:[#allocation23 + $0x1430] sm:$0xff]
        %v5084 = vld [vmem:[#allocation23 + $0x1438] sm:$0xff]
        %v5085 = vld [vmem:[#allocation23 + $0x1440] sm:$0xff]
        %v5086 = vld [vmem:[#allocation23 + $0x1448] sm:$0xff]
        %v5087 = vld [vmem:[#allocation23 + $0x1450] sm:$0xff]
        %v5088 = vld [vmem:[#allocation23 + $0x1458] sm:$0xff]
        %v5089 = vld [vmem:[#allocation23 + $0x1460] sm:$0xff]
        %v5090 = vld [vmem:[#allocation23 + $0x1468] sm:$0xff]
        %v5091 = vld [vmem:[#allocation23 + $0x1470] sm:$0xff]
        %v5092 = vld [vmem:[#allocation23 + $0x1478] sm:$0xff]
        %v5093 = vld [vmem:[#allocation23 + $0x1480] sm:$0xff]
        %v5094 = vld [vmem:[#allocation23 + $0x1488] sm:$0xff]
        %v5095 = vld [vmem:[#allocation23 + $0x1490] sm:$0xff]
        %v5096 = vld [vmem:[#allocation23 + $0x1498] sm:$0xff]
        %v5097 = vld [vmem:[#allocation23 + $0x14a0] sm:$0xff]
        %v5098 = vld [vmem:[#allocation23 + $0x14a8] sm:$0xff]
        %v5099 = vld [vmem:[#allocation23 + $0x14b0] sm:$0xff]
        %v5100 = vld [vmem:[#allocation23 + $0x14b8] sm:$0xff]
        %v5101 = vld [vmem:[#allocation23 + $0x14c0] sm:$0xff]
        %v5102 = vld [vmem:[#allocation23 + $0x14c8] sm:$0xff]
        %v5103 = vld [vmem:[#allocation23 + $0x14d0] sm:$0xff]
        %v5104 = vld [vmem:[#allocation23 + $0x14d8] sm:$0xff]
        %v5105 = vld [vmem:[#allocation23 + $0x14e0] sm:$0xff]
        %v5106 = vld [vmem:[#allocation23 + $0x14e8] sm:$0xff]
        %v5107 = vld [vmem:[#allocation23 + $0x14f0] sm:$0xff]
        %v5108 = vld [vmem:[#allocation23 + $0x14f8] sm:$0xff]
        %v5109 = vld [vmem:[#allocation23 + $0x1500] sm:$0xff]
        %v5110 = vld [vmem:[#allocation23 + $0x1508] sm:$0xff]
        %v5111 = vld [vmem:[#allocation23 + $0x1510] sm:$0xff]
        %v5112 = vld [vmem:[#allocation23 + $0x1518] sm:$0xff]
        %v5113 = vld [vmem:[#allocation23 + $0x1520] sm:$0xff]
        %v5114 = vld [vmem:[#allocation23 + $0x1528] sm:$0xff]
        %v5115 = vld [vmem:[#allocation23 + $0x1530] sm:$0xff]
        %v5116 = vld [vmem:[#allocation23 + $0x1538] sm:$0xff]
        %v5117 = vld [vmem:[#allocation23 + $0x1540] sm:$0xff]
        %v5118 = vld [vmem:[#allocation23 + $0x1548] sm:$0xff]
        %v5119 = vld [vmem:[#allocation23 + $0x1550] sm:$0xff]
        %v5120 = vld [vmem:[#allocation23 + $0x1558] sm:$0xff]
        %v5121 = vld [vmem:[#allocation23 + $0x1560] sm:$0xff]
        %v5122 = vld [vmem:[#allocation23 + $0x1568] sm:$0xff]
        %v5123 = vld [vmem:[#allocation23 + $0x1570] sm:$0xff]
        %v5124 = vld [vmem:[#allocation23 + $0x1578] sm:$0xff]
        %v5125 = vld [vmem:[#allocation23 + $0x1580] sm:$0xff]
        %v5126 = vld [vmem:[#allocation23 + $0x1588] sm:$0xff]
        %v5127 = vld [vmem:[#allocation23 + $0x1590] sm:$0xff]
        %v5128 = vld [vmem:[#allocation23 + $0x1598] sm:$0xff]
        %v5129 = vld [vmem:[#allocation23 + $0x15a0] sm:$0xff]
        %v5130 = vld [vmem:[#allocation23 + $0x15a8] sm:$0xff]
        %v5131 = vld [vmem:[#allocation23 + $0x15b0] sm:$0xff]
        %v5132 = vld [vmem:[#allocation23 + $0x15b8] sm:$0xff]
        %v5133 = vld [vmem:[#allocation23 + $0x15c0] sm:$0xff]
        %v5134 = vld [vmem:[#allocation23 + $0x15c8] sm:$0xff]
        %v5135 = vld [vmem:[#allocation23 + $0x15d0] sm:$0xff]
        %v5136 = vld [vmem:[#allocation23 + $0x15d8] sm:$0xff]
        %v5137 = vld [vmem:[#allocation23 + $0x15e0] sm:$0xff]
        %v5138 = vld [vmem:[#allocation23 + $0x15e8] sm:$0xff]
        %v5139 = vld [vmem:[#allocation23 + $0x15f0] sm:$0xff]
        %v5140 = vld [vmem:[#allocation23 + $0x15f8] sm:$0xff]
        %v5141 = vld [vmem:[#allocation23 + $0x1600] sm:$0xff]
        %v5142 = vld [vmem:[#allocation23 + $0x1608] sm:$0xff]
        %v5143 = vld [vmem:[#allocation23 + $0x1610] sm:$0xff]
        %v5144 = vld [vmem:[#allocation23 + $0x1618] sm:$0xff]
        %v5145 = vld [vmem:[#allocation23 + $0x1620] sm:$0xff]
        %v5146 = vld [vmem:[#allocation23 + $0x1628] sm:$0xff]
        %v5147 = vld [vmem:[#allocation23 + $0x1630] sm:$0xff]
        %v5148 = vld [vmem:[#allocation23 + $0x1638] sm:$0xff]
        %v5149 = vld [vmem:[#allocation23 + $0x1640] sm:$0xff]
        %v5150 = vld [vmem:[#allocation23 + $0x1648] sm:$0xff]
        %v5151 = vld [vmem:[#allocation23 + $0x1650] sm:$0xff]
        %v5152 = vld [vmem:[#allocation23 + $0x1658] sm:$0xff]
        %v5153 = vld [vmem:[#allocation23 + $0x1660] sm:$0xff]
        %v5154 = vld [vmem:[#allocation23 + $0x1668] sm:$0xff]
        %v5155 = vld [vmem:[#allocation23 + $0x1670] sm:$0xff]
        %v5156 = vld [vmem:[#allocation23 + $0x1678] sm:$0xff]
        %v5157 = vld [vmem:[#allocation23 + $0x1680] sm:$0xff]
        %v5158 = vld [vmem:[#allocation23 + $0x1688] sm:$0xff]
        %v5159 = vld [vmem:[#allocation23 + $0x1690] sm:$0xff]
        %v5160 = vld [vmem:[#allocation23 + $0x1698] sm:$0xff]
        %v5161 = vld [vmem:[#allocation23 + $0x16a0] sm:$0xff]
        %v5162 = vld [vmem:[#allocation23 + $0x16a8] sm:$0xff]
        %v5163 = vld [vmem:[#allocation23 + $0x16b0] sm:$0xff]
        %v5164 = vld [vmem:[#allocation23 + $0x16b8] sm:$0xff]
        %v5165 = vld [vmem:[#allocation23 + $0x16c0] sm:$0xff]
        %v5166 = vld [vmem:[#allocation23 + $0x16c8] sm:$0xff]
        %v5167 = vld [vmem:[#allocation23 + $0x16d0] sm:$0xff]
        %v5168 = vld [vmem:[#allocation23 + $0x16d8] sm:$0xff]
        %v5169 = vld [vmem:[#allocation23 + $0x16e0] sm:$0xff]
        %v5170 = vld [vmem:[#allocation23 + $0x16e8] sm:$0xff]
        %v5171 = vld [vmem:[#allocation23 + $0x16f0] sm:$0xff]
        %v5172 = vld [vmem:[#allocation23 + $0x16f8] sm:$0xff]
        %v5173 = vld [vmem:[#allocation23 + $0x1700] sm:$0xff]
        %v5174 = vld [vmem:[#allocation23 + $0x1708] sm:$0xff]
        %v5175 = vld [vmem:[#allocation23 + $0x1710] sm:$0xff]
        %v5176 = vld [vmem:[#allocation23 + $0x1718] sm:$0xff]
        %v5177 = vld [vmem:[#allocation23 + $0x1720] sm:$0xff]
        %v5178 = vld [vmem:[#allocation23 + $0x1728] sm:$0xff]
        %v5179 = vld [vmem:[#allocation23 + $0x1730] sm:$0xff]
        %v5180 = vld [vmem:[#allocation23 + $0x1738] sm:$0xff]
        %v5181 = vld [vmem:[#allocation23 + $0x1740] sm:$0xff]
        %v5182 = vld [vmem:[#allocation23 + $0x1748] sm:$0xff]
        %v5183 = vld [vmem:[#allocation23 + $0x1750] sm:$0xff]
        %v5184 = vld [vmem:[#allocation23 + $0x1758] sm:$0xff]
        %v5185 = vld [vmem:[#allocation23 + $0x1760] sm:$0xff]
        %v5186 = vld [vmem:[#allocation23 + $0x1768] sm:$0xff]
        %v5187 = vld [vmem:[#allocation23 + $0x1770] sm:$0xff]
        %v5188 = vld [vmem:[#allocation23 + $0x1778] sm:$0xff]
        %v5189 = vld [vmem:[#allocation23 + $0x1780] sm:$0xff]
        %v5190 = vld [vmem:[#allocation23 + $0x1788] sm:$0xff]
        %v5191 = vld [vmem:[#allocation23 + $0x1790] sm:$0xff]
        %v5192 = vld [vmem:[#allocation23 + $0x1798] sm:$0xff]
        %v5193 = vld [vmem:[#allocation23 + $0x17a0] sm:$0xff]
        %v5194 = vld [vmem:[#allocation23 + $0x17a8] sm:$0xff]
        %v5195 = vld [vmem:[#allocation23 + $0x17b0] sm:$0xff]
        %v5196 = vld [vmem:[#allocation23 + $0x17b8] sm:$0xff]
        %v5197 = vld [vmem:[#allocation23 + $0x17c0] sm:$0xff]
        %v5198 = vld [vmem:[#allocation23 + $0x17c8] sm:$0xff]
        %v5199 = vld [vmem:[#allocation23 + $0x17d0] sm:$0xff]
        %v5200 = vld [vmem:[#allocation23 + $0x17d8] sm:$0xff]
        %v5201 = vld [vmem:[#allocation23 + $0x17e0] sm:$0xff]
        %v5202 = vld [vmem:[#allocation23 + $0x17e8] sm:$0xff]
        %v5203 = vld [vmem:[#allocation23 + $0x17f0] sm:$0xff]
        %v5204 = vld [vmem:[#allocation23 + $0x17f8] sm:$0xff]
        %v5205 = vld [vmem:[#allocation24] sm:$0xf]
        %v5207 = vlaneseq
        %v5208 = vshrl.u32 %v5207, 7
        %v5209 = vsub.s32 0, %v5208
        %v5210 = vrot.slane %v5205, %v5209
        %v5211 = vlaneseq
        %v5212 = vshrl.u32 %v5211, 7
        %v5213 = vsub.s32 1, %v5212
        %v5214 = vrot.slane %v5205, %v5213
        %v5215 = vlaneseq
        %v5216 = vshrl.u32 %v5215, 7
        %v5217 = vsub.s32 2, %v5216
        %v5218 = vrot.slane %v5205, %v5217
        %v5219 = vlaneseq
        %v5220 = vshrl.u32 %v5219, 7
        %v5221 = vsub.s32 3, %v5220
        %v5222 = vrot.slane %v5205, %v5221
        %5227 = vmatprep.subr.mxu0 %v4438
        %5228 = vmatpush1.msra.mxu0 %v4437
        %5229 = vmatprep.subr.mxu0 %v4442
        %5230 = vmatpush1.msra.mxu0 %v4441
        %5231 = vmatprep.subr.mxu0 %v4446
        %5232 = vmatpush1.msra.mxu0 %v4445
        %5233 = vmatprep.subr.mxu0 %v4450
        %5234 = vmatpush1.msra.mxu0 %v4449
        %5235 = vmatprep.subr.mxu0 %v4454
        %5236 = vmatpush1.msra.mxu0 %v4453
        %5237 = vmatprep.subr.mxu0 %v4458
        %5238 = vmatpush1.msra.mxu0 %v4457
        %5239 = vmatprep.subr.mxu0 %v4462
        %5240 = vmatpush1.msra.mxu0 %v4461
        %5241 = vmatprep.subr.mxu0 %v4466
        %5242 = vmatpush1.msra.mxu0 %v4465
        %5243 = vmatprep.subr.mxu0 %v4470
        %5244 = vmatpush1.msra.mxu0 %v4469
        %5245 = vmatprep.subr.mxu0 %v4474
        %5246 = vmatpush1.msra.mxu0 %v4473
        %5247 = vmatprep.subr.mxu0 %v4478
        %5248 = vmatpush1.msra.mxu0 %v4477
        %5249 = vmatprep.subr.mxu0 %v4482
        %5250 = vmatpush1.msra.mxu0 %v4481
        %5251 = vmatprep.subr.mxu0 %v4486
        %5252 = vmatpush1.msra.mxu0 %v4485
        %5253 = vmatprep.subr.mxu0 %v4490
        %5254 = vmatpush1.msra.mxu0 %v4489
        %5255 = vmatprep.subr.mxu0 %v4494
        %5256 = vmatpush1.msra.mxu0 %v4493
        %5257 = vmatprep.subr.mxu0 %v4498
        %5258 = vmatpush1.msra.mxu0 %v4497
        %5259 = vmatprep.subr.mxu0 %v4502
        %5260 = vmatpush1.msra.mxu0 %v4501
        %5261 = vmatprep.subr.mxu0 %v4506
        %5262 = vmatpush1.msra.mxu0 %v4505
        %5263 = vmatprep.subr.mxu0 %v4510
        %5264 = vmatpush1.msra.mxu0 %v4509
        %5265 = vmatprep.subr.mxu0 %v4514
        %5266 = vmatpush1.msra.mxu0 %v4513
        %5267 = vmatprep.subr.mxu0 %v4518
        %5268 = vmatpush1.msra.mxu0 %v4517
        %5269 = vmatprep.subr.mxu0 %v4522
        %5270 = vmatpush1.msra.mxu0 %v4521
        %5271 = vmatprep.subr.mxu0 %v4526
        %5272 = vmatpush1.msra.mxu0 %v4525
        %5273 = vmatprep.subr.mxu0 %v4530
        %5274 = vmatpush1.msra.mxu0 %v4529
        %5275 = vmatprep.subr.mxu0 %v4534
        %5276 = vmatpush1.msra.mxu0 %v4533
        %5277 = vmatprep.subr.mxu0 %v4538
        %5278 = vmatpush1.msra.mxu0 %v4537
        %5279 = vmatprep.subr.mxu0 %v4542
        %5280 = vmatpush1.msra.mxu0 %v4541
        %5281 = vmatprep.subr.mxu0 %v4546
        %5282 = vmatpush1.msra.mxu0 %v4545
        %5283 = vmatprep.subr.mxu0 %v4550
        %5284 = vmatpush1.msra.mxu0 %v4549
        %5285 = vmatprep.subr.mxu0 %v4554
        %5286 = vmatpush1.msra.mxu0 %v4553
        %5287 = vmatprep.subr.mxu0 %v4558
        %5288 = vmatpush1.msra.mxu0 %v4557
        %5289 = vmatprep.subr.mxu0 %v4562
        %5290 = vmatpush1.msra.mxu0 %v4561
        %5291 = vmatprep.mubr.f32.mxu0 %v4370
        %5292 = vmatmul.mubr.f32.gmra.mrb[0].mxu0 %v4369
        %v5293 = vpop.f32.mrb[0].mxu0
        %v5294 = vadd.f32 %v5210, %v5293
        %v5295 = vpop.f32.mrb[0].mxu0
        %v5296 = vadd.f32 %v5214, %v5295
        %5297 = vdwg.mxu0
        %5298 = vmatprep.subr.mxu0 %v4566
        %5299 = vmatpush1.msra.mxu0 %v4565
        %5300 = vmatprep.subr.mxu0 %v4570
        %5301 = vmatpush1.msra.mxu0 %v4569
        %5302 = vmatprep.subr.mxu0 %v4574
        %5303 = vmatpush1.msra.mxu0 %v4573
        %5304 = vmatprep.subr.mxu0 %v4578
        %5305 = vmatpush1.msra.mxu0 %v4577
        %5306 = vmatprep.subr.mxu0 %v4582
        %5307 = vmatpush1.msra.mxu0 %v4581
        %5308 = vmatprep.subr.mxu0 %v4586
        %5309 = vmatpush1.msra.mxu0 %v4585
        %5310 = vmatprep.subr.mxu0 %v4590
        %5311 = vmatpush1.msra.mxu0 %v4589
        %5312 = vmatprep.subr.mxu0 %v4594
        %5313 = vmatpush1.msra.mxu0 %v4593
        %5314 = vmatprep.subr.mxu0 %v4598
        %5315 = vmatpush1.msra.mxu0 %v4597
        %5316 = vmatprep.subr.mxu0 %v4602
        %5317 = vmatpush1.msra.mxu0 %v4601
        %5318 = vmatprep.subr.mxu0 %v4606
        %5319 = vmatpush1.msra.mxu0 %v4605
        %5320 = vmatprep.subr.mxu0 %v4610
        %5321 = vmatpush1.msra.mxu0 %v4609
        %5322 = vmatprep.subr.mxu0 %v4614
        %5323 = vmatpush1.msra.mxu0 %v4613
        %5324 = vmatprep.subr.mxu0 %v4618
        %5325 = vmatpush1.msra.mxu0 %v4617
        %5326 = vmatprep.subr.mxu0 %v4622
        %5327 = vmatpush1.msra.mxu0 %v4621
        %5328 = vmatprep.subr.mxu0 %v4626
        %5329 = vmatpush1.msra.mxu0 %v4625
        %5330 = vmatprep.subr.mxu0 %v4630
        %5331 = vmatpush1.msra.mxu0 %v4629
        %5332 = vmatprep.subr.mxu0 %v4634
        %5333 = vmatpush1.msra.mxu0 %v4633
        %5334 = vmatprep.subr.mxu0 %v4638
        %5335 = vmatpush1.msra.mxu0 %v4637
        %5336 = vmatprep.subr.mxu0 %v4642
        %5337 = vmatpush1.msra.mxu0 %v4641
        %5338 = vmatprep.subr.mxu0 %v4646
        %5339 = vmatpush1.msra.mxu0 %v4645
        %5340 = vmatprep.subr.mxu0 %v4650
        %5341 = vmatpush1.msra.mxu0 %v4649
        %5342 = vmatprep.subr.mxu0 %v4654
        %5343 = vmatpush1.msra.mxu0 %v4653
        %5344 = vmatprep.subr.mxu0 %v4658
        %5345 = vmatpush1.msra.mxu0 %v4657
        %5346 = vmatprep.subr.mxu0 %v4662
        %5347 = vmatpush1.msra.mxu0 %v4661
        %5348 = vmatprep.subr.mxu0 %v4666
        %5349 = vmatpush1.msra.mxu0 %v4665
        %5350 = vmatprep.subr.mxu0 %v4670
        %5351 = vmatpush1.msra.mxu0 %v4669
        %5352 = vmatprep.subr.mxu0 %v4674
        %5353 = vmatpush1.msra.mxu0 %v4673
        %5354 = vmatprep.subr.mxu0 %v4678
        %5355 = vmatpush1.msra.mxu0 %v4677
        %5356 = vmatprep.subr.mxu0 %v4682
        %5357 = vmatpush1.msra.mxu0 %v4681
        %5358 = vmatprep.subr.mxu0 %v4686
        %5359 = vmatpush1.msra.mxu0 %v4685
        %5360 = vmatprep.subr.mxu0 %v4690
        %5361 = vmatpush1.msra.mxu0 %v4689
        %5362 = vmatprep.mubr.f32.mxu0 %v4372
        %5363 = vmatmul.mubr.f32.gmra.mrb[0].mxu0 %v4371
        %v5364 = vpop.f32.mrb[0].mxu0
        %v5365 = vadd.f32 %v5294, %v5364
        %v5366 = vpop.f32.mrb[0].mxu0
        %v5367 = vadd.f32 %v5296, %v5366
        %5368 = vdwg.mxu0
        %5369 = vmatprep.subr.mxu0 %v4694
        %5370 = vmatpush1.msra.mxu0 %v4693
        %5371 = vmatprep.subr.mxu0 %v4698
        %5372 = vmatpush1.msra.mxu0 %v4697
        %5373 = vmatprep.subr.mxu0 %v4702
        %5374 = vmatpush1.msra.mxu0 %v4701
        %5375 = vmatprep.subr.mxu0 %v4706
        %5376 = vmatpush1.msra.mxu0 %v4705
        %5377 = vmatprep.subr.mxu0 %v4710
        %5378 = vmatpush1.msra.mxu0 %v4709
        %5379 = vmatprep.subr.mxu0 %v4714
        %5380 = vmatpush1.msra.mxu0 %v4713
        %5381 = vmatprep.subr.mxu0 %v4718
        %5382 = vmatpush1.msra.mxu0 %v4717
        %5383 = vmatprep.subr.mxu0 %v4722
        %5384 = vmatpush1.msra.mxu0 %v4721
        %5385 = vmatprep.subr.mxu0 %v4726
        %5386 = vmatpush1.msra.mxu0 %v4725
        %5387 = vmatprep.subr.mxu0 %v4730
        %5388 = vmatpush1.msra.mxu0 %v4729
        %5389 = vmatprep.subr.mxu0 %v4734
        %5390 = vmatpush1.msra.mxu0 %v4733
        %5391 = vmatprep.subr.mxu0 %v4738
        %5392 = vmatpush1.msra.mxu0 %v4737
        %5393 = vmatprep.subr.mxu0 %v4742
        %5394 = vmatpush1.msra.mxu0 %v4741
        %5395 = vmatprep.subr.mxu0 %v4746
        %5396 = vmatpush1.msra.mxu0 %v4745
        %5397 = vmatprep.subr.mxu0 %v4750
        %5398 = vmatpush1.msra.mxu0 %v4749
        %5399 = vmatprep.subr.mxu0 %v4754
        %5400 = vmatpush1.msra.mxu0 %v4753
        %5401 = vmatprep.subr.mxu0 %v4758
        %5402 = vmatpush1.msra.mxu0 %v4757
        %5403 = vmatprep.subr.mxu0 %v4762
        %5404 = vmatpush1.msra.mxu0 %v4761
        %5405 = vmatprep.subr.mxu0 %v4766
        %5406 = vmatpush1.msra.mxu0 %v4765
        %5407 = vmatprep.subr.mxu0 %v4770
        %5408 = vmatpush1.msra.mxu0 %v4769
        %5409 = vmatprep.subr.mxu0 %v4774
        %5410 = vmatpush1.msra.mxu0 %v4773
        %5411 = vmatprep.subr.mxu0 %v4778
        %5412 = vmatpush1.msra.mxu0 %v4777
        %5413 = vmatprep.subr.mxu0 %v4782
        %5414 = vmatpush1.msra.mxu0 %v4781
        %5415 = vmatprep.subr.mxu0 %v4786
        %5416 = vmatpush1.msra.mxu0 %v4785
        %5417 = vmatprep.subr.mxu0 %v4790
        %5418 = vmatpush1.msra.mxu0 %v4789
        %5419 = vmatprep.subr.mxu0 %v4794
        %5420 = vmatpush1.msra.mxu0 %v4793
        %5421 = vmatprep.subr.mxu0 %v4798
        %5422 = vmatpush1.msra.mxu0 %v4797
        %5423 = vmatprep.subr.mxu0 %v4802
        %5424 = vmatpush1.msra.mxu0 %v4801
        %5425 = vmatprep.subr.mxu0 %v4806
        %5426 = vmatpush1.msra.mxu0 %v4805
        %5427 = vmatprep.subr.mxu0 %v4810
        %5428 = vmatpush1.msra.mxu0 %v4809
        %5429 = vmatprep.subr.mxu0 %v4814
        %5430 = vmatpush1.msra.mxu0 %v4813
        %5431 = vmatprep.subr.mxu0 %v4818
        %5432 = vmatpush1.msra.mxu0 %v4817
        %5433 = vmatprep.mubr.f32.mxu0 %v4402
        %5434 = vmatmul.mubr.f32.gmra.mrb[0].mxu0 %v4399
        %v5435 = vpop.f32.mrb[0].mxu0
        %v5436 = vadd.f32 %v5365, %v5435
        %v5437 = vpop.f32.mrb[0].mxu0
        %v5438 = vadd.f32 %v5367, %v5437
        %5439 = vdwg.mxu0
        %5440 = vmatprep.subr.mxu0 %v4822
        %5441 = vmatpush1.msra.mxu0 %v4821
        %5442 = vmatprep.subr.mxu0 %v4826
        %5443 = vmatpush1.msra.mxu0 %v4825
        %5444 = vmatprep.subr.mxu0 %v4830
        %5445 = vmatpush1.msra.mxu0 %v4829
        %5446 = vmatprep.subr.mxu0 %v4834
        %5447 = vmatpush1.msra.mxu0 %v4833
        %5448 = vmatprep.subr.mxu0 %v4838
        %5449 = vmatpush1.msra.mxu0 %v4837
        %5450 = vmatprep.subr.mxu0 %v4842
        %5451 = vmatpush1.msra.mxu0 %v4841
        %5452 = vmatprep.subr.mxu0 %v4846
        %5453 = vmatpush1.msra.mxu0 %v4845
        %5454 = vmatprep.subr.mxu0 %v4850
        %5455 = vmatpush1.msra.mxu0 %v4849
        %5456 = vmatprep.subr.mxu0 %v4854
        %5457 = vmatpush1.msra.mxu0 %v4853
        %5458 = vmatprep.subr.mxu0 %v4858
        %5459 = vmatpush1.msra.mxu0 %v4857
        %5460 = vmatprep.subr.mxu0 %v4862
        %5461 = vmatpush1.msra.mxu0 %v4861
        %5462 = vmatprep.subr.mxu0 %v4866
        %5463 = vmatpush1.msra.mxu0 %v4865
        %5464 = vmatprep.subr.mxu0 %v4870
        %5465 = vmatpush1.msra.mxu0 %v4869
        %5466 = vmatprep.subr.mxu0 %v4874
        %5467 = vmatpush1.msra.mxu0 %v4873
        %5468 = vmatprep.subr.mxu0 %v4878
        %5469 = vmatpush1.msra.mxu0 %v4877
        %5470 = vmatprep.subr.mxu0 %v4882
        %5471 = vmatpush1.msra.mxu0 %v4881
        %5472 = vmatprep.subr.mxu0 %v4886
        %5473 = vmatpush1.msra.mxu0 %v4885
        %5474 = vmatprep.subr.mxu0 %v4890
        %5475 = vmatpush1.msra.mxu0 %v4889
        %5476 = vmatprep.subr.mxu0 %v4894
        %5477 = vmatpush1.msra.mxu0 %v4893
        %5478 = vmatprep.subr.mxu0 %v4898
        %5479 = vmatpush1.msra.mxu0 %v4897
        %5480 = vmatprep.subr.mxu0 %v4902
        %5481 = vmatpush1.msra.mxu0 %v4901
        %5482 = vmatprep.subr.mxu0 %v4906
        %5483 = vmatpush1.msra.mxu0 %v4905
        %5484 = vmatprep.subr.mxu0 %v4910
        %5485 = vmatpush1.msra.mxu0 %v4909
        %5486 = vmatprep.subr.mxu0 %v4914
        %5487 = vmatpush1.msra.mxu0 %v4913
        %5488 = vmatprep.subr.mxu0 %v4918
        %5489 = vmatpush1.msra.mxu0 %v4917
        %5490 = vmatprep.subr.mxu0 %v4922
        %5491 = vmatpush1.msra.mxu0 %v4921
        %5492 = vmatprep.subr.mxu0 %v4926
        %5493 = vmatpush1.msra.mxu0 %v4925
        %5494 = vmatprep.subr.mxu0 %v4930
        %5495 = vmatpush1.msra.mxu0 %v4929
        %5496 = vmatprep.subr.mxu0 %v4934
        %5497 = vmatpush1.msra.mxu0 %v4933
        %5498 = vmatprep.subr.mxu0 %v4938
        %5499 = vmatpush1.msra.mxu0 %v4937
        %5500 = vmatprep.subr.mxu0 %v4942
        %5501 = vmatpush1.msra.mxu0 %v4941
        %5502 = vmatprep.subr.mxu0 %v4946
        %5503 = vmatpush1.msra.mxu0 %v4945
        %5504 = vmatprep.mubr.f32.mxu0 %v4408
        %5505 = vmatmul.mubr.f32.gmra.mrb[0].mxu0 %v4405
        %v5506 = vpop.f32.mrb[0].mxu0
        %v5507 = vadd.f32 %v5436, %v5506
        %v5508 = vpop.f32.mrb[0].mxu0
        %v5509 = vadd.f32 %v5438, %v5508
        %5510 = vdwg.mxu0
        %5511 = vmatprep.subr.mxu0 %v4950
        %5512 = vmatpush1.msra.mxu0 %v4949
        %5513 = vmatprep.subr.mxu0 %v4954
        %5514 = vmatpush1.msra.mxu0 %v4953
        %5515 = vmatprep.subr.mxu0 %v4958
        %5516 = vmatpush1.msra.mxu0 %v4957
        %5517 = vmatprep.subr.mxu0 %v4962
        %5518 = vmatpush1.msra.mxu0 %v4961
        %5519 = vmatprep.subr.mxu0 %v4966
        %5520 = vmatpush1.msra.mxu0 %v4965
        %5521 = vmatprep.subr.mxu0 %v4970
        %5522 = vmatpush1.msra.mxu0 %v4969
        %5523 = vmatprep.subr.mxu0 %v4974
        %5524 = vmatpush1.msra.mxu0 %v4973
        %5525 = vmatprep.subr.mxu0 %v4978
        %5526 = vmatpush1.msra.mxu0 %v4977
        %5527 = vmatprep.subr.mxu0 %v4982
        %5528 = vmatpush1.msra.mxu0 %v4981
        %5529 = vmatprep.subr.mxu0 %v4986
        %5530 = vmatpush1.msra.mxu0 %v4985
        %5531 = vmatprep.subr.mxu0 %v4990
        %5532 = vmatpush1.msra.mxu0 %v4989
        %5533 = vmatprep.subr.mxu0 %v4994
        %5534 = vmatpush1.msra.mxu0 %v4993
        %5535 = vmatprep.subr.mxu0 %v4998
        %5536 = vmatpush1.msra.mxu0 %v4997
        %5537 = vmatprep.subr.mxu0 %v5002
        %5538 = vmatpush1.msra.mxu0 %v5001
        %5539 = vmatprep.subr.mxu0 %v5006
        %5540 = vmatpush1.msra.mxu0 %v5005
        %5541 = vmatprep.subr.mxu0 %v5010
        %5542 = vmatpush1.msra.mxu0 %v5009
        %5543 = vmatprep.subr.mxu0 %v5014
        %5544 = vmatpush1.msra.mxu0 %v5013
        %5545 = vmatprep.subr.mxu0 %v5018
        %5546 = vmatpush1.msra.mxu0 %v5017
        %5547 = vmatprep.subr.mxu0 %v5022
        %5548 = vmatpush1.msra.mxu0 %v5021
        %5549 = vmatprep.subr.mxu0 %v5026
        %5550 = vmatpush1.msra.mxu0 %v5025
        %5551 = vmatprep.subr.mxu0 %v5030
        %5552 = vmatpush1.msra.mxu0 %v5029
        %5553 = vmatprep.subr.mxu0 %v5034
        %5554 = vmatpush1.msra.mxu0 %v5033
        %5555 = vmatprep.subr.mxu0 %v5038
        %5556 = vmatpush1.msra.mxu0 %v5037
        %5557 = vmatprep.subr.mxu0 %v5042
        %5558 = vmatpush1.msra.mxu0 %v5041
        %5559 = vmatprep.subr.mxu0 %v5046
        %5560 = vmatpush1.msra.mxu0 %v5045
        %5561 = vmatprep.subr.mxu0 %v5050
        %5562 = vmatpush1.msra.mxu0 %v5049
        %5563 = vmatprep.subr.mxu0 %v5054
        %5564 = vmatpush1.msra.mxu0 %v5053
        %5565 = vmatprep.subr.mxu0 %v5058
        %5566 = vmatpush1.msra.mxu0 %v5057
        %5567 = vmatprep.subr.mxu0 %v5062
        %5568 = vmatpush1.msra.mxu0 %v5061
        %5569 = vmatprep.subr.mxu0 %v5066
        %5570 = vmatpush1.msra.mxu0 %v5065
        %5571 = vmatprep.subr.mxu0 %v5070
        %5572 = vmatpush1.msra.mxu0 %v5069
        %5573 = vmatprep.subr.mxu0 %v5074
        %5574 = vmatpush1.msra.mxu0 %v5073
        %5575 = vmatprep.mubr.f32.mxu0 %v4426
        %5576 = vmatmul.mubr.f32.gmra.mrb[0].mxu0 %v4423
        %v5577 = vpop.f32.mrb[0].mxu0
        %v5578 = vadd.f32 %v5507, %v5577
        %v5579 = vpop.f32.mrb[0].mxu0
        %v5580 = vadd.f32 %v5509, %v5579
        %5581 = vdwg.mxu0
        %5582 = vmatprep.subr.mxu0 %v5078
        %5583 = vmatpush1.msra.mxu0 %v5077
        %5584 = vmatprep.subr.mxu0 %v5082
        %5585 = vmatpush1.msra.mxu0 %v5081
        %5586 = vmatprep.subr.mxu0 %v5086
        %5587 = vmatpush1.msra.mxu0 %v5085
        %5588 = vmatprep.subr.mxu0 %v5090
        %5589 = vmatpush1.msra.mxu0 %v5089
        %5590 = vmatprep.subr.mxu0 %v5094
        %5591 = vmatpush1.msra.mxu0 %v5093
        %5592 = vmatprep.subr.mxu0 %v5098
        %5593 = vmatpush1.msra.mxu0 %v5097
        %5594 = vmatprep.subr.mxu0 %v5102
        %5595 = vmatpush1.msra.mxu0 %v5101
        %5596 = vmatprep.subr.mxu0 %v5106
        %5597 = vmatpush1.msra.mxu0 %v5105
        %5598 = vmatprep.subr.mxu0 %v5110
        %5599 = vmatpush1.msra.mxu0 %v5109
        %5600 = vmatprep.subr.mxu0 %v5114
        %5601 = vmatpush1.msra.mxu0 %v5113
        %5602 = vmatprep.subr.mxu0 %v5118
        %5603 = vmatpush1.msra.mxu0 %v5117
        %5604 = vmatprep.subr.mxu0 %v5122
        %5605 = vmatpush1.msra.mxu0 %v5121
        %5606 = vmatprep.subr.mxu0 %v5126
        %5607 = vmatpush1.msra.mxu0 %v5125
        %5608 = vmatprep.subr.mxu0 %v5130
        %5609 = vmatpush1.msra.mxu0 %v5129
        %5610 = vmatprep.subr.mxu0 %v5134
        %5611 = vmatpush1.msra.mxu0 %v5133
        %5612 = vmatprep.subr.mxu0 %v5138
        %5613 = vmatpush1.msra.mxu0 %v5137
        %5614 = vmatprep.subr.mxu0 %v5142
        %5615 = vmatpush1.msra.mxu0 %v5141
        %5616 = vmatprep.subr.mxu0 %v5146
        %5617 = vmatpush1.msra.mxu0 %v5145
        %5618 = vmatprep.subr.mxu0 %v5150
        %5619 = vmatpush1.msra.mxu0 %v5149
        %5620 = vmatprep.subr.mxu0 %v5154
        %5621 = vmatpush1.msra.mxu0 %v5153
        %5622 = vmatprep.subr.mxu0 %v5158
        %5623 = vmatpush1.msra.mxu0 %v5157
        %5624 = vmatprep.subr.mxu0 %v5162
        %5625 = vmatpush1.msra.mxu0 %v5161
        %5626 = vmatprep.subr.mxu0 %v5166
        %5627 = vmatpush1.msra.mxu0 %v5165
        %5628 = vmatprep.subr.mxu0 %v5170
        %5629 = vmatpush1.msra.mxu0 %v5169
        %5630 = vmatprep.subr.mxu0 %v5174
        %5631 = vmatpush1.msra.mxu0 %v5173
        %5632 = vmatprep.subr.mxu0 %v5178
        %5633 = vmatpush1.msra.mxu0 %v5177
        %5634 = vmatprep.subr.mxu0 %v5182
        %5635 = vmatpush1.msra.mxu0 %v5181
        %5636 = vmatprep.subr.mxu0 %v5186
        %5637 = vmatpush1.msra.mxu0 %v5185
        %5638 = vmatprep.subr.mxu0 %v5190
        %5639 = vmatpush1.msra.mxu0 %v5189
        %5640 = vmatprep.subr.mxu0 %v5194
        %5641 = vmatpush1.msra.mxu0 %v5193
        %5642 = vmatprep.subr.mxu0 %v5198
        %5643 = vmatpush1.msra.mxu0 %v5197
        %5644 = vmatprep.subr.mxu0 %v5202
        %5645 = vmatpush1.msra.mxu0 %v5201
        %5646 = vmatprep.mubr.f32.mxu0 %v4432
        %5647 = vmatmul.mubr.f32.gmra.mrb[0].mxu0 %v4429
        %v5648 = vpop.f32.mrb[0].mxu0
        %v5649 = vadd.f32 %v5578, %v5648
        %v5650 = vpop.f32.mrb[0].mxu0
        %v5651 = vadd.f32 %v5580, %v5650
        %5652 = vdwg.mxu0
        %5653 = vmatprep.subr.mxu0 %v4440
        %5654 = vmatpush1.msra.mxu0 %v4439
        %5655 = vmatprep.subr.mxu0 %v4444
        %5656 = vmatpush1.msra.mxu0 %v4443
        %5657 = vmatprep.subr.mxu0 %v4448
        %5658 = vmatpush1.msra.mxu0 %v4447
        %5659 = vmatprep.subr.mxu0 %v4452
        %5660 = vmatpush1.msra.mxu0 %v4451
        %5661 = vmatprep.subr.mxu0 %v4456
        %5662 = vmatpush1.msra.mxu0 %v4455
        %5663 = vmatprep.subr.mxu0 %v4460
        %5664 = vmatpush1.msra.mxu0 %v4459
        %5665 = vmatprep.subr.mxu0 %v4464
        %5666 = vmatpush1.msra.mxu0 %v4463
        %5667 = vmatprep.subr.mxu0 %v4468
        %5668 = vmatpush1.msra.mxu0 %v4467
        %5669 = vmatprep.subr.mxu0 %v4472
        %5670 = vmatpush1.msra.mxu0 %v4471
        %5671 = vmatprep.subr.mxu0 %v4476
        %5672 = vmatpush1.msra.mxu0 %v4475
        %5673 = vmatprep.subr.mxu0 %v4480
        %5674 = vmatpush1.msra.mxu0 %v4479
        %5675 = vmatprep.subr.mxu0 %v4484
        %5676 = vmatpush1.msra.mxu0 %v4483
        %5677 = vmatprep.subr.mxu0 %v4488
        %5678 = vmatpush1.msra.mxu0 %v4487
        %5679 = vmatprep.subr.mxu0 %v4492
        %5680 = vmatpush1.msra.mxu0 %v4491
        %5681 = vmatprep.subr.mxu0 %v4496
        %5682 = vmatpush1.msra.mxu0 %v4495
        %5683 = vmatprep.subr.mxu0 %v4500
        %5684 = vmatpush1.msra.mxu0 %v4499
        %5685 = vmatprep.subr.mxu0 %v4504
        %5686 = vmatpush1.msra.mxu0 %v4503
        %5687 = vmatprep.subr.mxu0 %v4508
        %5688 = vmatpush1.msra.mxu0 %v4507
        %5689 = vmatprep.subr.mxu0 %v4512
        %5690 = vmatpush1.msra.mxu0 %v4511
        %5691 = vmatprep.subr.mxu0 %v4516
        %5692 = vmatpush1.msra.mxu0 %v4515
        %5693 = vmatprep.subr.mxu0 %v4520
        %5694 = vmatpush1.msra.mxu0 %v4519
        %5695 = vmatprep.subr.mxu0 %v4524
        %5696 = vmatpush1.msra.mxu0 %v4523
        %5697 = vmatprep.subr.mxu0 %v4528
        %5698 = vmatpush1.msra.mxu0 %v4527
        %5699 = vmatprep.subr.mxu0 %v4532
        %5700 = vmatpush1.msra.mxu0 %v4531
        %5701 = vmatprep.subr.mxu0 %v4536
        %5702 = vmatpush1.msra.mxu0 %v4535
        %5703 = vmatprep.subr.mxu0 %v4540
        %5704 = vmatpush1.msra.mxu0 %v4539
        %5705 = vmatprep.subr.mxu0 %v4544
        %5706 = vmatpush1.msra.mxu0 %v4543
        %5707 = vmatprep.subr.mxu0 %v4548
        %5708 = vmatpush1.msra.mxu0 %v4547
        %5709 = vmatprep.subr.mxu0 %v4552
        %5710 = vmatpush1.msra.mxu0 %v4551
        %5711 = vmatprep.subr.mxu0 %v4556
        %5712 = vmatpush1.msra.mxu0 %v4555
        %5713 = vmatprep.subr.mxu0 %v4560
        %5714 = vmatpush1.msra.mxu0 %v4559
        %5715 = vmatprep.subr.mxu0 %v4564
        %5716 = vmatpush1.msra.mxu0 %v4563
        %5717 = vmatprep.mubr.f32.mxu0 %v4370
        %5718 = vmatmul.mubr.f32.gmra.mrb[0].mxu0 %v4369
        %v5719 = vpop.f32.mrb[0].mxu0
        %v5720 = vadd.f32 %v5218, %v5719
        %v5721 = vpop.f32.mrb[0].mxu0
        %v5722 = vadd.f32 %v5222, %v5721
        %5723 = vdwg.mxu0
        %5724 = vmatprep.subr.mxu0 %v4568
        %5725 = vmatpush1.msra.mxu0 %v4567
        %5726 = vmatprep.subr.mxu0 %v4572
        %5727 = vmatpush1.msra.mxu0 %v4571
        %5728 = vmatprep.subr.mxu0 %v4576
        %5729 = vmatpush1.msra.mxu0 %v4575
        %5730 = vmatprep.subr.mxu0 %v4580
        %5731 = vmatpush1.msra.mxu0 %v4579
        %5732 = vmatprep.subr.mxu0 %v4584
        %5733 = vmatpush1.msra.mxu0 %v4583
        %5734 = vmatprep.subr.mxu0 %v4588
        %5735 = vmatpush1.msra.mxu0 %v4587
        %5736 = vmatprep.subr.mxu0 %v4592
        %5737 = vmatpush1.msra.mxu0 %v4591
        %5738 = vmatprep.subr.mxu0 %v4596
        %5739 = vmatpush1.msra.mxu0 %v4595
        %5740 = vmatprep.subr.mxu0 %v4600
        %5741 = vmatpush1.msra.mxu0 %v4599
        %5742 = vmatprep.subr.mxu0 %v4604
        %5743 = vmatpush1.msra.mxu0 %v4603
        %5744 = vmatprep.subr.mxu0 %v4608
        %5745 = vmatpush1.msra.mxu0 %v4607
        %5746 = vmatprep.subr.mxu0 %v4612
        %5747 = vmatpush1.msra.mxu0 %v4611
        %5748 = vmatprep.subr.mxu0 %v4616
        %5749 = vmatpush1.msra.mxu0 %v4615
        %5750 = vmatprep.subr.mxu0 %v4620
        %5751 = vmatpush1.msra.mxu0 %v4619
        %5752 = vmatprep.subr.mxu0 %v4624
        %5753 = vmatpush1.msra.mxu0 %v4623
        %5754 = vmatprep.subr.mxu0 %v4628
        %5755 = vmatpush1.msra.mxu0 %v4627
        %5756 = vmatprep.subr.mxu0 %v4632
        %5757 = vmatpush1.msra.mxu0 %v4631
        %5758 = vmatprep.subr.mxu0 %v4636
        %5759 = vmatpush1.msra.mxu0 %v4635
        %5760 = vmatprep.subr.mxu0 %v4640
        %5761 = vmatpush1.msra.mxu0 %v4639
        %5762 = vmatprep.subr.mxu0 %v4644
        %5763 = vmatpush1.msra.mxu0 %v4643
        %5764 = vmatprep.subr.mxu0 %v4648
        %5765 = vmatpush1.msra.mxu0 %v4647
        %5766 = vmatprep.subr.mxu0 %v4652
        %5767 = vmatpush1.msra.mxu0 %v4651
        %5768 = vmatprep.subr.mxu0 %v4656
        %5769 = vmatpush1.msra.mxu0 %v4655
        %5770 = vmatprep.subr.mxu0 %v4660
        %5771 = vmatpush1.msra.mxu0 %v4659
        %5772 = vmatprep.subr.mxu0 %v4664
        %5773 = vmatpush1.msra.mxu0 %v4663
        %5774 = vmatprep.subr.mxu0 %v4668
        %5775 = vmatpush1.msra.mxu0 %v4667
        %5776 = vmatprep.subr.mxu0 %v4672
        %5777 = vmatpush1.msra.mxu0 %v4671
        %5778 = vmatprep.subr.mxu0 %v4676
        %5779 = vmatpush1.msra.mxu0 %v4675
        %5780 = vmatprep.subr.mxu0 %v4680
        %5781 = vmatpush1.msra.mxu0 %v4679
        %5782 = vmatprep.subr.mxu0 %v4684
        %5783 = vmatpush1.msra.mxu0 %v4683
        %5784 = vmatprep.subr.mxu0 %v4688
        %5785 = vmatpush1.msra.mxu0 %v4687
        %5786 = vmatprep.subr.mxu0 %v4692
        %5787 = vmatpush1.msra.mxu0 %v4691
        %5788 = vmatprep.mubr.f32.mxu0 %v4372
        %5789 = vmatmul.mubr.f32.gmra.mrb[0].mxu0 %v4371
        %v5790 = vpop.f32.mrb[0].mxu0
        %v5791 = vadd.f32 %v5720, %v5790
        %v5792 = vpop.f32.mrb[0].mxu0
        %v5793 = vadd.f32 %v5722, %v5792
        %5794 = vdwg.mxu0
        %5795 = vmatprep.subr.mxu0 %v4696
        %5796 = vmatpush1.msra.mxu0 %v4695
        %5797 = vmatprep.subr.mxu0 %v4700
        %5798 = vmatpush1.msra.mxu0 %v4699
        %5799 = vmatprep.subr.mxu0 %v4704
        %5800 = vmatpush1.msra.mxu0 %v4703
        %5801 = vmatprep.subr.mxu0 %v4708
        %5802 = vmatpush1.msra.mxu0 %v4707
        %5803 = vmatprep.subr.mxu0 %v4712
        %5804 = vmatpush1.msra.mxu0 %v4711
        %5805 = vmatprep.subr.mxu0 %v4716
        %5806 = vmatpush1.msra.mxu0 %v4715
        %5807 = vmatprep.subr.mxu0 %v4720
        %5808 = vmatpush1.msra.mxu0 %v4719
        %5809 = vmatprep.subr.mxu0 %v4724
        %5810 = vmatpush1.msra.mxu0 %v4723
        %5811 = vmatprep.subr.mxu0 %v4728
        %5812 = vmatpush1.msra.mxu0 %v4727
        %5813 = vmatprep.subr.mxu0 %v4732
        %5814 = vmatpush1.msra.mxu0 %v4731
        %5815 = vmatprep.subr.mxu0 %v4736
        %5816 = vmatpush1.msra.mxu0 %v4735
        %5817 = vmatprep.subr.mxu0 %v4740
        %5818 = vmatpush1.msra.mxu0 %v4739
        %5819 = vmatprep.subr.mxu0 %v4744
        %5820 = vmatpush1.msra.mxu0 %v4743
        %5821 = vmatprep.subr.mxu0 %v4748
        %5822 = vmatpush1.msra.mxu0 %v4747
        %5823 = vmatprep.subr.mxu0 %v4752
        %5824 = vmatpush1.msra.mxu0 %v4751
        %5825 = vmatprep.subr.mxu0 %v4756
        %5826 = vmatpush1.msra.mxu0 %v4755
        %5827 = vmatprep.subr.mxu0 %v4760
        %5828 = vmatpush1.msra.mxu0 %v4759
        %5829 = vmatprep.subr.mxu0 %v4764
        %5830 = vmatpush1.msra.mxu0 %v4763
        %5831 = vmatprep.subr.mxu0 %v4768
        %5832 = vmatpush1.msra.mxu0 %v4767
        %5833 = vmatprep.subr.mxu0 %v4772
        %5834 = vmatpush1.msra.mxu0 %v4771
        %5835 = vmatprep.subr.mxu0 %v4776
        %5836 = vmatpush1.msra.mxu0 %v4775
        %5837 = vmatprep.subr.mxu0 %v4780
        %5838 = vmatpush1.msra.mxu0 %v4779
        %5839 = vmatprep.subr.mxu0 %v4784
        %5840 = vmatpush1.msra.mxu0 %v4783
        %5841 = vmatprep.subr.mxu0 %v4788
        %5842 = vmatpush1.msra.mxu0 %v4787
        %5843 = vmatprep.subr.mxu0 %v4792
        %5844 = vmatpush1.msra.mxu0 %v4791
        %5845 = vmatprep.subr.mxu0 %v4796
        %5846 = vmatpush1.msra.mxu0 %v4795
        %5847 = vmatprep.subr.mxu0 %v4800
        %5848 = vmatpush1.msra.mxu0 %v4799
        %5849 = vmatprep.subr.mxu0 %v4804
        %5850 = vmatpush1.msra.mxu0 %v4803
        %5851 = vmatprep.subr.mxu0 %v4808
        %5852 = vmatpush1.msra.mxu0 %v4807
        %5853 = vmatprep.subr.mxu0 %v4812
        %5854 = vmatpush1.msra.mxu0 %v4811
        %5855 = vmatprep.subr.mxu0 %v4816
        %5856 = vmatpush1.msra.mxu0 %v4815
        %5857 = vmatprep.subr.mxu0 %v4820
        %5858 = vmatpush1.msra.mxu0 %v4819
        %5859 = vmatprep.mubr.f32.mxu0 %v4402
        %5860 = vmatmul.mubr.f32.gmra.mrb[0].mxu0 %v4399
        %v5861 = vpop.f32.mrb[0].mxu0
        %v5862 = vadd.f32 %v5791, %v5861
        %v5863 = vpop.f32.mrb[0].mxu0
        %v5864 = vadd.f32 %v5793, %v5863
        %5865 = vdwg.mxu0
        %5866 = vmatprep.subr.mxu0 %v4824
        %5867 = vmatpush1.msra.mxu0 %v4823
        %5868 = vmatprep.subr.mxu0 %v4828
        %5869 = vmatpush1.msra.mxu0 %v4827
        %5870 = vmatprep.subr.mxu0 %v4832
        %5871 = vmatpush1.msra.mxu0 %v4831
        %5872 = vmatprep.subr.mxu0 %v4836
        %5873 = vmatpush1.msra.mxu0 %v4835
        %5874 = vmatprep.subr.mxu0 %v4840
        %5875 = vmatpush1.msra.mxu0 %v4839
        %5876 = vmatprep.subr.mxu0 %v4844
        %5877 = vmatpush1.msra.mxu0 %v4843
        %5878 = vmatprep.subr.mxu0 %v4848
        %5879 = vmatpush1.msra.mxu0 %v4847
        %5880 = vmatprep.subr.mxu0 %v4852
        %5881 = vmatpush1.msra.mxu0 %v4851
        %5882 = vmatprep.subr.mxu0 %v4856
        %5883 = vmatpush1.msra.mxu0 %v4855
        %5884 = vmatprep.subr.mxu0 %v4860
        %5885 = vmatpush1.msra.mxu0 %v4859
        %5886 = vmatprep.subr.mxu0 %v4864
        %5887 = vmatpush1.msra.mxu0 %v4863
        %5888 = vmatprep.subr.mxu0 %v4868
        %5889 = vmatpush1.msra.mxu0 %v4867
        %5890 = vmatprep.subr.mxu0 %v4872
        %5891 = vmatpush1.msra.mxu0 %v4871
        %5892 = vmatprep.subr.mxu0 %v4876
        %5893 = vmatpush1.msra.mxu0 %v4875
        %5894 = vmatprep.subr.mxu0 %v4880
        %5895 = vmatpush1.msra.mxu0 %v4879
        %5896 = vmatprep.subr.mxu0 %v4884
        %5897 = vmatpush1.msra.mxu0 %v4883
        %5898 = vmatprep.subr.mxu0 %v4888
        %5899 = vmatpush1.msra.mxu0 %v4887
        %5900 = vmatprep.subr.mxu0 %v4892
        %5901 = vmatpush1.msra.mxu0 %v4891
        %5902 = vmatprep.subr.mxu0 %v4896
        %5903 = vmatpush1.msra.mxu0 %v4895
        %5904 = vmatprep.subr.mxu0 %v4900
        %5905 = vmatpush1.msra.mxu0 %v4899
        %5906 = vmatprep.subr.mxu0 %v4904
        %5907 = vmatpush1.msra.mxu0 %v4903
        %5908 = vmatprep.subr.mxu0 %v4908
        %5909 = vmatpush1.msra.mxu0 %v4907
        %5910 = vmatprep.subr.mxu0 %v4912
        %5911 = vmatpush1.msra.mxu0 %v4911
        %5912 = vmatprep.subr.mxu0 %v4916
        %5913 = vmatpush1.msra.mxu0 %v4915
        %5914 = vmatprep.subr.mxu0 %v4920
        %5915 = vmatpush1.msra.mxu0 %v4919
        %5916 = vmatprep.subr.mxu0 %v4924
        %5917 = vmatpush1.msra.mxu0 %v4923
        %5918 = vmatprep.subr.mxu0 %v4928
        %5919 = vmatpush1.msra.mxu0 %v4927
        %5920 = vmatprep.subr.mxu0 %v4932
        %5921 = vmatpush1.msra.mxu0 %v4931
        %5922 = vmatprep.subr.mxu0 %v4936
        %5923 = vmatpush1.msra.mxu0 %v4935
        %5924 = vmatprep.subr.mxu0 %v4940
        %5925 = vmatpush1.msra.mxu0 %v4939
        %5926 = vmatprep.subr.mxu0 %v4944
        %5927 = vmatpush1.msra.mxu0 %v4943
        %5928 = vmatprep.subr.mxu0 %v4948
        %5929 = vmatpush1.msra.mxu0 %v4947
        %5930 = vmatprep.mubr.f32.mxu0 %v4408
        %5931 = vmatmul.mubr.f32.gmra.mrb[0].mxu0 %v4405
        %v5932 = vpop.f32.mrb[0].mxu0
        %v5933 = vadd.f32 %v5862, %v5932
        %v5934 = vpop.f32.mrb[0].mxu0
        %v5935 = vadd.f32 %v5864, %v5934
        %5936 = vdwg.mxu0
        %5937 = vmatprep.subr.mxu0 %v4952
        %5938 = vmatpush1.msra.mxu0 %v4951
        %5939 = vmatprep.subr.mxu0 %v4956
        %5940 = vmatpush1.msra.mxu0 %v4955
        %5941 = vmatprep.subr.mxu0 %v4960
        %5942 = vmatpush1.msra.mxu0 %v4959
        %5943 = vmatprep.subr.mxu0 %v4964
        %5944 = vmatpush1.msra.mxu0 %v4963
        %5945 = vmatprep.subr.mxu0 %v4968
        %5946 = vmatpush1.msra.mxu0 %v4967
        %5947 = vmatprep.subr.mxu0 %v4972
        %5948 = vmatpush1.msra.mxu0 %v4971
        %5949 = vmatprep.subr.mxu0 %v4976
        %5950 = vmatpush1.msra.mxu0 %v4975
        %5951 = vmatprep.subr.mxu0 %v4980
        %5952 = vmatpush1.msra.mxu0 %v4979
        %5953 = vmatprep.subr.mxu0 %v4984
        %5954 = vmatpush1.msra.mxu0 %v4983
        %5955 = vmatprep.subr.mxu0 %v4988
        %5956 = vmatpush1.msra.mxu0 %v4987
        %5957 = vmatprep.subr.mxu0 %v4992
        %5958 = vmatpush1.msra.mxu0 %v4991
        %5959 = vmatprep.subr.mxu0 %v4996
        %5960 = vmatpush1.msra.mxu0 %v4995
        %5961 = vmatprep.subr.mxu0 %v5000
        %5962 = vmatpush1.msra.mxu0 %v4999
        %5963 = vmatprep.subr.mxu0 %v5004
        %5964 = vmatpush1.msra.mxu0 %v5003
        %5965 = vmatprep.subr.mxu0 %v5008
        %5966 = vmatpush1.msra.mxu0 %v5007
        %5967 = vmatprep.subr.mxu0 %v5012
        %5968 = vmatpush1.msra.mxu0 %v5011
        %5969 = vmatprep.subr.mxu0 %v5016
        %5970 = vmatpush1.msra.mxu0 %v5015
        %5971 = vmatprep.subr.mxu0 %v5020
        %5972 = vmatpush1.msra.mxu0 %v5019
        %5973 = vmatprep.subr.mxu0 %v5024
        %5974 = vmatpush1.msra.mxu0 %v5023
        %5975 = vmatprep.subr.mxu0 %v5028
        %5976 = vmatpush1.msra.mxu0 %v5027
        %5977 = vmatprep.subr.mxu0 %v5032
        %5978 = vmatpush1.msra.mxu0 %v5031
        %5979 = vmatprep.subr.mxu0 %v5036
        %5980 = vmatpush1.msra.mxu0 %v5035
        %5981 = vmatprep.subr.mxu0 %v5040
        %5982 = vmatpush1.msra.mxu0 %v5039
        %5983 = vmatprep.subr.mxu0 %v5044
        %5984 = vmatpush1.msra.mxu0 %v5043
        %5985 = vmatprep.subr.mxu0 %v5048
        %5986 = vmatpush1.msra.mxu0 %v5047
        %5987 = vmatprep.subr.mxu0 %v5052
        %5988 = vmatpush1.msra.mxu0 %v5051
        %5989 = vmatprep.subr.mxu0 %v5056
        %5990 = vmatpush1.msra.mxu0 %v5055
        %5991 = vmatprep.subr.mxu0 %v5060
        %5992 = vmatpush1.msra.mxu0 %v5059
        %5993 = vmatprep.subr.mxu0 %v5064
        %5994 = vmatpush1.msra.mxu0 %v5063
        %5995 = vmatprep.subr.mxu0 %v5068
        %5996 = vmatpush1.msra.mxu0 %v5067
        %5997 = vmatprep.subr.mxu0 %v5072
        %5998 = vmatpush1.msra.mxu0 %v5071
        %5999 = vmatprep.subr.mxu0 %v5076
        %6000 = vmatpush1.msra.mxu0 %v5075
        %6001 = vmatprep.mubr.f32.mxu0 %v4426
        %6002 = vmatmul.mubr.f32.gmra.mrb[0].mxu0 %v4423
        %v6003 = vpop.f32.mrb[0].mxu0
        %v6004 = vadd.f32 %v5933, %v6003
        %v6005 = vpop.f32.mrb[0].mxu0
        %v6006 = vadd.f32 %v5935, %v6005
        %6007 = vdwg.mxu0
        %6008 = vmatprep.subr.mxu0 %v5080
        %6009 = vmatpush1.msra.mxu0 %v5079
        %6010 = vmatprep.subr.mxu0 %v5084
        %6011 = vmatpush1.msra.mxu0 %v5083
        %6012 = vmatprep.subr.mxu0 %v5088
        %6013 = vmatpush1.msra.mxu0 %v5087
        %6014 = vmatprep.subr.mxu0 %v5092
        %6015 = vmatpush1.msra.mxu0 %v5091
        %6016 = vmatprep.subr.mxu0 %v5096
        %6017 = vmatpush1.msra.mxu0 %v5095
        %6018 = vmatprep.subr.mxu0 %v5100
        %6019 = vmatpush1.msra.mxu0 %v5099
        %6020 = vmatprep.subr.mxu0 %v5104
        %6021 = vmatpush1.msra.mxu0 %v5103
        %6022 = vmatprep.subr.mxu0 %v5108
        %6023 = vmatpush1.msra.mxu0 %v5107
        %6024 = vmatprep.subr.mxu0 %v5112
        %6025 = vmatpush1.msra.mxu0 %v5111
        %6026 = vmatprep.subr.mxu0 %v5116
        %6027 = vmatpush1.msra.mxu0 %v5115
        %6028 = vmatprep.subr.mxu0 %v5120
        %6029 = vmatpush1.msra.mxu0 %v5119
        %6030 = vmatprep.subr.mxu0 %v5124
        %6031 = vmatpush1.msra.mxu0 %v5123
        %6032 = vmatprep.subr.mxu0 %v5128
        %6033 = vmatpush1.msra.mxu0 %v5127
        %6034 = vmatprep.subr.mxu0 %v5132
        %6035 = vmatpush1.msra.mxu0 %v5131
        %6036 = vmatprep.subr.mxu0 %v5136
        %6037 = vmatpush1.msra.mxu0 %v5135
        %6038 = vmatprep.subr.mxu0 %v5140
        %6039 = vmatpush1.msra.mxu0 %v5139
        %6040 = vmatprep.subr.mxu0 %v5144
        %6041 = vmatpush1.msra.mxu0 %v5143
        %6042 = vmatprep.subr.mxu0 %v5148
        %6043 = vmatpush1.msra.mxu0 %v5147
        %6044 = vmatprep.subr.mxu0 %v5152
        %6045 = vmatpush1.msra.mxu0 %v5151
        %6046 = vmatprep.subr.mxu0 %v5156
        %6047 = vmatpush1.msra.mxu0 %v5155
        %6048 = vmatprep.subr.mxu0 %v5160
        %6049 = vmatpush1.msra.mxu0 %v5159
        %6050 = vmatprep.subr.mxu0 %v5164
        %6051 = vmatpush1.msra.mxu0 %v5163
        %6052 = vmatprep.subr.mxu0 %v5168
        %6053 = vmatpush1.msra.mxu0 %v5167
        %6054 = vmatprep.subr.mxu0 %v5172
        %6055 = vmatpush1.msra.mxu0 %v5171
        %6056 = vmatprep.subr.mxu0 %v5176
        %6057 = vmatpush1.msra.mxu0 %v5175
        %6058 = vmatprep.subr.mxu0 %v5180
        %6059 = vmatpush1.msra.mxu0 %v5179
        %6060 = vmatprep.subr.mxu0 %v5184
        %6061 = vmatpush1.msra.mxu0 %v5183
        %6062 = vmatprep.subr.mxu0 %v5188
        %6063 = vmatpush1.msra.mxu0 %v5187
        %6064 = vmatprep.subr.mxu0 %v5192
        %6065 = vmatpush1.msra.mxu0 %v5191
        %6066 = vmatprep.subr.mxu0 %v5196
        %6067 = vmatpush1.msra.mxu0 %v5195
        %6068 = vmatprep.subr.mxu0 %v5200
        %6069 = vmatpush1.msra.mxu0 %v5199
        %6070 = vmatprep.subr.mxu0 %v5204
        %6071 = vmatpush1.msra.mxu0 %v5203
        %6072 = vmatprep.mubr.f32.mxu0 %v4432
        %6073 = vmatmul.mubr.f32.gmra.mrb[0].mxu0 %v4429
        %v6074 = vpop.f32.mrb[0].mxu0
        %v6075 = vadd.f32 %v6004, %v6074
        %v6076 = vpop.f32.mrb[0].mxu0
        %v6077 = vadd.f32 %v6006, %v6076
        %6078 = vdwg.mxu0
        %v6079 = vadd.f32 %v741, %v5649
        %v6080 = vadd.f32 %v742, %v5651
        %v6081 = vadd.f32 %v743, %v6075
        %v6082 = vadd.f32 %v744, %v6077
        %6083 = vst [vmem:[%s731] sm:$0xff] %v6079
        %6084 = vst [vmem:[%s731 + $0x8] sm:$0xff] %v6080
        %6085 = vst [vmem:[%s731 + $0x10] sm:$0xff] %v6081
        %6086 = vst [vmem:[%s731 + $0x18] sm:$0xff] %v6082
        %s6087 = sand.u32 %s396, 1
        %s6088 = scalar_lea.sflag [#allocation5], %s6087
        %s6089 = sand.u32 %s396, 1
        %s6090 = smul.addr %s6089, 32
        %s6091 = scalar_lea.vmem [#allocation26], %s6090
        // Predicated region
        $region141: #{tpu_custom_call.1} parent=83 // pred_check
          %p6092 = pneg %p406
        $region142: #{tpu_custom_call.1} parent=83 // pred_check_branch
          %6094 = sbr.rel (%p6092) target = $region144
        $region143: #{tpu_custom_call.1} parent=83 // pred_region
          %s6096 = ssub.s32 512, 512
          %6097 = vsyncadd %s6088, %s6096
          %s6098 = smul.addr %s42, 4
          %s6099 = smul.addr %s6098, 128
          %s6100 = scalar_lea.hbm %s16, %s6099
          %s6102 = sshll.u32 %s6091, 4
          %s6103 = int_to_ptr.vmem [resolvable:$true] %s6102
          %6105 = dma.vmem_to_hbm [thread:$0]  %s6103, 512, %s6100, %s6088
        $region144: #{tpu_custom_call.1} parent=83 // pred_fallthru
          _
      $region84: #{tpu_custom_call.1} parent=5 // pred_fallthru
        _
      %p6106 = scmp.le.s32.totalorder 2, %s37
      // Predicated region
      $region145: #{tpu_custom_call.1} parent=5 // pred_check
        %p6107 = pneg %p6106
      $region146: #{tpu_custom_call.1} parent=5 // pred_check_branch
        %6109 = sbr.rel (%p6107) target = $region148
      $region147: #{tpu_custom_call.1} parent=5 // pred_region
        %s6110 = ssub.s32 %s37, 2
        // Predicated region
        $region149: #{tpu_custom_call.1} parent=147 // pred_check
          %p6111 = pneg %p412
        $region150: #{tpu_custom_call.1} parent=147 // pred_check_branch
          %6113 = sbr.rel (%p6111) target = $region152
        $region151: #{tpu_custom_call.1} parent=147 // pred_region
          %s6114 = sand.u32 %s397, 1
          %s6115 = scalar_lea.sflag [#allocation5], %s6114
          %s6116 = sand.u32 %s397, 1
          %s6117 = smul.addr %s6116, 32
          %s6118 = scalar_lea.vmem [#allocation26], %s6117
          %6119 = dma.done %s6115, 512
        $region152: #{tpu_custom_call.1} parent=147 // pred_fallthru
          _
      $region148: #{tpu_custom_call.1} parent=5 // pred_fallthru
        _
    $region6: #{tpu_custom_call.1} parent=1 // loop_footer
      %s41 = sadd.s32 1, %s37
    $region7: #{tpu_custom_call.1} parent=1 // loop_footer_branch
      %36 = sbr.rel target = $region3
    $region8: #{tpu_custom_call.1} parent=1 // loop_exit
      _
    %6120 = vsyncpa [#allocation4], 1
    %s6121 = scalar_lea.sflag [#allocation4], 1
    %6122 = vsyncpa %s6121, 1
    %6123 = vsyncpa [#allocation7], 1
    %s6124 = scalar_lea.sflag [#allocation7], 1
    %6125 = vsyncpa %s6124, 1
    %6126 = vsyncpa [#allocation10], 1
    %6127 = vsyncpa [#allocation13], 1
    %6128 = vsyncpa [#allocation16], 1
    %6129 = vsyncpa [#allocation19], 1
    %6130 = vsyncpa [#allocation22], 1
    %6131 = vsyncpa [#allocation25], 1
    %6132 = vsyncpa [#allocation5], 1
    %s6133 = scalar_lea.sflag [#allocation5], 1
    %6134 = vsyncpa %s6133, 1

</llo_original>
